<compile_context>
chip_gen: v7x
topology: tpu7x:2x2x1
jax: 0.10.0
libtpu: 0.0.40
codegen_flags: <defaults>
</compile_context>

<pallas_src>
import functools

import jax
import jax.numpy as jnp
from jax.experimental import pallas as pl
from jax.experimental.pallas import tpu as pltpu

NEG_SLOPE = 0.01  # F.leaky_relu default negative_slope
LANE = 128


# layer widths: n_feature -> 96 -> 192 -> 384 -> 768 -> 384 -> 192 -> 96 -> n_output
def _layer_dims(n_feature, n_output):
    return [n_feature, 96, 192, 384, 768, 384, 192, 96, n_output]


def _round_up(x, m):
    return ((x + m - 1) // m) * m


def _leaky_relu(x):
    return jnp.where(x >= 0, x, NEG_SLOPE * x)


def mlp_kernel(x_ref, *refs):
    # refs = (w0, b0, w1, b1, ..., w7, b7, o_ref)
    o_ref = refs[-1]
    wb_refs = refs[:-1]
    n_layers = len(wb_refs) // 2

    h = x_ref[...].astype(jnp.bfloat16)          # bf16 operands, f32 accumulate
    for layer in range(n_layers):
        w = wb_refs[2 * layer][...]              # bf16 (d_in, d_out)
        b = wb_refs[2 * layer + 1][...]          # f32  (1, d_out), broadcasts
        acc = jnp.dot(h, w, preferred_element_type=jnp.float32) + b
        if layer != n_layers - 1:                # no activation on `predict`
            h = _leaky_relu(acc).astype(jnp.bfloat16)
        else:
            h = acc
    o_ref[...] = h.astype(o_ref.dtype)


def init_params(key, n_feature, n_output, dtype=jnp.float32):
    """Deterministic synthetic parameters (torch-Linear-like uniform init).

    Weights are stored as (in_features, out_features) so the kernel computes
    y = x @ W + b (transpose of torch.nn.Linear's (out, in) layout).
    """
    dims = _layer_dims(n_feature, n_output)
    params = []
    for i in range(len(dims) - 1):
        d_in, d_out = dims[i], dims[i + 1]
        key, kw, kb = jax.random.split(key, 3)
        bound = 1.0 / (d_in ** 0.5)
        w = jax.random.uniform(kw, (d_in, d_out), dtype, -bound, bound)
        b = jax.random.uniform(kb, (1, d_out), dtype, -bound, bound)
        params.append((w, b))
    return params


def _prepare_params(params):
    """Zero-pad hidden/output widths up to 128 lanes; weights -> bf16, biases f32."""
    prepared = []
    for i, (w, b) in enumerate(params):
        d_in, d_out = w.shape
        d_in_p = d_in if i == 0 else _round_up(d_in, LANE)   # keep tiny n_feature as-is
        d_out_p = _round_up(d_out, LANE)
        w = jnp.pad(w, ((0, d_in_p - d_in), (0, d_out_p - d_out)))
        b = jnp.pad(b, ((0, 0), (0, d_out_p - d_out)))
        prepared.append((w.astype(jnp.bfloat16), b.astype(jnp.float32)))
    return prepared


@functools.partial(jax.jit, static_argnames=("block_b",))
def net_forward(x, params, block_b=256):
    B, n_feature = x.shape
    n_output = params[-1][1].shape[-1]
    out_dtype = x.dtype

    prepared = _prepare_params(params)
    n_output_p = prepared[-1][0].shape[-1]       # lane-dense (128-padded) output width

    # Don't use a tile much bigger than the (padded) batch.
    block_b = min(block_b, _round_up(B, 8))
    B_pad = _round_up(B, block_b)
    if B_pad != B:
        x = jnp.pad(x, ((0, B_pad - B), (0, 0)))

    # Flatten (w, b) pairs into the argument list.
    flat_args = []
    in_specs = [pl.BlockSpec((block_b, n_feature), lambda i: (i, 0))]
    for w, b in prepared:
        flat_args.append(w)
        in_specs.append(pl.BlockSpec(w.shape, lambda i: (0, 0)))  # full weight, resident
        flat_args.append(b)
        in_specs.append(pl.BlockSpec(b.shape, lambda i: (0, 0)))

    out_spec = pl.BlockSpec((block_b, n_output_p), lambda i: (i, 0))

    flops = 2 * B_pad * sum(int(w.shape[0]) * int(w.shape[1]) for w, _ in prepared)
    bytes_accessed = (
        sum(int(w.size) * 2 + int(b.size) * 4 for w, b in prepared)
        + int(B_pad) * (int(n_feature) + int(n_output_p)) * 4
    )
    cost = pl.CostEstimate(flops=flops, transcendentals=0,
                           bytes_accessed=bytes_accessed)

    out_padded = pl.pallas_call(
        mlp_kernel,
        out_shape=jax.ShapeDtypeStruct((B_pad, n_output_p), out_dtype),
        grid_spec=pltpu.PrefetchScalarGridSpec(
            num_scalar_prefetch=0,
            grid=(B_pad // block_b,),
            in_specs=in_specs,
            out_specs=out_spec,
        ),
        compiler_params=pltpu.CompilerParams(
            dimension_semantics=("parallel",),
            vmem_limit_bytes=32 * 1024 * 1024,
        ),
        cost_estimate=cost,
    )(x, *flat_args)

    # Slice off batch padding and the lane-dense output padding.
    return out_padded[:B, :n_output]


def net_forward_ref(x, params):
    """Pure-JAX reference matching the kernel's bf16-operand / f32-accumulate numerics."""
    h = x.astype(jnp.bfloat16)
    for i, (w, b) in enumerate(params):
        acc = jnp.dot(h, w.astype(jnp.bfloat16),
                      preferred_element_type=jnp.float32) + b.astype(jnp.float32)
        if i != len(params) - 1:
            h = _leaky_relu(acc).astype(jnp.bfloat16)
        else:
            h = acc
    return h.astype(x.dtype)


def net_forward_ref_f32(x, params):
    """Full-precision reference of the torch forward pass."""
    h = x.astype(jnp.float32)
    for i, (w, b) in enumerate(params):
        h = h @ w + b
        if i != len(params) - 1:
            h = _leaky_relu(h)
    return h.astype(x.dtype)


if __name__ == "__main__":
    key = jax.random.PRNGKey(0)
    n_feature, n_output = 8, 4
    batch = 512  # 2 parallel grid steps of 256 rows each

    kx, kp = jax.random.split(key)
    x = jax.random.normal(kx, (batch, n_feature), dtype=jnp.float32)
    params = init_params(kp, n_feature, n_output)

    out = net_forward(x, params, block_b=256)
    out = jax.block_until_ready(out)
    assert out.shape == (batch, n_output)

    # Tight check against a reference with the same bf16-matmul numerics.
    ref_bf16 = net_forward_ref(x, params)
    assert jnp.allclose(out, ref_bf16, atol=1e-2, rtol=1e-2)

    # Loose check against the full-f32 torch-equivalent forward.
    ref_f32 = net_forward_ref_f32(x, params)
    assert jnp.allclose(out, ref_f32, atol=5e-2, rtol=5e-2)

    print("KERNEL_OK")
</pallas_src>

<mosaic_0001>
module attributes {stable_mosaic.version = 11 : i64} {
  func.func @mlp_kernel(%arg0: i32, %arg1: memref<256x8xf32, #tpu.memory_space<vmem>>, %arg2: memref<8x128xbf16, #tpu.memory_space<vmem>>, %arg3: memref<1x128xf32, #tpu.memory_space<vmem>>, %arg4: memref<128x256xbf16, #tpu.memory_space<vmem>>, %arg5: memref<1x256xf32, #tpu.memory_space<vmem>>, %arg6: memref<256x384xbf16, #tpu.memory_space<vmem>>, %arg7: memref<1x384xf32, #tpu.memory_space<vmem>>, %arg8: memref<384x768xbf16, #tpu.memory_space<vmem>>, %arg9: memref<1x768xf32, #tpu.memory_space<vmem>>, %arg10: memref<768x384xbf16, #tpu.memory_space<vmem>>, %arg11: memref<1x384xf32, #tpu.memory_space<vmem>>, %arg12: memref<384x256xbf16, #tpu.memory_space<vmem>>, %arg13: memref<1x256xf32, #tpu.memory_space<vmem>>, %arg14: memref<256x128xbf16, #tpu.memory_space<vmem>>, %arg15: memref<1x128xf32, #tpu.memory_space<vmem>>, %arg16: memref<128x128xbf16, #tpu.memory_space<vmem>>, %arg17: memref<1x128xf32, #tpu.memory_space<vmem>>, %arg18: memref<256x128xf32, #tpu.memory_space<vmem>>) attributes {dimension_semantics = [#tpu.dimension_semantics<parallel>], iteration_bounds = array<i64: 2>, scalar_prefetch = 0 : i64, scratch_operands = 0 : i64, tpu.core_type = #tpu.core_type<tc>, window_params = [{transform_indices = @transform_0, window_bounds = array<i64: 256, 8>}, {pipeline_mode = #tpu.pipeline_mode<synchronous>, transform_indices = @transform_1, window_bounds = array<i64: 8, 128>}, {pipeline_mode = #tpu.pipeline_mode<synchronous>, transform_indices = @transform_2, window_bounds = array<i64: 1, 128>}, {pipeline_mode = #tpu.pipeline_mode<synchronous>, transform_indices = @transform_3, window_bounds = array<i64: 128, 256>}, {pipeline_mode = #tpu.pipeline_mode<synchronous>, transform_indices = @transform_4, window_bounds = array<i64: 1, 256>}, {pipeline_mode = #tpu.pipeline_mode<synchronous>, transform_indices = @transform_5, window_bounds = array<i64: 256, 384>}, {pipeline_mode = #tpu.pipeline_mode<synchronous>, transform_indices = @transform_6, window_bounds = array<i64: 1, 384>}, {pipeline_mode = #tpu.pipeline_mode<synchronous>, transform_indices = @transform_7, window_bounds = array<i64: 384, 768>}, {pipeline_mode = #tpu.pipeline_mode<synchronous>, transform_indices = @transform_8, window_bounds = array<i64: 1, 768>}, {pipeline_mode = #tpu.pipeline_mode<synchronous>, transform_indices = @transform_9, window_bounds = array<i64: 768, 384>}, {pipeline_mode = #tpu.pipeline_mode<synchronous>, transform_indices = @transform_10, window_bounds = array<i64: 1, 384>}, {pipeline_mode = #tpu.pipeline_mode<synchronous>, transform_indices = @transform_11, window_bounds = array<i64: 384, 256>}, {pipeline_mode = #tpu.pipeline_mode<synchronous>, transform_indices = @transform_12, window_bounds = array<i64: 1, 256>}, {pipeline_mode = #tpu.pipeline_mode<synchronous>, transform_indices = @transform_13, window_bounds = array<i64: 256, 128>}, {pipeline_mode = #tpu.pipeline_mode<synchronous>, transform_indices = @transform_14, window_bounds = array<i64: 1, 128>}, {pipeline_mode = #tpu.pipeline_mode<synchronous>, transform_indices = @transform_15, window_bounds = array<i64: 128, 128>}, {pipeline_mode = #tpu.pipeline_mode<synchronous>, transform_indices = @transform_16, window_bounds = array<i64: 1, 128>}, {transform_indices = @transform_17, window_bounds = array<i64: 256, 128>}]} {
    %c0 = arith.constant 0 : index
    %c0_0 = arith.constant 0 : index
    %0 = vector.load %arg1[%c0, %c0_0] : memref<256x8xf32, #tpu.memory_space<vmem>>, vector<256x8xf32>
    %1 = arith.truncf %0 : vector<256x8xf32> to vector<256x8xbf16>
    %c0_1 = arith.constant 0 : index
    %c0_2 = arith.constant 0 : index
    %2 = vector.load %arg2[%c0_1, %c0_2] : memref<8x128xbf16, #tpu.memory_space<vmem>>, vector<8x128xbf16>
    %c0_3 = arith.constant 0 : index
    %c0_4 = arith.constant 0 : index
    %3 = vector.load %arg3[%c0_3, %c0_4] : memref<1x128xf32, #tpu.memory_space<vmem>>, vector<1x128xf32>
    %cst = arith.constant dense<0.000000e+00> : vector<256x128xf32>
    %4 = tpu.matmul %1, %2, %cst {dimension_numbers = #tpu.dot_dimension_numbers<[1], [0], [0], [1], [0, 0, 1, 1], [], []>} : vector<256x8xbf16>, vector<8x128xbf16>, vector<256x128xf32> -> vector<256x128xf32>
    %5 = vector.broadcast %3 : vector<1x128xf32> to vector<256x128xf32>
    %6 = arith.addf %4, %5 : vector<256x128xf32>
    %cst_5 = arith.constant 0.000000e+00 : f32
    %7 = vector.broadcast %cst_5 : f32 to vector<256x128xf32>
    %8 = arith.cmpf oge, %6, %7 : vector<256x128xf32>
    %cst_6 = arith.constant 0.00999999977 : f32
    %9 = vector.broadcast %cst_6 : f32 to vector<256x128xf32>
    %10 = arith.mulf %9, %6 : vector<256x128xf32>
    %11 = arith.select %8, %6, %10 : vector<256x128xi1>, vector<256x128xf32>
    %12 = arith.truncf %11 : vector<256x128xf32> to vector<256x128xbf16>
    %c0_7 = arith.constant 0 : index
    %c0_8 = arith.constant 0 : index
    %13 = vector.load %arg4[%c0_7, %c0_8] : memref<128x256xbf16, #tpu.memory_space<vmem>>, vector<128x256xbf16>
    %c0_9 = arith.constant 0 : index
    %c0_10 = arith.constant 0 : index
    %14 = vector.load %arg5[%c0_9, %c0_10] : memref<1x256xf32, #tpu.memory_space<vmem>>, vector<1x256xf32>
    %cst_11 = arith.constant dense<0.000000e+00> : vector<256x256xf32>
    %15 = tpu.matmul %12, %13, %cst_11 {dimension_numbers = #tpu.dot_dimension_numbers<[1], [0], [0], [1], [0, 0, 1, 1], [], []>} : vector<256x128xbf16>, vector<128x256xbf16>, vector<256x256xf32> -> vector<256x256xf32>
    %16 = vector.broadcast %14 : vector<1x256xf32> to vector<256x256xf32>
    %17 = arith.addf %15, %16 : vector<256x256xf32>
    %cst_12 = arith.constant 0.000000e+00 : f32
    %18 = vector.broadcast %cst_12 : f32 to vector<256x256xf32>
    %19 = arith.cmpf oge, %17, %18 : vector<256x256xf32>
    %cst_13 = arith.constant 0.00999999977 : f32
    %20 = vector.broadcast %cst_13 : f32 to vector<256x256xf32>
    %21 = arith.mulf %20, %17 : vector<256x256xf32>
    %22 = arith.select %19, %17, %21 : vector<256x256xi1>, vector<256x256xf32>
    %23 = arith.truncf %22 : vector<256x256xf32> to vector<256x256xbf16>
    %c0_14 = arith.constant 0 : index
    %c0_15 = arith.constant 0 : index
    %24 = vector.load %arg6[%c0_14, %c0_15] : memref<256x384xbf16, #tpu.memory_space<vmem>>, vector<256x384xbf16>
    %c0_16 = arith.constant 0 : index
    %c0_17 = arith.constant 0 : index
    %25 = vector.load %arg7[%c0_16, %c0_17] : memref<1x384xf32, #tpu.memory_space<vmem>>, vector<1x384xf32>
    %cst_18 = arith.constant dense<0.000000e+00> : vector<256x384xf32>
    %26 = tpu.matmul %23, %24, %cst_18 {dimension_numbers = #tpu.dot_dimension_numbers<[1], [0], [0], [1], [0, 0, 1, 1], [], []>} : vector<256x256xbf16>, vector<256x384xbf16>, vector<256x384xf32> -> vector<256x384xf32>
    %27 = vector.broadcast %25 : vector<1x384xf32> to vector<256x384xf32>
    %28 = arith.addf %26, %27 : vector<256x384xf32>
    %cst_19 = arith.constant 0.000000e+00 : f32
    %29 = vector.broadcast %cst_19 : f32 to vector<256x384xf32>
    %30 = arith.cmpf oge, %28, %29 : vector<256x384xf32>
    %cst_20 = arith.constant 0.00999999977 : f32
    %31 = vector.broadcast %cst_20 : f32 to vector<256x384xf32>
    %32 = arith.mulf %31, %28 : vector<256x384xf32>
    %33 = arith.select %30, %28, %32 : vector<256x384xi1>, vector<256x384xf32>
    %34 = arith.truncf %33 : vector<256x384xf32> to vector<256x384xbf16>
    %c0_21 = arith.constant 0 : index
    %c0_22 = arith.constant 0 : index
    %35 = vector.load %arg8[%c0_21, %c0_22] : memref<384x768xbf16, #tpu.memory_space<vmem>>, vector<384x768xbf16>
    %c0_23 = arith.constant 0 : index
    %c0_24 = arith.constant 0 : index
    %36 = vector.load %arg9[%c0_23, %c0_24] : memref<1x768xf32, #tpu.memory_space<vmem>>, vector<1x768xf32>
    %cst_25 = arith.constant dense<0.000000e+00> : vector<256x768xf32>
    %37 = tpu.matmul %34, %35, %cst_25 {dimension_numbers = #tpu.dot_dimension_numbers<[1], [0], [0], [1], [0, 0, 1, 1], [], []>} : vector<256x384xbf16>, vector<384x768xbf16>, vector<256x768xf32> -> vector<256x768xf32>
    %38 = vector.broadcast %36 : vector<1x768xf32> to vector<256x768xf32>
    %39 = arith.addf %37, %38 : vector<256x768xf32>
    %cst_26 = arith.constant 0.000000e+00 : f32
    %40 = vector.broadcast %cst_26 : f32 to vector<256x768xf32>
    %41 = arith.cmpf oge, %39, %40 : vector<256x768xf32>
    %cst_27 = arith.constant 0.00999999977 : f32
    %42 = vector.broadcast %cst_27 : f32 to vector<256x768xf32>
    %43 = arith.mulf %42, %39 : vector<256x768xf32>
    %44 = arith.select %41, %39, %43 : vector<256x768xi1>, vector<256x768xf32>
    %45 = arith.truncf %44 : vector<256x768xf32> to vector<256x768xbf16>
    %c0_28 = arith.constant 0 : index
    %c0_29 = arith.constant 0 : index
    %46 = vector.load %arg10[%c0_28, %c0_29] : memref<768x384xbf16, #tpu.memory_space<vmem>>, vector<768x384xbf16>
    %c0_30 = arith.constant 0 : index
    %c0_31 = arith.constant 0 : index
    %47 = vector.load %arg11[%c0_30, %c0_31] : memref<1x384xf32, #tpu.memory_space<vmem>>, vector<1x384xf32>
    %cst_32 = arith.constant dense<0.000000e+00> : vector<256x384xf32>
    %48 = tpu.matmul %45, %46, %cst_32 {dimension_numbers = #tpu.dot_dimension_numbers<[1], [0], [0], [1], [0, 0, 1, 1], [], []>} : vector<256x768xbf16>, vector<768x384xbf16>, vector<256x384xf32> -> vector<256x384xf32>
    %49 = vector.broadcast %47 : vector<1x384xf32> to vector<256x384xf32>
    %50 = arith.addf %48, %49 : vector<256x384xf32>
    %cst_33 = arith.constant 0.000000e+00 : f32
    %51 = vector.broadcast %cst_33 : f32 to vector<256x384xf32>
    %52 = arith.cmpf oge, %50, %51 : vector<256x384xf32>
    %cst_34 = arith.constant 0.00999999977 : f32
    %53 = vector.broadcast %cst_34 : f32 to vector<256x384xf32>
    %54 = arith.mulf %53, %50 : vector<256x384xf32>
    %55 = arith.select %52, %50, %54 : vector<256x384xi1>, vector<256x384xf32>
    %56 = arith.truncf %55 : vector<256x384xf32> to vector<256x384xbf16>
    %c0_35 = arith.constant 0 : index
    %c0_36 = arith.constant 0 : index
    %57 = vector.load %arg12[%c0_35, %c0_36] : memref<384x256xbf16, #tpu.memory_space<vmem>>, vector<384x256xbf16>
    %c0_37 = arith.constant 0 : index
    %c0_38 = arith.constant 0 : index
    %58 = vector.load %arg13[%c0_37, %c0_38] : memref<1x256xf32, #tpu.memory_space<vmem>>, vector<1x256xf32>
    %cst_39 = arith.constant dense<0.000000e+00> : vector<256x256xf32>
    %59 = tpu.matmul %56, %57, %cst_39 {dimension_numbers = #tpu.dot_dimension_numbers<[1], [0], [0], [1], [0, 0, 1, 1], [], []>} : vector<256x384xbf16>, vector<384x256xbf16>, vector<256x256xf32> -> vector<256x256xf32>
    %60 = vector.broadcast %58 : vector<1x256xf32> to vector<256x256xf32>
    %61 = arith.addf %59, %60 : vector<256x256xf32>
    %cst_40 = arith.constant 0.000000e+00 : f32
    %62 = vector.broadcast %cst_40 : f32 to vector<256x256xf32>
    %63 = arith.cmpf oge, %61, %62 : vector<256x256xf32>
    %cst_41 = arith.constant 0.00999999977 : f32
    %64 = vector.broadcast %cst_41 : f32 to vector<256x256xf32>
    %65 = arith.mulf %64, %61 : vector<256x256xf32>
    %66 = arith.select %63, %61, %65 : vector<256x256xi1>, vector<256x256xf32>
    %67 = arith.truncf %66 : vector<256x256xf32> to vector<256x256xbf16>
    %c0_42 = arith.constant 0 : index
    %c0_43 = arith.constant 0 : index
    %68 = vector.load %arg14[%c0_42, %c0_43] : memref<256x128xbf16, #tpu.memory_space<vmem>>, vector<256x128xbf16>
    %c0_44 = arith.constant 0 : index
    %c0_45 = arith.constant 0 : index
    %69 = vector.load %arg15[%c0_44, %c0_45] : memref<1x128xf32, #tpu.memory_space<vmem>>, vector<1x128xf32>
    %cst_46 = arith.constant dense<0.000000e+00> : vector<256x128xf32>
    %70 = tpu.matmul %67, %68, %cst_46 {dimension_numbers = #tpu.dot_dimension_numbers<[1], [0], [0], [1], [0, 0, 1, 1], [], []>} : vector<256x256xbf16>, vector<256x128xbf16>, vector<256x128xf32> -> vector<256x128xf32>
    %71 = vector.broadcast %69 : vector<1x128xf32> to vector<256x128xf32>
    %72 = arith.addf %70, %71 : vector<256x128xf32>
    %cst_47 = arith.constant 0.000000e+00 : f32
    %73 = vector.broadcast %cst_47 : f32 to vector<256x128xf32>
    %74 = arith.cmpf oge, %72, %73 : vector<256x128xf32>
    %cst_48 = arith.constant 0.00999999977 : f32
    %75 = vector.broadcast %cst_48 : f32 to vector<256x128xf32>
    %76 = arith.mulf %75, %72 : vector<256x128xf32>
    %77 = arith.select %74, %72, %76 : vector<256x128xi1>, vector<256x128xf32>
    %78 = arith.truncf %77 : vector<256x128xf32> to vector<256x128xbf16>
    %c0_49 = arith.constant 0 : index
    %c0_50 = arith.constant 0 : index
    %79 = vector.load %arg16[%c0_49, %c0_50] : memref<128x128xbf16, #tpu.memory_space<vmem>>, vector<128x128xbf16>
    %c0_51 = arith.constant 0 : index
    %c0_52 = arith.constant 0 : index
    %80 = vector.load %arg17[%c0_51, %c0_52] : memref<1x128xf32, #tpu.memory_space<vmem>>, vector<1x128xf32>
    %cst_53 = arith.constant dense<0.000000e+00> : vector<256x128xf32>
    %81 = tpu.matmul %78, %79, %cst_53 {dimension_numbers = #tpu.dot_dimension_numbers<[1], [0], [0], [1], [0, 0, 1, 1], [], []>} : vector<256x128xbf16>, vector<128x128xbf16>, vector<256x128xf32> -> vector<256x128xf32>
    %82 = vector.broadcast %80 : vector<1x128xf32> to vector<256x128xf32>
    %83 = arith.addf %81, %82 : vector<256x128xf32>
    %c0_54 = arith.constant 0 : index
    %c0_55 = arith.constant 0 : index
    %84 = vector.load %arg18[%c0_54, %c0_55] : memref<256x128xf32, #tpu.memory_space<vmem>>, vector<256x128xf32>
    tpu.vector_store %arg18[%c0_54, %c0_55], %83 {strides = array<i32>} : memref<256x128xf32, #tpu.memory_space<vmem>>, vector<256x128xf32>,
    return
  }
  func.func @transform_0(%arg0: i32) -> (i32, i32) {
    %c0_i32 = arith.constant 0 : i32
    %c0_i32_0 = arith.constant 0 : i32
    return %arg0, %c0_i32 : i32, i32
  }
  func.func @transform_1(%arg0: i32) -> (i32, i32) {
    %c0_i32 = arith.constant 0 : i32
    %c0_i32_0 = arith.constant 0 : i32
    %c0_i32_1 = arith.constant 0 : i32
    return %c0_i32, %c0_i32_0 : i32, i32
  }
  func.func @transform_2(%arg0: i32) -> (i32, i32) {
    %c0_i32 = arith.constant 0 : i32
    %c0_i32_0 = arith.constant 0 : i32
    %c0_i32_1 = arith.constant 0 : i32
    return %c0_i32, %c0_i32_0 : i32, i32
  }
  func.func @transform_3(%arg0: i32) -> (i32, i32) {
    %c0_i32 = arith.constant 0 : i32
    %c0_i32_0 = arith.constant 0 : i32
    %c0_i32_1 = arith.constant 0 : i32
    return %c0_i32, %c0_i32_0 : i32, i32
  }
  func.func @transform_4(%arg0: i32) -> (i32, i32) {
    %c0_i32 = arith.constant 0 : i32
    %c0_i32_0 = arith.constant 0 : i32
    %c0_i32_1 = arith.constant 0 : i32
    return %c0_i32, %c0_i32_0 : i32, i32
  }
  func.func @transform_5(%arg0: i32) -> (i32, i32) {
    %c0_i32 = arith.constant 0 : i32
    %c0_i32_0 = arith.constant 0 : i32
    %c0_i32_1 = arith.constant 0 : i32
    return %c0_i32, %c0_i32_0 : i32, i32
  }
  func.func @transform_6(%arg0: i32) -> (i32, i32) {
    %c0_i32 = arith.constant 0 : i32
    %c0_i32_0 = arith.constant 0 : i32
    %c0_i32_1 = arith.constant 0 : i32
    return %c0_i32, %c0_i32_0 : i32, i32
  }
  func.func @transform_7(%arg0: i32) -> (i32, i32) {
    %c0_i32 = arith.constant 0 : i32
    %c0_i32_0 = arith.constant 0 : i32
    %c0_i32_1 = arith.constant 0 : i32
    return %c0_i32, %c0_i32_0 : i32, i32
  }
  func.func @transform_8(%arg0: i32) -> (i32, i32) {
    %c0_i32 = arith.constant 0 : i32
    %c0_i32_0 = arith.constant 0 : i32
    %c0_i32_1 = arith.constant 0 : i32
    return %c0_i32, %c0_i32_0 : i32, i32
  }
  func.func @transform_9(%arg0: i32) -> (i32, i32) {
    %c0_i32 = arith.constant 0 : i32
    %c0_i32_0 = arith.constant 0 : i32
    %c0_i32_1 = arith.constant 0 : i32
    return %c0_i32, %c0_i32_0 : i32, i32
  }
  func.func @transform_10(%arg0: i32) -> (i32, i32) {
    %c0_i32 = arith.constant 0 : i32
    %c0_i32_0 = arith.constant 0 : i32
    %c0_i32_1 = arith.constant 0 : i32
    return %c0_i32, %c0_i32_0 : i32, i32
  }
  func.func @transform_11(%arg0: i32) -> (i32, i32) {
    %c0_i32 = arith.constant 0 : i32
    %c0_i32_0 = arith.constant 0 : i32
    %c0_i32_1 = arith.constant 0 : i32
    return %c0_i32, %c0_i32_0 : i32, i32
  }
  func.func @transform_12(%arg0: i32) -> (i32, i32) {
    %c0_i32 = arith.constant 0 : i32
    %c0_i32_0 = arith.constant 0 : i32
    %c0_i32_1 = arith.constant 0 : i32
    return %c0_i32, %c0_i32_0 : i32, i32
  }
  func.func @transform_13(%arg0: i32) -> (i32, i32) {
    %c0_i32 = arith.constant 0 : i32
    %c0_i32_0 = arith.constant 0 : i32
    %c0_i32_1 = arith.constant 0 : i32
    return %c0_i32, %c0_i32_0 : i32, i32
  }
  func.func @transform_14(%arg0: i32) -> (i32, i32) {
    %c0_i32 = arith.constant 0 : i32
    %c0_i32_0 = arith.constant 0 : i32
    %c0_i32_1 = arith.constant 0 : i32
    return %c0_i32, %c0_i32_0 : i32, i32
  }
  func.func @transform_15(%arg0: i32) -> (i32, i32) {
    %c0_i32 = arith.constant 0 : i32
    %c0_i32_0 = arith.constant 0 : i32
    %c0_i32_1 = arith.constant 0 : i32
    return %c0_i32, %c0_i32_0 : i32, i32
  }
  func.func @transform_16(%arg0: i32) -> (i32, i32) {
    %c0_i32 = arith.constant 0 : i32
    %c0_i32_0 = arith.constant 0 : i32
    %c0_i32_1 = arith.constant 0 : i32
    return %c0_i32, %c0_i32_0 : i32, i32
  }
  func.func @transform_17(%arg0: i32) -> (i32, i32) {
    %c0_i32 = arith.constant 0 : i32
    %c0_i32_0 = arith.constant 0 : i32
    return %arg0, %c0_i32 : i32, i32
  }
}

</mosaic_0001>

<llo_original>
// kernel: net_forward.1
$region0: #{net_forward.1}
  #allocation0 [shape = 'u32[]', space=smem, size = 0x4, offset = 0x4, fixed_abs, tag = 'smem constant byte address 0x4 - core index']
  #allocation1 [shape = 'u32[144,128]{1,0:T(1,128)}', space=vmem, size = 0x12000, scoped, tag = 'internal scratch']
  %s0 = inlined_call_operand.vmem [shape: f32[512,8], index: 0, kind: input, shape index: {}]
  %s1 = inlined_call_operand.vmem [shape: bf16[8,128], index: 1, kind: input, shape index: {}]
  %s2 = inlined_call_operand.vmem [shape: f32[1,128], index: 2, kind: input, shape index: {}]
  %s3 = inlined_call_operand.vmem [shape: bf16[128,256], index: 3, kind: input, shape index: {}]
  %s4 = inlined_call_operand.vmem [shape: f32[1,256], index: 4, kind: input, shape index: {}]
  %s5 = inlined_call_operand.vmem [shape: bf16[256,384], index: 5, kind: input, shape index: {}]
  %s6 = inlined_call_operand.vmem [shape: f32[1,384], index: 6, kind: input, shape index: {}]
  %s7 = inlined_call_operand.vmem [shape: bf16[384,768], index: 7, kind: input, shape index: {}]
  %s8 = inlined_call_operand.vmem [shape: f32[1,768], index: 8, kind: input, shape index: {}]
  %s9 = inlined_call_operand.vmem [shape: bf16[768,384], index: 9, kind: input, shape index: {}]
  %s10 = inlined_call_operand.vmem [shape: f32[1,384], index: 10, kind: input, shape index: {}]
  %s11 = inlined_call_operand.vmem [shape: bf16[384,256], index: 11, kind: input, shape index: {}]
  %s12 = inlined_call_operand.vmem [shape: f32[1,256], index: 12, kind: input, shape index: {}]
  %s13 = inlined_call_operand.vmem [shape: bf16[256,128], index: 13, kind: input, shape index: {}]
  %s14 = inlined_call_operand.vmem [shape: f32[1,128], index: 14, kind: input, shape index: {}]
  %s15 = inlined_call_operand.vmem [shape: bf16[128,128], index: 15, kind: input, shape index: {}]
  %s16 = inlined_call_operand.vmem [shape: f32[1,128], index: 16, kind: input, shape index: {}]
  %s17 = inlined_call_operand.vmem [shape: f32[512,128], index: 17, kind: output, shape index: {}]
  %s18 = sld [smem:[#allocation0]]
  $region101: #{net_forward.1} parent=0
    _
  %s20 = ssub.s32 1, %s18
  %s21 = scalar_select 0, %s20, %s18
  loop: start=0, step=1, limit=4
  $region2: #{net_forward.1} parent=0 // loop_pre_header
    _
  $region3: #{net_forward.1} parent=0 // loop_header
    %s23 = sphi 0, %s27
    %p24 = scmp.ge.s32.totalorder %s23, 4
    %s33 = sphi 0, %s35
    %s36 = sphi 0, %s33
    %s37 = sphi 0, %s36
    %s53 = sphi 0, %s37
    %s57 = sphi 0, %s57
    %s59 = sphi 0, %s57
    %s60 = sphi 0, %s59
    %s74 = sphi 0, %s60
    %s78 = sphi 0, %s78
    %s80 = sphi 0, %s78
    %s81 = sphi 0, %s80
    %s95 = sphi 0, %s81
    %s99 = sphi 0, %s99
    %s101 = sphi 0, %s99
    %s102 = sphi 0, %s101
    %s116 = sphi 0, %s102
    %s120 = sphi 0, %s120
    %s122 = sphi 0, %s120
    %s123 = sphi 0, %s122
    %s137 = sphi 0, %s123
    %s141 = sphi 0, %s141
    %s143 = sphi 0, %s141
    %s144 = sphi 0, %s143
    %s158 = sphi 0, %s144
    %s162 = sphi 0, %s162
    %s164 = sphi 0, %s162
    %s165 = sphi 0, %s164
    %s179 = sphi 0, %s165
    %s183 = sphi 0, %s183
    %s185 = sphi 0, %s183
    %s186 = sphi 0, %s185
    %s200 = sphi 0, %s186
    %s204 = sphi 0, %s204
    %s206 = sphi 0, %s204
    %s207 = sphi 0, %s206
    %s221 = sphi 0, %s207
    %s225 = sphi 0, %s225
    %s227 = sphi 0, %s225
    %s228 = sphi 0, %s227
    %s242 = sphi 0, %s228
    %s246 = sphi 0, %s246
    %s248 = sphi 0, %s246
    %s249 = sphi 0, %s248
    %s263 = sphi 0, %s249
    %s267 = sphi 0, %s267
    %s269 = sphi 0, %s267
    %s270 = sphi 0, %s269
    %s284 = sphi 0, %s270
    %s288 = sphi 0, %s288
    %s290 = sphi 0, %s288
    %s291 = sphi 0, %s290
    %s305 = sphi 0, %s291
    %s309 = sphi 0, %s309
    %s311 = sphi 0, %s309
    %s312 = sphi 0, %s311
    %s326 = sphi 0, %s312
    %s330 = sphi 0, %s330
    %s332 = sphi 0, %s330
    %s333 = sphi 0, %s332
    %s347 = sphi 0, %s333
    %s351 = sphi 0, %s351
    %s353 = sphi 0, %s351
    %s354 = sphi 0, %s353
    %s368 = sphi 0, %s354
    %s372 = sphi 0, %s372
    %s374 = sphi 0, %s372
    %s375 = sphi 0, %s374
    %s389 = sphi 0, %s375
    %s395 = sphi 0, %s397
    %s398 = sphi 0, %s395
    %s399 = sphi 0, %s398
    %s415 = sphi 0, %s399
  $region4: #{net_forward.1} parent=0 // loop_header_branch
    %26 = sbr.rel (%p24) target = $region8
  $region5: #{net_forward.1} parent=0 // loop_body
    %s28 = ssub.s32 %s23, 1
    %s29 = ssub.s32 %s23, 2
    %s30 = sadd.s32 %s23, 1
    %s31 = ssub.s32 %s23, %s30
    %p32 = scmp.eq.s32.totalorder %s31, 0
    %s34 = sadd.s32 %s33, 1
    %s35 = scalar_select %p32, %s33, %s34
    %p38 = pneg %p32
    %p39 = scmp.eq.s32.totalorder %s23, 1
    %p40 = por %p38, %p39
    %p41 = scmp.ne.s32.totalorder %s33, %s36
    %p42 = scmp.eq.s32.totalorder %s23, 0
    %p43 = por %p41, %p42
    %p44 = scmp.ne.s32.totalorder %s33, %s36
    %p45 = scmp.eq.s32.totalorder %s28, 1
    %p46 = por %p44, %p45
    %p47 = scmp.ne.s32.totalorder %s36, %s37
    %p48 = scmp.eq.s32.totalorder %s28, 0
    %p49 = por %p47, %p48
    %p50 = scmp.ne.s32.totalorder %s36, %s37
    %p51 = scmp.eq.s32.totalorder %s29, 1
    %p52 = por %p50, %p51
    %p54 = scmp.ne.s32.totalorder %s37, %s53
    %p55 = scmp.eq.s32.totalorder %s29, 0
    %p56 = por %p54, %p55
    %s58 = sadd.s32 %s57, 1
    %p61 = scmp.eq.s32.totalorder %s23, 1
    %p62 = scmp.ne.s32.totalorder %s57, %s59
    %p63 = scmp.eq.s32.totalorder %s23, 0
    %p64 = por %p62, %p63
    %p65 = scmp.ne.s32.totalorder %s57, %s59
    %p66 = scmp.eq.s32.totalorder %s28, 1
    %p67 = por %p65, %p66
    %p68 = scmp.ne.s32.totalorder %s59, %s60
    %p69 = scmp.eq.s32.totalorder %s28, 0
    %p70 = por %p68, %p69
    %p71 = scmp.ne.s32.totalorder %s59, %s60
    %p72 = scmp.eq.s32.totalorder %s29, 1
    %p73 = por %p71, %p72
    %p75 = scmp.ne.s32.totalorder %s60, %s74
    %p76 = scmp.eq.s32.totalorder %s29, 0
    %p77 = por %p75, %p76
    %s79 = sadd.s32 %s78, 1
    %p82 = scmp.eq.s32.totalorder %s23, 1
    %p83 = scmp.ne.s32.totalorder %s78, %s80
    %p84 = scmp.eq.s32.totalorder %s23, 0
    %p85 = por %p83, %p84
    %p86 = scmp.ne.s32.totalorder %s78, %s80
    %p87 = scmp.eq.s32.totalorder %s28, 1
    %p88 = por %p86, %p87
    %p89 = scmp.ne.s32.totalorder %s80, %s81
    %p90 = scmp.eq.s32.totalorder %s28, 0
    %p91 = por %p89, %p90
    %p92 = scmp.ne.s32.totalorder %s80, %s81
    %p93 = scmp.eq.s32.totalorder %s29, 1
    %p94 = por %p92, %p93
    %p96 = scmp.ne.s32.totalorder %s81, %s95
    %p97 = scmp.eq.s32.totalorder %s29, 0
    %p98 = por %p96, %p97
    %s100 = sadd.s32 %s99, 1
    %p103 = scmp.eq.s32.totalorder %s23, 1
    %p104 = scmp.ne.s32.totalorder %s99, %s101
    %p105 = scmp.eq.s32.totalorder %s23, 0
    %p106 = por %p104, %p105
    %p107 = scmp.ne.s32.totalorder %s99, %s101
    %p108 = scmp.eq.s32.totalorder %s28, 1
    %p109 = por %p107, %p108
    %p110 = scmp.ne.s32.totalorder %s101, %s102
    %p111 = scmp.eq.s32.totalorder %s28, 0
    %p112 = por %p110, %p111
    %p113 = scmp.ne.s32.totalorder %s101, %s102
    %p114 = scmp.eq.s32.totalorder %s29, 1
    %p115 = por %p113, %p114
    %p117 = scmp.ne.s32.totalorder %s102, %s116
    %p118 = scmp.eq.s32.totalorder %s29, 0
    %p119 = por %p117, %p118
    %s121 = sadd.s32 %s120, 1
    %p124 = scmp.eq.s32.totalorder %s23, 1
    %p125 = scmp.ne.s32.totalorder %s120, %s122
    %p126 = scmp.eq.s32.totalorder %s23, 0
    %p127 = por %p125, %p126
    %p128 = scmp.ne.s32.totalorder %s120, %s122
    %p129 = scmp.eq.s32.totalorder %s28, 1
    %p130 = por %p128, %p129
    %p131 = scmp.ne.s32.totalorder %s122, %s123
    %p132 = scmp.eq.s32.totalorder %s28, 0
    %p133 = por %p131, %p132
    %p134 = scmp.ne.s32.totalorder %s122, %s123
    %p135 = scmp.eq.s32.totalorder %s29, 1
    %p136 = por %p134, %p135
    %p138 = scmp.ne.s32.totalorder %s123, %s137
    %p139 = scmp.eq.s32.totalorder %s29, 0
    %p140 = por %p138, %p139
    %s142 = sadd.s32 %s141, 1
    %p145 = scmp.eq.s32.totalorder %s23, 1
    %p146 = scmp.ne.s32.totalorder %s141, %s143
    %p147 = scmp.eq.s32.totalorder %s23, 0
    %p148 = por %p146, %p147
    %p149 = scmp.ne.s32.totalorder %s141, %s143
    %p150 = scmp.eq.s32.totalorder %s28, 1
    %p151 = por %p149, %p150
    %p152 = scmp.ne.s32.totalorder %s143, %s144
    %p153 = scmp.eq.s32.totalorder %s28, 0
    %p154 = por %p152, %p153
    %p155 = scmp.ne.s32.totalorder %s143, %s144
    %p156 = scmp.eq.s32.totalorder %s29, 1
    %p157 = por %p155, %p156
    %p159 = scmp.ne.s32.totalorder %s144, %s158
    %p160 = scmp.eq.s32.totalorder %s29, 0
    %p161 = por %p159, %p160
    %s163 = sadd.s32 %s162, 1
    %p166 = scmp.eq.s32.totalorder %s23, 1
    %p167 = scmp.ne.s32.totalorder %s162, %s164
    %p168 = scmp.eq.s32.totalorder %s23, 0
    %p169 = por %p167, %p168
    %p170 = scmp.ne.s32.totalorder %s162, %s164
    %p171 = scmp.eq.s32.totalorder %s28, 1
    %p172 = por %p170, %p171
    %p173 = scmp.ne.s32.totalorder %s164, %s165
    %p174 = scmp.eq.s32.totalorder %s28, 0
    %p175 = por %p173, %p174
    %p176 = scmp.ne.s32.totalorder %s164, %s165
    %p177 = scmp.eq.s32.totalorder %s29, 1
    %p178 = por %p176, %p177
    %p180 = scmp.ne.s32.totalorder %s165, %s179
    %p181 = scmp.eq.s32.totalorder %s29, 0
    %p182 = por %p180, %p181
    %s184 = sadd.s32 %s183, 1
    %p187 = scmp.eq.s32.totalorder %s23, 1
    %p188 = scmp.ne.s32.totalorder %s183, %s185
    %p189 = scmp.eq.s32.totalorder %s23, 0
    %p190 = por %p188, %p189
    %p191 = scmp.ne.s32.totalorder %s183, %s185
    %p192 = scmp.eq.s32.totalorder %s28, 1
    %p193 = por %p191, %p192
    %p194 = scmp.ne.s32.totalorder %s185, %s186
    %p195 = scmp.eq.s32.totalorder %s28, 0
    %p196 = por %p194, %p195
    %p197 = scmp.ne.s32.totalorder %s185, %s186
    %p198 = scmp.eq.s32.totalorder %s29, 1
    %p199 = por %p197, %p198
    %p201 = scmp.ne.s32.totalorder %s186, %s200
    %p202 = scmp.eq.s32.totalorder %s29, 0
    %p203 = por %p201, %p202
    %s205 = sadd.s32 %s204, 1
    %p208 = scmp.eq.s32.totalorder %s23, 1
    %p209 = scmp.ne.s32.totalorder %s204, %s206
    %p210 = scmp.eq.s32.totalorder %s23, 0
    %p211 = por %p209, %p210
    %p212 = scmp.ne.s32.totalorder %s204, %s206
    %p213 = scmp.eq.s32.totalorder %s28, 1
    %p214 = por %p212, %p213
    %p215 = scmp.ne.s32.totalorder %s206, %s207
    %p216 = scmp.eq.s32.totalorder %s28, 0
    %p217 = por %p215, %p216
    %p218 = scmp.ne.s32.totalorder %s206, %s207
    %p219 = scmp.eq.s32.totalorder %s29, 1
    %p220 = por %p218, %p219
    %p222 = scmp.ne.s32.totalorder %s207, %s221
    %p223 = scmp.eq.s32.totalorder %s29, 0
    %p224 = por %p222, %p223
    %s226 = sadd.s32 %s225, 1
    %p229 = scmp.eq.s32.totalorder %s23, 1
    %p230 = scmp.ne.s32.totalorder %s225, %s227
    %p231 = scmp.eq.s32.totalorder %s23, 0
    %p232 = por %p230, %p231
    %p233 = scmp.ne.s32.totalorder %s225, %s227
    %p234 = scmp.eq.s32.totalorder %s28, 1
    %p235 = por %p233, %p234
    %p236 = scmp.ne.s32.totalorder %s227, %s228
    %p237 = scmp.eq.s32.totalorder %s28, 0
    %p238 = por %p236, %p237
    %p239 = scmp.ne.s32.totalorder %s227, %s228
    %p240 = scmp.eq.s32.totalorder %s29, 1
    %p241 = por %p239, %p240
    %p243 = scmp.ne.s32.totalorder %s228, %s242
    %p244 = scmp.eq.s32.totalorder %s29, 0
    %p245 = por %p243, %p244
    %s247 = sadd.s32 %s246, 1
    %p250 = scmp.eq.s32.totalorder %s23, 1
    %p251 = scmp.ne.s32.totalorder %s246, %s248
    %p252 = scmp.eq.s32.totalorder %s23, 0
    %p253 = por %p251, %p252
    %p254 = scmp.ne.s32.totalorder %s246, %s248
    %p255 = scmp.eq.s32.totalorder %s28, 1
    %p256 = por %p254, %p255
    %p257 = scmp.ne.s32.totalorder %s248, %s249
    %p258 = scmp.eq.s32.totalorder %s28, 0
    %p259 = por %p257, %p258
    %p260 = scmp.ne.s32.totalorder %s248, %s249
    %p261 = scmp.eq.s32.totalorder %s29, 1
    %p262 = por %p260, %p261
    %p264 = scmp.ne.s32.totalorder %s249, %s263
    %p265 = scmp.eq.s32.totalorder %s29, 0
    %p266 = por %p264, %p265
    %s268 = sadd.s32 %s267, 1
    %p271 = scmp.eq.s32.totalorder %s23, 1
    %p272 = scmp.ne.s32.totalorder %s267, %s269
    %p273 = scmp.eq.s32.totalorder %s23, 0
    %p274 = por %p272, %p273
    %p275 = scmp.ne.s32.totalorder %s267, %s269
    %p276 = scmp.eq.s32.totalorder %s28, 1
    %p277 = por %p275, %p276
    %p278 = scmp.ne.s32.totalorder %s269, %s270
    %p279 = scmp.eq.s32.totalorder %s28, 0
    %p280 = por %p278, %p279
    %p281 = scmp.ne.s32.totalorder %s269, %s270
    %p282 = scmp.eq.s32.totalorder %s29, 1
    %p283 = por %p281, %p282
    %p285 = scmp.ne.s32.totalorder %s270, %s284
    %p286 = scmp.eq.s32.totalorder %s29, 0
    %p287 = por %p285, %p286
    %s289 = sadd.s32 %s288, 1
    %p292 = scmp.eq.s32.totalorder %s23, 1
    %p293 = scmp.ne.s32.totalorder %s288, %s290
    %p294 = scmp.eq.s32.totalorder %s23, 0
    %p295 = por %p293, %p294
    %p296 = scmp.ne.s32.totalorder %s288, %s290
    %p297 = scmp.eq.s32.totalorder %s28, 1
    %p298 = por %p296, %p297
    %p299 = scmp.ne.s32.totalorder %s290, %s291
    %p300 = scmp.eq.s32.totalorder %s28, 0
    %p301 = por %p299, %p300
    %p302 = scmp.ne.s32.totalorder %s290, %s291
    %p303 = scmp.eq.s32.totalorder %s29, 1
    %p304 = por %p302, %p303
    %p306 = scmp.ne.s32.totalorder %s291, %s305
    %p307 = scmp.eq.s32.totalorder %s29, 0
    %p308 = por %p306, %p307
    %s310 = sadd.s32 %s309, 1
    %p313 = scmp.eq.s32.totalorder %s23, 1
    %p314 = scmp.ne.s32.totalorder %s309, %s311
    %p315 = scmp.eq.s32.totalorder %s23, 0
    %p316 = por %p314, %p315
    %p317 = scmp.ne.s32.totalorder %s309, %s311
    %p318 = scmp.eq.s32.totalorder %s28, 1
    %p319 = por %p317, %p318
    %p320 = scmp.ne.s32.totalorder %s311, %s312
    %p321 = scmp.eq.s32.totalorder %s28, 0
    %p322 = por %p320, %p321
    %p323 = scmp.ne.s32.totalorder %s311, %s312
    %p324 = scmp.eq.s32.totalorder %s29, 1
    %p325 = por %p323, %p324
    %p327 = scmp.ne.s32.totalorder %s312, %s326
    %p328 = scmp.eq.s32.totalorder %s29, 0
    %p329 = por %p327, %p328
    %s331 = sadd.s32 %s330, 1
    %p334 = scmp.eq.s32.totalorder %s23, 1
    %p335 = scmp.ne.s32.totalorder %s330, %s332
    %p336 = scmp.eq.s32.totalorder %s23, 0
    %p337 = por %p335, %p336
    %p338 = scmp.ne.s32.totalorder %s330, %s332
    %p339 = scmp.eq.s32.totalorder %s28, 1
    %p340 = por %p338, %p339
    %p341 = scmp.ne.s32.totalorder %s332, %s333
    %p342 = scmp.eq.s32.totalorder %s28, 0
    %p343 = por %p341, %p342
    %p344 = scmp.ne.s32.totalorder %s332, %s333
    %p345 = scmp.eq.s32.totalorder %s29, 1
    %p346 = por %p344, %p345
    %p348 = scmp.ne.s32.totalorder %s333, %s347
    %p349 = scmp.eq.s32.totalorder %s29, 0
    %p350 = por %p348, %p349
    %s352 = sadd.s32 %s351, 1
    %p355 = scmp.eq.s32.totalorder %s23, 1
    %p356 = scmp.ne.s32.totalorder %s351, %s353
    %p357 = scmp.eq.s32.totalorder %s23, 0
    %p358 = por %p356, %p357
    %p359 = scmp.ne.s32.totalorder %s351, %s353
    %p360 = scmp.eq.s32.totalorder %s28, 1
    %p361 = por %p359, %p360
    %p362 = scmp.ne.s32.totalorder %s353, %s354
    %p363 = scmp.eq.s32.totalorder %s28, 0
    %p364 = por %p362, %p363
    %p365 = scmp.ne.s32.totalorder %s353, %s354
    %p366 = scmp.eq.s32.totalorder %s29, 1
    %p367 = por %p365, %p366
    %p369 = scmp.ne.s32.totalorder %s354, %s368
    %p370 = scmp.eq.s32.totalorder %s29, 0
    %p371 = por %p369, %p370
    %s373 = sadd.s32 %s372, 1
    %p376 = scmp.eq.s32.totalorder %s23, 1
    %p377 = scmp.ne.s32.totalorder %s372, %s374
    %p378 = scmp.eq.s32.totalorder %s23, 0
    %p379 = por %p377, %p378
    %p380 = scmp.ne.s32.totalorder %s372, %s374
    %p381 = scmp.eq.s32.totalorder %s28, 1
    %p382 = por %p380, %p381
    %p383 = scmp.ne.s32.totalorder %s374, %s375
    %p384 = scmp.eq.s32.totalorder %s28, 0
    %p385 = por %p383, %p384
    %p386 = scmp.ne.s32.totalorder %s374, %s375
    %p387 = scmp.eq.s32.totalorder %s29, 1
    %p388 = por %p386, %p387
    %p390 = scmp.ne.s32.totalorder %s375, %s389
    %p391 = scmp.eq.s32.totalorder %s29, 0
    %p392 = por %p390, %p391
    %s393 = ssub.s32 %s23, %s30
    %p394 = scmp.eq.s32.totalorder %s393, 0
    %s396 = sadd.s32 %s395, 1
    %s397 = scalar_select %p394, %s395, %s396
    %p400 = pneg %p394
    %p401 = scmp.eq.s32.totalorder %s23, 1
    %p402 = por %p400, %p401
    %p403 = scmp.ne.s32.totalorder %s395, %s398
    %p404 = scmp.eq.s32.totalorder %s23, 0
    %p405 = por %p403, %p404
    %p406 = scmp.ne.s32.totalorder %s395, %s398
    %p407 = scmp.eq.s32.totalorder %s28, 1
    %p408 = por %p406, %p407
    %p409 = scmp.ne.s32.totalorder %s398, %s399
    %p410 = scmp.eq.s32.totalorder %s28, 0
    %p411 = por %p409, %p410
    %p412 = scmp.ne.s32.totalorder %s398, %s399
    %p413 = scmp.eq.s32.totalorder %s29, 1
    %p414 = por %p412, %p413
    %p416 = scmp.ne.s32.totalorder %s399, %s415
    %p417 = scmp.eq.s32.totalorder %s29, 0
    %p418 = por %p416, %p417
    %p419 = scmp.le.s32.totalorder 1, %s23
    %p420 = scmp.lt.s32.totalorder %s23, 3
    %p421 = pnand %p419, %p420
    %p422 = pneg %p421
    // Predicated region
    $region9: #{net_forward.1} parent=5 // pred_check
      _
    $region10: #{net_forward.1} parent=5 // pred_check_branch
      %424 = sbr.rel (%p421) target = $region12
    $region11: #{net_forward.1} parent=5 // pred_region
      %s425 = ssub.s32 %s23, 1
      // Predicated region
      $region13: #{net_forward.1} parent=11 // pred_check
        %p426 = pneg %p70
      $region14: #{net_forward.1} parent=11 // pred_check_branch
        %428 = sbr.rel (%p426) target = $region16
      $region15: #{net_forward.1} parent=11 // pred_region
        _
      $region16: #{net_forward.1} parent=11 // pred_fallthru
        _
      // Predicated region
      $region17: #{net_forward.1} parent=11 // pred_check
        %p429 = pneg %p91
      $region18: #{net_forward.1} parent=11 // pred_check_branch
        %431 = sbr.rel (%p429) target = $region20
      $region19: #{net_forward.1} parent=11 // pred_region
        _
      $region20: #{net_forward.1} parent=11 // pred_fallthru
        _
      // Predicated region
      $region21: #{net_forward.1} parent=11 // pred_check
        %p432 = pneg %p112
      $region22: #{net_forward.1} parent=11 // pred_check_branch
        %434 = sbr.rel (%p432) target = $region24
      $region23: #{net_forward.1} parent=11 // pred_region
        _
      $region24: #{net_forward.1} parent=11 // pred_fallthru
        _
      // Predicated region
      $region25: #{net_forward.1} parent=11 // pred_check
        %p435 = pneg %p133
      $region26: #{net_forward.1} parent=11 // pred_check_branch
        %437 = sbr.rel (%p435) target = $region28
      $region27: #{net_forward.1} parent=11 // pred_region
        _
      $region28: #{net_forward.1} parent=11 // pred_fallthru
        _
      // Predicated region
      $region29: #{net_forward.1} parent=11 // pred_check
        %p438 = pneg %p154
      $region30: #{net_forward.1} parent=11 // pred_check_branch
        %440 = sbr.rel (%p438) target = $region32
      $region31: #{net_forward.1} parent=11 // pred_region
        _
      $region32: #{net_forward.1} parent=11 // pred_fallthru
        _
      // Predicated region
      $region33: #{net_forward.1} parent=11 // pred_check
        %p441 = pneg %p175
      $region34: #{net_forward.1} parent=11 // pred_check_branch
        %443 = sbr.rel (%p441) target = $region36
      $region35: #{net_forward.1} parent=11 // pred_region
        _
      $region36: #{net_forward.1} parent=11 // pred_fallthru
        _
      // Predicated region
      $region37: #{net_forward.1} parent=11 // pred_check
        %p444 = pneg %p196
      $region38: #{net_forward.1} parent=11 // pred_check_branch
        %446 = sbr.rel (%p444) target = $region40
      $region39: #{net_forward.1} parent=11 // pred_region
        _
      $region40: #{net_forward.1} parent=11 // pred_fallthru
        _
      // Predicated region
      $region41: #{net_forward.1} parent=11 // pred_check
        %p447 = pneg %p217
      $region42: #{net_forward.1} parent=11 // pred_check_branch
        %449 = sbr.rel (%p447) target = $region44
      $region43: #{net_forward.1} parent=11 // pred_region
        _
      $region44: #{net_forward.1} parent=11 // pred_fallthru
        _
      // Predicated region
      $region45: #{net_forward.1} parent=11 // pred_check
        %p450 = pneg %p238
      $region46: #{net_forward.1} parent=11 // pred_check_branch
        %452 = sbr.rel (%p450) target = $region48
      $region47: #{net_forward.1} parent=11 // pred_region
        _
      $region48: #{net_forward.1} parent=11 // pred_fallthru
        _
      // Predicated region
      $region49: #{net_forward.1} parent=11 // pred_check
        %p453 = pneg %p259
      $region50: #{net_forward.1} parent=11 // pred_check_branch
        %455 = sbr.rel (%p453) target = $region52
      $region51: #{net_forward.1} parent=11 // pred_region
        _
      $region52: #{net_forward.1} parent=11 // pred_fallthru
        _
      // Predicated region
      $region53: #{net_forward.1} parent=11 // pred_check
        %p456 = pneg %p280
      $region54: #{net_forward.1} parent=11 // pred_check_branch
        %458 = sbr.rel (%p456) target = $region56
      $region55: #{net_forward.1} parent=11 // pred_region
        _
      $region56: #{net_forward.1} parent=11 // pred_fallthru
        _
      // Predicated region
      $region57: #{net_forward.1} parent=11 // pred_check
        %p459 = pneg %p301
      $region58: #{net_forward.1} parent=11 // pred_check_branch
        %461 = sbr.rel (%p459) target = $region60
      $region59: #{net_forward.1} parent=11 // pred_region
        _
      $region60: #{net_forward.1} parent=11 // pred_fallthru
        _
      // Predicated region
      $region61: #{net_forward.1} parent=11 // pred_check
        %p462 = pneg %p322
      $region62: #{net_forward.1} parent=11 // pred_check_branch
        %464 = sbr.rel (%p462) target = $region64
      $region63: #{net_forward.1} parent=11 // pred_region
        _
      $region64: #{net_forward.1} parent=11 // pred_fallthru
        _
      // Predicated region
      $region65: #{net_forward.1} parent=11 // pred_check
        %p465 = pneg %p343
      $region66: #{net_forward.1} parent=11 // pred_check_branch
        %467 = sbr.rel (%p465) target = $region68
      $region67: #{net_forward.1} parent=11 // pred_region
        _
      $region68: #{net_forward.1} parent=11 // pred_fallthru
        _
      // Predicated region
      $region69: #{net_forward.1} parent=11 // pred_check
        %p468 = pneg %p364
      $region70: #{net_forward.1} parent=11 // pred_check_branch
        %470 = sbr.rel (%p468) target = $region72
      $region71: #{net_forward.1} parent=11 // pred_region
        _
      $region72: #{net_forward.1} parent=11 // pred_fallthru
        _
      // Predicated region
      $region73: #{net_forward.1} parent=11 // pred_check
        %p471 = pneg %p385
      $region74: #{net_forward.1} parent=11 // pred_check_branch
        %473 = sbr.rel (%p471) target = $region76
      $region75: #{net_forward.1} parent=11 // pred_region
        _
      $region76: #{net_forward.1} parent=11 // pred_fallthru
        _
    $region12: #{net_forward.1} parent=5 // pred_fallthru
      _
    %p474 = scmp.lt.s32.totalorder %s23, 2
    // Predicated region
    $region77: #{net_forward.1} parent=5 // pred_check
      %p475 = pneg %p474
    $region78: #{net_forward.1} parent=5 // pred_check_branch
      %477 = sbr.rel (%p475) target = $region80
    $region79: #{net_forward.1} parent=5 // pred_region
      // Predicated region
      $region81: #{net_forward.1} parent=79 // pred_check
        %p478 = pneg %p43
      $region82: #{net_forward.1} parent=79 // pred_check_branch
        %480 = sbr.rel (%p478) target = $region84
      $region83: #{net_forward.1} parent=79 // pred_region
        %s481 = smul.u32 32, %s23
        %p482 = scmp.lt.s32.totalorder %s481, 63
        %s483 = scalar_select %p482, %s481, 63
        %s484 = smul.addr %s483, 8
        %s485 = scalar_lea.vmem %s0, %s484
        %s486 = smul.u32 32, %s23
      $region84: #{net_forward.1} parent=79 // pred_fallthru
        _
    $region80: #{net_forward.1} parent=5 // pred_fallthru
      _
    %p487 = scmp.le.s32.totalorder 1, %s23
    %p488 = scmp.lt.s32.totalorder %s23, 3
    %p489 = pnand %p487, %p488
    %p490 = pneg %p489
    // Predicated region
    $region85: #{net_forward.1} parent=5 // pred_check
      _
    $region86: #{net_forward.1} parent=5 // pred_check_branch
      %492 = sbr.rel (%p489) target = $region88
    $region87: #{net_forward.1} parent=5 // pred_region
      %s493 = ssub.s32 %s23, 1
      %s494 = smul.u32 32, %s28
      %p495 = scmp.lt.s32.totalorder %s494, 63
      %s496 = scalar_select %p495, %s494, 63
      %s497 = smul.addr %s496, 8
      %s498 = scalar_lea.vmem %s0, %s497
      %p499 = pneg %p49
      %p500 = pneg %p46
      %p501 = pneg %p70
      %p502 = pneg %p67
      %p503 = pneg %p91
      %p504 = pneg %p88
      %p505 = pneg %p112
      %p506 = pneg %p109
      %p507 = pneg %p133
      %p508 = pneg %p130
      %p509 = pneg %p154
      %p510 = pneg %p151
      %p511 = pneg %p175
      %p512 = pneg %p172
      %p513 = pneg %p196
      %p514 = pneg %p193
      %p515 = pneg %p217
      %p516 = pneg %p214
      %p517 = pneg %p238
      %p518 = pneg %p235
      %p519 = pneg %p259
      %p520 = pneg %p256
      %p521 = pneg %p280
      %p522 = pneg %p277
      %p523 = pneg %p301
      %p524 = pneg %p298
      %p525 = pneg %p322
      %p526 = pneg %p319
      %p527 = pneg %p343
      %p528 = pneg %p340
      %p529 = pneg %p364
      %p530 = pneg %p361
      %p531 = pneg %p385
      %p532 = pneg %p382
      %p533 = pneg %p411
      %p534 = pneg %p408
      %s535 = smul.u32 32, %s28
      %p536 = scmp.lt.s32.totalorder %s535, 63
      %s537 = scalar_select %p536, %s535, 63
      %s538 = smul.addr %s537, 8
      %s539 = scalar_lea.vmem %s17, %s538
      %s540 = smul.u32 32, %s28
      %p541 = scmp.lt.s32.totalorder %s540, 63
      %s542 = scalar_select %p541, %s540, 63
      %s543 = smul.addr %s542, 8
      %s544 = scalar_lea.vmem %s0, %s543
      %s545 = smul.u32 32, %s28
      %s546 = smul.u32 32, %s28
      %p547 = scmp.lt.s32.totalorder %s546, 63
      %s548 = scalar_select %p547, %s546, 63
      %s549 = smul.addr %s548, 8
      %s550 = scalar_lea.vmem %s17, %s549
      %s551 = smul.u32 32, %s28
      %v553 = vld [vmem:[%s544] sm:$0xff]
      %v554 = vld [vmem:[%s544 + $0x8] sm:$0xff]
      %v555 = vld [vmem:[%s544 + $0x10] sm:$0xff]
      %v556 = vld [vmem:[%s544 + $0x18] sm:$0xff]
      %v557 = vld [vmem:[%s544 + $0x20] sm:$0xff]
      %v558 = vld [vmem:[%s544 + $0x28] sm:$0xff]
      %v559 = vld [vmem:[%s544 + $0x30] sm:$0xff]
      %v560 = vld [vmem:[%s544 + $0x38] sm:$0xff]
      %v561 = vld [vmem:[%s544 + $0x40] sm:$0xff]
      %v562 = vld [vmem:[%s544 + $0x48] sm:$0xff]
      %v563 = vld [vmem:[%s544 + $0x50] sm:$0xff]
      %v564 = vld [vmem:[%s544 + $0x58] sm:$0xff]
      %v565 = vld [vmem:[%s544 + $0x60] sm:$0xff]
      %v566 = vld [vmem:[%s544 + $0x68] sm:$0xff]
      %v567 = vld [vmem:[%s544 + $0x70] sm:$0xff]
      %v568 = vld [vmem:[%s544 + $0x78] sm:$0xff]
      %v569 = vld [vmem:[%s544 + $0x80] sm:$0xff]
      %v570 = vld [vmem:[%s544 + $0x88] sm:$0xff]
      %v571 = vld [vmem:[%s544 + $0x90] sm:$0xff]
      %v572 = vld [vmem:[%s544 + $0x98] sm:$0xff]
      %v573 = vld [vmem:[%s544 + $0xa0] sm:$0xff]
      %v574 = vld [vmem:[%s544 + $0xa8] sm:$0xff]
      %v575 = vld [vmem:[%s544 + $0xb0] sm:$0xff]
      %v576 = vld [vmem:[%s544 + $0xb8] sm:$0xff]
      %v577 = vld [vmem:[%s544 + $0xc0] sm:$0xff]
      %v578 = vld [vmem:[%s544 + $0xc8] sm:$0xff]
      %v579 = vld [vmem:[%s544 + $0xd0] sm:$0xff]
      %v580 = vld [vmem:[%s544 + $0xd8] sm:$0xff]
      %v581 = vld [vmem:[%s544 + $0xe0] sm:$0xff]
      %v582 = vld [vmem:[%s544 + $0xe8] sm:$0xff]
      %v583 = vld [vmem:[%s544 + $0xf0] sm:$0xff]
      %v584 = vld [vmem:[%s544 + $0xf8] sm:$0xff]
      %v585 = vpack.c.bf16 %v554, %v553
      %v586 = vpack.c.bf16 %v556, %v555
      %v587 = vpack.c.bf16 %v558, %v557
      %v588 = vpack.c.bf16 %v560, %v559
      %v589 = vpack.c.bf16 %v562, %v561
      %v590 = vpack.c.bf16 %v564, %v563
      %v591 = vpack.c.bf16 %v566, %v565
      %v592 = vpack.c.bf16 %v568, %v567
      %v593 = vpack.c.bf16 %v570, %v569
      %v594 = vpack.c.bf16 %v572, %v571
      %v595 = vpack.c.bf16 %v574, %v573
      %v596 = vpack.c.bf16 %v576, %v575
      %v597 = vpack.c.bf16 %v578, %v577
      %v598 = vpack.c.bf16 %v580, %v579
      %v599 = vpack.c.bf16 %v582, %v581
      %v600 = vpack.c.bf16 %v584, %v583
      %v601 = vld [vmem:[%s1] sm:$0xf]
      %v602 = vld [vmem:[%s2] sm:$0x1]
      %v604 = vlaneseq
      %v605 = vshrl.u32 %v604, 7
      %v606 = vsub.s32 0, %v605
      %v607 = vrot.slane %v602, %v606
      %vm609 = vcmask 64512
      %v611 = vsel %vm609, %v585, 0
      %v614 = vsel %vm609, %v586, 0
      %v617 = vsel %vm609, %v587, 0
      %v620 = vsel %vm609, %v588, 0
      %v623 = vsel %vm609, %v589, 0
      %v626 = vsel %vm609, %v590, 0
      %v629 = vsel %vm609, %v591, 0
      %v632 = vsel %vm609, %v592, 0
      %v635 = vsel %vm609, %v593, 0
      %v638 = vsel %vm609, %v594, 0
      %v641 = vsel %vm609, %v595, 0
      %v644 = vsel %vm609, %v596, 0
      %v647 = vsel %vm609, %v597, 0
      %v650 = vsel %vm609, %v598, 0
      %v653 = vsel %vm609, %v599, 0
      %v656 = vsel %vm609, %v600, 0
      %vm658 = vcmask 1043456
      %v660 = vsel %vm658, %v601, 0
      %662 = vmatprep.subr.bf16.mxu0 0
      %663 = vmatpush1.bf16.msra.mxu0 %v660
      %664 = vmatprep.subr.bf16.mxu0 0
      %665 = vmatpush1.bf16.msra.mxu0 0
      %666 = vmatprep.subr.bf16.mxu0 0
      %667 = vmatpush1.bf16.msra.mxu0 0
      %668 = vmatprep.subr.bf16.mxu0 0
      %669 = vmatpush1.bf16.msra.mxu0 0
      %670 = vmatprep.subr.bf16.mxu0 0
      %671 = vmatpush1.bf16.msra.mxu0 0
      %672 = vmatprep.subr.bf16.mxu0 0
      %673 = vmatpush1.bf16.msra.mxu0 0
      %674 = vmatprep.subr.bf16.mxu0 0
      %675 = vmatpush1.bf16.msra.mxu0 0
      %676 = vmatprep.subr.bf16.mxu0 0
      %677 = vmatpush1.bf16.msra.mxu0 0
      %678 = vmatprep.subr.bf16.mxu0 0
      %679 = vmatpush1.bf16.msra.mxu0 0
      %680 = vmatprep.subr.bf16.mxu0 0
      %681 = vmatpush1.bf16.msra.mxu0 0
      %682 = vmatprep.subr.bf16.mxu0 0
      %683 = vmatpush1.bf16.msra.mxu0 0
      %684 = vmatprep.subr.bf16.mxu0 0
      %685 = vmatpush1.bf16.msra.mxu0 0
      %686 = vmatprep.subr.bf16.mxu0 0
      %687 = vmatpush1.bf16.msra.mxu0 0
      %688 = vmatprep.subr.bf16.mxu0 0
      %689 = vmatpush1.bf16.msra.mxu0 0
      %690 = vmatprep.subr.bf16.mxu0 0
      %691 = vmatpush1.bf16.msra.mxu0 0
      %692 = vmatprep.subr.bf16.mxu0 0
      %693 = vmatpush1.bf16.msra.mxu0 0
      %694 = vmatprep.mubr.bf16.mxu0 0
      %695 = vmatmul.mubr.bf16.gmra.mrb[0].mxu0 %v611
      %v696 = vpop.f32.mrb[0].mxu0
      %v697 = vadd.f32 %v607, %v696
      %v698 = vpop.f32.mrb[0].mxu0
      %v699 = vpop.f32.mrb[0].mxu0
      %v700 = vadd.f32 %v607, %v699
      %v701 = vpop.f32.mrb[0].mxu0
      %702 = vmatprep.mubr.bf16.mxu0 0
      %703 = vmatmul.mubr.bf16.gmra.mrb[0].mxu0 %v614
      %v704 = vpop.f32.mrb[0].mxu0
      %v705 = vadd.f32 %v607, %v704
      %v706 = vpop.f32.mrb[0].mxu0
      %v707 = vpop.f32.mrb[0].mxu0
      %v708 = vadd.f32 %v607, %v707
      %v709 = vpop.f32.mrb[0].mxu0
      %710 = vmatprep.mubr.bf16.mxu0 0
      %711 = vmatmul.mubr.bf16.gmra.mrb[0].mxu0 %v617
      %v712 = vpop.f32.mrb[0].mxu0
      %v713 = vadd.f32 %v607, %v712
      %v714 = vpop.f32.mrb[0].mxu0
      %v715 = vpop.f32.mrb[0].mxu0
      %v716 = vadd.f32 %v607, %v715
      %v717 = vpop.f32.mrb[0].mxu0
      %718 = vmatprep.mubr.bf16.mxu0 0
      %719 = vmatmul.mubr.bf16.gmra.mrb[0].mxu0 %v620
      %v720 = vpop.f32.mrb[0].mxu0
      %v721 = vadd.f32 %v607, %v720
      %v722 = vpop.f32.mrb[0].mxu0
      %v723 = vpop.f32.mrb[0].mxu0
      %v724 = vadd.f32 %v607, %v723
      %v725 = vpop.f32.mrb[0].mxu0
      %726 = vmatprep.mubr.bf16.mxu0 0
      %727 = vmatmul.mubr.bf16.gmra.mrb[0].mxu0 %v623
      %v728 = vpop.f32.mrb[0].mxu0
      %v729 = vadd.f32 %v607, %v728
      %v730 = vpop.f32.mrb[0].mxu0
      %v731 = vpop.f32.mrb[0].mxu0
      %v732 = vadd.f32 %v607, %v731
      %v733 = vpop.f32.mrb[0].mxu0
      %734 = vmatprep.mubr.bf16.mxu0 0
      %735 = vmatmul.mubr.bf16.gmra.mrb[0].mxu0 %v626
      %v736 = vpop.f32.mrb[0].mxu0
      %v737 = vadd.f32 %v607, %v736
      %v738 = vpop.f32.mrb[0].mxu0
      %v739 = vpop.f32.mrb[0].mxu0
      %v740 = vadd.f32 %v607, %v739
      %v741 = vpop.f32.mrb[0].mxu0
      %742 = vmatprep.mubr.bf16.mxu0 0
      %743 = vmatmul.mubr.bf16.gmra.mrb[0].mxu0 %v629
      %v744 = vpop.f32.mrb[0].mxu0
      %v745 = vadd.f32 %v607, %v744
      %v746 = vpop.f32.mrb[0].mxu0
      %v747 = vpop.f32.mrb[0].mxu0
      %v748 = vadd.f32 %v607, %v747
      %v749 = vpop.f32.mrb[0].mxu0
      %750 = vmatprep.mubr.bf16.mxu0 0
      %751 = vmatmul.mubr.bf16.gmra.mrb[0].mxu0 %v632
      %v752 = vpop.f32.mrb[0].mxu0
      %v753 = vadd.f32 %v607, %v752
      %v754 = vpop.f32.mrb[0].mxu0
      %v755 = vpop.f32.mrb[0].mxu0
      %v756 = vadd.f32 %v607, %v755
      %v757 = vpop.f32.mrb[0].mxu0
      %758 = vmatprep.mubr.bf16.mxu0 0
      %759 = vmatmul.mubr.bf16.gmra.mrb[0].mxu0 %v635
      %v760 = vpop.f32.mrb[0].mxu0
      %v761 = vadd.f32 %v607, %v760
      %v762 = vpop.f32.mrb[0].mxu0
      %v763 = vpop.f32.mrb[0].mxu0
      %v764 = vadd.f32 %v607, %v763
      %v765 = vpop.f32.mrb[0].mxu0
      %766 = vmatprep.mubr.bf16.mxu0 0
      %767 = vmatmul.mubr.bf16.gmra.mrb[0].mxu0 %v638
      %v768 = vpop.f32.mrb[0].mxu0
      %v769 = vadd.f32 %v607, %v768
      %v770 = vpop.f32.mrb[0].mxu0
      %v771 = vpop.f32.mrb[0].mxu0
      %v772 = vadd.f32 %v607, %v771
      %v773 = vpop.f32.mrb[0].mxu0
      %774 = vmatprep.mubr.bf16.mxu0 0
      %775 = vmatmul.mubr.bf16.gmra.mrb[0].mxu0 %v641
      %v776 = vpop.f32.mrb[0].mxu0
      %v777 = vadd.f32 %v607, %v776
      %v778 = vpop.f32.mrb[0].mxu0
      %v779 = vpop.f32.mrb[0].mxu0
      %v780 = vadd.f32 %v607, %v779
      %v781 = vpop.f32.mrb[0].mxu0
      %782 = vmatprep.mubr.bf16.mxu0 0
      %783 = vmatmul.mubr.bf16.gmra.mrb[0].mxu0 %v644
      %v784 = vpop.f32.mrb[0].mxu0
      %v785 = vadd.f32 %v607, %v784
      %v786 = vpop.f32.mrb[0].mxu0
      %v787 = vpop.f32.mrb[0].mxu0
      %v788 = vadd.f32 %v607, %v787
      %v789 = vpop.f32.mrb[0].mxu0
      %790 = vmatprep.mubr.bf16.mxu0 0
      %791 = vmatmul.mubr.bf16.gmra.mrb[0].mxu0 %v647
      %v792 = vpop.f32.mrb[0].mxu0
      %v793 = vadd.f32 %v607, %v792
      %v794 = vpop.f32.mrb[0].mxu0
      %v795 = vpop.f32.mrb[0].mxu0
      %v796 = vadd.f32 %v607, %v795
      %v797 = vpop.f32.mrb[0].mxu0
      %798 = vmatprep.mubr.bf16.mxu0 0
      %799 = vmatmul.mubr.bf16.gmra.mrb[0].mxu0 %v650
      %v800 = vpop.f32.mrb[0].mxu0
      %v801 = vadd.f32 %v607, %v800
      %v802 = vpop.f32.mrb[0].mxu0
      %v803 = vpop.f32.mrb[0].mxu0
      %v804 = vadd.f32 %v607, %v803
      %v805 = vpop.f32.mrb[0].mxu0
      %806 = vmatprep.mubr.bf16.mxu0 0
      %807 = vmatmul.mubr.bf16.gmra.mrb[0].mxu0 %v653
      %v808 = vpop.f32.mrb[0].mxu0
      %v809 = vadd.f32 %v607, %v808
      %v810 = vpop.f32.mrb[0].mxu0
      %v811 = vpop.f32.mrb[0].mxu0
      %v812 = vadd.f32 %v607, %v811
      %v813 = vpop.f32.mrb[0].mxu0
      %814 = vmatprep.mubr.bf16.mxu0 0
      %815 = vmatmul.mubr.bf16.gmra.mrb[0].mxu0 %v656
      %v816 = vpop.f32.mrb[0].mxu0
      %v817 = vadd.f32 %v607, %v816
      %v818 = vpop.f32.mrb[0].mxu0
      %v819 = vpop.f32.mrb[0].mxu0
      %v820 = vadd.f32 %v607, %v819
      %v821 = vpop.f32.mrb[0].mxu0
      %822 = vdwg.mxu0
      %vm823 = vcmp.ge.f32.partialorder %v697, 0.0
      %vm824 = vcmp.ge.f32.partialorder %v700, 0.0
      %vm825 = vcmp.ge.f32.partialorder %v705, 0.0
      %vm826 = vcmp.ge.f32.partialorder %v708, 0.0
      %vm827 = vcmp.ge.f32.partialorder %v713, 0.0
      %vm828 = vcmp.ge.f32.partialorder %v716, 0.0
      %vm829 = vcmp.ge.f32.partialorder %v721, 0.0
      %vm830 = vcmp.ge.f32.partialorder %v724, 0.0
      %vm831 = vcmp.ge.f32.partialorder %v729, 0.0
      %vm832 = vcmp.ge.f32.partialorder %v732, 0.0
      %vm833 = vcmp.ge.f32.partialorder %v737, 0.0
      %vm834 = vcmp.ge.f32.partialorder %v740, 0.0
      %vm835 = vcmp.ge.f32.partialorder %v745, 0.0
      %vm836 = vcmp.ge.f32.partialorder %v748, 0.0
      %vm837 = vcmp.ge.f32.partialorder %v753, 0.0
      %vm838 = vcmp.ge.f32.partialorder %v756, 0.0
      %vm839 = vcmp.ge.f32.partialorder %v761, 0.0
      %vm840 = vcmp.ge.f32.partialorder %v764, 0.0
      %vm841 = vcmp.ge.f32.partialorder %v769, 0.0
      %vm842 = vcmp.ge.f32.partialorder %v772, 0.0
      %vm843 = vcmp.ge.f32.partialorder %v777, 0.0
      %vm844 = vcmp.ge.f32.partialorder %v780, 0.0
      %vm845 = vcmp.ge.f32.partialorder %v785, 0.0
      %vm846 = vcmp.ge.f32.partialorder %v788, 0.0
      %vm847 = vcmp.ge.f32.partialorder %v793, 0.0
      %vm848 = vcmp.ge.f32.partialorder %v796, 0.0
      %vm849 = vcmp.ge.f32.partialorder %v801, 0.0
      %vm850 = vcmp.ge.f32.partialorder %v804, 0.0
      %vm851 = vcmp.ge.f32.partialorder %v809, 0.0
      %vm852 = vcmp.ge.f32.partialorder %v812, 0.0
      %vm853 = vcmp.ge.f32.partialorder %v817, 0.0
      %vm854 = vcmp.ge.f32.partialorder %v820, 0.0
      %v855 = vmul.f32 %v697, 0.01
      %v856 = vmul.f32 %v700, 0.01
      %v857 = vmul.f32 %v705, 0.01
      %v858 = vmul.f32 %v708, 0.01
      %v859 = vmul.f32 %v713, 0.01
      %v860 = vmul.f32 %v716, 0.01
      %v861 = vmul.f32 %v721, 0.01
      %v862 = vmul.f32 %v724, 0.01
      %v863 = vmul.f32 %v729, 0.01
      %v864 = vmul.f32 %v732, 0.01
      %v865 = vmul.f32 %v737, 0.01
      %v866 = vmul.f32 %v740, 0.01
      %v867 = vmul.f32 %v745, 0.01
      %v868 = vmul.f32 %v748, 0.01
      %v869 = vmul.f32 %v753, 0.01
      %v870 = vmul.f32 %v756, 0.01
      %v871 = vmul.f32 %v761, 0.01
      %v872 = vmul.f32 %v764, 0.01
      %v873 = vmul.f32 %v769, 0.01
      %v874 = vmul.f32 %v772, 0.01
      %v875 = vmul.f32 %v777, 0.01
      %v876 = vmul.f32 %v780, 0.01
      %v877 = vmul.f32 %v785, 0.01
      %v878 = vmul.f32 %v788, 0.01
      %v879 = vmul.f32 %v793, 0.01
      %v880 = vmul.f32 %v796, 0.01
      %v881 = vmul.f32 %v801, 0.01
      %v882 = vmul.f32 %v804, 0.01
      %v883 = vmul.f32 %v809, 0.01
      %v884 = vmul.f32 %v812, 0.01
      %v885 = vmul.f32 %v817, 0.01
      %v886 = vmul.f32 %v820, 0.01
      %v887 = vsel %vm823, %v697, %v855
      %v888 = vsel %vm824, %v700, %v856
      %v889 = vsel %vm825, %v705, %v857
      %v890 = vsel %vm826, %v708, %v858
      %v891 = vsel %vm827, %v713, %v859
      %v892 = vsel %vm828, %v716, %v860
      %v893 = vsel %vm829, %v721, %v861
      %v894 = vsel %vm830, %v724, %v862
      %v895 = vsel %vm831, %v729, %v863
      %v896 = vsel %vm832, %v732, %v864
      %v897 = vsel %vm833, %v737, %v865
      %v898 = vsel %vm834, %v740, %v866
      %v899 = vsel %vm835, %v745, %v867
      %v900 = vsel %vm836, %v748, %v868
      %v901 = vsel %vm837, %v753, %v869
      %v902 = vsel %vm838, %v756, %v870
      %v903 = vsel %vm839, %v761, %v871
      %v904 = vsel %vm840, %v764, %v872
      %v905 = vsel %vm841, %v769, %v873
      %v906 = vsel %vm842, %v772, %v874
      %v907 = vsel %vm843, %v777, %v875
      %v908 = vsel %vm844, %v780, %v876
      %v909 = vsel %vm845, %v785, %v877
      %v910 = vsel %vm846, %v788, %v878
      %v911 = vsel %vm847, %v793, %v879
      %v912 = vsel %vm848, %v796, %v880
      %v913 = vsel %vm849, %v801, %v881
      %v914 = vsel %vm850, %v804, %v882
      %v915 = vsel %vm851, %v809, %v883
      %v916 = vsel %vm852, %v812, %v884
      %v917 = vsel %vm853, %v817, %v885
      %v918 = vsel %vm854, %v820, %v886
      %v919 = vpack.c.bf16 %v888, %v887
      %v920 = vpack.c.bf16 %v890, %v889
      %v921 = vpack.c.bf16 %v892, %v891
      %v922 = vpack.c.bf16 %v894, %v893
      %v923 = vpack.c.bf16 %v896, %v895
      %v924 = vpack.c.bf16 %v898, %v897
      %v925 = vpack.c.bf16 %v900, %v899
      %v926 = vpack.c.bf16 %v902, %v901
      %v927 = vpack.c.bf16 %v904, %v903
      %v928 = vpack.c.bf16 %v906, %v905
      %v929 = vpack.c.bf16 %v908, %v907
      %v930 = vpack.c.bf16 %v910, %v909
      %v931 = vpack.c.bf16 %v912, %v911
      %v932 = vpack.c.bf16 %v914, %v913
      %v933 = vpack.c.bf16 %v916, %v915
      %v934 = vpack.c.bf16 %v918, %v917
      %v935 = vld [vmem:[%s3] sm:$0xff]
      %v936 = vld [vmem:[%s3 + $0x8] sm:$0xff]
      %v937 = vld [vmem:[%s3 + $0x10] sm:$0xff]
      %v938 = vld [vmem:[%s3 + $0x18] sm:$0xff]
      %v939 = vld [vmem:[%s3 + $0x20] sm:$0xff]
      %v940 = vld [vmem:[%s3 + $0x28] sm:$0xff]
      %v941 = vld [vmem:[%s3 + $0x30] sm:$0xff]
      %v942 = vld [vmem:[%s3 + $0x38] sm:$0xff]
      %v943 = vld [vmem:[%s3 + $0x40] sm:$0xff]
      %v944 = vld [vmem:[%s3 + $0x48] sm:$0xff]
      %v945 = vld [vmem:[%s3 + $0x50] sm:$0xff]
      %v946 = vld [vmem:[%s3 + $0x58] sm:$0xff]
      %v947 = vld [vmem:[%s3 + $0x60] sm:$0xff]
      %v948 = vld [vmem:[%s3 + $0x68] sm:$0xff]
      %v949 = vld [vmem:[%s3 + $0x70] sm:$0xff]
      %v950 = vld [vmem:[%s3 + $0x78] sm:$0xff]
      %v951 = vld [vmem:[%s4] sm:$0x3]
      %v953 = vlaneseq
      %v954 = vshrl.u32 %v953, 7
      %v955 = vsub.s32 0, %v954
      %v956 = vrot.slane %v951, %v955
      %v957 = vlaneseq
      %v958 = vshrl.u32 %v957, 7
      %v959 = vsub.s32 1, %v958
      %v960 = vrot.slane %v951, %v959
      %v979 = vunpack.c.l.b16 %v935
      %v980 = vunpack.c.h.b16 %v935
      %v981 = vunpack.c.l.b16 %v936
      %v982 = vunpack.c.h.b16 %v936
      %v983 = vunpack.c.l.b16 %v937
      %v984 = vunpack.c.h.b16 %v937
      %v985 = vunpack.c.l.b16 %v938
      %v986 = vunpack.c.h.b16 %v938
      %v987 = vunpack.c.l.b16 %v939
      %v988 = vunpack.c.h.b16 %v939
      %v989 = vunpack.c.l.b16 %v940
      %v990 = vunpack.c.h.b16 %v940
      %v991 = vunpack.c.l.b16 %v941
      %v992 = vunpack.c.h.b16 %v941
      %v993 = vunpack.c.l.b16 %v942
      %v994 = vunpack.c.h.b16 %v942
      %v995 = vunpack.c.l.b16 %v943
      %v996 = vunpack.c.h.b16 %v943
      %v997 = vunpack.c.l.b16 %v944
      %v998 = vunpack.c.h.b16 %v944
      %v999 = vunpack.c.l.b16 %v945
      %v1000 = vunpack.c.h.b16 %v945
      %v1001 = vunpack.c.l.b16 %v946
      %v1002 = vunpack.c.h.b16 %v946
      %v1003 = vunpack.c.l.b16 %v947
      %v1004 = vunpack.c.h.b16 %v947
      %v1005 = vunpack.c.l.b16 %v948
      %v1006 = vunpack.c.h.b16 %v948
      %v1007 = vunpack.c.l.b16 %v949
      %v1008 = vunpack.c.h.b16 %v949
      %v1009 = vunpack.c.l.b16 %v950
      %v1010 = vunpack.c.h.b16 %v950
      %v1011 = vpack.c.b16 %v981, %v979
      %v1012 = vpack.c.b16 %v982, %v980
      %v1013 = vpack.c.b16 %v985, %v983
      %v1014 = vpack.c.b16 %v986, %v984
      %v1015 = vpack.c.b16 %v989, %v987
      %v1016 = vpack.c.b16 %v990, %v988
      %v1017 = vpack.c.b16 %v993, %v991
      %v1018 = vpack.c.b16 %v994, %v992
      %v1019 = vpack.c.b16 %v997, %v995
      %v1020 = vpack.c.b16 %v998, %v996
      %v1021 = vpack.c.b16 %v1001, %v999
      %v1022 = vpack.c.b16 %v1002, %v1000
      %v1023 = vpack.c.b16 %v1005, %v1003
      %v1024 = vpack.c.b16 %v1006, %v1004
      %v1025 = vpack.c.b16 %v1009, %v1007
      %v1026 = vpack.c.b16 %v1010, %v1008
      %1043 = vmatprep.subr.bf16.mxu0 %v1012
      %1044 = vmatpush1.bf16.msra.mxu0 %v1011
      %1045 = vmatprep.subr.bf16.mxu0 %v1014
      %1046 = vmatpush1.bf16.msra.mxu0 %v1013
      %1047 = vmatprep.subr.bf16.mxu0 %v1016
      %1048 = vmatpush1.bf16.msra.mxu0 %v1015
      %1049 = vmatprep.subr.bf16.mxu0 %v1018
      %1050 = vmatpush1.bf16.msra.mxu0 %v1017
      %1051 = vmatprep.subr.bf16.mxu0 %v1020
      %1052 = vmatpush1.bf16.msra.mxu0 %v1019
      %1053 = vmatprep.subr.bf16.mxu0 %v1022
      %1054 = vmatpush1.bf16.msra.mxu0 %v1021
      %1055 = vmatprep.subr.bf16.mxu0 %v1024
      %1056 = vmatpush1.bf16.msra.mxu0 %v1023
      %1057 = vmatprep.subr.bf16.mxu0 %v1026
      %1058 = vmatpush1.bf16.msra.mxu0 %v1025
      %1059 = vmatprep.subr.bf16.mxu0 0
      %1060 = vmatpush1.bf16.msra.mxu0 0
      %1061 = vmatprep.subr.bf16.mxu0 0
      %1062 = vmatpush1.bf16.msra.mxu0 0
      %1063 = vmatprep.subr.bf16.mxu0 0
      %1064 = vmatpush1.bf16.msra.mxu0 0
      %1065 = vmatprep.subr.bf16.mxu0 0
      %1066 = vmatpush1.bf16.msra.mxu0 0
      %1067 = vmatprep.subr.bf16.mxu0 0
      %1068 = vmatpush1.bf16.msra.mxu0 0
      %1069 = vmatprep.subr.bf16.mxu0 0
      %1070 = vmatpush1.bf16.msra.mxu0 0
      %1071 = vmatprep.subr.bf16.mxu0 0
      %1072 = vmatpush1.bf16.msra.mxu0 0
      %1073 = vmatprep.subr.bf16.mxu0 0
      %1074 = vmatpush1.bf16.msra.mxu0 0
      %1075 = vmatprep.mubr.bf16.mxu0 0
      %1076 = vmatmul.mubr.bf16.gmra.mrb[0].mxu0 %v919
      %v1077 = vpop.f32.mrb[0].mxu0
      %v1078 = vadd.f32 %v956, %v1077
      %v1079 = vpop.f32.mrb[0].mxu0
      %v1080 = vadd.f32 %v960, %v1079
      %v1081 = vpop.f32.mrb[0].mxu0
      %v1082 = vadd.f32 %v956, %v1081
      %v1083 = vpop.f32.mrb[0].mxu0
      %v1084 = vadd.f32 %v960, %v1083
      %1085 = vmatprep.mubr.bf16.mxu0 0
      %1086 = vmatmul.mubr.bf16.gmra.mrb[0].mxu0 %v920
      %v1087 = vpop.f32.mrb[0].mxu0
      %v1088 = vadd.f32 %v956, %v1087
      %v1089 = vpop.f32.mrb[0].mxu0
      %v1090 = vadd.f32 %v960, %v1089
      %v1091 = vpop.f32.mrb[0].mxu0
      %v1092 = vadd.f32 %v956, %v1091
      %v1093 = vpop.f32.mrb[0].mxu0
      %v1094 = vadd.f32 %v960, %v1093
      %1095 = vmatprep.mubr.bf16.mxu0 0
      %1096 = vmatmul.mubr.bf16.gmra.mrb[0].mxu0 %v921
      %v1097 = vpop.f32.mrb[0].mxu0
      %v1098 = vadd.f32 %v956, %v1097
      %v1099 = vpop.f32.mrb[0].mxu0
      %v1100 = vadd.f32 %v960, %v1099
      %v1101 = vpop.f32.mrb[0].mxu0
      %v1102 = vadd.f32 %v956, %v1101
      %v1103 = vpop.f32.mrb[0].mxu0
      %v1104 = vadd.f32 %v960, %v1103
      %1105 = vmatprep.mubr.bf16.mxu0 0
      %1106 = vmatmul.mubr.bf16.gmra.mrb[0].mxu0 %v922
      %v1107 = vpop.f32.mrb[0].mxu0
      %v1108 = vadd.f32 %v956, %v1107
      %v1109 = vpop.f32.mrb[0].mxu0
      %v1110 = vadd.f32 %v960, %v1109
      %v1111 = vpop.f32.mrb[0].mxu0
      %v1112 = vadd.f32 %v956, %v1111
      %v1113 = vpop.f32.mrb[0].mxu0
      %v1114 = vadd.f32 %v960, %v1113
      %1115 = vmatprep.mubr.bf16.mxu0 0
      %1116 = vmatmul.mubr.bf16.gmra.mrb[0].mxu0 %v923
      %v1117 = vpop.f32.mrb[0].mxu0
      %v1118 = vadd.f32 %v956, %v1117
      %v1119 = vpop.f32.mrb[0].mxu0
      %v1120 = vadd.f32 %v960, %v1119
      %v1121 = vpop.f32.mrb[0].mxu0
      %v1122 = vadd.f32 %v956, %v1121
      %v1123 = vpop.f32.mrb[0].mxu0
      %v1124 = vadd.f32 %v960, %v1123
      %1125 = vmatprep.mubr.bf16.mxu0 0
      %1126 = vmatmul.mubr.bf16.gmra.mrb[0].mxu0 %v924
      %v1127 = vpop.f32.mrb[0].mxu0
      %v1128 = vadd.f32 %v956, %v1127
      %v1129 = vpop.f32.mrb[0].mxu0
      %v1130 = vadd.f32 %v960, %v1129
      %v1131 = vpop.f32.mrb[0].mxu0
      %v1132 = vadd.f32 %v956, %v1131
      %v1133 = vpop.f32.mrb[0].mxu0
      %v1134 = vadd.f32 %v960, %v1133
      %1135 = vmatprep.mubr.bf16.mxu0 0
      %1136 = vmatmul.mubr.bf16.gmra.mrb[0].mxu0 %v925
      %v1137 = vpop.f32.mrb[0].mxu0
      %v1138 = vadd.f32 %v956, %v1137
      %v1139 = vpop.f32.mrb[0].mxu0
      %v1140 = vadd.f32 %v960, %v1139
      %v1141 = vpop.f32.mrb[0].mxu0
      %v1142 = vadd.f32 %v956, %v1141
      %v1143 = vpop.f32.mrb[0].mxu0
      %v1144 = vadd.f32 %v960, %v1143
      %1145 = vmatprep.mubr.bf16.mxu0 0
      %1146 = vmatmul.mubr.bf16.gmra.mrb[0].mxu0 %v926
      %v1147 = vpop.f32.mrb[0].mxu0
      %v1148 = vadd.f32 %v956, %v1147
      %v1149 = vpop.f32.mrb[0].mxu0
      %v1150 = vadd.f32 %v960, %v1149
      %v1151 = vpop.f32.mrb[0].mxu0
      %v1152 = vadd.f32 %v956, %v1151
      %v1153 = vpop.f32.mrb[0].mxu0
      %v1154 = vadd.f32 %v960, %v1153
      %1155 = vmatprep.mubr.bf16.mxu0 0
      %1156 = vmatmul.mubr.bf16.gmra.mrb[0].mxu0 %v927
      %v1157 = vpop.f32.mrb[0].mxu0
      %v1158 = vadd.f32 %v956, %v1157
      %v1159 = vpop.f32.mrb[0].mxu0
      %v1160 = vadd.f32 %v960, %v1159
      %v1161 = vpop.f32.mrb[0].mxu0
      %v1162 = vadd.f32 %v956, %v1161
      %v1163 = vpop.f32.mrb[0].mxu0
      %v1164 = vadd.f32 %v960, %v1163
      %1165 = vmatprep.mubr.bf16.mxu0 0
      %1166 = vmatmul.mubr.bf16.gmra.mrb[0].mxu0 %v928
      %v1167 = vpop.f32.mrb[0].mxu0
      %v1168 = vadd.f32 %v956, %v1167
      %v1169 = vpop.f32.mrb[0].mxu0
      %v1170 = vadd.f32 %v960, %v1169
      %v1171 = vpop.f32.mrb[0].mxu0
      %v1172 = vadd.f32 %v956, %v1171
      %v1173 = vpop.f32.mrb[0].mxu0
      %v1174 = vadd.f32 %v960, %v1173
      %1175 = vmatprep.mubr.bf16.mxu0 0
      %1176 = vmatmul.mubr.bf16.gmra.mrb[0].mxu0 %v929
      %v1177 = vpop.f32.mrb[0].mxu0
      %v1178 = vadd.f32 %v956, %v1177
      %v1179 = vpop.f32.mrb[0].mxu0
      %v1180 = vadd.f32 %v960, %v1179
      %v1181 = vpop.f32.mrb[0].mxu0
      %v1182 = vadd.f32 %v956, %v1181
      %v1183 = vpop.f32.mrb[0].mxu0
      %v1184 = vadd.f32 %v960, %v1183
      %1185 = vmatprep.mubr.bf16.mxu0 0
      %1186 = vmatmul.mubr.bf16.gmra.mrb[0].mxu0 %v930
      %v1187 = vpop.f32.mrb[0].mxu0
      %v1188 = vadd.f32 %v956, %v1187
      %v1189 = vpop.f32.mrb[0].mxu0
      %v1190 = vadd.f32 %v960, %v1189
      %v1191 = vpop.f32.mrb[0].mxu0
      %v1192 = vadd.f32 %v956, %v1191
      %v1193 = vpop.f32.mrb[0].mxu0
      %v1194 = vadd.f32 %v960, %v1193
      %1195 = vmatprep.mubr.bf16.mxu0 0
      %1196 = vmatmul.mubr.bf16.gmra.mrb[0].mxu0 %v931
      %v1197 = vpop.f32.mrb[0].mxu0
      %v1198 = vadd.f32 %v956, %v1197
      %v1199 = vpop.f32.mrb[0].mxu0
      %v1200 = vadd.f32 %v960, %v1199
      %v1201 = vpop.f32.mrb[0].mxu0
      %v1202 = vadd.f32 %v956, %v1201
      %v1203 = vpop.f32.mrb[0].mxu0
      %v1204 = vadd.f32 %v960, %v1203
      %1205 = vmatprep.mubr.bf16.mxu0 0
      %1206 = vmatmul.mubr.bf16.gmra.mrb[0].mxu0 %v932
      %v1207 = vpop.f32.mrb[0].mxu0
      %v1208 = vadd.f32 %v956, %v1207
      %v1209 = vpop.f32.mrb[0].mxu0
      %v1210 = vadd.f32 %v960, %v1209
      %v1211 = vpop.f32.mrb[0].mxu0
      %v1212 = vadd.f32 %v956, %v1211
      %v1213 = vpop.f32.mrb[0].mxu0
      %v1214 = vadd.f32 %v960, %v1213
      %1215 = vmatprep.mubr.bf16.mxu0 0
      %1216 = vmatmul.mubr.bf16.gmra.mrb[0].mxu0 %v933
      %v1217 = vpop.f32.mrb[0].mxu0
      %v1218 = vadd.f32 %v956, %v1217
      %v1219 = vpop.f32.mrb[0].mxu0
      %v1220 = vadd.f32 %v960, %v1219
      %v1221 = vpop.f32.mrb[0].mxu0
      %v1222 = vadd.f32 %v956, %v1221
      %v1223 = vpop.f32.mrb[0].mxu0
      %v1224 = vadd.f32 %v960, %v1223
      %1225 = vmatprep.mubr.bf16.mxu0 0
      %1226 = vmatmul.mubr.bf16.gmra.mrb[0].mxu0 %v934
      %v1227 = vpop.f32.mrb[0].mxu0
      %v1228 = vadd.f32 %v956, %v1227
      %v1229 = vpop.f32.mrb[0].mxu0
      %v1230 = vadd.f32 %v960, %v1229
      %v1231 = vpop.f32.mrb[0].mxu0
      %v1232 = vadd.f32 %v956, %v1231
      %v1233 = vpop.f32.mrb[0].mxu0
      %v1234 = vadd.f32 %v960, %v1233
      %1235 = vdwg.mxu0
      %vm1236 = vcmp.ge.f32.partialorder %v1078, 0.0
      %vm1237 = vcmp.ge.f32.partialorder %v1080, 0.0
      %vm1238 = vcmp.ge.f32.partialorder %v1082, 0.0
      %vm1239 = vcmp.ge.f32.partialorder %v1084, 0.0
      %vm1240 = vcmp.ge.f32.partialorder %v1088, 0.0
      %vm1241 = vcmp.ge.f32.partialorder %v1090, 0.0
      %vm1242 = vcmp.ge.f32.partialorder %v1092, 0.0
      %vm1243 = vcmp.ge.f32.partialorder %v1094, 0.0
      %vm1244 = vcmp.ge.f32.partialorder %v1098, 0.0
      %vm1245 = vcmp.ge.f32.partialorder %v1100, 0.0
      %vm1246 = vcmp.ge.f32.partialorder %v1102, 0.0
      %vm1247 = vcmp.ge.f32.partialorder %v1104, 0.0
      %vm1248 = vcmp.ge.f32.partialorder %v1108, 0.0
      %vm1249 = vcmp.ge.f32.partialorder %v1110, 0.0
      %vm1250 = vcmp.ge.f32.partialorder %v1112, 0.0
      %vm1251 = vcmp.ge.f32.partialorder %v1114, 0.0
      %vm1252 = vcmp.ge.f32.partialorder %v1118, 0.0
      %vm1253 = vcmp.ge.f32.partialorder %v1120, 0.0
      %vm1254 = vcmp.ge.f32.partialorder %v1122, 0.0
      %vm1255 = vcmp.ge.f32.partialorder %v1124, 0.0
      %vm1256 = vcmp.ge.f32.partialorder %v1128, 0.0
      %vm1257 = vcmp.ge.f32.partialorder %v1130, 0.0
      %vm1258 = vcmp.ge.f32.partialorder %v1132, 0.0
      %vm1259 = vcmp.ge.f32.partialorder %v1134, 0.0
      %vm1260 = vcmp.ge.f32.partialorder %v1138, 0.0
      %vm1261 = vcmp.ge.f32.partialorder %v1140, 0.0
      %vm1262 = vcmp.ge.f32.partialorder %v1142, 0.0
      %vm1263 = vcmp.ge.f32.partialorder %v1144, 0.0
      %vm1264 = vcmp.ge.f32.partialorder %v1148, 0.0
      %vm1265 = vcmp.ge.f32.partialorder %v1150, 0.0
      %vm1266 = vcmp.ge.f32.partialorder %v1152, 0.0
      %vm1267 = vcmp.ge.f32.partialorder %v1154, 0.0
      %vm1268 = vcmp.ge.f32.partialorder %v1158, 0.0
      %vm1269 = vcmp.ge.f32.partialorder %v1160, 0.0
      %vm1270 = vcmp.ge.f32.partialorder %v1162, 0.0
      %vm1271 = vcmp.ge.f32.partialorder %v1164, 0.0
      %vm1272 = vcmp.ge.f32.partialorder %v1168, 0.0
      %vm1273 = vcmp.ge.f32.partialorder %v1170, 0.0
      %vm1274 = vcmp.ge.f32.partialorder %v1172, 0.0
      %vm1275 = vcmp.ge.f32.partialorder %v1174, 0.0
      %vm1276 = vcmp.ge.f32.partialorder %v1178, 0.0
      %vm1277 = vcmp.ge.f32.partialorder %v1180, 0.0
      %vm1278 = vcmp.ge.f32.partialorder %v1182, 0.0
      %vm1279 = vcmp.ge.f32.partialorder %v1184, 0.0
      %vm1280 = vcmp.ge.f32.partialorder %v1188, 0.0
      %vm1281 = vcmp.ge.f32.partialorder %v1190, 0.0
      %vm1282 = vcmp.ge.f32.partialorder %v1192, 0.0
      %vm1283 = vcmp.ge.f32.partialorder %v1194, 0.0
      %vm1284 = vcmp.ge.f32.partialorder %v1198, 0.0
      %vm1285 = vcmp.ge.f32.partialorder %v1200, 0.0
      %vm1286 = vcmp.ge.f32.partialorder %v1202, 0.0
      %vm1287 = vcmp.ge.f32.partialorder %v1204, 0.0
      %vm1288 = vcmp.ge.f32.partialorder %v1208, 0.0
      %vm1289 = vcmp.ge.f32.partialorder %v1210, 0.0
      %vm1290 = vcmp.ge.f32.partialorder %v1212, 0.0
      %vm1291 = vcmp.ge.f32.partialorder %v1214, 0.0
      %vm1292 = vcmp.ge.f32.partialorder %v1218, 0.0
      %vm1293 = vcmp.ge.f32.partialorder %v1220, 0.0
      %vm1294 = vcmp.ge.f32.partialorder %v1222, 0.0
      %vm1295 = vcmp.ge.f32.partialorder %v1224, 0.0
      %vm1296 = vcmp.ge.f32.partialorder %v1228, 0.0
      %vm1297 = vcmp.ge.f32.partialorder %v1230, 0.0
      %vm1298 = vcmp.ge.f32.partialorder %v1232, 0.0
      %vm1299 = vcmp.ge.f32.partialorder %v1234, 0.0
      %v1300 = vmul.f32 %v1078, 0.01
      %v1301 = vmul.f32 %v1080, 0.01
      %v1302 = vmul.f32 %v1082, 0.01
      %v1303 = vmul.f32 %v1084, 0.01
      %v1304 = vmul.f32 %v1088, 0.01
      %v1305 = vmul.f32 %v1090, 0.01
      %v1306 = vmul.f32 %v1092, 0.01
      %v1307 = vmul.f32 %v1094, 0.01
      %v1308 = vmul.f32 %v1098, 0.01
      %v1309 = vmul.f32 %v1100, 0.01
      %v1310 = vmul.f32 %v1102, 0.01
      %v1311 = vmul.f32 %v1104, 0.01
      %v1312 = vmul.f32 %v1108, 0.01
      %v1313 = vmul.f32 %v1110, 0.01
      %v1314 = vmul.f32 %v1112, 0.01
      %v1315 = vmul.f32 %v1114, 0.01
      %v1316 = vmul.f32 %v1118, 0.01
      %v1317 = vmul.f32 %v1120, 0.01
      %v1318 = vmul.f32 %v1122, 0.01
      %v1319 = vmul.f32 %v1124, 0.01
      %v1320 = vmul.f32 %v1128, 0.01
      %v1321 = vmul.f32 %v1130, 0.01
      %v1322 = vmul.f32 %v1132, 0.01
      %v1323 = vmul.f32 %v1134, 0.01
      %v1324 = vmul.f32 %v1138, 0.01
      %v1325 = vmul.f32 %v1140, 0.01
      %v1326 = vmul.f32 %v1142, 0.01
      %v1327 = vmul.f32 %v1144, 0.01
      %v1328 = vmul.f32 %v1148, 0.01
      %v1329 = vmul.f32 %v1150, 0.01
      %v1330 = vmul.f32 %v1152, 0.01
      %v1331 = vmul.f32 %v1154, 0.01
      %v1332 = vmul.f32 %v1158, 0.01
      %v1333 = vmul.f32 %v1160, 0.01
      %v1334 = vmul.f32 %v1162, 0.01
      %v1335 = vmul.f32 %v1164, 0.01
      %v1336 = vmul.f32 %v1168, 0.01
      %v1337 = vmul.f32 %v1170, 0.01
      %v1338 = vmul.f32 %v1172, 0.01
      %v1339 = vmul.f32 %v1174, 0.01
      %v1340 = vmul.f32 %v1178, 0.01
      %v1341 = vmul.f32 %v1180, 0.01
      %v1342 = vmul.f32 %v1182, 0.01
      %v1343 = vmul.f32 %v1184, 0.01
      %v1344 = vmul.f32 %v1188, 0.01
      %v1345 = vmul.f32 %v1190, 0.01
      %v1346 = vmul.f32 %v1192, 0.01
      %v1347 = vmul.f32 %v1194, 0.01
      %v1348 = vmul.f32 %v1198, 0.01
      %v1349 = vmul.f32 %v1200, 0.01
      %v1350 = vmul.f32 %v1202, 0.01
      %v1351 = vmul.f32 %v1204, 0.01
      %v1352 = vmul.f32 %v1208, 0.01
      %v1353 = vmul.f32 %v1210, 0.01
      %v1354 = vmul.f32 %v1212, 0.01
      %v1355 = vmul.f32 %v1214, 0.01
      %v1356 = vmul.f32 %v1218, 0.01
      %v1357 = vmul.f32 %v1220, 0.01
      %v1358 = vmul.f32 %v1222, 0.01
      %v1359 = vmul.f32 %v1224, 0.01
      %v1360 = vmul.f32 %v1228, 0.01
      %v1361 = vmul.f32 %v1230, 0.01
      %v1362 = vmul.f32 %v1232, 0.01
      %v1363 = vmul.f32 %v1234, 0.01
      %v1364 = vsel %vm1236, %v1078, %v1300
      %v1365 = vsel %vm1237, %v1080, %v1301
      %v1366 = vsel %vm1238, %v1082, %v1302
      %v1367 = vsel %vm1239, %v1084, %v1303
      %v1368 = vsel %vm1240, %v1088, %v1304
      %v1369 = vsel %vm1241, %v1090, %v1305
      %v1370 = vsel %vm1242, %v1092, %v1306
      %v1371 = vsel %vm1243, %v1094, %v1307
      %v1372 = vsel %vm1244, %v1098, %v1308
      %v1373 = vsel %vm1245, %v1100, %v1309
      %v1374 = vsel %vm1246, %v1102, %v1310
      %v1375 = vsel %vm1247, %v1104, %v1311
      %v1376 = vsel %vm1248, %v1108, %v1312
      %v1377 = vsel %vm1249, %v1110, %v1313
      %v1378 = vsel %vm1250, %v1112, %v1314
      %v1379 = vsel %vm1251, %v1114, %v1315
      %v1380 = vsel %vm1252, %v1118, %v1316
      %v1381 = vsel %vm1253, %v1120, %v1317
      %v1382 = vsel %vm1254, %v1122, %v1318
      %v1383 = vsel %vm1255, %v1124, %v1319
      %v1384 = vsel %vm1256, %v1128, %v1320
      %v1385 = vsel %vm1257, %v1130, %v1321
      %v1386 = vsel %vm1258, %v1132, %v1322
      %v1387 = vsel %vm1259, %v1134, %v1323
      %v1388 = vsel %vm1260, %v1138, %v1324
      %v1389 = vsel %vm1261, %v1140, %v1325
      %v1390 = vsel %vm1262, %v1142, %v1326
      %v1391 = vsel %vm1263, %v1144, %v1327
      %v1392 = vsel %vm1264, %v1148, %v1328
      %v1393 = vsel %vm1265, %v1150, %v1329
      %v1394 = vsel %vm1266, %v1152, %v1330
      %v1395 = vsel %vm1267, %v1154, %v1331
      %v1396 = vsel %vm1268, %v1158, %v1332
      %v1397 = vsel %vm1269, %v1160, %v1333
      %v1398 = vsel %vm1270, %v1162, %v1334
      %v1399 = vsel %vm1271, %v1164, %v1335
      %v1400 = vsel %vm1272, %v1168, %v1336
      %v1401 = vsel %vm1273, %v1170, %v1337
      %v1402 = vsel %vm1274, %v1172, %v1338
      %v1403 = vsel %vm1275, %v1174, %v1339
      %v1404 = vsel %vm1276, %v1178, %v1340
      %v1405 = vsel %vm1277, %v1180, %v1341
      %v1406 = vsel %vm1278, %v1182, %v1342
      %v1407 = vsel %vm1279, %v1184, %v1343
      %v1408 = vsel %vm1280, %v1188, %v1344
      %v1409 = vsel %vm1281, %v1190, %v1345
      %v1410 = vsel %vm1282, %v1192, %v1346
      %v1411 = vsel %vm1283, %v1194, %v1347
      %v1412 = vsel %vm1284, %v1198, %v1348
      %v1413 = vsel %vm1285, %v1200, %v1349
      %v1414 = vsel %vm1286, %v1202, %v1350
      %v1415 = vsel %vm1287, %v1204, %v1351
      %v1416 = vsel %vm1288, %v1208, %v1352
      %v1417 = vsel %vm1289, %v1210, %v1353
      %v1418 = vsel %vm1290, %v1212, %v1354
      %v1419 = vsel %vm1291, %v1214, %v1355
      %v1420 = vsel %vm1292, %v1218, %v1356
      %v1421 = vsel %vm1293, %v1220, %v1357
      %v1422 = vsel %vm1294, %v1222, %v1358
      %v1423 = vsel %vm1295, %v1224, %v1359
      %v1424 = vsel %vm1296, %v1228, %v1360
      %v1425 = vsel %vm1297, %v1230, %v1361
      %v1426 = vsel %vm1298, %v1232, %v1362
      %v1427 = vsel %vm1299, %v1234, %v1363
      %v1428 = vpack.c.bf16 %v1366, %v1364
      %v1429 = vpack.c.bf16 %v1367, %v1365
      %v1430 = vpack.c.bf16 %v1370, %v1368
      %v1431 = vpack.c.bf16 %v1371, %v1369
      %v1432 = vpack.c.bf16 %v1374, %v1372
      %v1433 = vpack.c.bf16 %v1375, %v1373
      %v1434 = vpack.c.bf16 %v1378, %v1376
      %v1435 = vpack.c.bf16 %v1379, %v1377
      %v1436 = vpack.c.bf16 %v1382, %v1380
      %v1437 = vpack.c.bf16 %v1383, %v1381
      %v1438 = vpack.c.bf16 %v1386, %v1384
      %v1439 = vpack.c.bf16 %v1387, %v1385
      %v1440 = vpack.c.bf16 %v1390, %v1388
      %v1441 = vpack.c.bf16 %v1391, %v1389
      %v1442 = vpack.c.bf16 %v1394, %v1392
      %v1443 = vpack.c.bf16 %v1395, %v1393
      %v1444 = vpack.c.bf16 %v1398, %v1396
      %v1445 = vpack.c.bf16 %v1399, %v1397
      %v1446 = vpack.c.bf16 %v1402, %v1400
      %v1447 = vpack.c.bf16 %v1403, %v1401
      %v1448 = vpack.c.bf16 %v1406, %v1404
      %v1449 = vpack.c.bf16 %v1407, %v1405
      %v1450 = vpack.c.bf16 %v1410, %v1408
      %v1451 = vpack.c.bf16 %v1411, %v1409
      %v1452 = vpack.c.bf16 %v1414, %v1412
      %v1453 = vpack.c.bf16 %v1415, %v1413
      %v1454 = vpack.c.bf16 %v1418, %v1416
      %v1455 = vpack.c.bf16 %v1419, %v1417
      %v1456 = vpack.c.bf16 %v1422, %v1420
      %v1457 = vpack.c.bf16 %v1423, %v1421
      %v1458 = vpack.c.bf16 %v1426, %v1424
      %v1459 = vpack.c.bf16 %v1427, %v1425
      %v1460 = vld [vmem:[%s5] sm:$0xff]
      %v1461 = vld [vmem:[%s5 + $0x8] sm:$0xf]
      %v1462 = vld [vmem:[%s5 + $0xc] sm:$0xff]
      %v1463 = vld [vmem:[%s5 + $0x14] sm:$0xf]
      %v1464 = vld [vmem:[%s5 + $0x18] sm:$0xff]
      %v1465 = vld [vmem:[%s5 + $0x20] sm:$0xf]
      %v1466 = vld [vmem:[%s5 + $0x24] sm:$0xff]
      %v1467 = vld [vmem:[%s5 + $0x2c] sm:$0xf]
      %v1468 = vld [vmem:[%s5 + $0x30] sm:$0xff]
      %v1469 = vld [vmem:[%s5 + $0x38] sm:$0xf]
      %v1470 = vld [vmem:[%s5 + $0x3c] sm:$0xff]
      %v1471 = vld [vmem:[%s5 + $0x44] sm:$0xf]
      %v1472 = vld [vmem:[%s5 + $0x48] sm:$0xff]
      %v1473 = vld [vmem:[%s5 + $0x50] sm:$0xf]
      %v1474 = vld [vmem:[%s5 + $0x54] sm:$0xff]
      %v1475 = vld [vmem:[%s5 + $0x5c] sm:$0xf]
      %v1476 = vld [vmem:[%s5 + $0x60] sm:$0xff]
      %v1477 = vld [vmem:[%s5 + $0x68] sm:$0xf]
      %v1478 = vld [vmem:[%s5 + $0x6c] sm:$0xff]
      %v1479 = vld [vmem:[%s5 + $0x74] sm:$0xf]
      %v1480 = vld [vmem:[%s5 + $0x78] sm:$0xff]
      %v1481 = vld [vmem:[%s5 + $0x80] sm:$0xf]
      %v1482 = vld [vmem:[%s5 + $0x84] sm:$0xff]
      %v1483 = vld [vmem:[%s5 + $0x8c] sm:$0xf]
      %v1484 = vld [vmem:[%s5 + $0x90] sm:$0xff]
      %v1485 = vld [vmem:[%s5 + $0x98] sm:$0xf]
      %v1486 = vld [vmem:[%s5 + $0x9c] sm:$0xff]
      %v1487 = vld [vmem:[%s5 + $0xa4] sm:$0xf]
      %v1488 = vld [vmem:[%s5 + $0xa8] sm:$0xff]
      %v1489 = vld [vmem:[%s5 + $0xb0] sm:$0xf]
      %v1490 = vld [vmem:[%s5 + $0xb4] sm:$0xff]
      %v1491 = vld [vmem:[%s5 + $0xbc] sm:$0xf]
      %v1492 = vld [vmem:[%s5 + $0xc0] sm:$0xff]
      %v1493 = vld [vmem:[%s5 + $0xc8] sm:$0xf]
      %v1494 = vld [vmem:[%s5 + $0xcc] sm:$0xff]
      %v1495 = vld [vmem:[%s5 + $0xd4] sm:$0xf]
      %v1496 = vld [vmem:[%s5 + $0xd8] sm:$0xff]
      %v1497 = vld [vmem:[%s5 + $0xe0] sm:$0xf]
      %v1498 = vld [vmem:[%s5 + $0xe4] sm:$0xff]
      %v1499 = vld [vmem:[%s5 + $0xec] sm:$0xf]
      %v1500 = vld [vmem:[%s5 + $0xf0] sm:$0xff]
      %v1501 = vld [vmem:[%s5 + $0xf8] sm:$0xf]
      %v1502 = vld [vmem:[%s5 + $0xfc] sm:$0xff]
      %v1503 = vld [vmem:[%s5 + $0x104] sm:$0xf]
      %v1504 = vld [vmem:[%s5 + $0x108] sm:$0xff]
      %v1505 = vld [vmem:[%s5 + $0x110] sm:$0xf]
      %v1506 = vld [vmem:[%s5 + $0x114] sm:$0xff]
      %v1507 = vld [vmem:[%s5 + $0x11c] sm:$0xf]
      %v1508 = vld [vmem:[%s5 + $0x120] sm:$0xff]
      %v1509 = vld [vmem:[%s5 + $0x128] sm:$0xf]
      %v1510 = vld [vmem:[%s5 + $0x12c] sm:$0xff]
      %v1511 = vld [vmem:[%s5 + $0x134] sm:$0xf]
      %v1512 = vld [vmem:[%s5 + $0x138] sm:$0xff]
      %v1513 = vld [vmem:[%s5 + $0x140] sm:$0xf]
      %v1514 = vld [vmem:[%s5 + $0x144] sm:$0xff]
      %v1515 = vld [vmem:[%s5 + $0x14c] sm:$0xf]
      %v1516 = vld [vmem:[%s5 + $0x150] sm:$0xff]
      %v1517 = vld [vmem:[%s5 + $0x158] sm:$0xf]
      %v1518 = vld [vmem:[%s5 + $0x15c] sm:$0xff]
      %v1519 = vld [vmem:[%s5 + $0x164] sm:$0xf]
      %v1520 = vld [vmem:[%s5 + $0x168] sm:$0xff]
      %v1521 = vld [vmem:[%s5 + $0x170] sm:$0xf]
      %v1522 = vld [vmem:[%s5 + $0x174] sm:$0xff]
      %v1523 = vld [vmem:[%s5 + $0x17c] sm:$0xf]
      %v1524 = vld [vmem:[%s6] sm:$0x7]
      %v1526 = vlaneseq
      %v1527 = vshrl.u32 %v1526, 7
      %v1528 = vsub.s32 0, %v1527
      %v1529 = vrot.slane %v1524, %v1528
      %v1530 = vlaneseq
      %v1531 = vshrl.u32 %v1530, 7
      %v1532 = vsub.s32 1, %v1531
      %v1533 = vrot.slane %v1524, %v1532
      %v1534 = vlaneseq
      %v1535 = vshrl.u32 %v1534, 7
      %v1536 = vsub.s32 2, %v1535
      %v1537 = vrot.slane %v1524, %v1536
      %v1605 = vunpack.c.l.b16 %v1460
      %v1606 = vunpack.c.h.b16 %v1460
      %v1607 = vunpack.c.l.b16 %v1461
      %v1608 = vunpack.c.l.b16 %v1462
      %v1609 = vunpack.c.h.b16 %v1462
      %v1610 = vunpack.c.l.b16 %v1463
      %v1611 = vunpack.c.l.b16 %v1464
      %v1612 = vunpack.c.h.b16 %v1464
      %v1613 = vunpack.c.l.b16 %v1465
      %v1614 = vunpack.c.l.b16 %v1466
      %v1615 = vunpack.c.h.b16 %v1466
      %v1616 = vunpack.c.l.b16 %v1467
      %v1617 = vunpack.c.l.b16 %v1468
      %v1618 = vunpack.c.h.b16 %v1468
      %v1619 = vunpack.c.l.b16 %v1469
      %v1620 = vunpack.c.l.b16 %v1470
      %v1621 = vunpack.c.h.b16 %v1470
      %v1622 = vunpack.c.l.b16 %v1471
      %v1623 = vunpack.c.l.b16 %v1472
      %v1624 = vunpack.c.h.b16 %v1472
      %v1625 = vunpack.c.l.b16 %v1473
      %v1626 = vunpack.c.l.b16 %v1474
      %v1627 = vunpack.c.h.b16 %v1474
      %v1628 = vunpack.c.l.b16 %v1475
      %v1629 = vunpack.c.l.b16 %v1476
      %v1630 = vunpack.c.h.b16 %v1476
      %v1631 = vunpack.c.l.b16 %v1477
      %v1632 = vunpack.c.l.b16 %v1478
      %v1633 = vunpack.c.h.b16 %v1478
      %v1634 = vunpack.c.l.b16 %v1479
      %v1635 = vunpack.c.l.b16 %v1480
      %v1636 = vunpack.c.h.b16 %v1480
      %v1637 = vunpack.c.l.b16 %v1481
      %v1638 = vunpack.c.l.b16 %v1482
      %v1639 = vunpack.c.h.b16 %v1482
      %v1640 = vunpack.c.l.b16 %v1483
      %v1641 = vunpack.c.l.b16 %v1484
      %v1642 = vunpack.c.h.b16 %v1484
      %v1643 = vunpack.c.l.b16 %v1485
      %v1644 = vunpack.c.l.b16 %v1486
      %v1645 = vunpack.c.h.b16 %v1486
      %v1646 = vunpack.c.l.b16 %v1487
      %v1647 = vunpack.c.l.b16 %v1488
      %v1648 = vunpack.c.h.b16 %v1488
      %v1649 = vunpack.c.l.b16 %v1489
      %v1650 = vunpack.c.l.b16 %v1490
      %v1651 = vunpack.c.h.b16 %v1490
      %v1652 = vunpack.c.l.b16 %v1491
      %v1653 = vunpack.c.l.b16 %v1492
      %v1654 = vunpack.c.h.b16 %v1492
      %v1655 = vunpack.c.l.b16 %v1493
      %v1656 = vunpack.c.l.b16 %v1494
      %v1657 = vunpack.c.h.b16 %v1494
      %v1658 = vunpack.c.l.b16 %v1495
      %v1659 = vunpack.c.l.b16 %v1496
      %v1660 = vunpack.c.h.b16 %v1496
      %v1661 = vunpack.c.l.b16 %v1497
      %v1662 = vunpack.c.l.b16 %v1498
      %v1663 = vunpack.c.h.b16 %v1498
      %v1664 = vunpack.c.l.b16 %v1499
      %v1665 = vunpack.c.l.b16 %v1500
      %v1666 = vunpack.c.h.b16 %v1500
      %v1667 = vunpack.c.l.b16 %v1501
      %v1668 = vunpack.c.l.b16 %v1502
      %v1669 = vunpack.c.h.b16 %v1502
      %v1670 = vunpack.c.l.b16 %v1503
      %v1671 = vunpack.c.l.b16 %v1504
      %v1672 = vunpack.c.h.b16 %v1504
      %v1673 = vunpack.c.l.b16 %v1505
      %v1674 = vunpack.c.l.b16 %v1506
      %v1675 = vunpack.c.h.b16 %v1506
      %v1676 = vunpack.c.l.b16 %v1507
      %v1677 = vunpack.c.l.b16 %v1508
      %v1678 = vunpack.c.h.b16 %v1508
      %v1679 = vunpack.c.l.b16 %v1509
      %v1680 = vunpack.c.l.b16 %v1510
      %v1681 = vunpack.c.h.b16 %v1510
      %v1682 = vunpack.c.l.b16 %v1511
      %v1683 = vunpack.c.l.b16 %v1512
      %v1684 = vunpack.c.h.b16 %v1512
      %v1685 = vunpack.c.l.b16 %v1513
      %v1686 = vunpack.c.l.b16 %v1514
      %v1687 = vunpack.c.h.b16 %v1514
      %v1688 = vunpack.c.l.b16 %v1515
      %v1689 = vunpack.c.l.b16 %v1516
      %v1690 = vunpack.c.h.b16 %v1516
      %v1691 = vunpack.c.l.b16 %v1517
      %v1692 = vunpack.c.l.b16 %v1518
      %v1693 = vunpack.c.h.b16 %v1518
      %v1694 = vunpack.c.l.b16 %v1519
      %v1695 = vunpack.c.l.b16 %v1520
      %v1696 = vunpack.c.h.b16 %v1520
      %v1697 = vunpack.c.l.b16 %v1521
      %v1698 = vunpack.c.l.b16 %v1522
      %v1699 = vunpack.c.h.b16 %v1522
      %v1700 = vunpack.c.l.b16 %v1523
      %v1701 = vpack.c.b16 %v1608, %v1605
      %v1702 = vpack.c.b16 %v1609, %v1606
      %v1703 = vpack.c.b16 %v1610, %v1607
      %v1704 = vpack.c.b16 %v1614, %v1611
      %v1705 = vpack.c.b16 %v1615, %v1612
      %v1706 = vpack.c.b16 %v1616, %v1613
      %v1707 = vpack.c.b16 %v1620, %v1617
      %v1708 = vpack.c.b16 %v1621, %v1618
      %v1709 = vpack.c.b16 %v1622, %v1619
      %v1710 = vpack.c.b16 %v1626, %v1623
      %v1711 = vpack.c.b16 %v1627, %v1624
      %v1712 = vpack.c.b16 %v1628, %v1625
      %v1713 = vpack.c.b16 %v1632, %v1629
      %v1714 = vpack.c.b16 %v1633, %v1630
      %v1715 = vpack.c.b16 %v1634, %v1631
      %v1716 = vpack.c.b16 %v1638, %v1635
      %v1717 = vpack.c.b16 %v1639, %v1636
      %v1718 = vpack.c.b16 %v1640, %v1637
      %v1719 = vpack.c.b16 %v1644, %v1641
      %v1720 = vpack.c.b16 %v1645, %v1642
      %v1721 = vpack.c.b16 %v1646, %v1643
      %v1722 = vpack.c.b16 %v1650, %v1647
      %v1723 = vpack.c.b16 %v1651, %v1648
      %v1724 = vpack.c.b16 %v1652, %v1649
      %v1725 = vpack.c.b16 %v1656, %v1653
      %v1726 = vpack.c.b16 %v1657, %v1654
      %v1727 = vpack.c.b16 %v1658, %v1655
      %v1728 = vpack.c.b16 %v1662, %v1659
      %v1729 = vpack.c.b16 %v1663, %v1660
      %v1730 = vpack.c.b16 %v1664, %v1661
      %v1731 = vpack.c.b16 %v1668, %v1665
      %v1732 = vpack.c.b16 %v1669, %v1666
      %v1733 = vpack.c.b16 %v1670, %v1667
      %v1734 = vpack.c.b16 %v1674, %v1671
      %v1735 = vpack.c.b16 %v1675, %v1672
      %v1736 = vpack.c.b16 %v1676, %v1673
      %v1737 = vpack.c.b16 %v1680, %v1677
      %v1738 = vpack.c.b16 %v1681, %v1678
      %v1739 = vpack.c.b16 %v1682, %v1679
      %v1740 = vpack.c.b16 %v1686, %v1683
      %v1741 = vpack.c.b16 %v1687, %v1684
      %v1742 = vpack.c.b16 %v1688, %v1685
      %v1743 = vpack.c.b16 %v1692, %v1689
      %v1744 = vpack.c.b16 %v1693, %v1690
      %v1745 = vpack.c.b16 %v1694, %v1691
      %v1746 = vpack.c.b16 %v1698, %v1695
      %v1747 = vpack.c.b16 %v1699, %v1696
      %v1748 = vpack.c.b16 %v1700, %v1697
      %1797 = vmatprep.subr.bf16.mxu0 %v1702
      %1798 = vmatpush1.bf16.msra.mxu0 %v1701
      %1799 = vmatprep.subr.bf16.mxu0 %v1705
      %1800 = vmatpush1.bf16.msra.mxu0 %v1704
      %1801 = vmatprep.subr.bf16.mxu0 %v1708
      %1802 = vmatpush1.bf16.msra.mxu0 %v1707
      %1803 = vmatprep.subr.bf16.mxu0 %v1711
      %1804 = vmatpush1.bf16.msra.mxu0 %v1710
      %1805 = vmatprep.subr.bf16.mxu0 %v1714
      %1806 = vmatpush1.bf16.msra.mxu0 %v1713
      %1807 = vmatprep.subr.bf16.mxu0 %v1717
      %1808 = vmatpush1.bf16.msra.mxu0 %v1716
      %1809 = vmatprep.subr.bf16.mxu0 %v1720
      %1810 = vmatpush1.bf16.msra.mxu0 %v1719
      %1811 = vmatprep.subr.bf16.mxu0 %v1723
      %1812 = vmatpush1.bf16.msra.mxu0 %v1722
      %1813 = vmatprep.subr.bf16.mxu0 %v1726
      %1814 = vmatpush1.bf16.msra.mxu0 %v1725
      %1815 = vmatprep.subr.bf16.mxu0 %v1729
      %1816 = vmatpush1.bf16.msra.mxu0 %v1728
      %1817 = vmatprep.subr.bf16.mxu0 %v1732
      %1818 = vmatpush1.bf16.msra.mxu0 %v1731
      %1819 = vmatprep.subr.bf16.mxu0 %v1735
      %1820 = vmatpush1.bf16.msra.mxu0 %v1734
      %1821 = vmatprep.subr.bf16.mxu0 %v1738
      %1822 = vmatpush1.bf16.msra.mxu0 %v1737
      %1823 = vmatprep.subr.bf16.mxu0 %v1741
      %1824 = vmatpush1.bf16.msra.mxu0 %v1740
      %1825 = vmatprep.subr.bf16.mxu0 %v1744
      %1826 = vmatpush1.bf16.msra.mxu0 %v1743
      %1827 = vmatprep.subr.bf16.mxu0 %v1747
      %1828 = vmatpush1.bf16.msra.mxu0 %v1746
      %1829 = vmatprep.mubr.bf16.mxu0 %v1429
      %1830 = vmatmul.mubr.bf16.gmra.mrb[0].mxu0 %v1428
      %v1831 = vpop.f32.mrb[0].mxu0
      %v1832 = vadd.f32 %v1529, %v1831
      %v1833 = vpop.f32.mrb[0].mxu0
      %v1834 = vadd.f32 %v1533, %v1833
      %v1835 = vpop.f32.mrb[0].mxu0
      %v1836 = vadd.f32 %v1529, %v1835
      %v1837 = vpop.f32.mrb[0].mxu0
      %v1838 = vadd.f32 %v1533, %v1837
      %1839 = vmatprep.mubr.bf16.mxu0 %v1431
      %1840 = vmatmul.mubr.bf16.gmra.mrb[0].mxu0 %v1430
      %v1841 = vpop.f32.mrb[0].mxu0
      %v1842 = vadd.f32 %v1529, %v1841
      %v1843 = vpop.f32.mrb[0].mxu0
      %v1844 = vadd.f32 %v1533, %v1843
      %v1845 = vpop.f32.mrb[0].mxu0
      %v1846 = vadd.f32 %v1529, %v1845
      %v1847 = vpop.f32.mrb[0].mxu0
      %v1848 = vadd.f32 %v1533, %v1847
      %1849 = vmatprep.mubr.bf16.mxu0 %v1433
      %1850 = vmatmul.mubr.bf16.gmra.mrb[0].mxu0 %v1432
      %v1851 = vpop.f32.mrb[0].mxu0
      %v1852 = vadd.f32 %v1529, %v1851
      %v1853 = vpop.f32.mrb[0].mxu0
      %v1854 = vadd.f32 %v1533, %v1853
      %v1855 = vpop.f32.mrb[0].mxu0
      %v1856 = vadd.f32 %v1529, %v1855
      %v1857 = vpop.f32.mrb[0].mxu0
      %v1858 = vadd.f32 %v1533, %v1857
      %1859 = vmatprep.mubr.bf16.mxu0 %v1435
      %1860 = vmatmul.mubr.bf16.gmra.mrb[0].mxu0 %v1434
      %v1861 = vpop.f32.mrb[0].mxu0
      %v1862 = vadd.f32 %v1529, %v1861
      %v1863 = vpop.f32.mrb[0].mxu0
      %v1864 = vadd.f32 %v1533, %v1863
      %v1865 = vpop.f32.mrb[0].mxu0
      %v1866 = vadd.f32 %v1529, %v1865
      %v1867 = vpop.f32.mrb[0].mxu0
      %v1868 = vadd.f32 %v1533, %v1867
      %1869 = vmatprep.mubr.bf16.mxu0 %v1437
      %1870 = vmatmul.mubr.bf16.gmra.mrb[0].mxu0 %v1436
      %v1871 = vpop.f32.mrb[0].mxu0
      %v1872 = vadd.f32 %v1529, %v1871
      %v1873 = vpop.f32.mrb[0].mxu0
      %v1874 = vadd.f32 %v1533, %v1873
      %v1875 = vpop.f32.mrb[0].mxu0
      %v1876 = vadd.f32 %v1529, %v1875
      %v1877 = vpop.f32.mrb[0].mxu0
      %v1878 = vadd.f32 %v1533, %v1877
      %1879 = vmatprep.mubr.bf16.mxu0 %v1439
      %1880 = vmatmul.mubr.bf16.gmra.mrb[0].mxu0 %v1438
      %v1881 = vpop.f32.mrb[0].mxu0
      %v1882 = vadd.f32 %v1529, %v1881
      %v1883 = vpop.f32.mrb[0].mxu0
      %v1884 = vadd.f32 %v1533, %v1883
      %v1885 = vpop.f32.mrb[0].mxu0
      %v1886 = vadd.f32 %v1529, %v1885
      %v1887 = vpop.f32.mrb[0].mxu0
      %v1888 = vadd.f32 %v1533, %v1887
      %1889 = vmatprep.mubr.bf16.mxu0 %v1441
      %1890 = vmatmul.mubr.bf16.gmra.mrb[0].mxu0 %v1440
      %v1891 = vpop.f32.mrb[0].mxu0
      %v1892 = vadd.f32 %v1529, %v1891
      %v1893 = vpop.f32.mrb[0].mxu0
      %v1894 = vadd.f32 %v1533, %v1893
      %v1895 = vpop.f32.mrb[0].mxu0
      %v1896 = vadd.f32 %v1529, %v1895
      %v1897 = vpop.f32.mrb[0].mxu0
      %v1898 = vadd.f32 %v1533, %v1897
      %1899 = vmatprep.mubr.bf16.mxu0 %v1443
      %1900 = vmatmul.mubr.bf16.gmra.mrb[0].mxu0 %v1442
      %v1901 = vpop.f32.mrb[0].mxu0
      %v1902 = vadd.f32 %v1529, %v1901
      %v1903 = vpop.f32.mrb[0].mxu0
      %v1904 = vadd.f32 %v1533, %v1903
      %v1905 = vpop.f32.mrb[0].mxu0
      %v1906 = vadd.f32 %v1529, %v1905
      %v1907 = vpop.f32.mrb[0].mxu0
      %v1908 = vadd.f32 %v1533, %v1907
      %1909 = vmatprep.mubr.bf16.mxu0 %v1445
      %1910 = vmatmul.mubr.bf16.gmra.mrb[0].mxu0 %v1444
      %v1911 = vpop.f32.mrb[0].mxu0
      %v1912 = vadd.f32 %v1529, %v1911
      %v1913 = vpop.f32.mrb[0].mxu0
      %v1914 = vadd.f32 %v1533, %v1913
      %v1915 = vpop.f32.mrb[0].mxu0
      %v1916 = vadd.f32 %v1529, %v1915
      %v1917 = vpop.f32.mrb[0].mxu0
      %v1918 = vadd.f32 %v1533, %v1917
      %1919 = vmatprep.mubr.bf16.mxu0 %v1447
      %1920 = vmatmul.mubr.bf16.gmra.mrb[0].mxu0 %v1446
      %v1921 = vpop.f32.mrb[0].mxu0
      %v1922 = vadd.f32 %v1529, %v1921
      %v1923 = vpop.f32.mrb[0].mxu0
      %v1924 = vadd.f32 %v1533, %v1923
      %v1925 = vpop.f32.mrb[0].mxu0
      %v1926 = vadd.f32 %v1529, %v1925
      %v1927 = vpop.f32.mrb[0].mxu0
      %v1928 = vadd.f32 %v1533, %v1927
      %1929 = vmatprep.mubr.bf16.mxu0 %v1449
      %1930 = vmatmul.mubr.bf16.gmra.mrb[0].mxu0 %v1448
      %v1931 = vpop.f32.mrb[0].mxu0
      %v1932 = vadd.f32 %v1529, %v1931
      %v1933 = vpop.f32.mrb[0].mxu0
      %v1934 = vadd.f32 %v1533, %v1933
      %v1935 = vpop.f32.mrb[0].mxu0
      %v1936 = vadd.f32 %v1529, %v1935
      %v1937 = vpop.f32.mrb[0].mxu0
      %v1938 = vadd.f32 %v1533, %v1937
      %1939 = vmatprep.mubr.bf16.mxu0 %v1451
      %1940 = vmatmul.mubr.bf16.gmra.mrb[0].mxu0 %v1450
      %v1941 = vpop.f32.mrb[0].mxu0
      %v1942 = vadd.f32 %v1529, %v1941
      %v1943 = vpop.f32.mrb[0].mxu0
      %v1944 = vadd.f32 %v1533, %v1943
      %v1945 = vpop.f32.mrb[0].mxu0
      %v1946 = vadd.f32 %v1529, %v1945
      %v1947 = vpop.f32.mrb[0].mxu0
      %v1948 = vadd.f32 %v1533, %v1947
      %1949 = vmatprep.mubr.bf16.mxu0 %v1453
      %1950 = vmatmul.mubr.bf16.gmra.mrb[0].mxu0 %v1452
      %v1951 = vpop.f32.mrb[0].mxu0
      %v1952 = vadd.f32 %v1529, %v1951
      %v1953 = vpop.f32.mrb[0].mxu0
      %v1954 = vadd.f32 %v1533, %v1953
      %v1955 = vpop.f32.mrb[0].mxu0
      %v1956 = vadd.f32 %v1529, %v1955
      %v1957 = vpop.f32.mrb[0].mxu0
      %v1958 = vadd.f32 %v1533, %v1957
      %1959 = vmatprep.mubr.bf16.mxu0 %v1455
      %1960 = vmatmul.mubr.bf16.gmra.mrb[0].mxu0 %v1454
      %v1961 = vpop.f32.mrb[0].mxu0
      %v1962 = vadd.f32 %v1529, %v1961
      %v1963 = vpop.f32.mrb[0].mxu0
      %v1964 = vadd.f32 %v1533, %v1963
      %v1965 = vpop.f32.mrb[0].mxu0
      %v1966 = vadd.f32 %v1529, %v1965
      %v1967 = vpop.f32.mrb[0].mxu0
      %v1968 = vadd.f32 %v1533, %v1967
      %1969 = vmatprep.mubr.bf16.mxu0 %v1457
      %1970 = vmatmul.mubr.bf16.gmra.mrb[0].mxu0 %v1456
      %v1971 = vpop.f32.mrb[0].mxu0
      %v1972 = vadd.f32 %v1529, %v1971
      %v1973 = vpop.f32.mrb[0].mxu0
      %v1974 = vadd.f32 %v1533, %v1973
      %v1975 = vpop.f32.mrb[0].mxu0
      %v1976 = vadd.f32 %v1529, %v1975
      %v1977 = vpop.f32.mrb[0].mxu0
      %v1978 = vadd.f32 %v1533, %v1977
      %1979 = vmatprep.mubr.bf16.mxu0 %v1459
      %1980 = vmatmul.mubr.bf16.gmra.mrb[0].mxu0 %v1458
      %v1981 = vpop.f32.mrb[0].mxu0
      %v1982 = vadd.f32 %v1529, %v1981
      %v1983 = vpop.f32.mrb[0].mxu0
      %v1984 = vadd.f32 %v1533, %v1983
      %v1985 = vpop.f32.mrb[0].mxu0
      %v1986 = vadd.f32 %v1529, %v1985
      %v1987 = vpop.f32.mrb[0].mxu0
      %v1988 = vadd.f32 %v1533, %v1987
      %1989 = vdwg.mxu0
      %1990 = vmatprep.subr.bf16.mxu0 0
      %1991 = vmatpush1.bf16.msra.mxu0 %v1703
      %1992 = vmatprep.subr.bf16.mxu0 0
      %1993 = vmatpush1.bf16.msra.mxu0 %v1706
      %1994 = vmatprep.subr.bf16.mxu0 0
      %1995 = vmatpush1.bf16.msra.mxu0 %v1709
      %1996 = vmatprep.subr.bf16.mxu0 0
      %1997 = vmatpush1.bf16.msra.mxu0 %v1712
      %1998 = vmatprep.subr.bf16.mxu0 0
      %1999 = vmatpush1.bf16.msra.mxu0 %v1715
      %2000 = vmatprep.subr.bf16.mxu0 0
      %2001 = vmatpush1.bf16.msra.mxu0 %v1718
      %2002 = vmatprep.subr.bf16.mxu0 0
      %2003 = vmatpush1.bf16.msra.mxu0 %v1721
      %2004 = vmatprep.subr.bf16.mxu0 0
      %2005 = vmatpush1.bf16.msra.mxu0 %v1724
      %2006 = vmatprep.subr.bf16.mxu0 0
      %2007 = vmatpush1.bf16.msra.mxu0 %v1727
      %2008 = vmatprep.subr.bf16.mxu0 0
      %2009 = vmatpush1.bf16.msra.mxu0 %v1730
      %2010 = vmatprep.subr.bf16.mxu0 0
      %2011 = vmatpush1.bf16.msra.mxu0 %v1733
      %2012 = vmatprep.subr.bf16.mxu0 0
      %2013 = vmatpush1.bf16.msra.mxu0 %v1736
      %2014 = vmatprep.subr.bf16.mxu0 0
      %2015 = vmatpush1.bf16.msra.mxu0 %v1739
      %2016 = vmatprep.subr.bf16.mxu0 0
      %2017 = vmatpush1.bf16.msra.mxu0 %v1742
      %2018 = vmatprep.subr.bf16.mxu0 0
      %2019 = vmatpush1.bf16.msra.mxu0 %v1745
      %2020 = vmatprep.subr.bf16.mxu0 0
      %2021 = vmatpush1.bf16.msra.mxu0 %v1748
      %2022 = vmatprep.mubr.bf16.mxu0 %v1429
      %2023 = vmatmul.mubr.bf16.gmra.mrb[0].mxu0 %v1428
      %v2024 = vpop.f32.mrb[0].mxu0
      %v2025 = vadd.f32 %v1537, %v2024
      %v2026 = vpop.f32.mrb[0].mxu0
      %v2027 = vpop.f32.mrb[0].mxu0
      %v2028 = vadd.f32 %v1537, %v2027
      %v2029 = vpop.f32.mrb[0].mxu0
      %2030 = vmatprep.mubr.bf16.mxu0 %v1431
      %2031 = vmatmul.mubr.bf16.gmra.mrb[0].mxu0 %v1430
      %v2032 = vpop.f32.mrb[0].mxu0
      %v2033 = vadd.f32 %v1537, %v2032
      %v2034 = vpop.f32.mrb[0].mxu0
      %v2035 = vpop.f32.mrb[0].mxu0
      %v2036 = vadd.f32 %v1537, %v2035
      %v2037 = vpop.f32.mrb[0].mxu0
      %2038 = vmatprep.mubr.bf16.mxu0 %v1433
      %2039 = vmatmul.mubr.bf16.gmra.mrb[0].mxu0 %v1432
      %v2040 = vpop.f32.mrb[0].mxu0
      %v2041 = vadd.f32 %v1537, %v2040
      %v2042 = vpop.f32.mrb[0].mxu0
      %v2043 = vpop.f32.mrb[0].mxu0
      %v2044 = vadd.f32 %v1537, %v2043
      %v2045 = vpop.f32.mrb[0].mxu0
      %2046 = vmatprep.mubr.bf16.mxu0 %v1435
      %2047 = vmatmul.mubr.bf16.gmra.mrb[0].mxu0 %v1434
      %v2048 = vpop.f32.mrb[0].mxu0
      %v2049 = vadd.f32 %v1537, %v2048
      %v2050 = vpop.f32.mrb[0].mxu0
      %v2051 = vpop.f32.mrb[0].mxu0
      %v2052 = vadd.f32 %v1537, %v2051
      %v2053 = vpop.f32.mrb[0].mxu0
      %2054 = vmatprep.mubr.bf16.mxu0 %v1437
      %2055 = vmatmul.mubr.bf16.gmra.mrb[0].mxu0 %v1436
      %v2056 = vpop.f32.mrb[0].mxu0
      %v2057 = vadd.f32 %v1537, %v2056
      %v2058 = vpop.f32.mrb[0].mxu0
      %v2059 = vpop.f32.mrb[0].mxu0
      %v2060 = vadd.f32 %v1537, %v2059
      %v2061 = vpop.f32.mrb[0].mxu0
      %2062 = vmatprep.mubr.bf16.mxu0 %v1439
      %2063 = vmatmul.mubr.bf16.gmra.mrb[0].mxu0 %v1438
      %v2064 = vpop.f32.mrb[0].mxu0
      %v2065 = vadd.f32 %v1537, %v2064
      %v2066 = vpop.f32.mrb[0].mxu0
      %v2067 = vpop.f32.mrb[0].mxu0
      %v2068 = vadd.f32 %v1537, %v2067
      %v2069 = vpop.f32.mrb[0].mxu0
      %2070 = vmatprep.mubr.bf16.mxu0 %v1441
      %2071 = vmatmul.mubr.bf16.gmra.mrb[0].mxu0 %v1440
      %v2072 = vpop.f32.mrb[0].mxu0
      %v2073 = vadd.f32 %v1537, %v2072
      %v2074 = vpop.f32.mrb[0].mxu0
      %v2075 = vpop.f32.mrb[0].mxu0
      %v2076 = vadd.f32 %v1537, %v2075
      %v2077 = vpop.f32.mrb[0].mxu0
      %2078 = vmatprep.mubr.bf16.mxu0 %v1443
      %2079 = vmatmul.mubr.bf16.gmra.mrb[0].mxu0 %v1442
      %v2080 = vpop.f32.mrb[0].mxu0
      %v2081 = vadd.f32 %v1537, %v2080
      %v2082 = vpop.f32.mrb[0].mxu0
      %v2083 = vpop.f32.mrb[0].mxu0
      %v2084 = vadd.f32 %v1537, %v2083
      %v2085 = vpop.f32.mrb[0].mxu0
      %2086 = vmatprep.mubr.bf16.mxu0 %v1445
      %2087 = vmatmul.mubr.bf16.gmra.mrb[0].mxu0 %v1444
      %v2088 = vpop.f32.mrb[0].mxu0
      %v2089 = vadd.f32 %v1537, %v2088
      %v2090 = vpop.f32.mrb[0].mxu0
      %v2091 = vpop.f32.mrb[0].mxu0
      %v2092 = vadd.f32 %v1537, %v2091
      %v2093 = vpop.f32.mrb[0].mxu0
      %2094 = vmatprep.mubr.bf16.mxu0 %v1447
      %2095 = vmatmul.mubr.bf16.gmra.mrb[0].mxu0 %v1446
      %v2096 = vpop.f32.mrb[0].mxu0
      %v2097 = vadd.f32 %v1537, %v2096
      %v2098 = vpop.f32.mrb[0].mxu0
      %v2099 = vpop.f32.mrb[0].mxu0
      %v2100 = vadd.f32 %v1537, %v2099
      %v2101 = vpop.f32.mrb[0].mxu0
      %2102 = vmatprep.mubr.bf16.mxu0 %v1449
      %2103 = vmatmul.mubr.bf16.gmra.mrb[0].mxu0 %v1448
      %v2104 = vpop.f32.mrb[0].mxu0
      %v2105 = vadd.f32 %v1537, %v2104
      %v2106 = vpop.f32.mrb[0].mxu0
      %v2107 = vpop.f32.mrb[0].mxu0
      %v2108 = vadd.f32 %v1537, %v2107
      %v2109 = vpop.f32.mrb[0].mxu0
      %2110 = vmatprep.mubr.bf16.mxu0 %v1451
      %2111 = vmatmul.mubr.bf16.gmra.mrb[0].mxu0 %v1450
      %v2112 = vpop.f32.mrb[0].mxu0
      %v2113 = vadd.f32 %v1537, %v2112
      %v2114 = vpop.f32.mrb[0].mxu0
      %v2115 = vpop.f32.mrb[0].mxu0
      %v2116 = vadd.f32 %v1537, %v2115
      %v2117 = vpop.f32.mrb[0].mxu0
      %2118 = vmatprep.mubr.bf16.mxu0 %v1453
      %2119 = vmatmul.mubr.bf16.gmra.mrb[0].mxu0 %v1452
      %v2120 = vpop.f32.mrb[0].mxu0
      %v2121 = vadd.f32 %v1537, %v2120
      %v2122 = vpop.f32.mrb[0].mxu0
      %v2123 = vpop.f32.mrb[0].mxu0
      %v2124 = vadd.f32 %v1537, %v2123
      %v2125 = vpop.f32.mrb[0].mxu0
      %2126 = vmatprep.mubr.bf16.mxu0 %v1455
      %2127 = vmatmul.mubr.bf16.gmra.mrb[0].mxu0 %v1454
      %v2128 = vpop.f32.mrb[0].mxu0
      %v2129 = vadd.f32 %v1537, %v2128
      %v2130 = vpop.f32.mrb[0].mxu0
      %v2131 = vpop.f32.mrb[0].mxu0
      %v2132 = vadd.f32 %v1537, %v2131
      %v2133 = vpop.f32.mrb[0].mxu0
      %2134 = vmatprep.mubr.bf16.mxu0 %v1457
      %2135 = vmatmul.mubr.bf16.gmra.mrb[0].mxu0 %v1456
      %v2136 = vpop.f32.mrb[0].mxu0
      %v2137 = vadd.f32 %v1537, %v2136
      %v2138 = vpop.f32.mrb[0].mxu0
      %v2139 = vpop.f32.mrb[0].mxu0
      %v2140 = vadd.f32 %v1537, %v2139
      %v2141 = vpop.f32.mrb[0].mxu0
      %2142 = vmatprep.mubr.bf16.mxu0 %v1459
      %2143 = vmatmul.mubr.bf16.gmra.mrb[0].mxu0 %v1458
      %v2144 = vpop.f32.mrb[0].mxu0
      %v2145 = vadd.f32 %v1537, %v2144
      %v2146 = vpop.f32.mrb[0].mxu0
      %v2147 = vpop.f32.mrb[0].mxu0
      %v2148 = vadd.f32 %v1537, %v2147
      %v2149 = vpop.f32.mrb[0].mxu0
      %2150 = vdwg.mxu0
      %vm2151 = vcmp.ge.f32.partialorder %v1832, 0.0
      %vm2152 = vcmp.ge.f32.partialorder %v1834, 0.0
      %vm2153 = vcmp.ge.f32.partialorder %v2025, 0.0
      %vm2154 = vcmp.ge.f32.partialorder %v1836, 0.0
      %vm2155 = vcmp.ge.f32.partialorder %v1838, 0.0
      %vm2156 = vcmp.ge.f32.partialorder %v2028, 0.0
      %vm2157 = vcmp.ge.f32.partialorder %v1842, 0.0
      %vm2158 = vcmp.ge.f32.partialorder %v1844, 0.0
      %vm2159 = vcmp.ge.f32.partialorder %v2033, 0.0
      %vm2160 = vcmp.ge.f32.partialorder %v1846, 0.0
      %vm2161 = vcmp.ge.f32.partialorder %v1848, 0.0
      %vm2162 = vcmp.ge.f32.partialorder %v2036, 0.0
      %vm2163 = vcmp.ge.f32.partialorder %v1852, 0.0
      %vm2164 = vcmp.ge.f32.partialorder %v1854, 0.0
      %vm2165 = vcmp.ge.f32.partialorder %v2041, 0.0
      %vm2166 = vcmp.ge.f32.partialorder %v1856, 0.0
      %vm2167 = vcmp.ge.f32.partialorder %v1858, 0.0
      %vm2168 = vcmp.ge.f32.partialorder %v2044, 0.0
      %vm2169 = vcmp.ge.f32.partialorder %v1862, 0.0
      %vm2170 = vcmp.ge.f32.partialorder %v1864, 0.0
      %vm2171 = vcmp.ge.f32.partialorder %v2049, 0.0
      %vm2172 = vcmp.ge.f32.partialorder %v1866, 0.0
      %vm2173 = vcmp.ge.f32.partialorder %v1868, 0.0
      %vm2174 = vcmp.ge.f32.partialorder %v2052, 0.0
      %vm2175 = vcmp.ge.f32.partialorder %v1872, 0.0
      %vm2176 = vcmp.ge.f32.partialorder %v1874, 0.0
      %vm2177 = vcmp.ge.f32.partialorder %v2057, 0.0
      %vm2178 = vcmp.ge.f32.partialorder %v1876, 0.0
      %vm2179 = vcmp.ge.f32.partialorder %v1878, 0.0
      %vm2180 = vcmp.ge.f32.partialorder %v2060, 0.0
      %vm2181 = vcmp.ge.f32.partialorder %v1882, 0.0
      %vm2182 = vcmp.ge.f32.partialorder %v1884, 0.0
      %vm2183 = vcmp.ge.f32.partialorder %v2065, 0.0
      %vm2184 = vcmp.ge.f32.partialorder %v1886, 0.0
      %vm2185 = vcmp.ge.f32.partialorder %v1888, 0.0
      %vm2186 = vcmp.ge.f32.partialorder %v2068, 0.0
      %vm2187 = vcmp.ge.f32.partialorder %v1892, 0.0
      %vm2188 = vcmp.ge.f32.partialorder %v1894, 0.0
      %vm2189 = vcmp.ge.f32.partialorder %v2073, 0.0
      %vm2190 = vcmp.ge.f32.partialorder %v1896, 0.0
      %vm2191 = vcmp.ge.f32.partialorder %v1898, 0.0
      %vm2192 = vcmp.ge.f32.partialorder %v2076, 0.0
      %vm2193 = vcmp.ge.f32.partialorder %v1902, 0.0
      %vm2194 = vcmp.ge.f32.partialorder %v1904, 0.0
      %vm2195 = vcmp.ge.f32.partialorder %v2081, 0.0
      %vm2196 = vcmp.ge.f32.partialorder %v1906, 0.0
      %vm2197 = vcmp.ge.f32.partialorder %v1908, 0.0
      %vm2198 = vcmp.ge.f32.partialorder %v2084, 0.0
      %vm2199 = vcmp.ge.f32.partialorder %v1912, 0.0
      %vm2200 = vcmp.ge.f32.partialorder %v1914, 0.0
      %vm2201 = vcmp.ge.f32.partialorder %v2089, 0.0
      %vm2202 = vcmp.ge.f32.partialorder %v1916, 0.0
      %vm2203 = vcmp.ge.f32.partialorder %v1918, 0.0
      %vm2204 = vcmp.ge.f32.partialorder %v2092, 0.0
      %vm2205 = vcmp.ge.f32.partialorder %v1922, 0.0
      %vm2206 = vcmp.ge.f32.partialorder %v1924, 0.0
      %vm2207 = vcmp.ge.f32.partialorder %v2097, 0.0
      %vm2208 = vcmp.ge.f32.partialorder %v1926, 0.0
      %vm2209 = vcmp.ge.f32.partialorder %v1928, 0.0
      %vm2210 = vcmp.ge.f32.partialorder %v2100, 0.0
      %vm2211 = vcmp.ge.f32.partialorder %v1932, 0.0
      %vm2212 = vcmp.ge.f32.partialorder %v1934, 0.0
      %vm2213 = vcmp.ge.f32.partialorder %v2105, 0.0
      %vm2214 = vcmp.ge.f32.partialorder %v1936, 0.0
      %vm2215 = vcmp.ge.f32.partialorder %v1938, 0.0
      %vm2216 = vcmp.ge.f32.partialorder %v2108, 0.0
      %vm2217 = vcmp.ge.f32.partialorder %v1942, 0.0
      %vm2218 = vcmp.ge.f32.partialorder %v1944, 0.0
      %vm2219 = vcmp.ge.f32.partialorder %v2113, 0.0
      %vm2220 = vcmp.ge.f32.partialorder %v1946, 0.0
      %vm2221 = vcmp.ge.f32.partialorder %v1948, 0.0
      %vm2222 = vcmp.ge.f32.partialorder %v2116, 0.0
      %vm2223 = vcmp.ge.f32.partialorder %v1952, 0.0
      %vm2224 = vcmp.ge.f32.partialorder %v1954, 0.0
      %vm2225 = vcmp.ge.f32.partialorder %v2121, 0.0
      %vm2226 = vcmp.ge.f32.partialorder %v1956, 0.0
      %vm2227 = vcmp.ge.f32.partialorder %v1958, 0.0
      %vm2228 = vcmp.ge.f32.partialorder %v2124, 0.0
      %vm2229 = vcmp.ge.f32.partialorder %v1962, 0.0
      %vm2230 = vcmp.ge.f32.partialorder %v1964, 0.0
      %vm2231 = vcmp.ge.f32.partialorder %v2129, 0.0
      %vm2232 = vcmp.ge.f32.partialorder %v1966, 0.0
      %vm2233 = vcmp.ge.f32.partialorder %v1968, 0.0
      %vm2234 = vcmp.ge.f32.partialorder %v2132, 0.0
      %vm2235 = vcmp.ge.f32.partialorder %v1972, 0.0
      %vm2236 = vcmp.ge.f32.partialorder %v1974, 0.0
      %vm2237 = vcmp.ge.f32.partialorder %v2137, 0.0
      %vm2238 = vcmp.ge.f32.partialorder %v1976, 0.0
      %vm2239 = vcmp.ge.f32.partialorder %v1978, 0.0
      %vm2240 = vcmp.ge.f32.partialorder %v2140, 0.0
      %vm2241 = vcmp.ge.f32.partialorder %v1982, 0.0
      %vm2242 = vcmp.ge.f32.partialorder %v1984, 0.0
      %vm2243 = vcmp.ge.f32.partialorder %v2145, 0.0
      %vm2244 = vcmp.ge.f32.partialorder %v1986, 0.0
      %vm2245 = vcmp.ge.f32.partialorder %v1988, 0.0
      %vm2246 = vcmp.ge.f32.partialorder %v2148, 0.0
      %v2247 = vmul.f32 %v1832, 0.01
      %v2248 = vmul.f32 %v1834, 0.01
      %v2249 = vmul.f32 %v2025, 0.01
      %v2250 = vmul.f32 %v1836, 0.01
      %v2251 = vmul.f32 %v1838, 0.01
      %v2252 = vmul.f32 %v2028, 0.01
      %v2253 = vmul.f32 %v1842, 0.01
      %v2254 = vmul.f32 %v1844, 0.01
      %v2255 = vmul.f32 %v2033, 0.01
      %v2256 = vmul.f32 %v1846, 0.01
      %v2257 = vmul.f32 %v1848, 0.01
      %v2258 = vmul.f32 %v2036, 0.01
      %v2259 = vmul.f32 %v1852, 0.01
      %v2260 = vmul.f32 %v1854, 0.01
      %v2261 = vmul.f32 %v2041, 0.01
      %v2262 = vmul.f32 %v1856, 0.01
      %v2263 = vmul.f32 %v1858, 0.01
      %v2264 = vmul.f32 %v2044, 0.01
      %v2265 = vmul.f32 %v1862, 0.01
      %v2266 = vmul.f32 %v1864, 0.01
      %v2267 = vmul.f32 %v2049, 0.01
      %v2268 = vmul.f32 %v1866, 0.01
      %v2269 = vmul.f32 %v1868, 0.01
      %v2270 = vmul.f32 %v2052, 0.01
      %v2271 = vmul.f32 %v1872, 0.01
      %v2272 = vmul.f32 %v1874, 0.01
      %v2273 = vmul.f32 %v2057, 0.01
      %v2274 = vmul.f32 %v1876, 0.01
      %v2275 = vmul.f32 %v1878, 0.01
      %v2276 = vmul.f32 %v2060, 0.01
      %v2277 = vmul.f32 %v1882, 0.01
      %v2278 = vmul.f32 %v1884, 0.01
      %v2279 = vmul.f32 %v2065, 0.01
      %v2280 = vmul.f32 %v1886, 0.01
      %v2281 = vmul.f32 %v1888, 0.01
      %v2282 = vmul.f32 %v2068, 0.01
      %v2283 = vmul.f32 %v1892, 0.01
      %v2284 = vmul.f32 %v1894, 0.01
      %v2285 = vmul.f32 %v2073, 0.01
      %v2286 = vmul.f32 %v1896, 0.01
      %v2287 = vmul.f32 %v1898, 0.01
      %v2288 = vmul.f32 %v2076, 0.01
      %v2289 = vmul.f32 %v1902, 0.01
      %v2290 = vmul.f32 %v1904, 0.01
      %v2291 = vmul.f32 %v2081, 0.01
      %v2292 = vmul.f32 %v1906, 0.01
      %v2293 = vmul.f32 %v1908, 0.01
      %v2294 = vmul.f32 %v2084, 0.01
      %v2295 = vmul.f32 %v1912, 0.01
      %v2296 = vmul.f32 %v1914, 0.01
      %v2297 = vmul.f32 %v2089, 0.01
      %v2298 = vmul.f32 %v1916, 0.01
      %v2299 = vmul.f32 %v1918, 0.01
      %v2300 = vmul.f32 %v2092, 0.01
      %v2301 = vmul.f32 %v1922, 0.01
      %v2302 = vmul.f32 %v1924, 0.01
      %v2303 = vmul.f32 %v2097, 0.01
      %v2304 = vmul.f32 %v1926, 0.01
      %v2305 = vmul.f32 %v1928, 0.01
      %v2306 = vmul.f32 %v2100, 0.01
      %v2307 = vmul.f32 %v1932, 0.01
      %v2308 = vmul.f32 %v1934, 0.01
      %v2309 = vmul.f32 %v2105, 0.01
      %v2310 = vmul.f32 %v1936, 0.01
      %v2311 = vmul.f32 %v1938, 0.01
      %v2312 = vmul.f32 %v2108, 0.01
      %v2313 = vmul.f32 %v1942, 0.01
      %v2314 = vmul.f32 %v1944, 0.01
      %v2315 = vmul.f32 %v2113, 0.01
      %v2316 = vmul.f32 %v1946, 0.01
      %v2317 = vmul.f32 %v1948, 0.01
      %v2318 = vmul.f32 %v2116, 0.01
      %v2319 = vmul.f32 %v1952, 0.01
      %v2320 = vmul.f32 %v1954, 0.01
      %v2321 = vmul.f32 %v2121, 0.01
      %v2322 = vmul.f32 %v1956, 0.01
      %v2323 = vmul.f32 %v1958, 0.01
      %v2324 = vmul.f32 %v2124, 0.01
      %v2325 = vmul.f32 %v1962, 0.01
      %v2326 = vmul.f32 %v1964, 0.01
      %v2327 = vmul.f32 %v2129, 0.01
      %v2328 = vmul.f32 %v1966, 0.01
      %v2329 = vmul.f32 %v1968, 0.01
      %v2330 = vmul.f32 %v2132, 0.01
      %v2331 = vmul.f32 %v1972, 0.01
      %v2332 = vmul.f32 %v1974, 0.01
      %v2333 = vmul.f32 %v2137, 0.01
      %v2334 = vmul.f32 %v1976, 0.01
      %v2335 = vmul.f32 %v1978, 0.01
      %v2336 = vmul.f32 %v2140, 0.01
      %v2337 = vmul.f32 %v1982, 0.01
      %v2338 = vmul.f32 %v1984, 0.01
      %v2339 = vmul.f32 %v2145, 0.01
      %v2340 = vmul.f32 %v1986, 0.01
      %v2341 = vmul.f32 %v1988, 0.01
      %v2342 = vmul.f32 %v2148, 0.01
      %v2343 = vsel %vm2151, %v1832, %v2247
      %v2344 = vsel %vm2152, %v1834, %v2248
      %v2345 = vsel %vm2153, %v2025, %v2249
      %v2346 = vsel %vm2154, %v1836, %v2250
      %v2347 = vsel %vm2155, %v1838, %v2251
      %v2348 = vsel %vm2156, %v2028, %v2252
      %v2349 = vsel %vm2157, %v1842, %v2253
      %v2350 = vsel %vm2158, %v1844, %v2254
      %v2351 = vsel %vm2159, %v2033, %v2255
      %v2352 = vsel %vm2160, %v1846, %v2256
      %v2353 = vsel %vm2161, %v1848, %v2257
      %v2354 = vsel %vm2162, %v2036, %v2258
      %v2355 = vsel %vm2163, %v1852, %v2259
      %v2356 = vsel %vm2164, %v1854, %v2260
      %v2357 = vsel %vm2165, %v2041, %v2261
      %v2358 = vsel %vm2166, %v1856, %v2262
      %v2359 = vsel %vm2167, %v1858, %v2263
      %v2360 = vsel %vm2168, %v2044, %v2264
      %v2361 = vsel %vm2169, %v1862, %v2265
      %v2362 = vsel %vm2170, %v1864, %v2266
      %v2363 = vsel %vm2171, %v2049, %v2267
      %v2364 = vsel %vm2172, %v1866, %v2268
      %v2365 = vsel %vm2173, %v1868, %v2269
      %v2366 = vsel %vm2174, %v2052, %v2270
      %v2367 = vsel %vm2175, %v1872, %v2271
      %v2368 = vsel %vm2176, %v1874, %v2272
      %v2369 = vsel %vm2177, %v2057, %v2273
      %v2370 = vsel %vm2178, %v1876, %v2274
      %v2371 = vsel %vm2179, %v1878, %v2275
      %v2372 = vsel %vm2180, %v2060, %v2276
      %v2373 = vsel %vm2181, %v1882, %v2277
      %v2374 = vsel %vm2182, %v1884, %v2278
      %v2375 = vsel %vm2183, %v2065, %v2279
      %v2376 = vsel %vm2184, %v1886, %v2280
      %v2377 = vsel %vm2185, %v1888, %v2281
      %v2378 = vsel %vm2186, %v2068, %v2282
      %v2379 = vsel %vm2187, %v1892, %v2283
      %v2380 = vsel %vm2188, %v1894, %v2284
      %v2381 = vsel %vm2189, %v2073, %v2285
      %v2382 = vsel %vm2190, %v1896, %v2286
      %v2383 = vsel %vm2191, %v1898, %v2287
      %v2384 = vsel %vm2192, %v2076, %v2288
      %v2385 = vsel %vm2193, %v1902, %v2289
      %v2386 = vsel %vm2194, %v1904, %v2290
      %v2387 = vsel %vm2195, %v2081, %v2291
      %v2388 = vsel %vm2196, %v1906, %v2292
      %v2389 = vsel %vm2197, %v1908, %v2293
      %v2390 = vsel %vm2198, %v2084, %v2294
      %v2391 = vsel %vm2199, %v1912, %v2295
      %v2392 = vsel %vm2200, %v1914, %v2296
      %v2393 = vsel %vm2201, %v2089, %v2297
      %v2394 = vsel %vm2202, %v1916, %v2298
      %v2395 = vsel %vm2203, %v1918, %v2299
      %v2396 = vsel %vm2204, %v2092, %v2300
      %v2397 = vsel %vm2205, %v1922, %v2301
      %v2398 = vsel %vm2206, %v1924, %v2302
      %v2399 = vsel %vm2207, %v2097, %v2303
      %v2400 = vsel %vm2208, %v1926, %v2304
      %v2401 = vsel %vm2209, %v1928, %v2305
      %v2402 = vsel %vm2210, %v2100, %v2306
      %v2403 = vsel %vm2211, %v1932, %v2307
      %v2404 = vsel %vm2212, %v1934, %v2308
      %v2405 = vsel %vm2213, %v2105, %v2309
      %v2406 = vsel %vm2214, %v1936, %v2310
      %v2407 = vsel %vm2215, %v1938, %v2311
      %v2408 = vsel %vm2216, %v2108, %v2312
      %v2409 = vsel %vm2217, %v1942, %v2313
      %v2410 = vsel %vm2218, %v1944, %v2314
      %v2411 = vsel %vm2219, %v2113, %v2315
      %v2412 = vsel %vm2220, %v1946, %v2316
      %v2413 = vsel %vm2221, %v1948, %v2317
      %v2414 = vsel %vm2222, %v2116, %v2318
      %v2415 = vsel %vm2223, %v1952, %v2319
      %v2416 = vsel %vm2224, %v1954, %v2320
      %v2417 = vsel %vm2225, %v2121, %v2321
      %v2418 = vsel %vm2226, %v1956, %v2322
      %v2419 = vsel %vm2227, %v1958, %v2323
      %v2420 = vsel %vm2228, %v2124, %v2324
      %v2421 = vsel %vm2229, %v1962, %v2325
      %v2422 = vsel %vm2230, %v1964, %v2326
      %v2423 = vsel %vm2231, %v2129, %v2327
      %v2424 = vsel %vm2232, %v1966, %v2328
      %v2425 = vsel %vm2233, %v1968, %v2329
      %v2426 = vsel %vm2234, %v2132, %v2330
      %v2427 = vsel %vm2235, %v1972, %v2331
      %v2428 = vsel %vm2236, %v1974, %v2332
      %v2429 = vsel %vm2237, %v2137, %v2333
      %v2430 = vsel %vm2238, %v1976, %v2334
      %v2431 = vsel %vm2239, %v1978, %v2335
      %v2432 = vsel %vm2240, %v2140, %v2336
      %v2433 = vsel %vm2241, %v1982, %v2337
      %v2434 = vsel %vm2242, %v1984, %v2338
      %v2435 = vsel %vm2243, %v2145, %v2339
      %v2436 = vsel %vm2244, %v1986, %v2340
      %v2437 = vsel %vm2245, %v1988, %v2341
      %v2438 = vsel %vm2246, %v2148, %v2342
      %v2439 = vpack.c.bf16 %v2346, %v2343
      %v2440 = vpack.c.bf16 %v2347, %v2344
      %v2441 = vpack.c.bf16 %v2348, %v2345
      %v2442 = vpack.c.bf16 %v2352, %v2349
      %v2443 = vpack.c.bf16 %v2353, %v2350
      %v2444 = vpack.c.bf16 %v2354, %v2351
      %v2445 = vpack.c.bf16 %v2358, %v2355
      %v2446 = vpack.c.bf16 %v2359, %v2356
      %v2447 = vpack.c.bf16 %v2360, %v2357
      %v2448 = vpack.c.bf16 %v2364, %v2361
      %v2449 = vpack.c.bf16 %v2365, %v2362
      %v2450 = vpack.c.bf16 %v2366, %v2363
      %v2451 = vpack.c.bf16 %v2370, %v2367
      %v2452 = vpack.c.bf16 %v2371, %v2368
      %v2453 = vpack.c.bf16 %v2372, %v2369
      %v2454 = vpack.c.bf16 %v2376, %v2373
      %v2455 = vpack.c.bf16 %v2377, %v2374
      %v2456 = vpack.c.bf16 %v2378, %v2375
      %v2457 = vpack.c.bf16 %v2382, %v2379
      %v2458 = vpack.c.bf16 %v2383, %v2380
      %v2459 = vpack.c.bf16 %v2384, %v2381
      %v2460 = vpack.c.bf16 %v2388, %v2385
      %v2461 = vpack.c.bf16 %v2389, %v2386
      %v2462 = vpack.c.bf16 %v2390, %v2387
      %v2463 = vpack.c.bf16 %v2394, %v2391
      %v2464 = vpack.c.bf16 %v2395, %v2392
      %v2465 = vpack.c.bf16 %v2396, %v2393
      %v2466 = vpack.c.bf16 %v2400, %v2397
      %v2467 = vpack.c.bf16 %v2401, %v2398
      %v2468 = vpack.c.bf16 %v2402, %v2399
      %v2469 = vpack.c.bf16 %v2406, %v2403
      %v2470 = vpack.c.bf16 %v2407, %v2404
      %v2471 = vpack.c.bf16 %v2408, %v2405
      %v2472 = vpack.c.bf16 %v2412, %v2409
      %v2473 = vpack.c.bf16 %v2413, %v2410
      %v2474 = vpack.c.bf16 %v2414, %v2411
      %v2475 = vpack.c.bf16 %v2418, %v2415
      %v2476 = vpack.c.bf16 %v2419, %v2416
      %v2477 = vpack.c.bf16 %v2420, %v2417
      %v2478 = vpack.c.bf16 %v2424, %v2421
      %v2479 = vpack.c.bf16 %v2425, %v2422
      %v2480 = vpack.c.bf16 %v2426, %v2423
      %v2481 = vpack.c.bf16 %v2430, %v2427
      %v2482 = vpack.c.bf16 %v2431, %v2428
      %v2483 = vpack.c.bf16 %v2432, %v2429
      %v2484 = vpack.c.bf16 %v2436, %v2433
      %v2485 = vpack.c.bf16 %v2437, %v2434
      %v2486 = vpack.c.bf16 %v2438, %v2435
      %v2487 = vld [vmem:[%s7] sm:$0xff]
      %v2488 = vld [vmem:[%s7 + $0x8] sm:$0xff]
      %v2489 = vld [vmem:[%s7 + $0x10] sm:$0xff]
      %v2490 = vld [vmem:[%s7 + $0x18] sm:$0xff]
      %v2491 = vld [vmem:[%s7 + $0x20] sm:$0xff]
      %v2492 = vld [vmem:[%s7 + $0x28] sm:$0xff]
      %v2493 = vld [vmem:[%s7 + $0x30] sm:$0xff]
      %v2494 = vld [vmem:[%s7 + $0x38] sm:$0xff]
      %v2495 = vld [vmem:[%s7 + $0x40] sm:$0xff]
      %v2496 = vld [vmem:[%s7 + $0x48] sm:$0xff]
      %v2497 = vld [vmem:[%s7 + $0x50] sm:$0xff]
      %v2498 = vld [vmem:[%s7 + $0x58] sm:$0xff]
      %v2499 = vld [vmem:[%s7 + $0x60] sm:$0xff]
      %v2500 = vld [vmem:[%s7 + $0x68] sm:$0xff]
      %v2501 = vld [vmem:[%s7 + $0x70] sm:$0xff]
      %v2502 = vld [vmem:[%s7 + $0x78] sm:$0xff]
      %v2503 = vld [vmem:[%s7 + $0x80] sm:$0xff]
      %v2504 = vld [vmem:[%s7 + $0x88] sm:$0xff]
      %v2505 = vld [vmem:[%s7 + $0x90] sm:$0xff]
      %v2506 = vld [vmem:[%s7 + $0x98] sm:$0xff]
      %v2507 = vld [vmem:[%s7 + $0xa0] sm:$0xff]
      %v2508 = vld [vmem:[%s7 + $0xa8] sm:$0xff]
      %v2509 = vld [vmem:[%s7 + $0xb0] sm:$0xff]
      %v2510 = vld [vmem:[%s7 + $0xb8] sm:$0xff]
      %v2511 = vld [vmem:[%s7 + $0xc0] sm:$0xff]
      %v2512 = vld [vmem:[%s7 + $0xc8] sm:$0xff]
      %v2513 = vld [vmem:[%s7 + $0xd0] sm:$0xff]
      %v2514 = vld [vmem:[%s7 + $0xd8] sm:$0xff]
      %v2515 = vld [vmem:[%s7 + $0xe0] sm:$0xff]
      %v2516 = vld [vmem:[%s7 + $0xe8] sm:$0xff]
      %v2517 = vld [vmem:[%s7 + $0xf0] sm:$0xff]
      %v2518 = vld [vmem:[%s7 + $0xf8] sm:$0xff]
      %v2519 = vld [vmem:[%s7 + $0x100] sm:$0xff]
      %v2520 = vld [vmem:[%s7 + $0x108] sm:$0xff]
      %v2521 = vld [vmem:[%s7 + $0x110] sm:$0xff]
      %v2522 = vld [vmem:[%s7 + $0x118] sm:$0xff]
      %v2523 = vld [vmem:[%s7 + $0x120] sm:$0xff]
      %v2524 = vld [vmem:[%s7 + $0x128] sm:$0xff]
      %v2525 = vld [vmem:[%s7 + $0x130] sm:$0xff]
      %v2526 = vld [vmem:[%s7 + $0x138] sm:$0xff]
      %v2527 = vld [vmem:[%s7 + $0x140] sm:$0xff]
      %v2528 = vld [vmem:[%s7 + $0x148] sm:$0xff]
      %v2529 = vld [vmem:[%s7 + $0x150] sm:$0xff]
      %v2530 = vld [vmem:[%s7 + $0x158] sm:$0xff]
      %v2531 = vld [vmem:[%s7 + $0x160] sm:$0xff]
      %v2532 = vld [vmem:[%s7 + $0x168] sm:$0xff]
      %v2533 = vld [vmem:[%s7 + $0x170] sm:$0xff]
      %v2534 = vld [vmem:[%s7 + $0x178] sm:$0xff]
      %v2535 = vld [vmem:[%s7 + $0x180] sm:$0xff]
      %v2536 = vld [vmem:[%s7 + $0x188] sm:$0xff]
      %v2537 = vld [vmem:[%s7 + $0x190] sm:$0xff]
      %v2538 = vld [vmem:[%s7 + $0x198] sm:$0xff]
      %v2539 = vld [vmem:[%s7 + $0x1a0] sm:$0xff]
      %v2540 = vld [vmem:[%s7 + $0x1a8] sm:$0xff]
      %v2541 = vld [vmem:[%s7 + $0x1b0] sm:$0xff]
      %v2542 = vld [vmem:[%s7 + $0x1b8] sm:$0xff]
      %v2543 = vld [vmem:[%s7 + $0x1c0] sm:$0xff]
      %v2544 = vld [vmem:[%s7 + $0x1c8] sm:$0xff]
      %v2545 = vld [vmem:[%s7 + $0x1d0] sm:$0xff]
      %v2546 = vld [vmem:[%s7 + $0x1d8] sm:$0xff]
      %v2547 = vld [vmem:[%s7 + $0x1e0] sm:$0xff]
      %v2548 = vld [vmem:[%s7 + $0x1e8] sm:$0xff]
      %v2549 = vld [vmem:[%s7 + $0x1f0] sm:$0xff]
      %v2550 = vld [vmem:[%s7 + $0x1f8] sm:$0xff]
      %v2551 = vld [vmem:[%s7 + $0x200] sm:$0xff]
      %v2552 = vld [vmem:[%s7 + $0x208] sm:$0xff]
      %v2553 = vld [vmem:[%s7 + $0x210] sm:$0xff]
      %v2554 = vld [vmem:[%s7 + $0x218] sm:$0xff]
      %v2555 = vld [vmem:[%s7 + $0x220] sm:$0xff]
      %v2556 = vld [vmem:[%s7 + $0x228] sm:$0xff]
      %v2557 = vld [vmem:[%s7 + $0x230] sm:$0xff]
      %v2558 = vld [vmem:[%s7 + $0x238] sm:$0xff]
      %v2559 = vld [vmem:[%s7 + $0x240] sm:$0xff]
      %v2560 = vld [vmem:[%s7 + $0x248] sm:$0xff]
      %v2561 = vld [vmem:[%s7 + $0x250] sm:$0xff]
      %v2562 = vld [vmem:[%s7 + $0x258] sm:$0xff]
      %v2563 = vld [vmem:[%s7 + $0x260] sm:$0xff]
      %v2564 = vld [vmem:[%s7 + $0x268] sm:$0xff]
      %v2565 = vld [vmem:[%s7 + $0x270] sm:$0xff]
      %v2566 = vld [vmem:[%s7 + $0x278] sm:$0xff]
      %v2567 = vld [vmem:[%s7 + $0x280] sm:$0xff]
      %v2568 = vld [vmem:[%s7 + $0x288] sm:$0xff]
      %v2569 = vld [vmem:[%s7 + $0x290] sm:$0xff]
      %v2570 = vld [vmem:[%s7 + $0x298] sm:$0xff]
      %v2571 = vld [vmem:[%s7 + $0x2a0] sm:$0xff]
      %v2572 = vld [vmem:[%s7 + $0x2a8] sm:$0xff]
      %v2573 = vld [vmem:[%s7 + $0x2b0] sm:$0xff]
      %v2574 = vld [vmem:[%s7 + $0x2b8] sm:$0xff]
      %v2575 = vld [vmem:[%s7 + $0x2c0] sm:$0xff]
      %v2576 = vld [vmem:[%s7 + $0x2c8] sm:$0xff]
      %v2577 = vld [vmem:[%s7 + $0x2d0] sm:$0xff]
      %v2578 = vld [vmem:[%s7 + $0x2d8] sm:$0xff]
      %v2579 = vld [vmem:[%s7 + $0x2e0] sm:$0xff]
      %v2580 = vld [vmem:[%s7 + $0x2e8] sm:$0xff]
      %v2581 = vld [vmem:[%s7 + $0x2f0] sm:$0xff]
      %v2582 = vld [vmem:[%s7 + $0x2f8] sm:$0xff]
      %v2583 = vld [vmem:[%s7 + $0x300] sm:$0xff]
      %v2584 = vld [vmem:[%s7 + $0x308] sm:$0xff]
      %v2585 = vld [vmem:[%s7 + $0x310] sm:$0xff]
      %v2586 = vld [vmem:[%s7 + $0x318] sm:$0xff]
      %v2587 = vld [vmem:[%s7 + $0x320] sm:$0xff]
      %v2588 = vld [vmem:[%s7 + $0x328] sm:$0xff]
      %v2589 = vld [vmem:[%s7 + $0x330] sm:$0xff]
      %v2590 = vld [vmem:[%s7 + $0x338] sm:$0xff]
      %v2591 = vld [vmem:[%s7 + $0x340] sm:$0xff]
      %v2592 = vld [vmem:[%s7 + $0x348] sm:$0xff]
      %v2593 = vld [vmem:[%s7 + $0x350] sm:$0xff]
      %v2594 = vld [vmem:[%s7 + $0x358] sm:$0xff]
      %v2595 = vld [vmem:[%s7 + $0x360] sm:$0xff]
      %v2596 = vld [vmem:[%s7 + $0x368] sm:$0xff]
      %v2597 = vld [vmem:[%s7 + $0x370] sm:$0xff]
      %v2598 = vld [vmem:[%s7 + $0x378] sm:$0xff]
      %v2599 = vld [vmem:[%s7 + $0x380] sm:$0xff]
      %v2600 = vld [vmem:[%s7 + $0x388] sm:$0xff]
      %v2601 = vld [vmem:[%s7 + $0x390] sm:$0xff]
      %v2602 = vld [vmem:[%s7 + $0x398] sm:$0xff]
      %v2603 = vld [vmem:[%s7 + $0x3a0] sm:$0xff]
      %v2604 = vld [vmem:[%s7 + $0x3a8] sm:$0xff]
      %v2605 = vld [vmem:[%s7 + $0x3b0] sm:$0xff]
      %v2606 = vld [vmem:[%s7 + $0x3b8] sm:$0xff]
      %v2607 = vld [vmem:[%s7 + $0x3c0] sm:$0xff]
      %v2608 = vld [vmem:[%s7 + $0x3c8] sm:$0xff]
      %v2609 = vld [vmem:[%s7 + $0x3d0] sm:$0xff]
      %v2610 = vld [vmem:[%s7 + $0x3d8] sm:$0xff]
      %v2611 = vld [vmem:[%s7 + $0x3e0] sm:$0xff]
      %v2612 = vld [vmem:[%s7 + $0x3e8] sm:$0xff]
      %v2613 = vld [vmem:[%s7 + $0x3f0] sm:$0xff]
      %v2614 = vld [vmem:[%s7 + $0x3f8] sm:$0xff]
      %v2615 = vld [vmem:[%s7 + $0x400] sm:$0xff]
      %v2616 = vld [vmem:[%s7 + $0x408] sm:$0xff]
      %v2617 = vld [vmem:[%s7 + $0x410] sm:$0xff]
      %v2618 = vld [vmem:[%s7 + $0x418] sm:$0xff]
      %v2619 = vld [vmem:[%s7 + $0x420] sm:$0xff]
      %v2620 = vld [vmem:[%s7 + $0x428] sm:$0xff]
      %v2621 = vld [vmem:[%s7 + $0x430] sm:$0xff]
      %v2622 = vld [vmem:[%s7 + $0x438] sm:$0xff]
      %v2623 = vld [vmem:[%s7 + $0x440] sm:$0xff]
      %v2624 = vld [vmem:[%s7 + $0x448] sm:$0xff]
      %v2625 = vld [vmem:[%s7 + $0x450] sm:$0xff]
      %v2626 = vld [vmem:[%s7 + $0x458] sm:$0xff]
      %v2627 = vld [vmem:[%s7 + $0x460] sm:$0xff]
      %v2628 = vld [vmem:[%s7 + $0x468] sm:$0xff]
      %v2629 = vld [vmem:[%s7 + $0x470] sm:$0xff]
      %v2630 = vld [vmem:[%s7 + $0x478] sm:$0xff]
      %v2631 = vld [vmem:[%s8] sm:$0x3f]
      %v2633 = vlaneseq
      %v2634 = vshrl.u32 %v2633, 7
      %v2635 = vsub.s32 0, %v2634
      %v2636 = vrot.slane %v2631, %v2635
      %v2637 = vlaneseq
      %v2638 = vshrl.u32 %v2637, 7
      %v2639 = vsub.s32 1, %v2638
      %v2640 = vrot.slane %v2631, %v2639
      %v2641 = vlaneseq
      %v2642 = vshrl.u32 %v2641, 7
      %v2643 = vsub.s32 2, %v2642
      %v2644 = vrot.slane %v2631, %v2643
      %v2645 = vlaneseq
      %v2646 = vshrl.u32 %v2645, 7
      %v2647 = vsub.s32 3, %v2646
      %v2648 = vrot.slane %v2631, %v2647
      %v2649 = vlaneseq
      %v2650 = vshrl.u32 %v2649, 7
      %v2651 = vsub.s32 4, %v2650
      %v2652 = vrot.slane %v2631, %v2651
      %v2653 = vlaneseq
      %v2654 = vshrl.u32 %v2653, 7
      %v2655 = vsub.s32 5, %v2654
      %v2656 = vrot.slane %v2631, %v2655
      %v2807 = vunpack.c.l.b16 %v2487
      %v2808 = vunpack.c.h.b16 %v2487
      %v2809 = vunpack.c.l.b16 %v2488
      %v2810 = vunpack.c.h.b16 %v2488
      %v2811 = vunpack.c.l.b16 %v2489
      %v2812 = vunpack.c.h.b16 %v2489
      %v2813 = vunpack.c.l.b16 %v2490
      %v2814 = vunpack.c.h.b16 %v2490
      %v2815 = vunpack.c.l.b16 %v2491
      %v2816 = vunpack.c.h.b16 %v2491
      %v2817 = vunpack.c.l.b16 %v2492
      %v2818 = vunpack.c.h.b16 %v2492
      %v2819 = vunpack.c.l.b16 %v2493
      %v2820 = vunpack.c.h.b16 %v2493
      %v2821 = vunpack.c.l.b16 %v2494
      %v2822 = vunpack.c.h.b16 %v2494
      %v2823 = vunpack.c.l.b16 %v2495
      %v2824 = vunpack.c.h.b16 %v2495
      %v2825 = vunpack.c.l.b16 %v2496
      %v2826 = vunpack.c.h.b16 %v2496
      %v2827 = vunpack.c.l.b16 %v2497
      %v2828 = vunpack.c.h.b16 %v2497
      %v2829 = vunpack.c.l.b16 %v2498
      %v2830 = vunpack.c.h.b16 %v2498
      %v2831 = vunpack.c.l.b16 %v2499
      %v2832 = vunpack.c.h.b16 %v2499
      %v2833 = vunpack.c.l.b16 %v2500
      %v2834 = vunpack.c.h.b16 %v2500
      %v2835 = vunpack.c.l.b16 %v2501
      %v2836 = vunpack.c.h.b16 %v2501
      %v2837 = vunpack.c.l.b16 %v2502
      %v2838 = vunpack.c.h.b16 %v2502
      %v2839 = vunpack.c.l.b16 %v2503
      %v2840 = vunpack.c.h.b16 %v2503
      %v2841 = vunpack.c.l.b16 %v2504
      %v2842 = vunpack.c.h.b16 %v2504
      %v2843 = vunpack.c.l.b16 %v2505
      %v2844 = vunpack.c.h.b16 %v2505
      %v2845 = vunpack.c.l.b16 %v2506
      %v2846 = vunpack.c.h.b16 %v2506
      %v2847 = vunpack.c.l.b16 %v2507
      %v2848 = vunpack.c.h.b16 %v2507
      %v2849 = vunpack.c.l.b16 %v2508
      %v2850 = vunpack.c.h.b16 %v2508
      %v2851 = vunpack.c.l.b16 %v2509
      %v2852 = vunpack.c.h.b16 %v2509
      %v2853 = vunpack.c.l.b16 %v2510
      %v2854 = vunpack.c.h.b16 %v2510
      %v2855 = vunpack.c.l.b16 %v2511
      %v2856 = vunpack.c.h.b16 %v2511
      %v2857 = vunpack.c.l.b16 %v2512
      %v2858 = vunpack.c.h.b16 %v2512
      %v2859 = vunpack.c.l.b16 %v2513
      %v2860 = vunpack.c.h.b16 %v2513
      %v2861 = vunpack.c.l.b16 %v2514
      %v2862 = vunpack.c.h.b16 %v2514
      %v2863 = vunpack.c.l.b16 %v2515
      %v2864 = vunpack.c.h.b16 %v2515
      %v2865 = vunpack.c.l.b16 %v2516
      %v2866 = vunpack.c.h.b16 %v2516
      %v2867 = vunpack.c.l.b16 %v2517
      %v2868 = vunpack.c.h.b16 %v2517
      %v2869 = vunpack.c.l.b16 %v2518
      %v2870 = vunpack.c.h.b16 %v2518
      %v2871 = vunpack.c.l.b16 %v2519
      %v2872 = vunpack.c.h.b16 %v2519
      %v2873 = vunpack.c.l.b16 %v2520
      %v2874 = vunpack.c.h.b16 %v2520
      %v2875 = vunpack.c.l.b16 %v2521
      %v2876 = vunpack.c.h.b16 %v2521
      %v2877 = vunpack.c.l.b16 %v2522
      %v2878 = vunpack.c.h.b16 %v2522
      %v2879 = vunpack.c.l.b16 %v2523
      %v2880 = vunpack.c.h.b16 %v2523
      %v2881 = vunpack.c.l.b16 %v2524
      %v2882 = vunpack.c.h.b16 %v2524
      %v2883 = vunpack.c.l.b16 %v2525
      %v2884 = vunpack.c.h.b16 %v2525
      %v2885 = vunpack.c.l.b16 %v2526
      %v2886 = vunpack.c.h.b16 %v2526
      %v2887 = vunpack.c.l.b16 %v2527
      %v2888 = vunpack.c.h.b16 %v2527
      %v2889 = vunpack.c.l.b16 %v2528
      %v2890 = vunpack.c.h.b16 %v2528
      %v2891 = vunpack.c.l.b16 %v2529
      %v2892 = vunpack.c.h.b16 %v2529
      %v2893 = vunpack.c.l.b16 %v2530
      %v2894 = vunpack.c.h.b16 %v2530
      %v2895 = vunpack.c.l.b16 %v2531
      %v2896 = vunpack.c.h.b16 %v2531
      %v2897 = vunpack.c.l.b16 %v2532
      %v2898 = vunpack.c.h.b16 %v2532
      %v2899 = vunpack.c.l.b16 %v2533
      %v2900 = vunpack.c.h.b16 %v2533
      %v2901 = vunpack.c.l.b16 %v2534
      %v2902 = vunpack.c.h.b16 %v2534
      %v2903 = vunpack.c.l.b16 %v2535
      %v2904 = vunpack.c.h.b16 %v2535
      %v2905 = vunpack.c.l.b16 %v2536
      %v2906 = vunpack.c.h.b16 %v2536
      %v2907 = vunpack.c.l.b16 %v2537
      %v2908 = vunpack.c.h.b16 %v2537
      %v2909 = vunpack.c.l.b16 %v2538
      %v2910 = vunpack.c.h.b16 %v2538
      %v2911 = vunpack.c.l.b16 %v2539
      %v2912 = vunpack.c.h.b16 %v2539
      %v2913 = vunpack.c.l.b16 %v2540
      %v2914 = vunpack.c.h.b16 %v2540
      %v2915 = vunpack.c.l.b16 %v2541
      %v2916 = vunpack.c.h.b16 %v2541
      %v2917 = vunpack.c.l.b16 %v2542
      %v2918 = vunpack.c.h.b16 %v2542
      %v2919 = vunpack.c.l.b16 %v2543
      %v2920 = vunpack.c.h.b16 %v2543
      %v2921 = vunpack.c.l.b16 %v2544
      %v2922 = vunpack.c.h.b16 %v2544
      %v2923 = vunpack.c.l.b16 %v2545
      %v2924 = vunpack.c.h.b16 %v2545
      %v2925 = vunpack.c.l.b16 %v2546
      %v2926 = vunpack.c.h.b16 %v2546
      %v2927 = vunpack.c.l.b16 %v2547
      %v2928 = vunpack.c.h.b16 %v2547
      %v2929 = vunpack.c.l.b16 %v2548
      %v2930 = vunpack.c.h.b16 %v2548
      %v2931 = vunpack.c.l.b16 %v2549
      %v2932 = vunpack.c.h.b16 %v2549
      %v2933 = vunpack.c.l.b16 %v2550
      %v2934 = vunpack.c.h.b16 %v2550
      %v2935 = vunpack.c.l.b16 %v2551
      %v2936 = vunpack.c.h.b16 %v2551
      %v2937 = vunpack.c.l.b16 %v2552
      %v2938 = vunpack.c.h.b16 %v2552
      %v2939 = vunpack.c.l.b16 %v2553
      %v2940 = vunpack.c.h.b16 %v2553
      %v2941 = vunpack.c.l.b16 %v2554
      %v2942 = vunpack.c.h.b16 %v2554
      %v2943 = vunpack.c.l.b16 %v2555
      %v2944 = vunpack.c.h.b16 %v2555
      %v2945 = vunpack.c.l.b16 %v2556
      %v2946 = vunpack.c.h.b16 %v2556
      %v2947 = vunpack.c.l.b16 %v2557
      %v2948 = vunpack.c.h.b16 %v2557
      %v2949 = vunpack.c.l.b16 %v2558
      %v2950 = vunpack.c.h.b16 %v2558
      %v2951 = vunpack.c.l.b16 %v2559
      %v2952 = vunpack.c.h.b16 %v2559
      %v2953 = vunpack.c.l.b16 %v2560
      %v2954 = vunpack.c.h.b16 %v2560
      %v2955 = vunpack.c.l.b16 %v2561
      %v2956 = vunpack.c.h.b16 %v2561
      %v2957 = vunpack.c.l.b16 %v2562
      %v2958 = vunpack.c.h.b16 %v2562
      %v2959 = vunpack.c.l.b16 %v2563
      %v2960 = vunpack.c.h.b16 %v2563
      %v2961 = vunpack.c.l.b16 %v2564
      %v2962 = vunpack.c.h.b16 %v2564
      %v2963 = vunpack.c.l.b16 %v2565
      %v2964 = vunpack.c.h.b16 %v2565
      %v2965 = vunpack.c.l.b16 %v2566
      %v2966 = vunpack.c.h.b16 %v2566
      %v2967 = vunpack.c.l.b16 %v2567
      %v2968 = vunpack.c.h.b16 %v2567
      %v2969 = vunpack.c.l.b16 %v2568
      %v2970 = vunpack.c.h.b16 %v2568
      %v2971 = vunpack.c.l.b16 %v2569
      %v2972 = vunpack.c.h.b16 %v2569
      %v2973 = vunpack.c.l.b16 %v2570
      %v2974 = vunpack.c.h.b16 %v2570
      %v2975 = vunpack.c.l.b16 %v2571
      %v2976 = vunpack.c.h.b16 %v2571
      %v2977 = vunpack.c.l.b16 %v2572
      %v2978 = vunpack.c.h.b16 %v2572
      %v2979 = vunpack.c.l.b16 %v2573
      %v2980 = vunpack.c.h.b16 %v2573
      %v2981 = vunpack.c.l.b16 %v2574
      %v2982 = vunpack.c.h.b16 %v2574
      %v2983 = vunpack.c.l.b16 %v2575
      %v2984 = vunpack.c.h.b16 %v2575
      %v2985 = vunpack.c.l.b16 %v2576
      %v2986 = vunpack.c.h.b16 %v2576
      %v2987 = vunpack.c.l.b16 %v2577
      %v2988 = vunpack.c.h.b16 %v2577
      %v2989 = vunpack.c.l.b16 %v2578
      %v2990 = vunpack.c.h.b16 %v2578
      %v2991 = vunpack.c.l.b16 %v2579
      %v2992 = vunpack.c.h.b16 %v2579
      %v2993 = vunpack.c.l.b16 %v2580
      %v2994 = vunpack.c.h.b16 %v2580
      %v2995 = vunpack.c.l.b16 %v2581
      %v2996 = vunpack.c.h.b16 %v2581
      %v2997 = vunpack.c.l.b16 %v2582
      %v2998 = vunpack.c.h.b16 %v2582
      %v2999 = vunpack.c.l.b16 %v2583
      %v3000 = vunpack.c.h.b16 %v2583
      %v3001 = vunpack.c.l.b16 %v2584
      %v3002 = vunpack.c.h.b16 %v2584
      %v3003 = vunpack.c.l.b16 %v2585
      %v3004 = vunpack.c.h.b16 %v2585
      %v3005 = vunpack.c.l.b16 %v2586
      %v3006 = vunpack.c.h.b16 %v2586
      %v3007 = vunpack.c.l.b16 %v2587
      %v3008 = vunpack.c.h.b16 %v2587
      %v3009 = vunpack.c.l.b16 %v2588
      %v3010 = vunpack.c.h.b16 %v2588
      %v3011 = vunpack.c.l.b16 %v2589
      %v3012 = vunpack.c.h.b16 %v2589
      %v3013 = vunpack.c.l.b16 %v2590
      %v3014 = vunpack.c.h.b16 %v2590
      %v3015 = vunpack.c.l.b16 %v2591
      %v3016 = vunpack.c.h.b16 %v2591
      %v3017 = vunpack.c.l.b16 %v2592
      %v3018 = vunpack.c.h.b16 %v2592
      %v3019 = vunpack.c.l.b16 %v2593
      %v3020 = vunpack.c.h.b16 %v2593
      %v3021 = vunpack.c.l.b16 %v2594
      %v3022 = vunpack.c.h.b16 %v2594
      %v3023 = vunpack.c.l.b16 %v2595
      %v3024 = vunpack.c.h.b16 %v2595
      %v3025 = vunpack.c.l.b16 %v2596
      %v3026 = vunpack.c.h.b16 %v2596
      %v3027 = vunpack.c.l.b16 %v2597
      %v3028 = vunpack.c.h.b16 %v2597
      %v3029 = vunpack.c.l.b16 %v2598
      %v3030 = vunpack.c.h.b16 %v2598
      %v3031 = vunpack.c.l.b16 %v2599
      %v3032 = vunpack.c.h.b16 %v2599
      %v3033 = vunpack.c.l.b16 %v2600
      %v3034 = vunpack.c.h.b16 %v2600
      %v3035 = vunpack.c.l.b16 %v2601
      %v3036 = vunpack.c.h.b16 %v2601
      %v3037 = vunpack.c.l.b16 %v2602
      %v3038 = vunpack.c.h.b16 %v2602
      %v3039 = vunpack.c.l.b16 %v2603
      %v3040 = vunpack.c.h.b16 %v2603
      %v3041 = vunpack.c.l.b16 %v2604
      %v3042 = vunpack.c.h.b16 %v2604
      %v3043 = vunpack.c.l.b16 %v2605
      %v3044 = vunpack.c.h.b16 %v2605
      %v3045 = vunpack.c.l.b16 %v2606
      %v3046 = vunpack.c.h.b16 %v2606
      %v3047 = vunpack.c.l.b16 %v2607
      %v3048 = vunpack.c.h.b16 %v2607
      %v3049 = vunpack.c.l.b16 %v2608
      %v3050 = vunpack.c.h.b16 %v2608
      %v3051 = vunpack.c.l.b16 %v2609
      %v3052 = vunpack.c.h.b16 %v2609
      %v3053 = vunpack.c.l.b16 %v2610
      %v3054 = vunpack.c.h.b16 %v2610
      %v3055 = vunpack.c.l.b16 %v2611
      %v3056 = vunpack.c.h.b16 %v2611
      %v3057 = vunpack.c.l.b16 %v2612
      %v3058 = vunpack.c.h.b16 %v2612
      %v3059 = vunpack.c.l.b16 %v2613
      %v3060 = vunpack.c.h.b16 %v2613
      %v3061 = vunpack.c.l.b16 %v2614
      %v3062 = vunpack.c.h.b16 %v2614
      %v3063 = vunpack.c.l.b16 %v2615
      %v3064 = vunpack.c.h.b16 %v2615
      %v3065 = vunpack.c.l.b16 %v2616
      %v3066 = vunpack.c.h.b16 %v2616
      %v3067 = vunpack.c.l.b16 %v2617
      %v3068 = vunpack.c.h.b16 %v2617
      %v3069 = vunpack.c.l.b16 %v2618
      %v3070 = vunpack.c.h.b16 %v2618
      %v3071 = vunpack.c.l.b16 %v2619
      %v3072 = vunpack.c.h.b16 %v2619
      %v3073 = vunpack.c.l.b16 %v2620
      %v3074 = vunpack.c.h.b16 %v2620
      %v3075 = vunpack.c.l.b16 %v2621
      %v3076 = vunpack.c.h.b16 %v2621
      %v3077 = vunpack.c.l.b16 %v2622
      %v3078 = vunpack.c.h.b16 %v2622
      %v3079 = vunpack.c.l.b16 %v2623
      %v3080 = vunpack.c.h.b16 %v2623
      %v3081 = vunpack.c.l.b16 %v2624
      %v3082 = vunpack.c.h.b16 %v2624
      %v3083 = vunpack.c.l.b16 %v2625
      %v3084 = vunpack.c.h.b16 %v2625
      %v3085 = vunpack.c.l.b16 %v2626
      %v3086 = vunpack.c.h.b16 %v2626
      %v3087 = vunpack.c.l.b16 %v2627
      %v3088 = vunpack.c.h.b16 %v2627
      %v3089 = vunpack.c.l.b16 %v2628
      %v3090 = vunpack.c.h.b16 %v2628
      %v3091 = vunpack.c.l.b16 %v2629
      %v3092 = vunpack.c.h.b16 %v2629
      %v3093 = vunpack.c.l.b16 %v2630
      %v3094 = vunpack.c.h.b16 %v2630
      %v3095 = vpack.c.b16 %v2813, %v2807
      %v3096 = vpack.c.b16 %v2814, %v2808
      %v3097 = vpack.c.b16 %v2815, %v2809
      %v3098 = vpack.c.b16 %v2816, %v2810
      %v3099 = vpack.c.b16 %v2817, %v2811
      %v3100 = vpack.c.b16 %v2818, %v2812
      %v3101 = vpack.c.b16 %v2825, %v2819
      %v3102 = vpack.c.b16 %v2826, %v2820
      %v3103 = vpack.c.b16 %v2827, %v2821
      %v3104 = vpack.c.b16 %v2828, %v2822
      %v3105 = vpack.c.b16 %v2829, %v2823
      %v3106 = vpack.c.b16 %v2830, %v2824
      %v3107 = vpack.c.b16 %v2837, %v2831
      %v3108 = vpack.c.b16 %v2838, %v2832
      %v3109 = vpack.c.b16 %v2839, %v2833
      %v3110 = vpack.c.b16 %v2840, %v2834
      %v3111 = vpack.c.b16 %v2841, %v2835
      %v3112 = vpack.c.b16 %v2842, %v2836
      %v3113 = vpack.c.b16 %v2849, %v2843
      %v3114 = vpack.c.b16 %v2850, %v2844
      %v3115 = vpack.c.b16 %v2851, %v2845
      %v3116 = vpack.c.b16 %v2852, %v2846
      %v3117 = vpack.c.b16 %v2853, %v2847
      %v3118 = vpack.c.b16 %v2854, %v2848
      %v3119 = vpack.c.b16 %v2861, %v2855
      %v3120 = vpack.c.b16 %v2862, %v2856
      %v3121 = vpack.c.b16 %v2863, %v2857
      %v3122 = vpack.c.b16 %v2864, %v2858
      %v3123 = vpack.c.b16 %v2865, %v2859
      %v3124 = vpack.c.b16 %v2866, %v2860
      %v3125 = vpack.c.b16 %v2873, %v2867
      %v3126 = vpack.c.b16 %v2874, %v2868
      %v3127 = vpack.c.b16 %v2875, %v2869
      %v3128 = vpack.c.b16 %v2876, %v2870
      %v3129 = vpack.c.b16 %v2877, %v2871
      %v3130 = vpack.c.b16 %v2878, %v2872
      %v3131 = vpack.c.b16 %v2885, %v2879
      %v3132 = vpack.c.b16 %v2886, %v2880
      %v3133 = vpack.c.b16 %v2887, %v2881
      %v3134 = vpack.c.b16 %v2888, %v2882
      %v3135 = vpack.c.b16 %v2889, %v2883
      %v3136 = vpack.c.b16 %v2890, %v2884
      %v3137 = vpack.c.b16 %v2897, %v2891
      %v3138 = vpack.c.b16 %v2898, %v2892
      %v3139 = vpack.c.b16 %v2899, %v2893
      %v3140 = vpack.c.b16 %v2900, %v2894
      %v3141 = vpack.c.b16 %v2901, %v2895
      %v3142 = vpack.c.b16 %v2902, %v2896
      %v3143 = vpack.c.b16 %v2909, %v2903
      %v3144 = vpack.c.b16 %v2910, %v2904
      %v3145 = vpack.c.b16 %v2911, %v2905
      %v3146 = vpack.c.b16 %v2912, %v2906
      %v3147 = vpack.c.b16 %v2913, %v2907
      %v3148 = vpack.c.b16 %v2914, %v2908
      %v3149 = vpack.c.b16 %v2921, %v2915
      %v3150 = vpack.c.b16 %v2922, %v2916
      %v3151 = vpack.c.b16 %v2923, %v2917
      %v3152 = vpack.c.b16 %v2924, %v2918
      %v3153 = vpack.c.b16 %v2925, %v2919
      %v3154 = vpack.c.b16 %v2926, %v2920
      %v3155 = vpack.c.b16 %v2933, %v2927
      %v3156 = vpack.c.b16 %v2934, %v2928
      %v3157 = vpack.c.b16 %v2935, %v2929
      %v3158 = vpack.c.b16 %v2936, %v2930
      %v3159 = vpack.c.b16 %v2937, %v2931
      %v3160 = vpack.c.b16 %v2938, %v2932
      %v3161 = vpack.c.b16 %v2945, %v2939
      %v3162 = vpack.c.b16 %v2946, %v2940
      %v3163 = vpack.c.b16 %v2947, %v2941
      %v3164 = vpack.c.b16 %v2948, %v2942
      %v3165 = vpack.c.b16 %v2949, %v2943
      %v3166 = vpack.c.b16 %v2950, %v2944
      %v3167 = vpack.c.b16 %v2957, %v2951
      %v3168 = vpack.c.b16 %v2958, %v2952
      %v3169 = vpack.c.b16 %v2959, %v2953
      %v3170 = vpack.c.b16 %v2960, %v2954
      %v3171 = vpack.c.b16 %v2961, %v2955
      %v3172 = vpack.c.b16 %v2962, %v2956
      %v3173 = vpack.c.b16 %v2969, %v2963
      %v3174 = vpack.c.b16 %v2970, %v2964
      %v3175 = vpack.c.b16 %v2971, %v2965
      %v3176 = vpack.c.b16 %v2972, %v2966
      %v3177 = vpack.c.b16 %v2973, %v2967
      %v3178 = vpack.c.b16 %v2974, %v2968
      %v3179 = vpack.c.b16 %v2981, %v2975
      %v3180 = vpack.c.b16 %v2982, %v2976
      %v3181 = vpack.c.b16 %v2983, %v2977
      %v3182 = vpack.c.b16 %v2984, %v2978
      %v3183 = vpack.c.b16 %v2985, %v2979
      %v3184 = vpack.c.b16 %v2986, %v2980
      %v3185 = vpack.c.b16 %v2993, %v2987
      %v3186 = vpack.c.b16 %v2994, %v2988
      %v3187 = vpack.c.b16 %v2995, %v2989
      %v3188 = vpack.c.b16 %v2996, %v2990
      %v3189 = vpack.c.b16 %v2997, %v2991
      %v3190 = vpack.c.b16 %v2998, %v2992
      %v3191 = vpack.c.b16 %v3005, %v2999
      %v3192 = vpack.c.b16 %v3006, %v3000
      %v3193 = vpack.c.b16 %v3007, %v3001
      %v3194 = vpack.c.b16 %v3008, %v3002
      %v3195 = vpack.c.b16 %v3009, %v3003
      %v3196 = vpack.c.b16 %v3010, %v3004
      %v3197 = vpack.c.b16 %v3017, %v3011
      %v3198 = vpack.c.b16 %v3018, %v3012
      %v3199 = vpack.c.b16 %v3019, %v3013
      %v3200 = vpack.c.b16 %v3020, %v3014
      %v3201 = vpack.c.b16 %v3021, %v3015
      %v3202 = vpack.c.b16 %v3022, %v3016
      %v3203 = vpack.c.b16 %v3029, %v3023
      %v3204 = vpack.c.b16 %v3030, %v3024
      %v3205 = vpack.c.b16 %v3031, %v3025
      %v3206 = vpack.c.b16 %v3032, %v3026
      %v3207 = vpack.c.b16 %v3033, %v3027
      %v3208 = vpack.c.b16 %v3034, %v3028
      %v3209 = vpack.c.b16 %v3041, %v3035
      %v3210 = vpack.c.b16 %v3042, %v3036
      %v3211 = vpack.c.b16 %v3043, %v3037
      %v3212 = vpack.c.b16 %v3044, %v3038
      %v3213 = vpack.c.b16 %v3045, %v3039
      %v3214 = vpack.c.b16 %v3046, %v3040
      %v3215 = vpack.c.b16 %v3053, %v3047
      %v3216 = vpack.c.b16 %v3054, %v3048
      %v3217 = vpack.c.b16 %v3055, %v3049
      %v3218 = vpack.c.b16 %v3056, %v3050
      %v3219 = vpack.c.b16 %v3057, %v3051
      %v3220 = vpack.c.b16 %v3058, %v3052
      %v3221 = vpack.c.b16 %v3065, %v3059
      %v3222 = vpack.c.b16 %v3066, %v3060
      %v3223 = vpack.c.b16 %v3067, %v3061
      %v3224 = vpack.c.b16 %v3068, %v3062
      %v3225 = vpack.c.b16 %v3069, %v3063
      %v3226 = vpack.c.b16 %v3070, %v3064
      %v3227 = vpack.c.b16 %v3077, %v3071
      %v3228 = vpack.c.b16 %v3078, %v3072
      %v3229 = vpack.c.b16 %v3079, %v3073
      %v3230 = vpack.c.b16 %v3080, %v3074
      %v3231 = vpack.c.b16 %v3081, %v3075
      %v3232 = vpack.c.b16 %v3082, %v3076
      %v3233 = vpack.c.b16 %v3089, %v3083
      %v3234 = vpack.c.b16 %v3090, %v3084
      %v3235 = vpack.c.b16 %v3091, %v3085
      %v3236 = vpack.c.b16 %v3092, %v3086
      %v3237 = vpack.c.b16 %v3093, %v3087
      %v3238 = vpack.c.b16 %v3094, %v3088
      %3383 = vmatprep.subr.bf16.mxu0 %v3096
      %3384 = vmatpush1.bf16.msra.mxu0 %v3095
      %3385 = vmatprep.subr.bf16.mxu0 %v3102
      %3386 = vmatpush1.bf16.msra.mxu0 %v3101
      %3387 = vmatprep.subr.bf16.mxu0 %v3108
      %3388 = vmatpush1.bf16.msra.mxu0 %v3107
      %3389 = vmatprep.subr.bf16.mxu0 %v3114
      %3390 = vmatpush1.bf16.msra.mxu0 %v3113
      %3391 = vmatprep.subr.bf16.mxu0 %v3120
      %3392 = vmatpush1.bf16.msra.mxu0 %v3119
      %3393 = vmatprep.subr.bf16.mxu0 %v3126
      %3394 = vmatpush1.bf16.msra.mxu0 %v3125
      %3395 = vmatprep.subr.bf16.mxu0 %v3132
      %3396 = vmatpush1.bf16.msra.mxu0 %v3131
      %3397 = vmatprep.subr.bf16.mxu0 %v3138
      %3398 = vmatpush1.bf16.msra.mxu0 %v3137
      %3399 = vmatprep.subr.bf16.mxu0 %v3144
      %3400 = vmatpush1.bf16.msra.mxu0 %v3143
      %3401 = vmatprep.subr.bf16.mxu0 %v3150
      %3402 = vmatpush1.bf16.msra.mxu0 %v3149
      %3403 = vmatprep.subr.bf16.mxu0 %v3156
      %3404 = vmatpush1.bf16.msra.mxu0 %v3155
      %3405 = vmatprep.subr.bf16.mxu0 %v3162
      %3406 = vmatpush1.bf16.msra.mxu0 %v3161
      %3407 = vmatprep.subr.bf16.mxu0 %v3168
      %3408 = vmatpush1.bf16.msra.mxu0 %v3167
      %3409 = vmatprep.subr.bf16.mxu0 %v3174
      %3410 = vmatpush1.bf16.msra.mxu0 %v3173
      %3411 = vmatprep.subr.bf16.mxu0 %v3180
      %3412 = vmatpush1.bf16.msra.mxu0 %v3179
      %3413 = vmatprep.subr.bf16.mxu0 %v3186
      %3414 = vmatpush1.bf16.msra.mxu0 %v3185
      %3415 = vmatprep.mubr.bf16.mxu0 %v2440
      %3416 = vmatmul.mubr.bf16.gmra.mrb[0].mxu0 %v2439
      %v3417 = vpop.f32.mrb[0].mxu0
      %v3418 = vadd.f32 %v2636, %v3417
      %v3419 = vpop.f32.mrb[0].mxu0
      %v3420 = vadd.f32 %v2640, %v3419
      %v3421 = vpop.f32.mrb[0].mxu0
      %v3422 = vadd.f32 %v2636, %v3421
      %v3423 = vpop.f32.mrb[0].mxu0
      %v3424 = vadd.f32 %v2640, %v3423
      %3425 = vmatprep.mubr.bf16.mxu0 %v2443
      %3426 = vmatmul.mubr.bf16.gmra.mrb[0].mxu0 %v2442
      %v3427 = vpop.f32.mrb[0].mxu0
      %v3428 = vadd.f32 %v2636, %v3427
      %v3429 = vpop.f32.mrb[0].mxu0
      %v3430 = vadd.f32 %v2640, %v3429
      %v3431 = vpop.f32.mrb[0].mxu0
      %v3432 = vadd.f32 %v2636, %v3431
      %v3433 = vpop.f32.mrb[0].mxu0
      %v3434 = vadd.f32 %v2640, %v3433
      %3435 = vmatprep.mubr.bf16.mxu0 %v2446
      %3436 = vmatmul.mubr.bf16.gmra.mrb[0].mxu0 %v2445
      %v3437 = vpop.f32.mrb[0].mxu0
      %v3438 = vadd.f32 %v2636, %v3437
      %v3439 = vpop.f32.mrb[0].mxu0
      %v3440 = vadd.f32 %v2640, %v3439
      %v3441 = vpop.f32.mrb[0].mxu0
      %v3442 = vadd.f32 %v2636, %v3441
      %v3443 = vpop.f32.mrb[0].mxu0
      %v3444 = vadd.f32 %v2640, %v3443
      %3445 = vmatprep.mubr.bf16.mxu0 %v2449
      %3446 = vmatmul.mubr.bf16.gmra.mrb[0].mxu0 %v2448
      %v3447 = vpop.f32.mrb[0].mxu0
      %v3448 = vadd.f32 %v2636, %v3447
      %v3449 = vpop.f32.mrb[0].mxu0
      %v3450 = vadd.f32 %v2640, %v3449
      %v3451 = vpop.f32.mrb[0].mxu0
      %v3452 = vadd.f32 %v2636, %v3451
      %v3453 = vpop.f32.mrb[0].mxu0
      %v3454 = vadd.f32 %v2640, %v3453
      %3455 = vmatprep.mubr.bf16.mxu0 %v2452
      %3456 = vmatmul.mubr.bf16.gmra.mrb[0].mxu0 %v2451
      %v3457 = vpop.f32.mrb[0].mxu0
      %v3458 = vadd.f32 %v2636, %v3457
      %v3459 = vpop.f32.mrb[0].mxu0
      %v3460 = vadd.f32 %v2640, %v3459
      %v3461 = vpop.f32.mrb[0].mxu0
      %v3462 = vadd.f32 %v2636, %v3461
      %v3463 = vpop.f32.mrb[0].mxu0
      %v3464 = vadd.f32 %v2640, %v3463
      %3465 = vmatprep.mubr.bf16.mxu0 %v2455
      %3466 = vmatmul.mubr.bf16.gmra.mrb[0].mxu0 %v2454
      %v3467 = vpop.f32.mrb[0].mxu0
      %v3468 = vadd.f32 %v2636, %v3467
      %v3469 = vpop.f32.mrb[0].mxu0
      %v3470 = vadd.f32 %v2640, %v3469
      %v3471 = vpop.f32.mrb[0].mxu0
      %v3472 = vadd.f32 %v2636, %v3471
      %v3473 = vpop.f32.mrb[0].mxu0
      %v3474 = vadd.f32 %v2640, %v3473
      %3475 = vmatprep.mubr.bf16.mxu0 %v2458
      %3476 = vmatmul.mubr.bf16.gmra.mrb[0].mxu0 %v2457
      %v3477 = vpop.f32.mrb[0].mxu0
      %v3478 = vadd.f32 %v2636, %v3477
      %v3479 = vpop.f32.mrb[0].mxu0
      %v3480 = vadd.f32 %v2640, %v3479
      %v3481 = vpop.f32.mrb[0].mxu0
      %v3482 = vadd.f32 %v2636, %v3481
      %v3483 = vpop.f32.mrb[0].mxu0
      %v3484 = vadd.f32 %v2640, %v3483
      %3485 = vmatprep.mubr.bf16.mxu0 %v2461
      %3486 = vmatmul.mubr.bf16.gmra.mrb[0].mxu0 %v2460
      %v3487 = vpop.f32.mrb[0].mxu0
      %v3488 = vadd.f32 %v2636, %v3487
      %v3489 = vpop.f32.mrb[0].mxu0
      %v3490 = vadd.f32 %v2640, %v3489
      %v3491 = vpop.f32.mrb[0].mxu0
      %v3492 = vadd.f32 %v2636, %v3491
      %v3493 = vpop.f32.mrb[0].mxu0
      %v3494 = vadd.f32 %v2640, %v3493
      %3495 = vmatprep.mubr.bf16.mxu0 %v2464
      %3496 = vmatmul.mubr.bf16.gmra.mrb[0].mxu0 %v2463
      %v3497 = vpop.f32.mrb[0].mxu0
      %v3498 = vadd.f32 %v2636, %v3497
      %v3499 = vpop.f32.mrb[0].mxu0
      %v3500 = vadd.f32 %v2640, %v3499
      %v3501 = vpop.f32.mrb[0].mxu0
      %v3502 = vadd.f32 %v2636, %v3501
      %v3503 = vpop.f32.mrb[0].mxu0
      %v3504 = vadd.f32 %v2640, %v3503
      %3505 = vmatprep.mubr.bf16.mxu0 %v2467
      %3506 = vmatmul.mubr.bf16.gmra.mrb[0].mxu0 %v2466
      %v3507 = vpop.f32.mrb[0].mxu0
      %v3508 = vadd.f32 %v2636, %v3507
      %v3509 = vpop.f32.mrb[0].mxu0
      %v3510 = vadd.f32 %v2640, %v3509
      %v3511 = vpop.f32.mrb[0].mxu0
      %v3512 = vadd.f32 %v2636, %v3511
      %v3513 = vpop.f32.mrb[0].mxu0
      %v3514 = vadd.f32 %v2640, %v3513
      %3515 = vmatprep.mubr.bf16.mxu0 %v2470
      %3516 = vmatmul.mubr.bf16.gmra.mrb[0].mxu0 %v2469
      %v3517 = vpop.f32.mrb[0].mxu0
      %v3518 = vadd.f32 %v2636, %v3517
      %v3519 = vpop.f32.mrb[0].mxu0
      %v3520 = vadd.f32 %v2640, %v3519
      %v3521 = vpop.f32.mrb[0].mxu0
      %v3522 = vadd.f32 %v2636, %v3521
      %v3523 = vpop.f32.mrb[0].mxu0
      %v3524 = vadd.f32 %v2640, %v3523
      %3525 = vmatprep.mubr.bf16.mxu0 %v2473
      %3526 = vmatmul.mubr.bf16.gmra.mrb[0].mxu0 %v2472
      %v3527 = vpop.f32.mrb[0].mxu0
      %v3528 = vadd.f32 %v2636, %v3527
      %v3529 = vpop.f32.mrb[0].mxu0
      %v3530 = vadd.f32 %v2640, %v3529
      %v3531 = vpop.f32.mrb[0].mxu0
      %v3532 = vadd.f32 %v2636, %v3531
      %v3533 = vpop.f32.mrb[0].mxu0
      %v3534 = vadd.f32 %v2640, %v3533
      %3535 = vmatprep.mubr.bf16.mxu0 %v2476
      %3536 = vmatmul.mubr.bf16.gmra.mrb[0].mxu0 %v2475
      %v3537 = vpop.f32.mrb[0].mxu0
      %v3538 = vadd.f32 %v2636, %v3537
      %v3539 = vpop.f32.mrb[0].mxu0
      %v3540 = vadd.f32 %v2640, %v3539
      %v3541 = vpop.f32.mrb[0].mxu0
      %v3542 = vadd.f32 %v2636, %v3541
      %v3543 = vpop.f32.mrb[0].mxu0
      %v3544 = vadd.f32 %v2640, %v3543
      %3545 = vmatprep.mubr.bf16.mxu0 %v2479
      %3546 = vmatmul.mubr.bf16.gmra.mrb[0].mxu0 %v2478
      %v3547 = vpop.f32.mrb[0].mxu0
      %v3548 = vadd.f32 %v2636, %v3547
      %v3549 = vpop.f32.mrb[0].mxu0
      %v3550 = vadd.f32 %v2640, %v3549
      %v3551 = vpop.f32.mrb[0].mxu0
      %v3552 = vadd.f32 %v2636, %v3551
      %v3553 = vpop.f32.mrb[0].mxu0
      %v3554 = vadd.f32 %v2640, %v3553
      %3555 = vmatprep.mubr.bf16.mxu0 %v2482
      %3556 = vmatmul.mubr.bf16.gmra.mrb[0].mxu0 %v2481
      %v3557 = vpop.f32.mrb[0].mxu0
      %v3558 = vadd.f32 %v2636, %v3557
      %v3559 = vpop.f32.mrb[0].mxu0
      %v3560 = vadd.f32 %v2640, %v3559
      %v3561 = vpop.f32.mrb[0].mxu0
      %v3562 = vadd.f32 %v2636, %v3561
      %v3563 = vpop.f32.mrb[0].mxu0
      %v3564 = vadd.f32 %v2640, %v3563
      %3565 = vmatprep.mubr.bf16.mxu0 %v2485
      %3566 = vmatmul.mubr.bf16.gmra.mrb[0].mxu0 %v2484
      %v3567 = vpop.f32.mrb[0].mxu0
      %v3568 = vadd.f32 %v2636, %v3567
      %v3569 = vpop.f32.mrb[0].mxu0
      %v3570 = vadd.f32 %v2640, %v3569
      %v3571 = vpop.f32.mrb[0].mxu0
      %v3572 = vadd.f32 %v2636, %v3571
      %v3573 = vpop.f32.mrb[0].mxu0
      %v3574 = vadd.f32 %v2640, %v3573
      %3575 = vdwg.mxu0
      %3576 = vmatprep.subr.bf16.mxu0 %v3192
      %3577 = vmatpush1.bf16.msra.mxu0 %v3191
      %3578 = vmatprep.subr.bf16.mxu0 %v3198
      %3579 = vmatpush1.bf16.msra.mxu0 %v3197
      %3580 = vmatprep.subr.bf16.mxu0 %v3204
      %3581 = vmatpush1.bf16.msra.mxu0 %v3203
      %3582 = vmatprep.subr.bf16.mxu0 %v3210
      %3583 = vmatpush1.bf16.msra.mxu0 %v3209
      %3584 = vmatprep.subr.bf16.mxu0 %v3216
      %3585 = vmatpush1.bf16.msra.mxu0 %v3215
      %3586 = vmatprep.subr.bf16.mxu0 %v3222
      %3587 = vmatpush1.bf16.msra.mxu0 %v3221
      %3588 = vmatprep.subr.bf16.mxu0 %v3228
      %3589 = vmatpush1.bf16.msra.mxu0 %v3227
      %3590 = vmatprep.subr.bf16.mxu0 %v3234
      %3591 = vmatpush1.bf16.msra.mxu0 %v3233
      %3592 = vmatprep.subr.bf16.mxu0 0
      %3593 = vmatpush1.bf16.msra.mxu0 0
      %3594 = vmatprep.subr.bf16.mxu0 0
      %3595 = vmatpush1.bf16.msra.mxu0 0
      %3596 = vmatprep.subr.bf16.mxu0 0
      %3597 = vmatpush1.bf16.msra.mxu0 0
      %3598 = vmatprep.subr.bf16.mxu0 0
      %3599 = vmatpush1.bf16.msra.mxu0 0
      %3600 = vmatprep.subr.bf16.mxu0 0
      %3601 = vmatpush1.bf16.msra.mxu0 0
      %3602 = vmatprep.subr.bf16.mxu0 0
      %3603 = vmatpush1.bf16.msra.mxu0 0
      %3604 = vmatprep.subr.bf16.mxu0 0
      %3605 = vmatpush1.bf16.msra.mxu0 0
      %3606 = vmatprep.subr.bf16.mxu0 0
      %3607 = vmatpush1.bf16.msra.mxu0 0
      %3608 = vmatprep.mubr.bf16.mxu0 0
      %3609 = vmatmul.mubr.bf16.gmra.mrb[0].mxu0 %v2441
      %v3610 = vpop.f32.mrb[0].mxu0
      %v3611 = vadd.f32 %v3418, %v3610
      %v3612 = vpop.f32.mrb[0].mxu0
      %v3613 = vadd.f32 %v3420, %v3612
      %v3614 = vpop.f32.mrb[0].mxu0
      %v3615 = vadd.f32 %v3422, %v3614
      %v3616 = vpop.f32.mrb[0].mxu0
      %v3617 = vadd.f32 %v3424, %v3616
      %3618 = vmatprep.mubr.bf16.mxu0 0
      %3619 = vmatmul.mubr.bf16.gmra.mrb[0].mxu0 %v2444
      %v3620 = vpop.f32.mrb[0].mxu0
      %v3621 = vadd.f32 %v3428, %v3620
      %v3622 = vpop.f32.mrb[0].mxu0
      %v3623 = vadd.f32 %v3430, %v3622
      %v3624 = vpop.f32.mrb[0].mxu0
      %v3625 = vadd.f32 %v3432, %v3624
      %v3626 = vpop.f32.mrb[0].mxu0
      %v3627 = vadd.f32 %v3434, %v3626
      %3628 = vmatprep.mubr.bf16.mxu0 0
      %3629 = vmatmul.mubr.bf16.gmra.mrb[0].mxu0 %v2447
      %v3630 = vpop.f32.mrb[0].mxu0
      %v3631 = vadd.f32 %v3438, %v3630
      %v3632 = vpop.f32.mrb[0].mxu0
      %v3633 = vadd.f32 %v3440, %v3632
      %v3634 = vpop.f32.mrb[0].mxu0
      %v3635 = vadd.f32 %v3442, %v3634
      %v3636 = vpop.f32.mrb[0].mxu0
      %v3637 = vadd.f32 %v3444, %v3636
      %3638 = vmatprep.mubr.bf16.mxu0 0
      %3639 = vmatmul.mubr.bf16.gmra.mrb[0].mxu0 %v2450
      %v3640 = vpop.f32.mrb[0].mxu0
      %v3641 = vadd.f32 %v3448, %v3640
      %v3642 = vpop.f32.mrb[0].mxu0
      %v3643 = vadd.f32 %v3450, %v3642
      %v3644 = vpop.f32.mrb[0].mxu0
      %v3645 = vadd.f32 %v3452, %v3644
      %v3646 = vpop.f32.mrb[0].mxu0
      %v3647 = vadd.f32 %v3454, %v3646
      %3648 = vmatprep.mubr.bf16.mxu0 0
      %3649 = vmatmul.mubr.bf16.gmra.mrb[0].mxu0 %v2453
      %v3650 = vpop.f32.mrb[0].mxu0
      %v3651 = vadd.f32 %v3458, %v3650
      %v3652 = vpop.f32.mrb[0].mxu0
      %v3653 = vadd.f32 %v3460, %v3652
      %v3654 = vpop.f32.mrb[0].mxu0
      %v3655 = vadd.f32 %v3462, %v3654
      %v3656 = vpop.f32.mrb[0].mxu0
      %v3657 = vadd.f32 %v3464, %v3656
      %3658 = vmatprep.mubr.bf16.mxu0 0
      %3659 = vmatmul.mubr.bf16.gmra.mrb[0].mxu0 %v2456
      %v3660 = vpop.f32.mrb[0].mxu0
      %v3661 = vadd.f32 %v3468, %v3660
      %v3662 = vpop.f32.mrb[0].mxu0
      %v3663 = vadd.f32 %v3470, %v3662
      %v3664 = vpop.f32.mrb[0].mxu0
      %v3665 = vadd.f32 %v3472, %v3664
      %v3666 = vpop.f32.mrb[0].mxu0
      %v3667 = vadd.f32 %v3474, %v3666
      %3668 = vmatprep.mubr.bf16.mxu0 0
      %3669 = vmatmul.mubr.bf16.gmra.mrb[0].mxu0 %v2459
      %v3670 = vpop.f32.mrb[0].mxu0
      %v3671 = vadd.f32 %v3478, %v3670
      %v3672 = vpop.f32.mrb[0].mxu0
      %v3673 = vadd.f32 %v3480, %v3672
      %v3674 = vpop.f32.mrb[0].mxu0
      %v3675 = vadd.f32 %v3482, %v3674
      %v3676 = vpop.f32.mrb[0].mxu0
      %v3677 = vadd.f32 %v3484, %v3676
      %3678 = vmatprep.mubr.bf16.mxu0 0
      %3679 = vmatmul.mubr.bf16.gmra.mrb[0].mxu0 %v2462
      %v3680 = vpop.f32.mrb[0].mxu0
      %v3681 = vadd.f32 %v3488, %v3680
      %v3682 = vpop.f32.mrb[0].mxu0
      %v3683 = vadd.f32 %v3490, %v3682
      %v3684 = vpop.f32.mrb[0].mxu0
      %v3685 = vadd.f32 %v3492, %v3684
      %v3686 = vpop.f32.mrb[0].mxu0
      %v3687 = vadd.f32 %v3494, %v3686
      %3688 = vmatprep.mubr.bf16.mxu0 0
      %3689 = vmatmul.mubr.bf16.gmra.mrb[0].mxu0 %v2465
      %v3690 = vpop.f32.mrb[0].mxu0
      %v3691 = vadd.f32 %v3498, %v3690
      %v3692 = vpop.f32.mrb[0].mxu0
      %v3693 = vadd.f32 %v3500, %v3692
      %v3694 = vpop.f32.mrb[0].mxu0
      %v3695 = vadd.f32 %v3502, %v3694
      %v3696 = vpop.f32.mrb[0].mxu0
      %v3697 = vadd.f32 %v3504, %v3696
      %3698 = vmatprep.mubr.bf16.mxu0 0
      %3699 = vmatmul.mubr.bf16.gmra.mrb[0].mxu0 %v2468
      %v3700 = vpop.f32.mrb[0].mxu0
      %v3701 = vadd.f32 %v3508, %v3700
      %v3702 = vpop.f32.mrb[0].mxu0
      %v3703 = vadd.f32 %v3510, %v3702
      %v3704 = vpop.f32.mrb[0].mxu0
      %v3705 = vadd.f32 %v3512, %v3704
      %v3706 = vpop.f32.mrb[0].mxu0
      %v3707 = vadd.f32 %v3514, %v3706
      %3708 = vmatprep.mubr.bf16.mxu0 0
      %3709 = vmatmul.mubr.bf16.gmra.mrb[0].mxu0 %v2471
      %v3710 = vpop.f32.mrb[0].mxu0
      %v3711 = vadd.f32 %v3518, %v3710
      %v3712 = vpop.f32.mrb[0].mxu0
      %v3713 = vadd.f32 %v3520, %v3712
      %v3714 = vpop.f32.mrb[0].mxu0
      %v3715 = vadd.f32 %v3522, %v3714
      %v3716 = vpop.f32.mrb[0].mxu0
      %v3717 = vadd.f32 %v3524, %v3716
      %3718 = vmatprep.mubr.bf16.mxu0 0
      %3719 = vmatmul.mubr.bf16.gmra.mrb[0].mxu0 %v2474
      %v3720 = vpop.f32.mrb[0].mxu0
      %v3721 = vadd.f32 %v3528, %v3720
      %v3722 = vpop.f32.mrb[0].mxu0
      %v3723 = vadd.f32 %v3530, %v3722
      %v3724 = vpop.f32.mrb[0].mxu0
      %v3725 = vadd.f32 %v3532, %v3724
      %v3726 = vpop.f32.mrb[0].mxu0
      %v3727 = vadd.f32 %v3534, %v3726
      %3728 = vmatprep.mubr.bf16.mxu0 0
      %3729 = vmatmul.mubr.bf16.gmra.mrb[0].mxu0 %v2477
      %v3730 = vpop.f32.mrb[0].mxu0
      %v3731 = vadd.f32 %v3538, %v3730
      %v3732 = vpop.f32.mrb[0].mxu0
      %v3733 = vadd.f32 %v3540, %v3732
      %v3734 = vpop.f32.mrb[0].mxu0
      %v3735 = vadd.f32 %v3542, %v3734
      %v3736 = vpop.f32.mrb[0].mxu0
      %v3737 = vadd.f32 %v3544, %v3736
      %3738 = vmatprep.mubr.bf16.mxu0 0
      %3739 = vmatmul.mubr.bf16.gmra.mrb[0].mxu0 %v2480
      %v3740 = vpop.f32.mrb[0].mxu0
      %v3741 = vadd.f32 %v3548, %v3740
      %v3742 = vpop.f32.mrb[0].mxu0
      %v3743 = vadd.f32 %v3550, %v3742
      %v3744 = vpop.f32.mrb[0].mxu0
      %v3745 = vadd.f32 %v3552, %v3744
      %v3746 = vpop.f32.mrb[0].mxu0
      %v3747 = vadd.f32 %v3554, %v3746
      %3748 = vmatprep.mubr.bf16.mxu0 0
      %3749 = vmatmul.mubr.bf16.gmra.mrb[0].mxu0 %v2483
      %v3750 = vpop.f32.mrb[0].mxu0
      %v3751 = vadd.f32 %v3558, %v3750
      %v3752 = vpop.f32.mrb[0].mxu0
      %v3753 = vadd.f32 %v3560, %v3752
      %v3754 = vpop.f32.mrb[0].mxu0
      %v3755 = vadd.f32 %v3562, %v3754
      %v3756 = vpop.f32.mrb[0].mxu0
      %v3757 = vadd.f32 %v3564, %v3756
      %3758 = vmatprep.mubr.bf16.mxu0 0
      %3759 = vmatmul.mubr.bf16.gmra.mrb[0].mxu0 %v2486
      %v3760 = vpop.f32.mrb[0].mxu0
      %v3761 = vadd.f32 %v3568, %v3760
      %v3762 = vpop.f32.mrb[0].mxu0
      %v3763 = vadd.f32 %v3570, %v3762
      %v3764 = vpop.f32.mrb[0].mxu0
      %v3765 = vadd.f32 %v3572, %v3764
      %v3766 = vpop.f32.mrb[0].mxu0
      %v3767 = vadd.f32 %v3574, %v3766
      %3768 = vdwg.mxu0
      %3769 = vmatprep.subr.bf16.mxu0 %v3098
      %3770 = vmatpush1.bf16.msra.mxu0 %v3097
      %3771 = vmatprep.subr.bf16.mxu0 %v3104
      %3772 = vmatpush1.bf16.msra.mxu0 %v3103
      %3773 = vmatprep.subr.bf16.mxu0 %v3110
      %3774 = vmatpush1.bf16.msra.mxu0 %v3109
      %3775 = vmatprep.subr.bf16.mxu0 %v3116
      %3776 = vmatpush1.bf16.msra.mxu0 %v3115
      %3777 = vmatprep.subr.bf16.mxu0 %v3122
      %3778 = vmatpush1.bf16.msra.mxu0 %v3121
      %3779 = vmatprep.subr.bf16.mxu0 %v3128
      %3780 = vmatpush1.bf16.msra.mxu0 %v3127
      %3781 = vmatprep.subr.bf16.mxu0 %v3134
      %3782 = vmatpush1.bf16.msra.mxu0 %v3133
      %3783 = vmatprep.subr.bf16.mxu0 %v3140
      %3784 = vmatpush1.bf16.msra.mxu0 %v3139
      %3785 = vmatprep.subr.bf16.mxu0 %v3146
      %3786 = vmatpush1.bf16.msra.mxu0 %v3145
      %3787 = vmatprep.subr.bf16.mxu0 %v3152
      %3788 = vmatpush1.bf16.msra.mxu0 %v3151
      %3789 = vmatprep.subr.bf16.mxu0 %v3158
      %3790 = vmatpush1.bf16.msra.mxu0 %v3157
      %3791 = vmatprep.subr.bf16.mxu0 %v3164
      %3792 = vmatpush1.bf16.msra.mxu0 %v3163
      %3793 = vmatprep.subr.bf16.mxu0 %v3170
      %3794 = vmatpush1.bf16.msra.mxu0 %v3169
      %3795 = vmatprep.subr.bf16.mxu0 %v3176
      %3796 = vmatpush1.bf16.msra.mxu0 %v3175
      %3797 = vmatprep.subr.bf16.mxu0 %v3182
      %3798 = vmatpush1.bf16.msra.mxu0 %v3181
      %3799 = vmatprep.subr.bf16.mxu0 %v3188
      %3800 = vmatpush1.bf16.msra.mxu0 %v3187
      %3801 = vmatprep.mubr.bf16.mxu0 %v2440
      %3802 = vmatmul.mubr.bf16.gmra.mrb[0].mxu0 %v2439
      %v3803 = vpop.f32.mrb[0].mxu0
      %v3804 = vadd.f32 %v2644, %v3803
      %v3805 = vpop.f32.mrb[0].mxu0
      %v3806 = vadd.f32 %v2648, %v3805
      %v3807 = vpop.f32.mrb[0].mxu0
      %v3808 = vadd.f32 %v2644, %v3807
      %v3809 = vpop.f32.mrb[0].mxu0
      %v3810 = vadd.f32 %v2648, %v3809
      %3811 = vmatprep.mubr.bf16.mxu0 %v2443
      %3812 = vmatmul.mubr.bf16.gmra.mrb[0].mxu0 %v2442
      %v3813 = vpop.f32.mrb[0].mxu0
      %v3814 = vadd.f32 %v2644, %v3813
      %v3815 = vpop.f32.mrb[0].mxu0
      %v3816 = vadd.f32 %v2648, %v3815
      %v3817 = vpop.f32.mrb[0].mxu0
      %v3818 = vadd.f32 %v2644, %v3817
      %v3819 = vpop.f32.mrb[0].mxu0
      %v3820 = vadd.f32 %v2648, %v3819
      %3821 = vmatprep.mubr.bf16.mxu0 %v2446
      %3822 = vmatmul.mubr.bf16.gmra.mrb[0].mxu0 %v2445
      %v3823 = vpop.f32.mrb[0].mxu0
      %v3824 = vadd.f32 %v2644, %v3823
      %v3825 = vpop.f32.mrb[0].mxu0
      %v3826 = vadd.f32 %v2648, %v3825
      %v3827 = vpop.f32.mrb[0].mxu0
      %v3828 = vadd.f32 %v2644, %v3827
      %v3829 = vpop.f32.mrb[0].mxu0
      %v3830 = vadd.f32 %v2648, %v3829
      %3831 = vmatprep.mubr.bf16.mxu0 %v2449
      %3832 = vmatmul.mubr.bf16.gmra.mrb[0].mxu0 %v2448
      %v3833 = vpop.f32.mrb[0].mxu0
      %v3834 = vadd.f32 %v2644, %v3833
      %v3835 = vpop.f32.mrb[0].mxu0
      %v3836 = vadd.f32 %v2648, %v3835
      %v3837 = vpop.f32.mrb[0].mxu0
      %v3838 = vadd.f32 %v2644, %v3837
      %v3839 = vpop.f32.mrb[0].mxu0
      %v3840 = vadd.f32 %v2648, %v3839
      %3841 = vmatprep.mubr.bf16.mxu0 %v2452
      %3842 = vmatmul.mubr.bf16.gmra.mrb[0].mxu0 %v2451
      %v3843 = vpop.f32.mrb[0].mxu0
      %v3844 = vadd.f32 %v2644, %v3843
      %v3845 = vpop.f32.mrb[0].mxu0
      %v3846 = vadd.f32 %v2648, %v3845
      %v3847 = vpop.f32.mrb[0].mxu0
      %v3848 = vadd.f32 %v2644, %v3847
      %v3849 = vpop.f32.mrb[0].mxu0
      %v3850 = vadd.f32 %v2648, %v3849
      %3851 = vmatprep.mubr.bf16.mxu0 %v2455
      %3852 = vmatmul.mubr.bf16.gmra.mrb[0].mxu0 %v2454
      %v3853 = vpop.f32.mrb[0].mxu0
      %v3854 = vadd.f32 %v2644, %v3853
      %v3855 = vpop.f32.mrb[0].mxu0
      %v3856 = vadd.f32 %v2648, %v3855
      %v3857 = vpop.f32.mrb[0].mxu0
      %v3858 = vadd.f32 %v2644, %v3857
      %v3859 = vpop.f32.mrb[0].mxu0
      %v3860 = vadd.f32 %v2648, %v3859
      %3861 = vmatprep.mubr.bf16.mxu0 %v2458
      %3862 = vmatmul.mubr.bf16.gmra.mrb[0].mxu0 %v2457
      %v3863 = vpop.f32.mrb[0].mxu0
      %v3864 = vadd.f32 %v2644, %v3863
      %v3865 = vpop.f32.mrb[0].mxu0
      %v3866 = vadd.f32 %v2648, %v3865
      %v3867 = vpop.f32.mrb[0].mxu0
      %v3868 = vadd.f32 %v2644, %v3867
      %v3869 = vpop.f32.mrb[0].mxu0
      %v3870 = vadd.f32 %v2648, %v3869
      %3871 = vmatprep.mubr.bf16.mxu0 %v2461
      %3872 = vmatmul.mubr.bf16.gmra.mrb[0].mxu0 %v2460
      %v3873 = vpop.f32.mrb[0].mxu0
      %v3874 = vadd.f32 %v2644, %v3873
      %v3875 = vpop.f32.mrb[0].mxu0
      %v3876 = vadd.f32 %v2648, %v3875
      %v3877 = vpop.f32.mrb[0].mxu0
      %v3878 = vadd.f32 %v2644, %v3877
      %v3879 = vpop.f32.mrb[0].mxu0
      %v3880 = vadd.f32 %v2648, %v3879
      %3881 = vmatprep.mubr.bf16.mxu0 %v2464
      %3882 = vmatmul.mubr.bf16.gmra.mrb[0].mxu0 %v2463
      %v3883 = vpop.f32.mrb[0].mxu0
      %v3884 = vadd.f32 %v2644, %v3883
      %v3885 = vpop.f32.mrb[0].mxu0
      %v3886 = vadd.f32 %v2648, %v3885
      %v3887 = vpop.f32.mrb[0].mxu0
      %v3888 = vadd.f32 %v2644, %v3887
      %v3889 = vpop.f32.mrb[0].mxu0
      %v3890 = vadd.f32 %v2648, %v3889
      %3891 = vmatprep.mubr.bf16.mxu0 %v2467
      %3892 = vmatmul.mubr.bf16.gmra.mrb[0].mxu0 %v2466
      %v3893 = vpop.f32.mrb[0].mxu0
      %v3894 = vadd.f32 %v2644, %v3893
      %v3895 = vpop.f32.mrb[0].mxu0
      %v3896 = vadd.f32 %v2648, %v3895
      %v3897 = vpop.f32.mrb[0].mxu0
      %v3898 = vadd.f32 %v2644, %v3897
      %v3899 = vpop.f32.mrb[0].mxu0
      %v3900 = vadd.f32 %v2648, %v3899
      %3901 = vmatprep.mubr.bf16.mxu0 %v2470
      %3902 = vmatmul.mubr.bf16.gmra.mrb[0].mxu0 %v2469
      %v3903 = vpop.f32.mrb[0].mxu0
      %v3904 = vadd.f32 %v2644, %v3903
      %v3905 = vpop.f32.mrb[0].mxu0
      %v3906 = vadd.f32 %v2648, %v3905
      %v3907 = vpop.f32.mrb[0].mxu0
      %v3908 = vadd.f32 %v2644, %v3907
      %v3909 = vpop.f32.mrb[0].mxu0
      %v3910 = vadd.f32 %v2648, %v3909
      %3911 = vmatprep.mubr.bf16.mxu0 %v2473
      %3912 = vmatmul.mubr.bf16.gmra.mrb[0].mxu0 %v2472
      %v3913 = vpop.f32.mrb[0].mxu0
      %v3914 = vadd.f32 %v2644, %v3913
      %v3915 = vpop.f32.mrb[0].mxu0
      %v3916 = vadd.f32 %v2648, %v3915
      %v3917 = vpop.f32.mrb[0].mxu0
      %v3918 = vadd.f32 %v2644, %v3917
      %v3919 = vpop.f32.mrb[0].mxu0
      %v3920 = vadd.f32 %v2648, %v3919
      %3921 = vmatprep.mubr.bf16.mxu0 %v2476
      %3922 = vmatmul.mubr.bf16.gmra.mrb[0].mxu0 %v2475
      %v3923 = vpop.f32.mrb[0].mxu0
      %v3924 = vadd.f32 %v2644, %v3923
      %v3925 = vpop.f32.mrb[0].mxu0
      %v3926 = vadd.f32 %v2648, %v3925
      %v3927 = vpop.f32.mrb[0].mxu0
      %v3928 = vadd.f32 %v2644, %v3927
      %v3929 = vpop.f32.mrb[0].mxu0
      %v3930 = vadd.f32 %v2648, %v3929
      %3931 = vmatprep.mubr.bf16.mxu0 %v2479
      %3932 = vmatmul.mubr.bf16.gmra.mrb[0].mxu0 %v2478
      %v3933 = vpop.f32.mrb[0].mxu0
      %v3934 = vadd.f32 %v2644, %v3933
      %v3935 = vpop.f32.mrb[0].mxu0
      %v3936 = vadd.f32 %v2648, %v3935
      %v3937 = vpop.f32.mrb[0].mxu0
      %v3938 = vadd.f32 %v2644, %v3937
      %v3939 = vpop.f32.mrb[0].mxu0
      %v3940 = vadd.f32 %v2648, %v3939
      %3941 = vmatprep.mubr.bf16.mxu0 %v2482
      %3942 = vmatmul.mubr.bf16.gmra.mrb[0].mxu0 %v2481
      %v3943 = vpop.f32.mrb[0].mxu0
      %v3944 = vadd.f32 %v2644, %v3943
      %v3945 = vpop.f32.mrb[0].mxu0
      %v3946 = vadd.f32 %v2648, %v3945
      %v3947 = vpop.f32.mrb[0].mxu0
      %v3948 = vadd.f32 %v2644, %v3947
      %v3949 = vpop.f32.mrb[0].mxu0
      %v3950 = vadd.f32 %v2648, %v3949
      %3951 = vmatprep.mubr.bf16.mxu0 %v2485
      %3952 = vmatmul.mubr.bf16.gmra.mrb[0].mxu0 %v2484
      %v3953 = vpop.f32.mrb[0].mxu0
      %v3954 = vadd.f32 %v2644, %v3953
      %v3955 = vpop.f32.mrb[0].mxu0
      %v3956 = vadd.f32 %v2648, %v3955
      %v3957 = vpop.f32.mrb[0].mxu0
      %v3958 = vadd.f32 %v2644, %v3957
      %v3959 = vpop.f32.mrb[0].mxu0
      %v3960 = vadd.f32 %v2648, %v3959
      %3961 = vdwg.mxu0
      %3962 = vmatprep.subr.bf16.mxu0 %v3194
      %3963 = vmatpush1.bf16.msra.mxu0 %v3193
      %3964 = vmatprep.subr.bf16.mxu0 %v3200
      %3965 = vmatpush1.bf16.msra.mxu0 %v3199
      %3966 = vmatprep.subr.bf16.mxu0 %v3206
      %3967 = vmatpush1.bf16.msra.mxu0 %v3205
      %3968 = vmatprep.subr.bf16.mxu0 %v3212
      %3969 = vmatpush1.bf16.msra.mxu0 %v3211
      %3970 = vmatprep.subr.bf16.mxu0 %v3218
      %3971 = vmatpush1.bf16.msra.mxu0 %v3217
      %3972 = vmatprep.subr.bf16.mxu0 %v3224
      %3973 = vmatpush1.bf16.msra.mxu0 %v3223
      %3974 = vmatprep.subr.bf16.mxu0 %v3230
      %3975 = vmatpush1.bf16.msra.mxu0 %v3229
      %3976 = vmatprep.subr.bf16.mxu0 %v3236
      %3977 = vmatpush1.bf16.msra.mxu0 %v3235
      %3978 = vmatprep.subr.bf16.mxu0 0
      %3979 = vmatpush1.bf16.msra.mxu0 0
      %3980 = vmatprep.subr.bf16.mxu0 0
      %3981 = vmatpush1.bf16.msra.mxu0 0
      %3982 = vmatprep.subr.bf16.mxu0 0
      %3983 = vmatpush1.bf16.msra.mxu0 0
      %3984 = vmatprep.subr.bf16.mxu0 0
      %3985 = vmatpush1.bf16.msra.mxu0 0
      %3986 = vmatprep.subr.bf16.mxu0 0
      %3987 = vmatpush1.bf16.msra.mxu0 0
      %3988 = vmatprep.subr.bf16.mxu0 0
      %3989 = vmatpush1.bf16.msra.mxu0 0
      %3990 = vmatprep.subr.bf16.mxu0 0
      %3991 = vmatpush1.bf16.msra.mxu0 0
      %3992 = vmatprep.subr.bf16.mxu0 0
      %3993 = vmatpush1.bf16.msra.mxu0 0
      %3994 = vmatprep.mubr.bf16.mxu0 0
      %3995 = vmatmul.mubr.bf16.gmra.mrb[0].mxu0 %v2441
      %v3996 = vpop.f32.mrb[0].mxu0
      %v3997 = vadd.f32 %v3804, %v3996
      %v3998 = vpop.f32.mrb[0].mxu0
      %v3999 = vadd.f32 %v3806, %v3998
      %v4000 = vpop.f32.mrb[0].mxu0
      %v4001 = vadd.f32 %v3808, %v4000
      %v4002 = vpop.f32.mrb[0].mxu0
      %v4003 = vadd.f32 %v3810, %v4002
      %4004 = vmatprep.mubr.bf16.mxu0 0
      %4005 = vmatmul.mubr.bf16.gmra.mrb[0].mxu0 %v2444
      %v4006 = vpop.f32.mrb[0].mxu0
      %v4007 = vadd.f32 %v3814, %v4006
      %v4008 = vpop.f32.mrb[0].mxu0
      %v4009 = vadd.f32 %v3816, %v4008
      %v4010 = vpop.f32.mrb[0].mxu0
      %v4011 = vadd.f32 %v3818, %v4010
      %v4012 = vpop.f32.mrb[0].mxu0
      %v4013 = vadd.f32 %v3820, %v4012
      %4014 = vmatprep.mubr.bf16.mxu0 0
      %4015 = vmatmul.mubr.bf16.gmra.mrb[0].mxu0 %v2447
      %v4016 = vpop.f32.mrb[0].mxu0
      %v4017 = vadd.f32 %v3824, %v4016
      %v4018 = vpop.f32.mrb[0].mxu0
      %v4019 = vadd.f32 %v3826, %v4018
      %v4020 = vpop.f32.mrb[0].mxu0
      %v4021 = vadd.f32 %v3828, %v4020
      %v4022 = vpop.f32.mrb[0].mxu0
      %v4023 = vadd.f32 %v3830, %v4022
      %4024 = vmatprep.mubr.bf16.mxu0 0
      %4025 = vmatmul.mubr.bf16.gmra.mrb[0].mxu0 %v2450
      %v4026 = vpop.f32.mrb[0].mxu0
      %v4027 = vadd.f32 %v3834, %v4026
      %v4028 = vpop.f32.mrb[0].mxu0
      %v4029 = vadd.f32 %v3836, %v4028
      %v4030 = vpop.f32.mrb[0].mxu0
      %v4031 = vadd.f32 %v3838, %v4030
      %v4032 = vpop.f32.mrb[0].mxu0
      %v4033 = vadd.f32 %v3840, %v4032
      %4034 = vmatprep.mubr.bf16.mxu0 0
      %4035 = vmatmul.mubr.bf16.gmra.mrb[0].mxu0 %v2453
      %v4036 = vpop.f32.mrb[0].mxu0
      %v4037 = vadd.f32 %v3844, %v4036
      %v4038 = vpop.f32.mrb[0].mxu0
      %v4039 = vadd.f32 %v3846, %v4038
      %v4040 = vpop.f32.mrb[0].mxu0
      %v4041 = vadd.f32 %v3848, %v4040
      %v4042 = vpop.f32.mrb[0].mxu0
      %v4043 = vadd.f32 %v3850, %v4042
      %4044 = vmatprep.mubr.bf16.mxu0 0
      %4045 = vmatmul.mubr.bf16.gmra.mrb[0].mxu0 %v2456
      %v4046 = vpop.f32.mrb[0].mxu0
      %v4047 = vadd.f32 %v3854, %v4046
      %v4048 = vpop.f32.mrb[0].mxu0
      %v4049 = vadd.f32 %v3856, %v4048
      %v4050 = vpop.f32.mrb[0].mxu0
      %v4051 = vadd.f32 %v3858, %v4050
      %v4052 = vpop.f32.mrb[0].mxu0
      %v4053 = vadd.f32 %v3860, %v4052
      %4054 = vmatprep.mubr.bf16.mxu0 0
      %4055 = vmatmul.mubr.bf16.gmra.mrb[0].mxu0 %v2459
      %v4056 = vpop.f32.mrb[0].mxu0
      %v4057 = vadd.f32 %v3864, %v4056
      %v4058 = vpop.f32.mrb[0].mxu0
      %v4059 = vadd.f32 %v3866, %v4058
      %v4060 = vpop.f32.mrb[0].mxu0
      %v4061 = vadd.f32 %v3868, %v4060
      %v4062 = vpop.f32.mrb[0].mxu0
      %v4063 = vadd.f32 %v3870, %v4062
      %4064 = vmatprep.mubr.bf16.mxu0 0
      %4065 = vmatmul.mubr.bf16.gmra.mrb[0].mxu0 %v2462
      %v4066 = vpop.f32.mrb[0].mxu0
      %v4067 = vadd.f32 %v3874, %v4066
      %v4068 = vpop.f32.mrb[0].mxu0
      %v4069 = vadd.f32 %v3876, %v4068
      %v4070 = vpop.f32.mrb[0].mxu0
      %v4071 = vadd.f32 %v3878, %v4070
      %v4072 = vpop.f32.mrb[0].mxu0
      %v4073 = vadd.f32 %v3880, %v4072
      %4074 = vmatprep.mubr.bf16.mxu0 0
      %4075 = vmatmul.mubr.bf16.gmra.mrb[0].mxu0 %v2465
      %v4076 = vpop.f32.mrb[0].mxu0
      %v4077 = vadd.f32 %v3884, %v4076
      %v4078 = vpop.f32.mrb[0].mxu0
      %v4079 = vadd.f32 %v3886, %v4078
      %v4080 = vpop.f32.mrb[0].mxu0
      %v4081 = vadd.f32 %v3888, %v4080
      %v4082 = vpop.f32.mrb[0].mxu0
      %v4083 = vadd.f32 %v3890, %v4082
      %4084 = vmatprep.mubr.bf16.mxu0 0
      %4085 = vmatmul.mubr.bf16.gmra.mrb[0].mxu0 %v2468
      %v4086 = vpop.f32.mrb[0].mxu0
      %v4087 = vadd.f32 %v3894, %v4086
      %v4088 = vpop.f32.mrb[0].mxu0
      %v4089 = vadd.f32 %v3896, %v4088
      %v4090 = vpop.f32.mrb[0].mxu0
      %v4091 = vadd.f32 %v3898, %v4090
      %v4092 = vpop.f32.mrb[0].mxu0
      %v4093 = vadd.f32 %v3900, %v4092
      %4094 = vmatprep.mubr.bf16.mxu0 0
      %4095 = vmatmul.mubr.bf16.gmra.mrb[0].mxu0 %v2471
      %v4096 = vpop.f32.mrb[0].mxu0
      %v4097 = vadd.f32 %v3904, %v4096
      %v4098 = vpop.f32.mrb[0].mxu0
      %v4099 = vadd.f32 %v3906, %v4098
      %v4100 = vpop.f32.mrb[0].mxu0
      %v4101 = vadd.f32 %v3908, %v4100
      %v4102 = vpop.f32.mrb[0].mxu0
      %v4103 = vadd.f32 %v3910, %v4102
      %4104 = vmatprep.mubr.bf16.mxu0 0
      %4105 = vmatmul.mubr.bf16.gmra.mrb[0].mxu0 %v2474
      %v4106 = vpop.f32.mrb[0].mxu0
      %v4107 = vadd.f32 %v3914, %v4106
      %v4108 = vpop.f32.mrb[0].mxu0
      %v4109 = vadd.f32 %v3916, %v4108
      %v4110 = vpop.f32.mrb[0].mxu0
      %v4111 = vadd.f32 %v3918, %v4110
      %v4112 = vpop.f32.mrb[0].mxu0
      %v4113 = vadd.f32 %v3920, %v4112
      %4114 = vmatprep.mubr.bf16.mxu0 0
      %4115 = vmatmul.mubr.bf16.gmra.mrb[0].mxu0 %v2477
      %v4116 = vpop.f32.mrb[0].mxu0
      %v4117 = vadd.f32 %v3924, %v4116
      %v4118 = vpop.f32.mrb[0].mxu0
      %v4119 = vadd.f32 %v3926, %v4118
      %v4120 = vpop.f32.mrb[0].mxu0
      %v4121 = vadd.f32 %v3928, %v4120
      %v4122 = vpop.f32.mrb[0].mxu0
      %v4123 = vadd.f32 %v3930, %v4122
      %4124 = vmatprep.mubr.bf16.mxu0 0
      %4125 = vmatmul.mubr.bf16.gmra.mrb[0].mxu0 %v2480
      %v4126 = vpop.f32.mrb[0].mxu0
      %v4127 = vadd.f32 %v3934, %v4126
      %v4128 = vpop.f32.mrb[0].mxu0
      %v4129 = vadd.f32 %v3936, %v4128
      %v4130 = vpop.f32.mrb[0].mxu0
      %v4131 = vadd.f32 %v3938, %v4130
      %v4132 = vpop.f32.mrb[0].mxu0
      %v4133 = vadd.f32 %v3940, %v4132
      %4134 = vmatprep.mubr.bf16.mxu0 0
      %4135 = vmatmul.mubr.bf16.gmra.mrb[0].mxu0 %v2483
      %v4136 = vpop.f32.mrb[0].mxu0
      %v4137 = vadd.f32 %v3944, %v4136
      %v4138 = vpop.f32.mrb[0].mxu0
      %v4139 = vadd.f32 %v3946, %v4138
      %v4140 = vpop.f32.mrb[0].mxu0
      %v4141 = vadd.f32 %v3948, %v4140
      %v4142 = vpop.f32.mrb[0].mxu0
      %v4143 = vadd.f32 %v3950, %v4142
      %4144 = vmatprep.mubr.bf16.mxu0 0
      %4145 = vmatmul.mubr.bf16.gmra.mrb[0].mxu0 %v2486
      %v4146 = vpop.f32.mrb[0].mxu0
      %v4147 = vadd.f32 %v3954, %v4146
      %v4148 = vpop.f32.mrb[0].mxu0
      %v4149 = vadd.f32 %v3956, %v4148
      %v4150 = vpop.f32.mrb[0].mxu0
      %v4151 = vadd.f32 %v3958, %v4150
      %v4152 = vpop.f32.mrb[0].mxu0
      %v4153 = vadd.f32 %v3960, %v4152
      %4154 = vdwg.mxu0
      %4155 = vmatprep.subr.bf16.mxu0 %v3100
      %4156 = vmatpush1.bf16.msra.mxu0 %v3099
      %4157 = vmatprep.subr.bf16.mxu0 %v3106
      %4158 = vmatpush1.bf16.msra.mxu0 %v3105
      %4159 = vmatprep.subr.bf16.mxu0 %v3112
      %4160 = vmatpush1.bf16.msra.mxu0 %v3111
      %4161 = vmatprep.subr.bf16.mxu0 %v3118
      %4162 = vmatpush1.bf16.msra.mxu0 %v3117
      %4163 = vmatprep.subr.bf16.mxu0 %v3124
      %4164 = vmatpush1.bf16.msra.mxu0 %v3123
      %4165 = vmatprep.subr.bf16.mxu0 %v3130
      %4166 = vmatpush1.bf16.msra.mxu0 %v3129
      %4167 = vmatprep.subr.bf16.mxu0 %v3136
      %4168 = vmatpush1.bf16.msra.mxu0 %v3135
      %4169 = vmatprep.subr.bf16.mxu0 %v3142
      %4170 = vmatpush1.bf16.msra.mxu0 %v3141
      %4171 = vmatprep.subr.bf16.mxu0 %v3148
      %4172 = vmatpush1.bf16.msra.mxu0 %v3147
      %4173 = vmatprep.subr.bf16.mxu0 %v3154
      %4174 = vmatpush1.bf16.msra.mxu0 %v3153
      %4175 = vmatprep.subr.bf16.mxu0 %v3160
      %4176 = vmatpush1.bf16.msra.mxu0 %v3159
      %4177 = vmatprep.subr.bf16.mxu0 %v3166
      %4178 = vmatpush1.bf16.msra.mxu0 %v3165
      %4179 = vmatprep.subr.bf16.mxu0 %v3172
      %4180 = vmatpush1.bf16.msra.mxu0 %v3171
      %4181 = vmatprep.subr.bf16.mxu0 %v3178
      %4182 = vmatpush1.bf16.msra.mxu0 %v3177
      %4183 = vmatprep.subr.bf16.mxu0 %v3184
      %4184 = vmatpush1.bf16.msra.mxu0 %v3183
      %4185 = vmatprep.subr.bf16.mxu0 %v3190
      %4186 = vmatpush1.bf16.msra.mxu0 %v3189
      %4187 = vmatprep.mubr.bf16.mxu0 %v2440
      %4188 = vmatmul.mubr.bf16.gmra.mrb[0].mxu0 %v2439
      %v4189 = vpop.f32.mrb[0].mxu0
      %v4190 = vadd.f32 %v2652, %v4189
      %v4191 = vpop.f32.mrb[0].mxu0
      %v4192 = vadd.f32 %v2656, %v4191
      %v4193 = vpop.f32.mrb[0].mxu0
      %v4194 = vadd.f32 %v2652, %v4193
      %v4195 = vpop.f32.mrb[0].mxu0
      %v4196 = vadd.f32 %v2656, %v4195
      %4197 = vmatprep.mubr.bf16.mxu0 %v2443
      %4198 = vmatmul.mubr.bf16.gmra.mrb[0].mxu0 %v2442
      %v4199 = vpop.f32.mrb[0].mxu0
      %v4200 = vadd.f32 %v2652, %v4199
      %v4201 = vpop.f32.mrb[0].mxu0
      %v4202 = vadd.f32 %v2656, %v4201
      %v4203 = vpop.f32.mrb[0].mxu0
      %v4204 = vadd.f32 %v2652, %v4203
      %v4205 = vpop.f32.mrb[0].mxu0
      %v4206 = vadd.f32 %v2656, %v4205
      %4207 = vmatprep.mubr.bf16.mxu0 %v2446
      %4208 = vmatmul.mubr.bf16.gmra.mrb[0].mxu0 %v2445
      %v4209 = vpop.f32.mrb[0].mxu0
      %v4210 = vadd.f32 %v2652, %v4209
      %v4211 = vpop.f32.mrb[0].mxu0
      %v4212 = vadd.f32 %v2656, %v4211
      %v4213 = vpop.f32.mrb[0].mxu0
      %v4214 = vadd.f32 %v2652, %v4213
      %v4215 = vpop.f32.mrb[0].mxu0
      %v4216 = vadd.f32 %v2656, %v4215
      %4217 = vmatprep.mubr.bf16.mxu0 %v2449
      %4218 = vmatmul.mubr.bf16.gmra.mrb[0].mxu0 %v2448
      %v4219 = vpop.f32.mrb[0].mxu0
      %v4220 = vadd.f32 %v2652, %v4219
      %v4221 = vpop.f32.mrb[0].mxu0
      %v4222 = vadd.f32 %v2656, %v4221
      %v4223 = vpop.f32.mrb[0].mxu0
      %v4224 = vadd.f32 %v2652, %v4223
      %v4225 = vpop.f32.mrb[0].mxu0
      %v4226 = vadd.f32 %v2656, %v4225
      %4227 = vmatprep.mubr.bf16.mxu0 %v2452
      %4228 = vmatmul.mubr.bf16.gmra.mrb[0].mxu0 %v2451
      %v4229 = vpop.f32.mrb[0].mxu0
      %v4230 = vadd.f32 %v2652, %v4229
      %v4231 = vpop.f32.mrb[0].mxu0
      %v4232 = vadd.f32 %v2656, %v4231
      %v4233 = vpop.f32.mrb[0].mxu0
      %v4234 = vadd.f32 %v2652, %v4233
      %v4235 = vpop.f32.mrb[0].mxu0
      %v4236 = vadd.f32 %v2656, %v4235
      %4237 = vmatprep.mubr.bf16.mxu0 %v2455
      %4238 = vmatmul.mubr.bf16.gmra.mrb[0].mxu0 %v2454
      %v4239 = vpop.f32.mrb[0].mxu0
      %v4240 = vadd.f32 %v2652, %v4239
      %v4241 = vpop.f32.mrb[0].mxu0
      %v4242 = vadd.f32 %v2656, %v4241
      %v4243 = vpop.f32.mrb[0].mxu0
      %v4244 = vadd.f32 %v2652, %v4243
      %v4245 = vpop.f32.mrb[0].mxu0
      %v4246 = vadd.f32 %v2656, %v4245
      %4247 = vmatprep.mubr.bf16.mxu0 %v2458
      %4248 = vmatmul.mubr.bf16.gmra.mrb[0].mxu0 %v2457
      %v4249 = vpop.f32.mrb[0].mxu0
      %v4250 = vadd.f32 %v2652, %v4249
      %v4251 = vpop.f32.mrb[0].mxu0
      %v4252 = vadd.f32 %v2656, %v4251
      %v4253 = vpop.f32.mrb[0].mxu0
      %v4254 = vadd.f32 %v2652, %v4253
      %v4255 = vpop.f32.mrb[0].mxu0
      %v4256 = vadd.f32 %v2656, %v4255
      %4257 = vmatprep.mubr.bf16.mxu0 %v2461
      %4258 = vmatmul.mubr.bf16.gmra.mrb[0].mxu0 %v2460
      %v4259 = vpop.f32.mrb[0].mxu0
      %v4260 = vadd.f32 %v2652, %v4259
      %v4261 = vpop.f32.mrb[0].mxu0
      %v4262 = vadd.f32 %v2656, %v4261
      %v4263 = vpop.f32.mrb[0].mxu0
      %v4264 = vadd.f32 %v2652, %v4263
      %v4265 = vpop.f32.mrb[0].mxu0
      %v4266 = vadd.f32 %v2656, %v4265
      %4267 = vmatprep.mubr.bf16.mxu0 %v2464
      %4268 = vmatmul.mubr.bf16.gmra.mrb[0].mxu0 %v2463
      %v4269 = vpop.f32.mrb[0].mxu0
      %v4270 = vadd.f32 %v2652, %v4269
      %v4271 = vpop.f32.mrb[0].mxu0
      %v4272 = vadd.f32 %v2656, %v4271
      %v4273 = vpop.f32.mrb[0].mxu0
      %v4274 = vadd.f32 %v2652, %v4273
      %v4275 = vpop.f32.mrb[0].mxu0
      %v4276 = vadd.f32 %v2656, %v4275
      %4277 = vmatprep.mubr.bf16.mxu0 %v2467
      %4278 = vmatmul.mubr.bf16.gmra.mrb[0].mxu0 %v2466
      %v4279 = vpop.f32.mrb[0].mxu0
      %v4280 = vadd.f32 %v2652, %v4279
      %v4281 = vpop.f32.mrb[0].mxu0
      %v4282 = vadd.f32 %v2656, %v4281
      %v4283 = vpop.f32.mrb[0].mxu0
      %v4284 = vadd.f32 %v2652, %v4283
      %v4285 = vpop.f32.mrb[0].mxu0
      %v4286 = vadd.f32 %v2656, %v4285
      %4287 = vmatprep.mubr.bf16.mxu0 %v2470
      %4288 = vmatmul.mubr.bf16.gmra.mrb[0].mxu0 %v2469
      %v4289 = vpop.f32.mrb[0].mxu0
      %v4290 = vadd.f32 %v2652, %v4289
      %v4291 = vpop.f32.mrb[0].mxu0
      %v4292 = vadd.f32 %v2656, %v4291
      %v4293 = vpop.f32.mrb[0].mxu0
      %v4294 = vadd.f32 %v2652, %v4293
      %v4295 = vpop.f32.mrb[0].mxu0
      %v4296 = vadd.f32 %v2656, %v4295
      %4297 = vmatprep.mubr.bf16.mxu0 %v2473
      %4298 = vmatmul.mubr.bf16.gmra.mrb[0].mxu0 %v2472
      %v4299 = vpop.f32.mrb[0].mxu0
      %v4300 = vadd.f32 %v2652, %v4299
      %v4301 = vpop.f32.mrb[0].mxu0
      %v4302 = vadd.f32 %v2656, %v4301
      %v4303 = vpop.f32.mrb[0].mxu0
      %v4304 = vadd.f32 %v2652, %v4303
      %v4305 = vpop.f32.mrb[0].mxu0
      %v4306 = vadd.f32 %v2656, %v4305
      %4307 = vmatprep.mubr.bf16.mxu0 %v2476
      %4308 = vmatmul.mubr.bf16.gmra.mrb[0].mxu0 %v2475
      %v4309 = vpop.f32.mrb[0].mxu0
      %v4310 = vadd.f32 %v2652, %v4309
      %v4311 = vpop.f32.mrb[0].mxu0
      %v4312 = vadd.f32 %v2656, %v4311
      %v4313 = vpop.f32.mrb[0].mxu0
      %v4314 = vadd.f32 %v2652, %v4313
      %v4315 = vpop.f32.mrb[0].mxu0
      %v4316 = vadd.f32 %v2656, %v4315
      %4317 = vmatprep.mubr.bf16.mxu0 %v2479
      %4318 = vmatmul.mubr.bf16.gmra.mrb[0].mxu0 %v2478
      %v4319 = vpop.f32.mrb[0].mxu0
      %v4320 = vadd.f32 %v2652, %v4319
      %v4321 = vpop.f32.mrb[0].mxu0
      %v4322 = vadd.f32 %v2656, %v4321
      %v4323 = vpop.f32.mrb[0].mxu0
      %v4324 = vadd.f32 %v2652, %v4323
      %v4325 = vpop.f32.mrb[0].mxu0
      %v4326 = vadd.f32 %v2656, %v4325
      %4327 = vmatprep.mubr.bf16.mxu0 %v2482
      %4328 = vmatmul.mubr.bf16.gmra.mrb[0].mxu0 %v2481
      %v4329 = vpop.f32.mrb[0].mxu0
      %v4330 = vadd.f32 %v2652, %v4329
      %v4331 = vpop.f32.mrb[0].mxu0
      %v4332 = vadd.f32 %v2656, %v4331
      %v4333 = vpop.f32.mrb[0].mxu0
      %v4334 = vadd.f32 %v2652, %v4333
      %v4335 = vpop.f32.mrb[0].mxu0
      %v4336 = vadd.f32 %v2656, %v4335
      %4337 = vmatprep.mubr.bf16.mxu0 %v2485
      %4338 = vmatmul.mubr.bf16.gmra.mrb[0].mxu0 %v2484
      %v4339 = vpop.f32.mrb[0].mxu0
      %v4340 = vadd.f32 %v2652, %v4339
      %v4341 = vpop.f32.mrb[0].mxu0
      %v4342 = vadd.f32 %v2656, %v4341
      %v4343 = vpop.f32.mrb[0].mxu0
      %v4344 = vadd.f32 %v2652, %v4343
      %v4345 = vpop.f32.mrb[0].mxu0
      %v4346 = vadd.f32 %v2656, %v4345
      %4347 = vdwg.mxu0
      %4348 = vmatprep.subr.bf16.mxu0 %v3196
      %4349 = vmatpush1.bf16.msra.mxu0 %v3195
      %4350 = vmatprep.subr.bf16.mxu0 %v3202
      %4351 = vmatpush1.bf16.msra.mxu0 %v3201
      %4352 = vmatprep.subr.bf16.mxu0 %v3208
      %4353 = vmatpush1.bf16.msra.mxu0 %v3207
      %4354 = vmatprep.subr.bf16.mxu0 %v3214
      %4355 = vmatpush1.bf16.msra.mxu0 %v3213
      %4356 = vmatprep.subr.bf16.mxu0 %v3220
      %4357 = vmatpush1.bf16.msra.mxu0 %v3219
      %4358 = vmatprep.subr.bf16.mxu0 %v3226
      %4359 = vmatpush1.bf16.msra.mxu0 %v3225
      %4360 = vmatprep.subr.bf16.mxu0 %v3232
      %4361 = vmatpush1.bf16.msra.mxu0 %v3231
      %4362 = vmatprep.subr.bf16.mxu0 %v3238
      %4363 = vmatpush1.bf16.msra.mxu0 %v3237
      %4364 = vmatprep.subr.bf16.mxu0 0
      %4365 = vmatpush1.bf16.msra.mxu0 0
      %4366 = vmatprep.subr.bf16.mxu0 0
      %4367 = vmatpush1.bf16.msra.mxu0 0
      %4368 = vmatprep.subr.bf16.mxu0 0
      %4369 = vmatpush1.bf16.msra.mxu0 0
      %4370 = vmatprep.subr.bf16.mxu0 0
      %4371 = vmatpush1.bf16.msra.mxu0 0
      %4372 = vmatprep.subr.bf16.mxu0 0
      %4373 = vmatpush1.bf16.msra.mxu0 0
      %4374 = vmatprep.subr.bf16.mxu0 0
      %4375 = vmatpush1.bf16.msra.mxu0 0
      %4376 = vmatprep.subr.bf16.mxu0 0
      %4377 = vmatpush1.bf16.msra.mxu0 0
      %4378 = vmatprep.subr.bf16.mxu0 0
      %4379 = vmatpush1.bf16.msra.mxu0 0
      %4380 = vmatprep.mubr.bf16.mxu0 0
      %4381 = vmatmul.mubr.bf16.gmra.mrb[0].mxu0 %v2441
      %v4382 = vpop.f32.mrb[0].mxu0
      %v4383 = vadd.f32 %v4190, %v4382
      %v4384 = vpop.f32.mrb[0].mxu0
      %v4385 = vadd.f32 %v4192, %v4384
      %v4386 = vpop.f32.mrb[0].mxu0
      %v4387 = vadd.f32 %v4194, %v4386
      %v4388 = vpop.f32.mrb[0].mxu0
      %v4389 = vadd.f32 %v4196, %v4388
      %4390 = vmatprep.mubr.bf16.mxu0 0
      %4391 = vmatmul.mubr.bf16.gmra.mrb[0].mxu0 %v2444
      %v4392 = vpop.f32.mrb[0].mxu0
      %v4393 = vadd.f32 %v4200, %v4392
      %v4394 = vpop.f32.mrb[0].mxu0
      %v4395 = vadd.f32 %v4202, %v4394
      %v4396 = vpop.f32.mrb[0].mxu0
      %v4397 = vadd.f32 %v4204, %v4396
      %v4398 = vpop.f32.mrb[0].mxu0
      %v4399 = vadd.f32 %v4206, %v4398
      %4400 = vmatprep.mubr.bf16.mxu0 0
      %4401 = vmatmul.mubr.bf16.gmra.mrb[0].mxu0 %v2447
      %v4402 = vpop.f32.mrb[0].mxu0
      %v4403 = vadd.f32 %v4210, %v4402
      %v4404 = vpop.f32.mrb[0].mxu0
      %v4405 = vadd.f32 %v4212, %v4404
      %v4406 = vpop.f32.mrb[0].mxu0
      %v4407 = vadd.f32 %v4214, %v4406
      %v4408 = vpop.f32.mrb[0].mxu0
      %v4409 = vadd.f32 %v4216, %v4408
      %4410 = vmatprep.mubr.bf16.mxu0 0
      %4411 = vmatmul.mubr.bf16.gmra.mrb[0].mxu0 %v2450
      %v4412 = vpop.f32.mrb[0].mxu0
      %v4413 = vadd.f32 %v4220, %v4412
      %v4414 = vpop.f32.mrb[0].mxu0
      %v4415 = vadd.f32 %v4222, %v4414
      %v4416 = vpop.f32.mrb[0].mxu0
      %v4417 = vadd.f32 %v4224, %v4416
      %v4418 = vpop.f32.mrb[0].mxu0
      %v4419 = vadd.f32 %v4226, %v4418
      %4420 = vmatprep.mubr.bf16.mxu0 0
      %4421 = vmatmul.mubr.bf16.gmra.mrb[0].mxu0 %v2453
      %v4422 = vpop.f32.mrb[0].mxu0
      %v4423 = vadd.f32 %v4230, %v4422
      %v4424 = vpop.f32.mrb[0].mxu0
      %v4425 = vadd.f32 %v4232, %v4424
      %v4426 = vpop.f32.mrb[0].mxu0
      %v4427 = vadd.f32 %v4234, %v4426
      %v4428 = vpop.f32.mrb[0].mxu0
      %v4429 = vadd.f32 %v4236, %v4428
      %4430 = vmatprep.mubr.bf16.mxu0 0
      %4431 = vmatmul.mubr.bf16.gmra.mrb[0].mxu0 %v2456
      %v4432 = vpop.f32.mrb[0].mxu0
      %v4433 = vadd.f32 %v4240, %v4432
      %v4434 = vpop.f32.mrb[0].mxu0
      %v4435 = vadd.f32 %v4242, %v4434
      %v4436 = vpop.f32.mrb[0].mxu0
      %v4437 = vadd.f32 %v4244, %v4436
      %v4438 = vpop.f32.mrb[0].mxu0
      %v4439 = vadd.f32 %v4246, %v4438
      %4440 = vmatprep.mubr.bf16.mxu0 0
      %4441 = vmatmul.mubr.bf16.gmra.mrb[0].mxu0 %v2459
      %v4442 = vpop.f32.mrb[0].mxu0
      %v4443 = vadd.f32 %v4250, %v4442
      %v4444 = vpop.f32.mrb[0].mxu0
      %v4445 = vadd.f32 %v4252, %v4444
      %v4446 = vpop.f32.mrb[0].mxu0
      %v4447 = vadd.f32 %v4254, %v4446
      %v4448 = vpop.f32.mrb[0].mxu0
      %v4449 = vadd.f32 %v4256, %v4448
      %4450 = vmatprep.mubr.bf16.mxu0 0
      %4451 = vmatmul.mubr.bf16.gmra.mrb[0].mxu0 %v2462
      %v4452 = vpop.f32.mrb[0].mxu0
      %v4453 = vadd.f32 %v4260, %v4452
      %v4454 = vpop.f32.mrb[0].mxu0
      %v4455 = vadd.f32 %v4262, %v4454
      %v4456 = vpop.f32.mrb[0].mxu0
      %v4457 = vadd.f32 %v4264, %v4456
      %v4458 = vpop.f32.mrb[0].mxu0
      %v4459 = vadd.f32 %v4266, %v4458
      %4460 = vmatprep.mubr.bf16.mxu0 0
      %4461 = vmatmul.mubr.bf16.gmra.mrb[0].mxu0 %v2465
      %v4462 = vpop.f32.mrb[0].mxu0
      %v4463 = vadd.f32 %v4270, %v4462
      %v4464 = vpop.f32.mrb[0].mxu0
      %v4465 = vadd.f32 %v4272, %v4464
      %v4466 = vpop.f32.mrb[0].mxu0
      %v4467 = vadd.f32 %v4274, %v4466
      %v4468 = vpop.f32.mrb[0].mxu0
      %v4469 = vadd.f32 %v4276, %v4468
      %4470 = vmatprep.mubr.bf16.mxu0 0
      %4471 = vmatmul.mubr.bf16.gmra.mrb[0].mxu0 %v2468
      %v4472 = vpop.f32.mrb[0].mxu0
      %v4473 = vadd.f32 %v4280, %v4472
      %v4474 = vpop.f32.mrb[0].mxu0
      %v4475 = vadd.f32 %v4282, %v4474
      %v4476 = vpop.f32.mrb[0].mxu0
      %v4477 = vadd.f32 %v4284, %v4476
      %v4478 = vpop.f32.mrb[0].mxu0
      %v4479 = vadd.f32 %v4286, %v4478
      %4480 = vmatprep.mubr.bf16.mxu0 0
      %4481 = vmatmul.mubr.bf16.gmra.mrb[0].mxu0 %v2471
      %v4482 = vpop.f32.mrb[0].mxu0
      %v4483 = vadd.f32 %v4290, %v4482
      %v4484 = vpop.f32.mrb[0].mxu0
      %v4485 = vadd.f32 %v4292, %v4484
      %v4486 = vpop.f32.mrb[0].mxu0
      %v4487 = vadd.f32 %v4294, %v4486
      %v4488 = vpop.f32.mrb[0].mxu0
      %v4489 = vadd.f32 %v4296, %v4488
      %4490 = vmatprep.mubr.bf16.mxu0 0
      %4491 = vmatmul.mubr.bf16.gmra.mrb[0].mxu0 %v2474
      %v4492 = vpop.f32.mrb[0].mxu0
      %v4493 = vadd.f32 %v4300, %v4492
      %v4494 = vpop.f32.mrb[0].mxu0
      %v4495 = vadd.f32 %v4302, %v4494
      %v4496 = vpop.f32.mrb[0].mxu0
      %v4497 = vadd.f32 %v4304, %v4496
      %v4498 = vpop.f32.mrb[0].mxu0
      %v4499 = vadd.f32 %v4306, %v4498
      %4500 = vmatprep.mubr.bf16.mxu0 0
      %4501 = vmatmul.mubr.bf16.gmra.mrb[0].mxu0 %v2477
      %v4502 = vpop.f32.mrb[0].mxu0
      %v4503 = vadd.f32 %v4310, %v4502
      %v4504 = vpop.f32.mrb[0].mxu0
      %v4505 = vadd.f32 %v4312, %v4504
      %v4506 = vpop.f32.mrb[0].mxu0
      %v4507 = vadd.f32 %v4314, %v4506
      %v4508 = vpop.f32.mrb[0].mxu0
      %v4509 = vadd.f32 %v4316, %v4508
      %4510 = vmatprep.mubr.bf16.mxu0 0
      %4511 = vmatmul.mubr.bf16.gmra.mrb[0].mxu0 %v2480
      %v4512 = vpop.f32.mrb[0].mxu0
      %v4513 = vadd.f32 %v4320, %v4512
      %v4514 = vpop.f32.mrb[0].mxu0
      %v4515 = vadd.f32 %v4322, %v4514
      %v4516 = vpop.f32.mrb[0].mxu0
      %v4517 = vadd.f32 %v4324, %v4516
      %v4518 = vpop.f32.mrb[0].mxu0
      %v4519 = vadd.f32 %v4326, %v4518
      %4520 = vmatprep.mubr.bf16.mxu0 0
      %4521 = vmatmul.mubr.bf16.gmra.mrb[0].mxu0 %v2483
      %v4522 = vpop.f32.mrb[0].mxu0
      %v4523 = vadd.f32 %v4330, %v4522
      %v4524 = vpop.f32.mrb[0].mxu0
      %v4525 = vadd.f32 %v4332, %v4524
      %v4526 = vpop.f32.mrb[0].mxu0
      %v4527 = vadd.f32 %v4334, %v4526
      %v4528 = vpop.f32.mrb[0].mxu0
      %v4529 = vadd.f32 %v4336, %v4528
      %4530 = vmatprep.mubr.bf16.mxu0 0
      %4531 = vmatmul.mubr.bf16.gmra.mrb[0].mxu0 %v2486
      %v4532 = vpop.f32.mrb[0].mxu0
      %v4533 = vadd.f32 %v4340, %v4532
      %v4534 = vpop.f32.mrb[0].mxu0
      %v4535 = vadd.f32 %v4342, %v4534
      %v4536 = vpop.f32.mrb[0].mxu0
      %v4537 = vadd.f32 %v4344, %v4536
      %v4538 = vpop.f32.mrb[0].mxu0
      %v4539 = vadd.f32 %v4346, %v4538
      %4540 = vdwg.mxu0
      %vm4541 = vcmp.ge.f32.partialorder %v3611, 0.0
      %vm4542 = vcmp.ge.f32.partialorder %v3613, 0.0
      %vm4543 = vcmp.ge.f32.partialorder %v3997, 0.0
      %vm4544 = vcmp.ge.f32.partialorder %v3999, 0.0
      %vm4545 = vcmp.ge.f32.partialorder %v4383, 0.0
      %vm4546 = vcmp.ge.f32.partialorder %v4385, 0.0
      %vm4547 = vcmp.ge.f32.partialorder %v3615, 0.0
      %vm4548 = vcmp.ge.f32.partialorder %v3617, 0.0
      %vm4549 = vcmp.ge.f32.partialorder %v4001, 0.0
      %vm4550 = vcmp.ge.f32.partialorder %v4003, 0.0
      %vm4551 = vcmp.ge.f32.partialorder %v4387, 0.0
      %vm4552 = vcmp.ge.f32.partialorder %v4389, 0.0
      %vm4553 = vcmp.ge.f32.partialorder %v3621, 0.0
      %vm4554 = vcmp.ge.f32.partialorder %v3623, 0.0
      %vm4555 = vcmp.ge.f32.partialorder %v4007, 0.0
      %vm4556 = vcmp.ge.f32.partialorder %v4009, 0.0
      %vm4557 = vcmp.ge.f32.partialorder %v4393, 0.0
      %vm4558 = vcmp.ge.f32.partialorder %v4395, 0.0
      %vm4559 = vcmp.ge.f32.partialorder %v3625, 0.0
      %vm4560 = vcmp.ge.f32.partialorder %v3627, 0.0
      %vm4561 = vcmp.ge.f32.partialorder %v4011, 0.0
      %vm4562 = vcmp.ge.f32.partialorder %v4013, 0.0
      %vm4563 = vcmp.ge.f32.partialorder %v4397, 0.0
      %vm4564 = vcmp.ge.f32.partialorder %v4399, 0.0
      %vm4565 = vcmp.ge.f32.partialorder %v3631, 0.0
      %vm4566 = vcmp.ge.f32.partialorder %v3633, 0.0
      %vm4567 = vcmp.ge.f32.partialorder %v4017, 0.0
      %vm4568 = vcmp.ge.f32.partialorder %v4019, 0.0
      %vm4569 = vcmp.ge.f32.partialorder %v4403, 0.0
      %vm4570 = vcmp.ge.f32.partialorder %v4405, 0.0
      %vm4571 = vcmp.ge.f32.partialorder %v3635, 0.0
      %vm4572 = vcmp.ge.f32.partialorder %v3637, 0.0
      %vm4573 = vcmp.ge.f32.partialorder %v4021, 0.0
      %vm4574 = vcmp.ge.f32.partialorder %v4023, 0.0
      %vm4575 = vcmp.ge.f32.partialorder %v4407, 0.0
      %vm4576 = vcmp.ge.f32.partialorder %v4409, 0.0
      %vm4577 = vcmp.ge.f32.partialorder %v3641, 0.0
      %vm4578 = vcmp.ge.f32.partialorder %v3643, 0.0
      %vm4579 = vcmp.ge.f32.partialorder %v4027, 0.0
      %vm4580 = vcmp.ge.f32.partialorder %v4029, 0.0
      %vm4581 = vcmp.ge.f32.partialorder %v4413, 0.0
      %vm4582 = vcmp.ge.f32.partialorder %v4415, 0.0
      %vm4583 = vcmp.ge.f32.partialorder %v3645, 0.0
      %vm4584 = vcmp.ge.f32.partialorder %v3647, 0.0
      %vm4585 = vcmp.ge.f32.partialorder %v4031, 0.0
      %vm4586 = vcmp.ge.f32.partialorder %v4033, 0.0
      %vm4587 = vcmp.ge.f32.partialorder %v4417, 0.0
      %vm4588 = vcmp.ge.f32.partialorder %v4419, 0.0
      %vm4589 = vcmp.ge.f32.partialorder %v3651, 0.0
      %vm4590 = vcmp.ge.f32.partialorder %v3653, 0.0
      %vm4591 = vcmp.ge.f32.partialorder %v4037, 0.0
      %vm4592 = vcmp.ge.f32.partialorder %v4039, 0.0
      %vm4593 = vcmp.ge.f32.partialorder %v4423, 0.0
      %vm4594 = vcmp.ge.f32.partialorder %v4425, 0.0
      %vm4595 = vcmp.ge.f32.partialorder %v3655, 0.0
      %vm4596 = vcmp.ge.f32.partialorder %v3657, 0.0
      %vm4597 = vcmp.ge.f32.partialorder %v4041, 0.0
      %vm4598 = vcmp.ge.f32.partialorder %v4043, 0.0
      %vm4599 = vcmp.ge.f32.partialorder %v4427, 0.0
      %vm4600 = vcmp.ge.f32.partialorder %v4429, 0.0
      %vm4601 = vcmp.ge.f32.partialorder %v3661, 0.0
      %vm4602 = vcmp.ge.f32.partialorder %v3663, 0.0
      %vm4603 = vcmp.ge.f32.partialorder %v4047, 0.0
      %vm4604 = vcmp.ge.f32.partialorder %v4049, 0.0
      %vm4605 = vcmp.ge.f32.partialorder %v4433, 0.0
      %vm4606 = vcmp.ge.f32.partialorder %v4435, 0.0
      %vm4607 = vcmp.ge.f32.partialorder %v3665, 0.0
      %vm4608 = vcmp.ge.f32.partialorder %v3667, 0.0
      %vm4609 = vcmp.ge.f32.partialorder %v4051, 0.0
      %vm4610 = vcmp.ge.f32.partialorder %v4053, 0.0
      %vm4611 = vcmp.ge.f32.partialorder %v4437, 0.0
      %vm4612 = vcmp.ge.f32.partialorder %v4439, 0.0
      %vm4613 = vcmp.ge.f32.partialorder %v3671, 0.0
      %vm4614 = vcmp.ge.f32.partialorder %v3673, 0.0
      %vm4615 = vcmp.ge.f32.partialorder %v4057, 0.0
      %vm4616 = vcmp.ge.f32.partialorder %v4059, 0.0
      %vm4617 = vcmp.ge.f32.partialorder %v4443, 0.0
      %vm4618 = vcmp.ge.f32.partialorder %v4445, 0.0
      %vm4619 = vcmp.ge.f32.partialorder %v3675, 0.0
      %vm4620 = vcmp.ge.f32.partialorder %v3677, 0.0
      %vm4621 = vcmp.ge.f32.partialorder %v4061, 0.0
      %vm4622 = vcmp.ge.f32.partialorder %v4063, 0.0
      %vm4623 = vcmp.ge.f32.partialorder %v4447, 0.0
      %vm4624 = vcmp.ge.f32.partialorder %v4449, 0.0
      %vm4625 = vcmp.ge.f32.partialorder %v3681, 0.0
      %vm4626 = vcmp.ge.f32.partialorder %v3683, 0.0
      %vm4627 = vcmp.ge.f32.partialorder %v4067, 0.0
      %vm4628 = vcmp.ge.f32.partialorder %v4069, 0.0
      %vm4629 = vcmp.ge.f32.partialorder %v4453, 0.0
      %vm4630 = vcmp.ge.f32.partialorder %v4455, 0.0
      %vm4631 = vcmp.ge.f32.partialorder %v3685, 0.0
      %vm4632 = vcmp.ge.f32.partialorder %v3687, 0.0
      %vm4633 = vcmp.ge.f32.partialorder %v4071, 0.0
      %vm4634 = vcmp.ge.f32.partialorder %v4073, 0.0
      %vm4635 = vcmp.ge.f32.partialorder %v4457, 0.0
      %vm4636 = vcmp.ge.f32.partialorder %v4459, 0.0
      %vm4637 = vcmp.ge.f32.partialorder %v3691, 0.0
      %vm4638 = vcmp.ge.f32.partialorder %v3693, 0.0
      %vm4639 = vcmp.ge.f32.partialorder %v4077, 0.0
      %vm4640 = vcmp.ge.f32.partialorder %v4079, 0.0
      %vm4641 = vcmp.ge.f32.partialorder %v4463, 0.0
      %vm4642 = vcmp.ge.f32.partialorder %v4465, 0.0
      %vm4643 = vcmp.ge.f32.partialorder %v3695, 0.0
      %vm4644 = vcmp.ge.f32.partialorder %v3697, 0.0
      %vm4645 = vcmp.ge.f32.partialorder %v4081, 0.0
      %vm4646 = vcmp.ge.f32.partialorder %v4083, 0.0
      %vm4647 = vcmp.ge.f32.partialorder %v4467, 0.0
      %vm4648 = vcmp.ge.f32.partialorder %v4469, 0.0
      %vm4649 = vcmp.ge.f32.partialorder %v3701, 0.0
      %vm4650 = vcmp.ge.f32.partialorder %v3703, 0.0
      %vm4651 = vcmp.ge.f32.partialorder %v4087, 0.0
      %vm4652 = vcmp.ge.f32.partialorder %v4089, 0.0
      %vm4653 = vcmp.ge.f32.partialorder %v4473, 0.0
      %vm4654 = vcmp.ge.f32.partialorder %v4475, 0.0
      %vm4655 = vcmp.ge.f32.partialorder %v3705, 0.0
      %vm4656 = vcmp.ge.f32.partialorder %v3707, 0.0
      %vm4657 = vcmp.ge.f32.partialorder %v4091, 0.0
      %vm4658 = vcmp.ge.f32.partialorder %v4093, 0.0
      %vm4659 = vcmp.ge.f32.partialorder %v4477, 0.0
      %vm4660 = vcmp.ge.f32.partialorder %v4479, 0.0
      %vm4661 = vcmp.ge.f32.partialorder %v3711, 0.0
      %vm4662 = vcmp.ge.f32.partialorder %v3713, 0.0
      %vm4663 = vcmp.ge.f32.partialorder %v4097, 0.0
      %vm4664 = vcmp.ge.f32.partialorder %v4099, 0.0
      %vm4665 = vcmp.ge.f32.partialorder %v4483, 0.0
      %vm4666 = vcmp.ge.f32.partialorder %v4485, 0.0
      %vm4667 = vcmp.ge.f32.partialorder %v3715, 0.0
      %vm4668 = vcmp.ge.f32.partialorder %v3717, 0.0
      %vm4669 = vcmp.ge.f32.partialorder %v4101, 0.0
      %vm4670 = vcmp.ge.f32.partialorder %v4103, 0.0
      %vm4671 = vcmp.ge.f32.partialorder %v4487, 0.0
      %vm4672 = vcmp.ge.f32.partialorder %v4489, 0.0
      %vm4673 = vcmp.ge.f32.partialorder %v3721, 0.0
      %vm4674 = vcmp.ge.f32.partialorder %v3723, 0.0
      %vm4675 = vcmp.ge.f32.partialorder %v4107, 0.0
      %vm4676 = vcmp.ge.f32.partialorder %v4109, 0.0
      %vm4677 = vcmp.ge.f32.partialorder %v4493, 0.0
      %vm4678 = vcmp.ge.f32.partialorder %v4495, 0.0
      %vm4679 = vcmp.ge.f32.partialorder %v3725, 0.0
      %vm4680 = vcmp.ge.f32.partialorder %v3727, 0.0
      %vm4681 = vcmp.ge.f32.partialorder %v4111, 0.0
      %vm4682 = vcmp.ge.f32.partialorder %v4113, 0.0
      %vm4683 = vcmp.ge.f32.partialorder %v4497, 0.0
      %vm4684 = vcmp.ge.f32.partialorder %v4499, 0.0
      %vm4685 = vcmp.ge.f32.partialorder %v3731, 0.0
      %vm4686 = vcmp.ge.f32.partialorder %v3733, 0.0
      %vm4687 = vcmp.ge.f32.partialorder %v4117, 0.0
      %vm4688 = vcmp.ge.f32.partialorder %v4119, 0.0
      %vm4689 = vcmp.ge.f32.partialorder %v4503, 0.0
      %vm4690 = vcmp.ge.f32.partialorder %v4505, 0.0
      %vm4691 = vcmp.ge.f32.partialorder %v3735, 0.0
      %vm4692 = vcmp.ge.f32.partialorder %v3737, 0.0
      %vm4693 = vcmp.ge.f32.partialorder %v4121, 0.0
      %vm4694 = vcmp.ge.f32.partialorder %v4123, 0.0
      %vm4695 = vcmp.ge.f32.partialorder %v4507, 0.0
      %vm4696 = vcmp.ge.f32.partialorder %v4509, 0.0
      %vm4697 = vcmp.ge.f32.partialorder %v3741, 0.0
      %vm4698 = vcmp.ge.f32.partialorder %v3743, 0.0
      %vm4699 = vcmp.ge.f32.partialorder %v4127, 0.0
      %vm4700 = vcmp.ge.f32.partialorder %v4129, 0.0
      %vm4701 = vcmp.ge.f32.partialorder %v4513, 0.0
      %vm4702 = vcmp.ge.f32.partialorder %v4515, 0.0
      %vm4703 = vcmp.ge.f32.partialorder %v3745, 0.0
      %vm4704 = vcmp.ge.f32.partialorder %v3747, 0.0
      %vm4705 = vcmp.ge.f32.partialorder %v4131, 0.0
      %vm4706 = vcmp.ge.f32.partialorder %v4133, 0.0
      %vm4707 = vcmp.ge.f32.partialorder %v4517, 0.0
      %vm4708 = vcmp.ge.f32.partialorder %v4519, 0.0
      %vm4709 = vcmp.ge.f32.partialorder %v3751, 0.0
      %vm4710 = vcmp.ge.f32.partialorder %v3753, 0.0
      %vm4711 = vcmp.ge.f32.partialorder %v4137, 0.0
      %vm4712 = vcmp.ge.f32.partialorder %v4139, 0.0
      %vm4713 = vcmp.ge.f32.partialorder %v4523, 0.0
      %vm4714 = vcmp.ge.f32.partialorder %v4525, 0.0
      %vm4715 = vcmp.ge.f32.partialorder %v3755, 0.0
      %vm4716 = vcmp.ge.f32.partialorder %v3757, 0.0
      %vm4717 = vcmp.ge.f32.partialorder %v4141, 0.0
      %vm4718 = vcmp.ge.f32.partialorder %v4143, 0.0
      %vm4719 = vcmp.ge.f32.partialorder %v4527, 0.0
      %vm4720 = vcmp.ge.f32.partialorder %v4529, 0.0
      %vm4721 = vcmp.ge.f32.partialorder %v3761, 0.0
      %vm4722 = vcmp.ge.f32.partialorder %v3763, 0.0
      %vm4723 = vcmp.ge.f32.partialorder %v4147, 0.0
      %vm4724 = vcmp.ge.f32.partialorder %v4149, 0.0
      %vm4725 = vcmp.ge.f32.partialorder %v4533, 0.0
      %vm4726 = vcmp.ge.f32.partialorder %v4535, 0.0
      %vm4727 = vcmp.ge.f32.partialorder %v3765, 0.0
      %vm4728 = vcmp.ge.f32.partialorder %v3767, 0.0
      %vm4729 = vcmp.ge.f32.partialorder %v4151, 0.0
      %vm4730 = vcmp.ge.f32.partialorder %v4153, 0.0
      %vm4731 = vcmp.ge.f32.partialorder %v4537, 0.0
      %vm4732 = vcmp.ge.f32.partialorder %v4539, 0.0
      %v4733 = vmul.f32 %v3611, 0.01
      %v4734 = vmul.f32 %v3613, 0.01
      %v4735 = vmul.f32 %v3997, 0.01
      %v4736 = vmul.f32 %v3999, 0.01
      %v4737 = vmul.f32 %v4383, 0.01
      %v4738 = vmul.f32 %v4385, 0.01
      %v4739 = vmul.f32 %v3615, 0.01
      %v4740 = vmul.f32 %v3617, 0.01
      %v4741 = vmul.f32 %v4001, 0.01
      %v4742 = vmul.f32 %v4003, 0.01
      %v4743 = vmul.f32 %v4387, 0.01
      %v4744 = vmul.f32 %v4389, 0.01
      %v4745 = vmul.f32 %v3621, 0.01
      %v4746 = vmul.f32 %v3623, 0.01
      %v4747 = vmul.f32 %v4007, 0.01
      %v4748 = vmul.f32 %v4009, 0.01
      %v4749 = vmul.f32 %v4393, 0.01
      %v4750 = vmul.f32 %v4395, 0.01
      %v4751 = vmul.f32 %v3625, 0.01
      %v4752 = vmul.f32 %v3627, 0.01
      %v4753 = vmul.f32 %v4011, 0.01
      %v4754 = vmul.f32 %v4013, 0.01
      %v4755 = vmul.f32 %v4397, 0.01
      %v4756 = vmul.f32 %v4399, 0.01
      %v4757 = vmul.f32 %v3631, 0.01
      %v4758 = vmul.f32 %v3633, 0.01
      %v4759 = vmul.f32 %v4017, 0.01
      %v4760 = vmul.f32 %v4019, 0.01
      %v4761 = vmul.f32 %v4403, 0.01
      %v4762 = vmul.f32 %v4405, 0.01
      %v4763 = vmul.f32 %v3635, 0.01
      %v4764 = vmul.f32 %v3637, 0.01
      %v4765 = vmul.f32 %v4021, 0.01
      %v4766 = vmul.f32 %v4023, 0.01
      %v4767 = vmul.f32 %v4407, 0.01
      %v4768 = vmul.f32 %v4409, 0.01
      %v4769 = vmul.f32 %v3641, 0.01
      %v4770 = vmul.f32 %v3643, 0.01
      %v4771 = vmul.f32 %v4027, 0.01
      %v4772 = vmul.f32 %v4029, 0.01
      %v4773 = vmul.f32 %v4413, 0.01
      %v4774 = vmul.f32 %v4415, 0.01
      %v4775 = vmul.f32 %v3645, 0.01
      %v4776 = vmul.f32 %v3647, 0.01
      %v4777 = vmul.f32 %v4031, 0.01
      %v4778 = vmul.f32 %v4033, 0.01
      %v4779 = vmul.f32 %v4417, 0.01
      %v4780 = vmul.f32 %v4419, 0.01
      %v4781 = vmul.f32 %v3651, 0.01
      %v4782 = vmul.f32 %v3653, 0.01
      %v4783 = vmul.f32 %v4037, 0.01
      %v4784 = vmul.f32 %v4039, 0.01
      %v4785 = vmul.f32 %v4423, 0.01
      %v4786 = vmul.f32 %v4425, 0.01
      %v4787 = vmul.f32 %v3655, 0.01
      %v4788 = vmul.f32 %v3657, 0.01
      %v4789 = vmul.f32 %v4041, 0.01
      %v4790 = vmul.f32 %v4043, 0.01
      %v4791 = vmul.f32 %v4427, 0.01
      %v4792 = vmul.f32 %v4429, 0.01
      %v4793 = vmul.f32 %v3661, 0.01
      %v4794 = vmul.f32 %v3663, 0.01
      %v4795 = vmul.f32 %v4047, 0.01
      %v4796 = vmul.f32 %v4049, 0.01
      %v4797 = vmul.f32 %v4433, 0.01
      %v4798 = vmul.f32 %v4435, 0.01
      %v4799 = vmul.f32 %v3665, 0.01
      %v4800 = vmul.f32 %v3667, 0.01
      %v4801 = vmul.f32 %v4051, 0.01
      %v4802 = vmul.f32 %v4053, 0.01
      %v4803 = vmul.f32 %v4437, 0.01
      %v4804 = vmul.f32 %v4439, 0.01
      %v4805 = vmul.f32 %v3671, 0.01
      %v4806 = vmul.f32 %v3673, 0.01
      %v4807 = vmul.f32 %v4057, 0.01
      %v4808 = vmul.f32 %v4059, 0.01
      %v4809 = vmul.f32 %v4443, 0.01
      %v4810 = vmul.f32 %v4445, 0.01
      %v4811 = vmul.f32 %v3675, 0.01
      %v4812 = vmul.f32 %v3677, 0.01
      %v4813 = vmul.f32 %v4061, 0.01
      %v4814 = vmul.f32 %v4063, 0.01
      %v4815 = vmul.f32 %v4447, 0.01
      %v4816 = vmul.f32 %v4449, 0.01
      %v4817 = vmul.f32 %v3681, 0.01
      %v4818 = vmul.f32 %v3683, 0.01
      %v4819 = vmul.f32 %v4067, 0.01
      %v4820 = vmul.f32 %v4069, 0.01
      %v4821 = vmul.f32 %v4453, 0.01
      %v4822 = vmul.f32 %v4455, 0.01
      %v4823 = vmul.f32 %v3685, 0.01
      %v4824 = vmul.f32 %v3687, 0.01
      %v4825 = vmul.f32 %v4071, 0.01
      %v4826 = vmul.f32 %v4073, 0.01
      %v4827 = vmul.f32 %v4457, 0.01
      %v4828 = vmul.f32 %v4459, 0.01
      %v4829 = vmul.f32 %v3691, 0.01
      %v4830 = vmul.f32 %v3693, 0.01
      %v4831 = vmul.f32 %v4077, 0.01
      %v4832 = vmul.f32 %v4079, 0.01
      %v4833 = vmul.f32 %v4463, 0.01
      %v4834 = vmul.f32 %v4465, 0.01
      %v4835 = vmul.f32 %v3695, 0.01
      %v4836 = vmul.f32 %v3697, 0.01
      %v4837 = vmul.f32 %v4081, 0.01
      %v4838 = vmul.f32 %v4083, 0.01
      %v4839 = vmul.f32 %v4467, 0.01
      %v4840 = vmul.f32 %v4469, 0.01
      %v4841 = vmul.f32 %v3701, 0.01
      %v4842 = vmul.f32 %v3703, 0.01
      %v4843 = vmul.f32 %v4087, 0.01
      %v4844 = vmul.f32 %v4089, 0.01
      %v4845 = vmul.f32 %v4473, 0.01
      %v4846 = vmul.f32 %v4475, 0.01
      %v4847 = vmul.f32 %v3705, 0.01
      %v4848 = vmul.f32 %v3707, 0.01
      %v4849 = vmul.f32 %v4091, 0.01
      %v4850 = vmul.f32 %v4093, 0.01
      %v4851 = vmul.f32 %v4477, 0.01
      %v4852 = vmul.f32 %v4479, 0.01
      %v4853 = vmul.f32 %v3711, 0.01
      %v4854 = vmul.f32 %v3713, 0.01
      %v4855 = vmul.f32 %v4097, 0.01
      %v4856 = vmul.f32 %v4099, 0.01
      %v4857 = vmul.f32 %v4483, 0.01
      %v4858 = vmul.f32 %v4485, 0.01
      %v4859 = vmul.f32 %v3715, 0.01
      %v4860 = vmul.f32 %v3717, 0.01
      %v4861 = vmul.f32 %v4101, 0.01
      %v4862 = vmul.f32 %v4103, 0.01
      %v4863 = vmul.f32 %v4487, 0.01
      %v4864 = vmul.f32 %v4489, 0.01
      %v4865 = vmul.f32 %v3721, 0.01
      %v4866 = vmul.f32 %v3723, 0.01
      %v4867 = vmul.f32 %v4107, 0.01
      %v4868 = vmul.f32 %v4109, 0.01
      %v4869 = vmul.f32 %v4493, 0.01
      %v4870 = vmul.f32 %v4495, 0.01
      %v4871 = vmul.f32 %v3725, 0.01
      %v4872 = vmul.f32 %v3727, 0.01
      %v4873 = vmul.f32 %v4111, 0.01
      %v4874 = vmul.f32 %v4113, 0.01
      %v4875 = vmul.f32 %v4497, 0.01
      %v4876 = vmul.f32 %v4499, 0.01
      %v4877 = vmul.f32 %v3731, 0.01
      %v4878 = vmul.f32 %v3733, 0.01
      %v4879 = vmul.f32 %v4117, 0.01
      %v4880 = vmul.f32 %v4119, 0.01
      %v4881 = vmul.f32 %v4503, 0.01
      %v4882 = vmul.f32 %v4505, 0.01
      %v4883 = vmul.f32 %v3735, 0.01
      %v4884 = vmul.f32 %v3737, 0.01
      %v4885 = vmul.f32 %v4121, 0.01
      %v4886 = vmul.f32 %v4123, 0.01
      %v4887 = vmul.f32 %v4507, 0.01
      %v4888 = vmul.f32 %v4509, 0.01
      %v4889 = vmul.f32 %v3741, 0.01
      %v4890 = vmul.f32 %v3743, 0.01
      %v4891 = vmul.f32 %v4127, 0.01
      %v4892 = vmul.f32 %v4129, 0.01
      %v4893 = vmul.f32 %v4513, 0.01
      %v4894 = vmul.f32 %v4515, 0.01
      %v4895 = vmul.f32 %v3745, 0.01
      %v4896 = vmul.f32 %v3747, 0.01
      %v4897 = vmul.f32 %v4131, 0.01
      %v4898 = vmul.f32 %v4133, 0.01
      %v4899 = vmul.f32 %v4517, 0.01
      %v4900 = vmul.f32 %v4519, 0.01
      %v4901 = vmul.f32 %v3751, 0.01
      %v4902 = vmul.f32 %v3753, 0.01
      %v4903 = vmul.f32 %v4137, 0.01
      %v4904 = vmul.f32 %v4139, 0.01
      %v4905 = vmul.f32 %v4523, 0.01
      %v4906 = vmul.f32 %v4525, 0.01
      %v4907 = vmul.f32 %v3755, 0.01
      %v4908 = vmul.f32 %v3757, 0.01
      %v4909 = vmul.f32 %v4141, 0.01
      %v4910 = vmul.f32 %v4143, 0.01
      %v4911 = vmul.f32 %v4527, 0.01
      %v4912 = vmul.f32 %v4529, 0.01
      %v4913 = vmul.f32 %v3761, 0.01
      %v4914 = vmul.f32 %v3763, 0.01
      %v4915 = vmul.f32 %v4147, 0.01
      %v4916 = vmul.f32 %v4149, 0.01
      %v4917 = vmul.f32 %v4533, 0.01
      %v4918 = vmul.f32 %v4535, 0.01
      %v4919 = vmul.f32 %v3765, 0.01
      %v4920 = vmul.f32 %v3767, 0.01
      %v4921 = vmul.f32 %v4151, 0.01
      %v4922 = vmul.f32 %v4153, 0.01
      %v4923 = vmul.f32 %v4537, 0.01
      %v4924 = vmul.f32 %v4539, 0.01
      %v4925 = vsel %vm4541, %v3611, %v4733
      %v4926 = vsel %vm4542, %v3613, %v4734
      %v4927 = vsel %vm4543, %v3997, %v4735
      %v4928 = vsel %vm4544, %v3999, %v4736
      %v4929 = vsel %vm4545, %v4383, %v4737
      %v4930 = vsel %vm4546, %v4385, %v4738
      %v4931 = vsel %vm4547, %v3615, %v4739
      %v4932 = vsel %vm4548, %v3617, %v4740
      %v4933 = vsel %vm4549, %v4001, %v4741
      %v4934 = vsel %vm4550, %v4003, %v4742
      %v4935 = vsel %vm4551, %v4387, %v4743
      %v4936 = vsel %vm4552, %v4389, %v4744
      %v4937 = vsel %vm4553, %v3621, %v4745
      %v4938 = vsel %vm4554, %v3623, %v4746
      %v4939 = vsel %vm4555, %v4007, %v4747
      %v4940 = vsel %vm4556, %v4009, %v4748
      %v4941 = vsel %vm4557, %v4393, %v4749
      %v4942 = vsel %vm4558, %v4395, %v4750
      %v4943 = vsel %vm4559, %v3625, %v4751
      %v4944 = vsel %vm4560, %v3627, %v4752
      %v4945 = vsel %vm4561, %v4011, %v4753
      %v4946 = vsel %vm4562, %v4013, %v4754
      %v4947 = vsel %vm4563, %v4397, %v4755
      %v4948 = vsel %vm4564, %v4399, %v4756
      %v4949 = vsel %vm4565, %v3631, %v4757
      %v4950 = vsel %vm4566, %v3633, %v4758
      %v4951 = vsel %vm4567, %v4017, %v4759
      %v4952 = vsel %vm4568, %v4019, %v4760
      %v4953 = vsel %vm4569, %v4403, %v4761
      %v4954 = vsel %vm4570, %v4405, %v4762
      %v4955 = vsel %vm4571, %v3635, %v4763
      %v4956 = vsel %vm4572, %v3637, %v4764
      %v4957 = vsel %vm4573, %v4021, %v4765
      %v4958 = vsel %vm4574, %v4023, %v4766
      %v4959 = vsel %vm4575, %v4407, %v4767
      %v4960 = vsel %vm4576, %v4409, %v4768
      %v4961 = vsel %vm4577, %v3641, %v4769
      %v4962 = vsel %vm4578, %v3643, %v4770
      %v4963 = vsel %vm4579, %v4027, %v4771
      %v4964 = vsel %vm4580, %v4029, %v4772
      %v4965 = vsel %vm4581, %v4413, %v4773
      %v4966 = vsel %vm4582, %v4415, %v4774
      %v4967 = vsel %vm4583, %v3645, %v4775
      %v4968 = vsel %vm4584, %v3647, %v4776
      %v4969 = vsel %vm4585, %v4031, %v4777
      %v4970 = vsel %vm4586, %v4033, %v4778
      %v4971 = vsel %vm4587, %v4417, %v4779
      %v4972 = vsel %vm4588, %v4419, %v4780
      %v4973 = vsel %vm4589, %v3651, %v4781
      %v4974 = vsel %vm4590, %v3653, %v4782
      %v4975 = vsel %vm4591, %v4037, %v4783
      %v4976 = vsel %vm4592, %v4039, %v4784
      %v4977 = vsel %vm4593, %v4423, %v4785
      %v4978 = vsel %vm4594, %v4425, %v4786
      %v4979 = vsel %vm4595, %v3655, %v4787
      %v4980 = vsel %vm4596, %v3657, %v4788
      %v4981 = vsel %vm4597, %v4041, %v4789
      %v4982 = vsel %vm4598, %v4043, %v4790
      %v4983 = vsel %vm4599, %v4427, %v4791
      %v4984 = vsel %vm4600, %v4429, %v4792
      %v4985 = vsel %vm4601, %v3661, %v4793
      %v4986 = vsel %vm4602, %v3663, %v4794
      %v4987 = vsel %vm4603, %v4047, %v4795
      %v4988 = vsel %vm4604, %v4049, %v4796
      %v4989 = vsel %vm4605, %v4433, %v4797
      %v4990 = vsel %vm4606, %v4435, %v4798
      %v4991 = vsel %vm4607, %v3665, %v4799
      %v4992 = vsel %vm4608, %v3667, %v4800
      %v4993 = vsel %vm4609, %v4051, %v4801
      %v4994 = vsel %vm4610, %v4053, %v4802
      %v4995 = vsel %vm4611, %v4437, %v4803
      %v4996 = vsel %vm4612, %v4439, %v4804
      %v4997 = vsel %vm4613, %v3671, %v4805
      %v4998 = vsel %vm4614, %v3673, %v4806
      %v4999 = vsel %vm4615, %v4057, %v4807
      %v5000 = vsel %vm4616, %v4059, %v4808
      %v5001 = vsel %vm4617, %v4443, %v4809
      %v5002 = vsel %vm4618, %v4445, %v4810
      %v5003 = vsel %vm4619, %v3675, %v4811
      %v5004 = vsel %vm4620, %v3677, %v4812
      %v5005 = vsel %vm4621, %v4061, %v4813
      %v5006 = vsel %vm4622, %v4063, %v4814
      %v5007 = vsel %vm4623, %v4447, %v4815
      %v5008 = vsel %vm4624, %v4449, %v4816
      %v5009 = vsel %vm4625, %v3681, %v4817
      %v5010 = vsel %vm4626, %v3683, %v4818
      %v5011 = vsel %vm4627, %v4067, %v4819
      %v5012 = vsel %vm4628, %v4069, %v4820
      %v5013 = vsel %vm4629, %v4453, %v4821
      %v5014 = vsel %vm4630, %v4455, %v4822
      %v5015 = vsel %vm4631, %v3685, %v4823
      %v5016 = vsel %vm4632, %v3687, %v4824
      %v5017 = vsel %vm4633, %v4071, %v4825
      %v5018 = vsel %vm4634, %v4073, %v4826
      %v5019 = vsel %vm4635, %v4457, %v4827
      %v5020 = vsel %vm4636, %v4459, %v4828
      %v5021 = vsel %vm4637, %v3691, %v4829
      %v5022 = vsel %vm4638, %v3693, %v4830
      %v5023 = vsel %vm4639, %v4077, %v4831
      %v5024 = vsel %vm4640, %v4079, %v4832
      %v5025 = vsel %vm4641, %v4463, %v4833
      %v5026 = vsel %vm4642, %v4465, %v4834
      %v5027 = vsel %vm4643, %v3695, %v4835
      %v5028 = vsel %vm4644, %v3697, %v4836
      %v5029 = vsel %vm4645, %v4081, %v4837
      %v5030 = vsel %vm4646, %v4083, %v4838
      %v5031 = vsel %vm4647, %v4467, %v4839
      %v5032 = vsel %vm4648, %v4469, %v4840
      %v5033 = vsel %vm4649, %v3701, %v4841
      %v5034 = vsel %vm4650, %v3703, %v4842
      %v5035 = vsel %vm4651, %v4087, %v4843
      %v5036 = vsel %vm4652, %v4089, %v4844
      %v5037 = vsel %vm4653, %v4473, %v4845
      %v5038 = vsel %vm4654, %v4475, %v4846
      %v5039 = vsel %vm4655, %v3705, %v4847
      %v5040 = vsel %vm4656, %v3707, %v4848
      %v5041 = vsel %vm4657, %v4091, %v4849
      %v5042 = vsel %vm4658, %v4093, %v4850
      %v5043 = vsel %vm4659, %v4477, %v4851
      %v5044 = vsel %vm4660, %v4479, %v4852
      %v5045 = vsel %vm4661, %v3711, %v4853
      %v5046 = vsel %vm4662, %v3713, %v4854
      %v5047 = vsel %vm4663, %v4097, %v4855
      %v5048 = vsel %vm4664, %v4099, %v4856
      %v5049 = vsel %vm4665, %v4483, %v4857
      %v5050 = vsel %vm4666, %v4485, %v4858
      %v5051 = vsel %vm4667, %v3715, %v4859
      %v5052 = vsel %vm4668, %v3717, %v4860
      %v5053 = vsel %vm4669, %v4101, %v4861
      %v5054 = vsel %vm4670, %v4103, %v4862
      %v5055 = vsel %vm4671, %v4487, %v4863
      %v5056 = vsel %vm4672, %v4489, %v4864
      %v5057 = vsel %vm4673, %v3721, %v4865
      %v5058 = vsel %vm4674, %v3723, %v4866
      %v5059 = vsel %vm4675, %v4107, %v4867
      %v5060 = vsel %vm4676, %v4109, %v4868
      %v5061 = vsel %vm4677, %v4493, %v4869
      %v5062 = vsel %vm4678, %v4495, %v4870
      %v5063 = vsel %vm4679, %v3725, %v4871
      %v5064 = vsel %vm4680, %v3727, %v4872
      %v5065 = vsel %vm4681, %v4111, %v4873
      %v5066 = vsel %vm4682, %v4113, %v4874
      %v5067 = vsel %vm4683, %v4497, %v4875
      %v5068 = vsel %vm4684, %v4499, %v4876
      %v5069 = vsel %vm4685, %v3731, %v4877
      %v5070 = vsel %vm4686, %v3733, %v4878
      %v5071 = vsel %vm4687, %v4117, %v4879
      %v5072 = vsel %vm4688, %v4119, %v4880
      %v5073 = vsel %vm4689, %v4503, %v4881
      %v5074 = vsel %vm4690, %v4505, %v4882
      %v5075 = vsel %vm4691, %v3735, %v4883
      %v5076 = vsel %vm4692, %v3737, %v4884
      %v5077 = vsel %vm4693, %v4121, %v4885
      %v5078 = vsel %vm4694, %v4123, %v4886
      %v5079 = vsel %vm4695, %v4507, %v4887
      %v5080 = vsel %vm4696, %v4509, %v4888
      %v5081 = vsel %vm4697, %v3741, %v4889
      %v5082 = vsel %vm4698, %v3743, %v4890
      %v5083 = vsel %vm4699, %v4127, %v4891
      %v5084 = vsel %vm4700, %v4129, %v4892
      %v5085 = vsel %vm4701, %v4513, %v4893
      %v5086 = vsel %vm4702, %v4515, %v4894
      %v5087 = vsel %vm4703, %v3745, %v4895
      %v5088 = vsel %vm4704, %v3747, %v4896
      %v5089 = vsel %vm4705, %v4131, %v4897
      %v5090 = vsel %vm4706, %v4133, %v4898
      %v5091 = vsel %vm4707, %v4517, %v4899
      %v5092 = vsel %vm4708, %v4519, %v4900
      %v5093 = vsel %vm4709, %v3751, %v4901
      %v5094 = vsel %vm4710, %v3753, %v4902
      %v5095 = vsel %vm4711, %v4137, %v4903
      %v5096 = vsel %vm4712, %v4139, %v4904
      %v5097 = vsel %vm4713, %v4523, %v4905
      %v5098 = vsel %vm4714, %v4525, %v4906
      %v5099 = vsel %vm4715, %v3755, %v4907
      %v5100 = vsel %vm4716, %v3757, %v4908
      %v5101 = vsel %vm4717, %v4141, %v4909
      %v5102 = vsel %vm4718, %v4143, %v4910
      %v5103 = vsel %vm4719, %v4527, %v4911
      %v5104 = vsel %vm4720, %v4529, %v4912
      %v5105 = vsel %vm4721, %v3761, %v4913
      %v5106 = vsel %vm4722, %v3763, %v4914
      %v5107 = vsel %vm4723, %v4147, %v4915
      %v5108 = vsel %vm4724, %v4149, %v4916
      %v5109 = vsel %vm4725, %v4533, %v4917
      %v5110 = vsel %vm4726, %v4535, %v4918
      %v5111 = vsel %vm4727, %v3765, %v4919
      %v5112 = vsel %vm4728, %v3767, %v4920
      %v5113 = vsel %vm4729, %v4151, %v4921
      %v5114 = vsel %vm4730, %v4153, %v4922
      %v5115 = vsel %vm4731, %v4537, %v4923
      %v5116 = vsel %vm4732, %v4539, %v4924
      %v5117 = vpack.c.bf16 %v4931, %v4925
      %v5118 = vpack.c.bf16 %v4932, %v4926
      %v5119 = vpack.c.bf16 %v4933, %v4927
      %v5120 = vpack.c.bf16 %v4934, %v4928
      %v5121 = vpack.c.bf16 %v4935, %v4929
      %v5122 = vpack.c.bf16 %v4936, %v4930
      %v5123 = vpack.c.bf16 %v4943, %v4937
      %v5124 = vpack.c.bf16 %v4944, %v4938
      %v5125 = vpack.c.bf16 %v4945, %v4939
      %v5126 = vpack.c.bf16 %v4946, %v4940
      %v5127 = vpack.c.bf16 %v4947, %v4941
      %v5128 = vpack.c.bf16 %v4948, %v4942
      %v5129 = vpack.c.bf16 %v4955, %v4949
      %v5130 = vpack.c.bf16 %v4956, %v4950
      %v5131 = vpack.c.bf16 %v4957, %v4951
      %v5132 = vpack.c.bf16 %v4958, %v4952
      %v5133 = vpack.c.bf16 %v4959, %v4953
      %v5134 = vpack.c.bf16 %v4960, %v4954
      %v5135 = vpack.c.bf16 %v4967, %v4961
      %v5136 = vpack.c.bf16 %v4968, %v4962
      %v5137 = vpack.c.bf16 %v4969, %v4963
      %v5138 = vpack.c.bf16 %v4970, %v4964
      %v5139 = vpack.c.bf16 %v4971, %v4965
      %v5140 = vpack.c.bf16 %v4972, %v4966
      %v5141 = vpack.c.bf16 %v4979, %v4973
      %v5142 = vpack.c.bf16 %v4980, %v4974
      %v5143 = vpack.c.bf16 %v4981, %v4975
      %v5144 = vpack.c.bf16 %v4982, %v4976
      %v5145 = vpack.c.bf16 %v4983, %v4977
      %v5146 = vpack.c.bf16 %v4984, %v4978
      %v5147 = vpack.c.bf16 %v4991, %v4985
      %v5148 = vpack.c.bf16 %v4992, %v4986
      %v5149 = vpack.c.bf16 %v4993, %v4987
      %v5150 = vpack.c.bf16 %v4994, %v4988
      %v5151 = vpack.c.bf16 %v4995, %v4989
      %v5152 = vpack.c.bf16 %v4996, %v4990
      %v5153 = vpack.c.bf16 %v5003, %v4997
      %v5154 = vpack.c.bf16 %v5004, %v4998
      %v5155 = vpack.c.bf16 %v5005, %v4999
      %v5156 = vpack.c.bf16 %v5006, %v5000
      %v5157 = vpack.c.bf16 %v5007, %v5001
      %v5158 = vpack.c.bf16 %v5008, %v5002
      %v5159 = vpack.c.bf16 %v5015, %v5009
      %v5160 = vpack.c.bf16 %v5016, %v5010
      %v5161 = vpack.c.bf16 %v5017, %v5011
      %v5162 = vpack.c.bf16 %v5018, %v5012
      %v5163 = vpack.c.bf16 %v5019, %v5013
      %v5164 = vpack.c.bf16 %v5020, %v5014
      %v5165 = vpack.c.bf16 %v5027, %v5021
      %v5166 = vpack.c.bf16 %v5028, %v5022
      %v5167 = vpack.c.bf16 %v5029, %v5023
      %v5168 = vpack.c.bf16 %v5030, %v5024
      %v5169 = vpack.c.bf16 %v5031, %v5025
      %v5170 = vpack.c.bf16 %v5032, %v5026
      %v5171 = vpack.c.bf16 %v5039, %v5033
      %v5172 = vpack.c.bf16 %v5040, %v5034
      %v5173 = vpack.c.bf16 %v5041, %v5035
      %v5174 = vpack.c.bf16 %v5042, %v5036
      %v5175 = vpack.c.bf16 %v5043, %v5037
      %v5176 = vpack.c.bf16 %v5044, %v5038
      %v5177 = vpack.c.bf16 %v5051, %v5045
      %v5178 = vpack.c.bf16 %v5052, %v5046
      %v5179 = vpack.c.bf16 %v5053, %v5047
      %v5180 = vpack.c.bf16 %v5054, %v5048
      %v5181 = vpack.c.bf16 %v5055, %v5049
      %v5182 = vpack.c.bf16 %v5056, %v5050
      %v5183 = vpack.c.bf16 %v5063, %v5057
      %v5184 = vpack.c.bf16 %v5064, %v5058
      %v5185 = vpack.c.bf16 %v5065, %v5059
      %v5186 = vpack.c.bf16 %v5066, %v5060
      %v5187 = vpack.c.bf16 %v5067, %v5061
      %v5188 = vpack.c.bf16 %v5068, %v5062
      %v5189 = vpack.c.bf16 %v5075, %v5069
      %v5190 = vpack.c.bf16 %v5076, %v5070
      %v5191 = vpack.c.bf16 %v5077, %v5071
      %v5192 = vpack.c.bf16 %v5078, %v5072
      %v5193 = vpack.c.bf16 %v5079, %v5073
      %v5194 = vpack.c.bf16 %v5080, %v5074
      %v5195 = vpack.c.bf16 %v5087, %v5081
      %v5196 = vpack.c.bf16 %v5088, %v5082
      %v5197 = vpack.c.bf16 %v5089, %v5083
      %v5198 = vpack.c.bf16 %v5090, %v5084
      %v5199 = vpack.c.bf16 %v5091, %v5085
      %v5200 = vpack.c.bf16 %v5092, %v5086
      %v5201 = vpack.c.bf16 %v5099, %v5093
      %v5202 = vpack.c.bf16 %v5100, %v5094
      %v5203 = vpack.c.bf16 %v5101, %v5095
      %v5204 = vpack.c.bf16 %v5102, %v5096
      %v5205 = vpack.c.bf16 %v5103, %v5097
      %v5206 = vpack.c.bf16 %v5104, %v5098
      %v5207 = vpack.c.bf16 %v5111, %v5105
      %v5208 = vpack.c.bf16 %v5112, %v5106
      %v5209 = vpack.c.bf16 %v5113, %v5107
      %v5210 = vpack.c.bf16 %v5114, %v5108
      %v5211 = vpack.c.bf16 %v5115, %v5109
      %v5212 = vpack.c.bf16 %v5116, %v5110
      %v5213 = vld [vmem:[%s9] sm:$0xff]
      %v5214 = vld [vmem:[%s9 + $0x8] sm:$0xf]
      %v5215 = vld [vmem:[%s9 + $0xc] sm:$0xff]
      %v5216 = vld [vmem:[%s9 + $0x14] sm:$0xf]
      %v5217 = vld [vmem:[%s9 + $0x18] sm:$0xff]
      %v5218 = vld [vmem:[%s9 + $0x20] sm:$0xf]
      %v5219 = vld [vmem:[%s9 + $0x24] sm:$0xff]
      %v5220 = vld [vmem:[%s9 + $0x2c] sm:$0xf]
      %v5221 = vld [vmem:[%s9 + $0x30] sm:$0xff]
      %v5222 = vld [vmem:[%s9 + $0x38] sm:$0xf]
      %v5223 = vld [vmem:[%s9 + $0x3c] sm:$0xff]
      %v5224 = vld [vmem:[%s9 + $0x44] sm:$0xf]
      %v5225 = vld [vmem:[%s9 + $0x48] sm:$0xff]
      %v5226 = vld [vmem:[%s9 + $0x50] sm:$0xf]
      %v5227 = vld [vmem:[%s9 + $0x54] sm:$0xff]
      %v5228 = vld [vmem:[%s9 + $0x5c] sm:$0xf]
      %v5229 = vld [vmem:[%s9 + $0x60] sm:$0xff]
      %v5230 = vld [vmem:[%s9 + $0x68] sm:$0xf]
      %v5231 = vld [vmem:[%s9 + $0x6c] sm:$0xff]
      %v5232 = vld [vmem:[%s9 + $0x74] sm:$0xf]
      %v5233 = vld [vmem:[%s9 + $0x78] sm:$0xff]
      %v5234 = vld [vmem:[%s9 + $0x80] sm:$0xf]
      %v5235 = vld [vmem:[%s9 + $0x84] sm:$0xff]
      %v5236 = vld [vmem:[%s9 + $0x8c] sm:$0xf]
      %v5237 = vld [vmem:[%s9 + $0x90] sm:$0xff]
      %v5238 = vld [vmem:[%s9 + $0x98] sm:$0xf]
      %v5239 = vld [vmem:[%s9 + $0x9c] sm:$0xff]
      %v5240 = vld [vmem:[%s9 + $0xa4] sm:$0xf]
      %v5241 = vld [vmem:[%s9 + $0xa8] sm:$0xff]
      %v5242 = vld [vmem:[%s9 + $0xb0] sm:$0xf]
      %v5243 = vld [vmem:[%s9 + $0xb4] sm:$0xff]
      %v5244 = vld [vmem:[%s9 + $0xbc] sm:$0xf]
      %v5245 = vld [vmem:[%s9 + $0xc0] sm:$0xff]
      %v5246 = vld [vmem:[%s9 + $0xc8] sm:$0xf]
      %v5247 = vld [vmem:[%s9 + $0xcc] sm:$0xff]
      %v5248 = vld [vmem:[%s9 + $0xd4] sm:$0xf]
      %v5249 = vld [vmem:[%s9 + $0xd8] sm:$0xff]
      %v5250 = vld [vmem:[%s9 + $0xe0] sm:$0xf]
      %v5251 = vld [vmem:[%s9 + $0xe4] sm:$0xff]
      %v5252 = vld [vmem:[%s9 + $0xec] sm:$0xf]
      %v5253 = vld [vmem:[%s9 + $0xf0] sm:$0xff]
      %v5254 = vld [vmem:[%s9 + $0xf8] sm:$0xf]
      %v5255 = vld [vmem:[%s9 + $0xfc] sm:$0xff]
      %v5256 = vld [vmem:[%s9 + $0x104] sm:$0xf]
      %v5257 = vld [vmem:[%s9 + $0x108] sm:$0xff]
      %v5258 = vld [vmem:[%s9 + $0x110] sm:$0xf]
      %v5259 = vld [vmem:[%s9 + $0x114] sm:$0xff]
      %v5260 = vld [vmem:[%s9 + $0x11c] sm:$0xf]
      %v5261 = vld [vmem:[%s9 + $0x120] sm:$0xff]
      %v5262 = vld [vmem:[%s9 + $0x128] sm:$0xf]
      %v5263 = vld [vmem:[%s9 + $0x12c] sm:$0xff]
      %v5264 = vld [vmem:[%s9 + $0x134] sm:$0xf]
      %v5265 = vld [vmem:[%s9 + $0x138] sm:$0xff]
      %v5266 = vld [vmem:[%s9 + $0x140] sm:$0xf]
      %v5267 = vld [vmem:[%s9 + $0x144] sm:$0xff]
      %v5268 = vld [vmem:[%s9 + $0x14c] sm:$0xf]
      %v5269 = vld [vmem:[%s9 + $0x150] sm:$0xff]
      %v5270 = vld [vmem:[%s9 + $0x158] sm:$0xf]
      %v5271 = vld [vmem:[%s9 + $0x15c] sm:$0xff]
      %v5272 = vld [vmem:[%s9 + $0x164] sm:$0xf]
      %v5273 = vld [vmem:[%s9 + $0x168] sm:$0xff]
      %v5274 = vld [vmem:[%s9 + $0x170] sm:$0xf]
      %v5275 = vld [vmem:[%s9 + $0x174] sm:$0xff]
      %v5276 = vld [vmem:[%s9 + $0x17c] sm:$0xf]
      %v5277 = vld [vmem:[%s9 + $0x180] sm:$0xff]
      %v5278 = vld [vmem:[%s9 + $0x188] sm:$0xf]
      %v5279 = vld [vmem:[%s9 + $0x18c] sm:$0xff]
      %v5280 = vld [vmem:[%s9 + $0x194] sm:$0xf]
      %v5281 = vld [vmem:[%s9 + $0x198] sm:$0xff]
      %v5282 = vld [vmem:[%s9 + $0x1a0] sm:$0xf]
      %v5283 = vld [vmem:[%s9 + $0x1a4] sm:$0xff]
      %v5284 = vld [vmem:[%s9 + $0x1ac] sm:$0xf]
      %v5285 = vld [vmem:[%s9 + $0x1b0] sm:$0xff]
      %v5286 = vld [vmem:[%s9 + $0x1b8] sm:$0xf]
      %v5287 = vld [vmem:[%s9 + $0x1bc] sm:$0xff]
      %v5288 = vld [vmem:[%s9 + $0x1c4] sm:$0xf]
      %v5289 = vld [vmem:[%s9 + $0x1c8] sm:$0xff]
      %v5290 = vld [vmem:[%s9 + $0x1d0] sm:$0xf]
      %v5291 = vld [vmem:[%s9 + $0x1d4] sm:$0xff]
      %v5292 = vld [vmem:[%s9 + $0x1dc] sm:$0xf]
      %v5293 = vld [vmem:[%s9 + $0x1e0] sm:$0xff]
      %v5294 = vld [vmem:[%s9 + $0x1e8] sm:$0xf]
      %v5295 = vld [vmem:[%s9 + $0x1ec] sm:$0xff]
      %v5296 = vld [vmem:[%s9 + $0x1f4] sm:$0xf]
      %v5297 = vld [vmem:[%s9 + $0x1f8] sm:$0xff]
      %v5298 = vld [vmem:[%s9 + $0x200] sm:$0xf]
      %v5299 = vld [vmem:[%s9 + $0x204] sm:$0xff]
      %v5300 = vld [vmem:[%s9 + $0x20c] sm:$0xf]
      %v5301 = vld [vmem:[%s9 + $0x210] sm:$0xff]
      %v5302 = vld [vmem:[%s9 + $0x218] sm:$0xf]
      %v5303 = vld [vmem:[%s9 + $0x21c] sm:$0xff]
      %v5304 = vld [vmem:[%s9 + $0x224] sm:$0xf]
      %v5305 = vld [vmem:[%s9 + $0x228] sm:$0xff]
      %v5306 = vld [vmem:[%s9 + $0x230] sm:$0xf]
      %v5307 = vld [vmem:[%s9 + $0x234] sm:$0xff]
      %v5308 = vld [vmem:[%s9 + $0x23c] sm:$0xf]
      %v5309 = vld [vmem:[%s9 + $0x240] sm:$0xff]
      %v5310 = vld [vmem:[%s9 + $0x248] sm:$0xf]
      %v5311 = vld [vmem:[%s9 + $0x24c] sm:$0xff]
      %v5312 = vld [vmem:[%s9 + $0x254] sm:$0xf]
      %v5313 = vld [vmem:[%s9 + $0x258] sm:$0xff]
      %v5314 = vld [vmem:[%s9 + $0x260] sm:$0xf]
      %v5315 = vld [vmem:[%s9 + $0x264] sm:$0xff]
      %v5316 = vld [vmem:[%s9 + $0x26c] sm:$0xf]
      %v5317 = vld [vmem:[%s9 + $0x270] sm:$0xff]
      %v5318 = vld [vmem:[%s9 + $0x278] sm:$0xf]
      %v5319 = vld [vmem:[%s9 + $0x27c] sm:$0xff]
      %v5320 = vld [vmem:[%s9 + $0x284] sm:$0xf]
      %v5321 = vld [vmem:[%s9 + $0x288] sm:$0xff]
      %v5322 = vld [vmem:[%s9 + $0x290] sm:$0xf]
      %v5323 = vld [vmem:[%s9 + $0x294] sm:$0xff]
      %v5324 = vld [vmem:[%s9 + $0x29c] sm:$0xf]
      %v5325 = vld [vmem:[%s9 + $0x2a0] sm:$0xff]
      %v5326 = vld [vmem:[%s9 + $0x2a8] sm:$0xf]
      %v5327 = vld [vmem:[%s9 + $0x2ac] sm:$0xff]
      %v5328 = vld [vmem:[%s9 + $0x2b4] sm:$0xf]
      %v5329 = vld [vmem:[%s9 + $0x2b8] sm:$0xff]
      %v5330 = vld [vmem:[%s9 + $0x2c0] sm:$0xf]
      %v5331 = vld [vmem:[%s9 + $0x2c4] sm:$0xff]
      %v5332 = vld [vmem:[%s9 + $0x2cc] sm:$0xf]
      %v5333 = vld [vmem:[%s9 + $0x2d0] sm:$0xff]
      %v5334 = vld [vmem:[%s9 + $0x2d8] sm:$0xf]
      %v5335 = vld [vmem:[%s9 + $0x2dc] sm:$0xff]
      %v5336 = vld [vmem:[%s9 + $0x2e4] sm:$0xf]
      %v5337 = vld [vmem:[%s9 + $0x2e8] sm:$0xff]
      %v5338 = vld [vmem:[%s9 + $0x2f0] sm:$0xf]
      %v5339 = vld [vmem:[%s9 + $0x2f4] sm:$0xff]
      %v5340 = vld [vmem:[%s9 + $0x2fc] sm:$0xf]
      %v5341 = vld [vmem:[%s9 + $0x300] sm:$0xff]
      %v5342 = vld [vmem:[%s9 + $0x308] sm:$0xf]
      %v5343 = vld [vmem:[%s9 + $0x30c] sm:$0xff]
      %v5344 = vld [vmem:[%s9 + $0x314] sm:$0xf]
      %v5345 = vld [vmem:[%s9 + $0x318] sm:$0xff]
      %v5346 = vld [vmem:[%s9 + $0x320] sm:$0xf]
      %v5347 = vld [vmem:[%s9 + $0x324] sm:$0xff]
      %v5348 = vld [vmem:[%s9 + $0x32c] sm:$0xf]
      %v5349 = vld [vmem:[%s9 + $0x330] sm:$0xff]
      %v5350 = vld [vmem:[%s9 + $0x338] sm:$0xf]
      %v5351 = vld [vmem:[%s9 + $0x33c] sm:$0xff]
      %v5352 = vld [vmem:[%s9 + $0x344] sm:$0xf]
      %v5353 = vld [vmem:[%s9 + $0x348] sm:$0xff]
      %v5354 = vld [vmem:[%s9 + $0x350] sm:$0xf]
      %v5355 = vld [vmem:[%s9 + $0x354] sm:$0xff]
      %v5356 = vld [vmem:[%s9 + $0x35c] sm:$0xf]
      %v5357 = vld [vmem:[%s9 + $0x360] sm:$0xff]
      %v5358 = vld [vmem:[%s9 + $0x368] sm:$0xf]
      %v5359 = vld [vmem:[%s9 + $0x36c] sm:$0xff]
      %v5360 = vld [vmem:[%s9 + $0x374] sm:$0xf]
      %v5361 = vld [vmem:[%s9 + $0x378] sm:$0xff]
      %v5362 = vld [vmem:[%s9 + $0x380] sm:$0xf]
      %v5363 = vld [vmem:[%s9 + $0x384] sm:$0xff]
      %v5364 = vld [vmem:[%s9 + $0x38c] sm:$0xf]
      %v5365 = vld [vmem:[%s9 + $0x390] sm:$0xff]
      %v5366 = vld [vmem:[%s9 + $0x398] sm:$0xf]
      %v5367 = vld [vmem:[%s9 + $0x39c] sm:$0xff]
      %v5368 = vld [vmem:[%s9 + $0x3a4] sm:$0xf]
      %v5369 = vld [vmem:[%s9 + $0x3a8] sm:$0xff]
      %v5370 = vld [vmem:[%s9 + $0x3b0] sm:$0xf]
      %v5371 = vld [vmem:[%s9 + $0x3b4] sm:$0xff]
      %v5372 = vld [vmem:[%s9 + $0x3bc] sm:$0xf]
      %v5373 = vld [vmem:[%s9 + $0x3c0] sm:$0xff]
      %v5374 = vld [vmem:[%s9 + $0x3c8] sm:$0xf]
      %v5375 = vld [vmem:[%s9 + $0x3cc] sm:$0xff]
      %v5376 = vld [vmem:[%s9 + $0x3d4] sm:$0xf]
      %v5377 = vld [vmem:[%s9 + $0x3d8] sm:$0xff]
      %v5378 = vld [vmem:[%s9 + $0x3e0] sm:$0xf]
      %v5379 = vld [vmem:[%s9 + $0x3e4] sm:$0xff]
      %v5380 = vld [vmem:[%s9 + $0x3ec] sm:$0xf]
      %v5381 = vld [vmem:[%s9 + $0x3f0] sm:$0xff]
      %v5382 = vld [vmem:[%s9 + $0x3f8] sm:$0xf]
      %v5383 = vld [vmem:[%s9 + $0x3fc] sm:$0xff]
      %v5384 = vld [vmem:[%s9 + $0x404] sm:$0xf]
      %v5385 = vld [vmem:[%s9 + $0x408] sm:$0xff]
      %v5386 = vld [vmem:[%s9 + $0x410] sm:$0xf]
      %v5387 = vld [vmem:[%s9 + $0x414] sm:$0xff]
      %v5388 = vld [vmem:[%s9 + $0x41c] sm:$0xf]
      %v5389 = vld [vmem:[%s9 + $0x420] sm:$0xff]
      %v5390 = vld [vmem:[%s9 + $0x428] sm:$0xf]
      %v5391 = vld [vmem:[%s9 + $0x42c] sm:$0xff]
      %v5392 = vld [vmem:[%s9 + $0x434] sm:$0xf]
      %v5393 = vld [vmem:[%s9 + $0x438] sm:$0xff]
      %v5394 = vld [vmem:[%s9 + $0x440] sm:$0xf]
      %v5395 = vld [vmem:[%s9 + $0x444] sm:$0xff]
      %v5396 = vld [vmem:[%s9 + $0x44c] sm:$0xf]
      %v5397 = vld [vmem:[%s9 + $0x450] sm:$0xff]
      %v5398 = vld [vmem:[%s9 + $0x458] sm:$0xf]
      %v5399 = vld [vmem:[%s9 + $0x45c] sm:$0xff]
      %v5400 = vld [vmem:[%s9 + $0x464] sm:$0xf]
      %v5401 = vld [vmem:[%s9 + $0x468] sm:$0xff]
      %v5402 = vld [vmem:[%s9 + $0x470] sm:$0xf]
      %v5403 = vld [vmem:[%s9 + $0x474] sm:$0xff]
      %v5404 = vld [vmem:[%s9 + $0x47c] sm:$0xf]
      %v5405 = vld [vmem:[%s10] sm:$0x7]
      %v5407 = vlaneseq
      %v5408 = vshrl.u32 %v5407, 7
      %v5409 = vsub.s32 0, %v5408
      %v5410 = vrot.slane %v5405, %v5409
      %v5411 = vlaneseq
      %v5412 = vshrl.u32 %v5411, 7
      %v5413 = vsub.s32 1, %v5412
      %v5414 = vrot.slane %v5405, %v5413
      %v5415 = vlaneseq
      %v5416 = vshrl.u32 %v5415, 7
      %v5417 = vsub.s32 2, %v5416
      %v5418 = vrot.slane %v5405, %v5417
      %v5614 = vunpack.c.l.b16 %v5213
      %v5615 = vunpack.c.h.b16 %v5213
      %v5616 = vunpack.c.l.b16 %v5214
      %v5617 = vunpack.c.l.b16 %v5215
      %v5618 = vunpack.c.h.b16 %v5215
      %v5619 = vunpack.c.l.b16 %v5216
      %v5620 = vunpack.c.l.b16 %v5217
      %v5621 = vunpack.c.h.b16 %v5217
      %v5622 = vunpack.c.l.b16 %v5218
      %v5623 = vunpack.c.l.b16 %v5219
      %v5624 = vunpack.c.h.b16 %v5219
      %v5625 = vunpack.c.l.b16 %v5220
      %v5626 = vunpack.c.l.b16 %v5221
      %v5627 = vunpack.c.h.b16 %v5221
      %v5628 = vunpack.c.l.b16 %v5222
      %v5629 = vunpack.c.l.b16 %v5223
      %v5630 = vunpack.c.h.b16 %v5223
      %v5631 = vunpack.c.l.b16 %v5224
      %v5632 = vunpack.c.l.b16 %v5225
      %v5633 = vunpack.c.h.b16 %v5225
      %v5634 = vunpack.c.l.b16 %v5226
      %v5635 = vunpack.c.l.b16 %v5227
      %v5636 = vunpack.c.h.b16 %v5227
      %v5637 = vunpack.c.l.b16 %v5228
      %v5638 = vunpack.c.l.b16 %v5229
      %v5639 = vunpack.c.h.b16 %v5229
      %v5640 = vunpack.c.l.b16 %v5230
      %v5641 = vunpack.c.l.b16 %v5231
      %v5642 = vunpack.c.h.b16 %v5231
      %v5643 = vunpack.c.l.b16 %v5232
      %v5644 = vunpack.c.l.b16 %v5233
      %v5645 = vunpack.c.h.b16 %v5233
      %v5646 = vunpack.c.l.b16 %v5234
      %v5647 = vunpack.c.l.b16 %v5235
      %v5648 = vunpack.c.h.b16 %v5235
      %v5649 = vunpack.c.l.b16 %v5236
      %v5650 = vunpack.c.l.b16 %v5237
      %v5651 = vunpack.c.h.b16 %v5237
      %v5652 = vunpack.c.l.b16 %v5238
      %v5653 = vunpack.c.l.b16 %v5239
      %v5654 = vunpack.c.h.b16 %v5239
      %v5655 = vunpack.c.l.b16 %v5240
      %v5656 = vunpack.c.l.b16 %v5241
      %v5657 = vunpack.c.h.b16 %v5241
      %v5658 = vunpack.c.l.b16 %v5242
      %v5659 = vunpack.c.l.b16 %v5243
      %v5660 = vunpack.c.h.b16 %v5243
      %v5661 = vunpack.c.l.b16 %v5244
      %v5662 = vunpack.c.l.b16 %v5245
      %v5663 = vunpack.c.h.b16 %v5245
      %v5664 = vunpack.c.l.b16 %v5246
      %v5665 = vunpack.c.l.b16 %v5247
      %v5666 = vunpack.c.h.b16 %v5247
      %v5667 = vunpack.c.l.b16 %v5248
      %v5668 = vunpack.c.l.b16 %v5249
      %v5669 = vunpack.c.h.b16 %v5249
      %v5670 = vunpack.c.l.b16 %v5250
      %v5671 = vunpack.c.l.b16 %v5251
      %v5672 = vunpack.c.h.b16 %v5251
      %v5673 = vunpack.c.l.b16 %v5252
      %v5674 = vunpack.c.l.b16 %v5253
      %v5675 = vunpack.c.h.b16 %v5253
      %v5676 = vunpack.c.l.b16 %v5254
      %v5677 = vunpack.c.l.b16 %v5255
      %v5678 = vunpack.c.h.b16 %v5255
      %v5679 = vunpack.c.l.b16 %v5256
      %v5680 = vunpack.c.l.b16 %v5257
      %v5681 = vunpack.c.h.b16 %v5257
      %v5682 = vunpack.c.l.b16 %v5258
      %v5683 = vunpack.c.l.b16 %v5259
      %v5684 = vunpack.c.h.b16 %v5259
      %v5685 = vunpack.c.l.b16 %v5260
      %v5686 = vunpack.c.l.b16 %v5261
      %v5687 = vunpack.c.h.b16 %v5261
      %v5688 = vunpack.c.l.b16 %v5262
      %v5689 = vunpack.c.l.b16 %v5263
      %v5690 = vunpack.c.h.b16 %v5263
      %v5691 = vunpack.c.l.b16 %v5264
      %v5692 = vunpack.c.l.b16 %v5265
      %v5693 = vunpack.c.h.b16 %v5265
      %v5694 = vunpack.c.l.b16 %v5266
      %v5695 = vunpack.c.l.b16 %v5267
      %v5696 = vunpack.c.h.b16 %v5267
      %v5697 = vunpack.c.l.b16 %v5268
      %v5698 = vunpack.c.l.b16 %v5269
      %v5699 = vunpack.c.h.b16 %v5269
      %v5700 = vunpack.c.l.b16 %v5270
      %v5701 = vunpack.c.l.b16 %v5271
      %v5702 = vunpack.c.h.b16 %v5271
      %v5703 = vunpack.c.l.b16 %v5272
      %v5704 = vunpack.c.l.b16 %v5273
      %v5705 = vunpack.c.h.b16 %v5273
      %v5706 = vunpack.c.l.b16 %v5274
      %v5707 = vunpack.c.l.b16 %v5275
      %v5708 = vunpack.c.h.b16 %v5275
      %v5709 = vunpack.c.l.b16 %v5276
      %v5710 = vunpack.c.l.b16 %v5277
      %v5711 = vunpack.c.h.b16 %v5277
      %v5712 = vunpack.c.l.b16 %v5278
      %v5713 = vunpack.c.l.b16 %v5279
      %v5714 = vunpack.c.h.b16 %v5279
      %v5715 = vunpack.c.l.b16 %v5280
      %v5716 = vunpack.c.l.b16 %v5281
      %v5717 = vunpack.c.h.b16 %v5281
      %v5718 = vunpack.c.l.b16 %v5282
      %v5719 = vunpack.c.l.b16 %v5283
      %v5720 = vunpack.c.h.b16 %v5283
      %v5721 = vunpack.c.l.b16 %v5284
      %v5722 = vunpack.c.l.b16 %v5285
      %v5723 = vunpack.c.h.b16 %v5285
      %v5724 = vunpack.c.l.b16 %v5286
      %v5725 = vunpack.c.l.b16 %v5287
      %v5726 = vunpack.c.h.b16 %v5287
      %v5727 = vunpack.c.l.b16 %v5288
      %v5728 = vunpack.c.l.b16 %v5289
      %v5729 = vunpack.c.h.b16 %v5289
      %v5730 = vunpack.c.l.b16 %v5290
      %v5731 = vunpack.c.l.b16 %v5291
      %v5732 = vunpack.c.h.b16 %v5291
      %v5733 = vunpack.c.l.b16 %v5292
      %v5734 = vunpack.c.l.b16 %v5293
      %v5735 = vunpack.c.h.b16 %v5293
      %v5736 = vunpack.c.l.b16 %v5294
      %v5737 = vunpack.c.l.b16 %v5295
      %v5738 = vunpack.c.h.b16 %v5295
      %v5739 = vunpack.c.l.b16 %v5296
      %v5740 = vunpack.c.l.b16 %v5297
      %v5741 = vunpack.c.h.b16 %v5297
      %v5742 = vunpack.c.l.b16 %v5298
      %v5743 = vunpack.c.l.b16 %v5299
      %v5744 = vunpack.c.h.b16 %v5299
      %v5745 = vunpack.c.l.b16 %v5300
      %v5746 = vunpack.c.l.b16 %v5301
      %v5747 = vunpack.c.h.b16 %v5301
      %v5748 = vunpack.c.l.b16 %v5302
      %v5749 = vunpack.c.l.b16 %v5303
      %v5750 = vunpack.c.h.b16 %v5303
      %v5751 = vunpack.c.l.b16 %v5304
      %v5752 = vunpack.c.l.b16 %v5305
      %v5753 = vunpack.c.h.b16 %v5305
      %v5754 = vunpack.c.l.b16 %v5306
      %v5755 = vunpack.c.l.b16 %v5307
      %v5756 = vunpack.c.h.b16 %v5307
      %v5757 = vunpack.c.l.b16 %v5308
      %v5758 = vunpack.c.l.b16 %v5309
      %v5759 = vunpack.c.h.b16 %v5309
      %v5760 = vunpack.c.l.b16 %v5310
      %v5761 = vunpack.c.l.b16 %v5311
      %v5762 = vunpack.c.h.b16 %v5311
      %v5763 = vunpack.c.l.b16 %v5312
      %v5764 = vunpack.c.l.b16 %v5313
      %v5765 = vunpack.c.h.b16 %v5313
      %v5766 = vunpack.c.l.b16 %v5314
      %v5767 = vunpack.c.l.b16 %v5315
      %v5768 = vunpack.c.h.b16 %v5315
      %v5769 = vunpack.c.l.b16 %v5316
      %v5770 = vunpack.c.l.b16 %v5317
      %v5771 = vunpack.c.h.b16 %v5317
      %v5772 = vunpack.c.l.b16 %v5318
      %v5773 = vunpack.c.l.b16 %v5319
      %v5774 = vunpack.c.h.b16 %v5319
      %v5775 = vunpack.c.l.b16 %v5320
      %v5776 = vunpack.c.l.b16 %v5321
      %v5777 = vunpack.c.h.b16 %v5321
      %v5778 = vunpack.c.l.b16 %v5322
      %v5779 = vunpack.c.l.b16 %v5323
      %v5780 = vunpack.c.h.b16 %v5323
      %v5781 = vunpack.c.l.b16 %v5324
      %v5782 = vunpack.c.l.b16 %v5325
      %v5783 = vunpack.c.h.b16 %v5325
      %v5784 = vunpack.c.l.b16 %v5326
      %v5785 = vunpack.c.l.b16 %v5327
      %v5786 = vunpack.c.h.b16 %v5327
      %v5787 = vunpack.c.l.b16 %v5328
      %v5788 = vunpack.c.l.b16 %v5329
      %v5789 = vunpack.c.h.b16 %v5329
      %v5790 = vunpack.c.l.b16 %v5330
      %v5791 = vunpack.c.l.b16 %v5331
      %v5792 = vunpack.c.h.b16 %v5331
      %v5793 = vunpack.c.l.b16 %v5332
      %v5794 = vunpack.c.l.b16 %v5333
      %v5795 = vunpack.c.h.b16 %v5333
      %v5796 = vunpack.c.l.b16 %v5334
      %v5797 = vunpack.c.l.b16 %v5335
      %v5798 = vunpack.c.h.b16 %v5335
      %v5799 = vunpack.c.l.b16 %v5336
      %v5800 = vunpack.c.l.b16 %v5337
      %v5801 = vunpack.c.h.b16 %v5337
      %v5802 = vunpack.c.l.b16 %v5338
      %v5803 = vunpack.c.l.b16 %v5339
      %v5804 = vunpack.c.h.b16 %v5339
      %v5805 = vunpack.c.l.b16 %v5340
      %v5806 = vunpack.c.l.b16 %v5341
      %v5807 = vunpack.c.h.b16 %v5341
      %v5808 = vunpack.c.l.b16 %v5342
      %v5809 = vunpack.c.l.b16 %v5343
      %v5810 = vunpack.c.h.b16 %v5343
      %v5811 = vunpack.c.l.b16 %v5344
      %v5812 = vunpack.c.l.b16 %v5345
      %v5813 = vunpack.c.h.b16 %v5345
      %v5814 = vunpack.c.l.b16 %v5346
      %v5815 = vunpack.c.l.b16 %v5347
      %v5816 = vunpack.c.h.b16 %v5347
      %v5817 = vunpack.c.l.b16 %v5348
      %v5818 = vunpack.c.l.b16 %v5349
      %v5819 = vunpack.c.h.b16 %v5349
      %v5820 = vunpack.c.l.b16 %v5350
      %v5821 = vunpack.c.l.b16 %v5351
      %v5822 = vunpack.c.h.b16 %v5351
      %v5823 = vunpack.c.l.b16 %v5352
      %v5824 = vunpack.c.l.b16 %v5353
      %v5825 = vunpack.c.h.b16 %v5353
      %v5826 = vunpack.c.l.b16 %v5354
      %v5827 = vunpack.c.l.b16 %v5355
      %v5828 = vunpack.c.h.b16 %v5355
      %v5829 = vunpack.c.l.b16 %v5356
      %v5830 = vunpack.c.l.b16 %v5357
      %v5831 = vunpack.c.h.b16 %v5357
      %v5832 = vunpack.c.l.b16 %v5358
      %v5833 = vunpack.c.l.b16 %v5359
      %v5834 = vunpack.c.h.b16 %v5359
      %v5835 = vunpack.c.l.b16 %v5360
      %v5836 = vunpack.c.l.b16 %v5361
      %v5837 = vunpack.c.h.b16 %v5361
      %v5838 = vunpack.c.l.b16 %v5362
      %v5839 = vunpack.c.l.b16 %v5363
      %v5840 = vunpack.c.h.b16 %v5363
      %v5841 = vunpack.c.l.b16 %v5364
      %v5842 = vunpack.c.l.b16 %v5365
      %v5843 = vunpack.c.h.b16 %v5365
      %v5844 = vunpack.c.l.b16 %v5366
      %v5845 = vunpack.c.l.b16 %v5367
      %v5846 = vunpack.c.h.b16 %v5367
      %v5847 = vunpack.c.l.b16 %v5368
      %v5848 = vunpack.c.l.b16 %v5369
      %v5849 = vunpack.c.h.b16 %v5369
      %v5850 = vunpack.c.l.b16 %v5370
      %v5851 = vunpack.c.l.b16 %v5371
      %v5852 = vunpack.c.h.b16 %v5371
      %v5853 = vunpack.c.l.b16 %v5372
      %v5854 = vunpack.c.l.b16 %v5373
      %v5855 = vunpack.c.h.b16 %v5373
      %v5856 = vunpack.c.l.b16 %v5374
      %v5857 = vunpack.c.l.b16 %v5375
      %v5858 = vunpack.c.h.b16 %v5375
      %v5859 = vunpack.c.l.b16 %v5376
      %v5860 = vunpack.c.l.b16 %v5377
      %v5861 = vunpack.c.h.b16 %v5377
      %v5862 = vunpack.c.l.b16 %v5378
      %v5863 = vunpack.c.l.b16 %v5379
      %v5864 = vunpack.c.h.b16 %v5379
      %v5865 = vunpack.c.l.b16 %v5380
      %v5866 = vunpack.c.l.b16 %v5381
      %v5867 = vunpack.c.h.b16 %v5381
      %v5868 = vunpack.c.l.b16 %v5382
      %v5869 = vunpack.c.l.b16 %v5383
      %v5870 = vunpack.c.h.b16 %v5383
      %v5871 = vunpack.c.l.b16 %v5384
      %v5872 = vunpack.c.l.b16 %v5385
      %v5873 = vunpack.c.h.b16 %v5385
      %v5874 = vunpack.c.l.b16 %v5386
      %v5875 = vunpack.c.l.b16 %v5387
      %v5876 = vunpack.c.h.b16 %v5387
      %v5877 = vunpack.c.l.b16 %v5388
      %v5878 = vunpack.c.l.b16 %v5389
      %v5879 = vunpack.c.h.b16 %v5389
      %v5880 = vunpack.c.l.b16 %v5390
      %v5881 = vunpack.c.l.b16 %v5391
      %v5882 = vunpack.c.h.b16 %v5391
      %v5883 = vunpack.c.l.b16 %v5392
      %v5884 = vunpack.c.l.b16 %v5393
      %v5885 = vunpack.c.h.b16 %v5393
      %v5886 = vunpack.c.l.b16 %v5394
      %v5887 = vunpack.c.l.b16 %v5395
      %v5888 = vunpack.c.h.b16 %v5395
      %v5889 = vunpack.c.l.b16 %v5396
      %v5890 = vunpack.c.l.b16 %v5397
      %v5891 = vunpack.c.h.b16 %v5397
      %v5892 = vunpack.c.l.b16 %v5398
      %v5893 = vunpack.c.l.b16 %v5399
      %v5894 = vunpack.c.h.b16 %v5399
      %v5895 = vunpack.c.l.b16 %v5400
      %v5896 = vunpack.c.l.b16 %v5401
      %v5897 = vunpack.c.h.b16 %v5401
      %v5898 = vunpack.c.l.b16 %v5402
      %v5899 = vunpack.c.l.b16 %v5403
      %v5900 = vunpack.c.h.b16 %v5403
      %v5901 = vunpack.c.l.b16 %v5404
      %v5902 = vpack.c.b16 %v5617, %v5614
      %v5903 = vpack.c.b16 %v5618, %v5615
      %v5904 = vpack.c.b16 %v5619, %v5616
      %v5905 = vpack.c.b16 %v5623, %v5620
      %v5906 = vpack.c.b16 %v5624, %v5621
      %v5907 = vpack.c.b16 %v5625, %v5622
      %v5908 = vpack.c.b16 %v5629, %v5626
      %v5909 = vpack.c.b16 %v5630, %v5627
      %v5910 = vpack.c.b16 %v5631, %v5628
      %v5911 = vpack.c.b16 %v5635, %v5632
      %v5912 = vpack.c.b16 %v5636, %v5633
      %v5913 = vpack.c.b16 %v5637, %v5634
      %v5914 = vpack.c.b16 %v5641, %v5638
      %v5915 = vpack.c.b16 %v5642, %v5639
      %v5916 = vpack.c.b16 %v5643, %v5640
      %v5917 = vpack.c.b16 %v5647, %v5644
      %v5918 = vpack.c.b16 %v5648, %v5645
      %v5919 = vpack.c.b16 %v5649, %v5646
      %v5920 = vpack.c.b16 %v5653, %v5650
      %v5921 = vpack.c.b16 %v5654, %v5651
      %v5922 = vpack.c.b16 %v5655, %v5652
      %v5923 = vpack.c.b16 %v5659, %v5656
      %v5924 = vpack.c.b16 %v5660, %v5657
      %v5925 = vpack.c.b16 %v5661, %v5658
      %v5926 = vpack.c.b16 %v5665, %v5662
      %v5927 = vpack.c.b16 %v5666, %v5663
      %v5928 = vpack.c.b16 %v5667, %v5664
      %v5929 = vpack.c.b16 %v5671, %v5668
      %v5930 = vpack.c.b16 %v5672, %v5669
      %v5931 = vpack.c.b16 %v5673, %v5670
      %v5932 = vpack.c.b16 %v5677, %v5674
      %v5933 = vpack.c.b16 %v5678, %v5675
      %v5934 = vpack.c.b16 %v5679, %v5676
      %v5935 = vpack.c.b16 %v5683, %v5680
      %v5936 = vpack.c.b16 %v5684, %v5681
      %v5937 = vpack.c.b16 %v5685, %v5682
      %v5938 = vpack.c.b16 %v5689, %v5686
      %v5939 = vpack.c.b16 %v5690, %v5687
      %v5940 = vpack.c.b16 %v5691, %v5688
      %v5941 = vpack.c.b16 %v5695, %v5692
      %v5942 = vpack.c.b16 %v5696, %v5693
      %v5943 = vpack.c.b16 %v5697, %v5694
      %v5944 = vpack.c.b16 %v5701, %v5698
      %v5945 = vpack.c.b16 %v5702, %v5699
      %v5946 = vpack.c.b16 %v5703, %v5700
      %v5947 = vpack.c.b16 %v5707, %v5704
      %v5948 = vpack.c.b16 %v5708, %v5705
      %v5949 = vpack.c.b16 %v5709, %v5706
      %v5950 = vpack.c.b16 %v5713, %v5710
      %v5951 = vpack.c.b16 %v5714, %v5711
      %v5952 = vpack.c.b16 %v5715, %v5712
      %v5953 = vpack.c.b16 %v5719, %v5716
      %v5954 = vpack.c.b16 %v5720, %v5717
      %v5955 = vpack.c.b16 %v5721, %v5718
      %v5956 = vpack.c.b16 %v5725, %v5722
      %v5957 = vpack.c.b16 %v5726, %v5723
      %v5958 = vpack.c.b16 %v5727, %v5724
      %v5959 = vpack.c.b16 %v5731, %v5728
      %v5960 = vpack.c.b16 %v5732, %v5729
      %v5961 = vpack.c.b16 %v5733, %v5730
      %v5962 = vpack.c.b16 %v5737, %v5734
      %v5963 = vpack.c.b16 %v5738, %v5735
      %v5964 = vpack.c.b16 %v5739, %v5736
      %v5965 = vpack.c.b16 %v5743, %v5740
      %v5966 = vpack.c.b16 %v5744, %v5741
      %v5967 = vpack.c.b16 %v5745, %v5742
      %v5968 = vpack.c.b16 %v5749, %v5746
      %v5969 = vpack.c.b16 %v5750, %v5747
      %v5970 = vpack.c.b16 %v5751, %v5748
      %v5971 = vpack.c.b16 %v5755, %v5752
      %v5972 = vpack.c.b16 %v5756, %v5753
      %v5973 = vpack.c.b16 %v5757, %v5754
      %v5974 = vpack.c.b16 %v5761, %v5758
      %v5975 = vpack.c.b16 %v5762, %v5759
      %v5976 = vpack.c.b16 %v5763, %v5760
      %v5977 = vpack.c.b16 %v5767, %v5764
      %v5978 = vpack.c.b16 %v5768, %v5765
      %v5979 = vpack.c.b16 %v5769, %v5766
      %v5980 = vpack.c.b16 %v5773, %v5770
      %v5981 = vpack.c.b16 %v5774, %v5771
      %v5982 = vpack.c.b16 %v5775, %v5772
      %v5983 = vpack.c.b16 %v5779, %v5776
      %v5984 = vpack.c.b16 %v5780, %v5777
      %v5985 = vpack.c.b16 %v5781, %v5778
      %v5986 = vpack.c.b16 %v5785, %v5782
      %v5987 = vpack.c.b16 %v5786, %v5783
      %v5988 = vpack.c.b16 %v5787, %v5784
      %v5989 = vpack.c.b16 %v5791, %v5788
      %v5990 = vpack.c.b16 %v5792, %v5789
      %v5991 = vpack.c.b16 %v5793, %v5790
      %v5992 = vpack.c.b16 %v5797, %v5794
      %v5993 = vpack.c.b16 %v5798, %v5795
      %v5994 = vpack.c.b16 %v5799, %v5796
      %v5995 = vpack.c.b16 %v5803, %v5800
      %v5996 = vpack.c.b16 %v5804, %v5801
      %v5997 = vpack.c.b16 %v5805, %v5802
      %v5998 = vpack.c.b16 %v5809, %v5806
      %v5999 = vpack.c.b16 %v5810, %v5807
      %v6000 = vpack.c.b16 %v5811, %v5808
      %v6001 = vpack.c.b16 %v5815, %v5812
      %v6002 = vpack.c.b16 %v5816, %v5813
      %v6003 = vpack.c.b16 %v5817, %v5814
      %v6004 = vpack.c.b16 %v5821, %v5818
      %v6005 = vpack.c.b16 %v5822, %v5819
      %v6006 = vpack.c.b16 %v5823, %v5820
      %v6007 = vpack.c.b16 %v5827, %v5824
      %v6008 = vpack.c.b16 %v5828, %v5825
      %v6009 = vpack.c.b16 %v5829, %v5826
      %v6010 = vpack.c.b16 %v5833, %v5830
      %v6011 = vpack.c.b16 %v5834, %v5831
      %v6012 = vpack.c.b16 %v5835, %v5832
      %v6013 = vpack.c.b16 %v5839, %v5836
      %v6014 = vpack.c.b16 %v5840, %v5837
      %v6015 = vpack.c.b16 %v5841, %v5838
      %v6016 = vpack.c.b16 %v5845, %v5842
      %v6017 = vpack.c.b16 %v5846, %v5843
      %v6018 = vpack.c.b16 %v5847, %v5844
      %v6019 = vpack.c.b16 %v5851, %v5848
      %v6020 = vpack.c.b16 %v5852, %v5849
      %v6021 = vpack.c.b16 %v5853, %v5850
      %v6022 = vpack.c.b16 %v5857, %v5854
      %v6023 = vpack.c.b16 %v5858, %v5855
      %v6024 = vpack.c.b16 %v5859, %v5856
      %v6025 = vpack.c.b16 %v5863, %v5860
      %v6026 = vpack.c.b16 %v5864, %v5861
      %v6027 = vpack.c.b16 %v5865, %v5862
      %v6028 = vpack.c.b16 %v5869, %v5866
      %v6029 = vpack.c.b16 %v5870, %v5867
      %v6030 = vpack.c.b16 %v5871, %v5868
      %v6031 = vpack.c.b16 %v5875, %v5872
      %v6032 = vpack.c.b16 %v5876, %v5873
      %v6033 = vpack.c.b16 %v5877, %v5874
      %v6034 = vpack.c.b16 %v5881, %v5878
      %v6035 = vpack.c.b16 %v5882, %v5879
      %v6036 = vpack.c.b16 %v5883, %v5880
      %v6037 = vpack.c.b16 %v5887, %v5884
      %v6038 = vpack.c.b16 %v5888, %v5885
      %v6039 = vpack.c.b16 %v5889, %v5886
      %v6040 = vpack.c.b16 %v5893, %v5890
      %v6041 = vpack.c.b16 %v5894, %v5891
      %v6042 = vpack.c.b16 %v5895, %v5892
      %v6043 = vpack.c.b16 %v5899, %v5896
      %v6044 = vpack.c.b16 %v5900, %v5897
      %v6045 = vpack.c.b16 %v5901, %v5898
      %6190 = vmatprep.subr.bf16.mxu0 %v5903
      %6191 = vmatpush1.bf16.msra.mxu0 %v5902
      %6192 = vmatprep.subr.bf16.mxu0 %v5906
      %6193 = vmatpush1.bf16.msra.mxu0 %v5905
      %6194 = vmatprep.subr.bf16.mxu0 %v5909
      %6195 = vmatpush1.bf16.msra.mxu0 %v5908
      %6196 = vmatprep.subr.bf16.mxu0 %v5912
      %6197 = vmatpush1.bf16.msra.mxu0 %v5911
      %6198 = vmatprep.subr.bf16.mxu0 %v5915
      %6199 = vmatpush1.bf16.msra.mxu0 %v5914
      %6200 = vmatprep.subr.bf16.mxu0 %v5918
      %6201 = vmatpush1.bf16.msra.mxu0 %v5917
      %6202 = vmatprep.subr.bf16.mxu0 %v5921
      %6203 = vmatpush1.bf16.msra.mxu0 %v5920
      %6204 = vmatprep.subr.bf16.mxu0 %v5924
      %6205 = vmatpush1.bf16.msra.mxu0 %v5923
      %6206 = vmatprep.subr.bf16.mxu0 %v5927
      %6207 = vmatpush1.bf16.msra.mxu0 %v5926
      %6208 = vmatprep.subr.bf16.mxu0 %v5930
      %6209 = vmatpush1.bf16.msra.mxu0 %v5929
      %6210 = vmatprep.subr.bf16.mxu0 %v5933
      %6211 = vmatpush1.bf16.msra.mxu0 %v5932
      %6212 = vmatprep.subr.bf16.mxu0 %v5936
      %6213 = vmatpush1.bf16.msra.mxu0 %v5935
      %6214 = vmatprep.subr.bf16.mxu0 %v5939
      %6215 = vmatpush1.bf16.msra.mxu0 %v5938
      %6216 = vmatprep.subr.bf16.mxu0 %v5942
      %6217 = vmatpush1.bf16.msra.mxu0 %v5941
      %6218 = vmatprep.subr.bf16.mxu0 %v5945
      %6219 = vmatpush1.bf16.msra.mxu0 %v5944
      %6220 = vmatprep.subr.bf16.mxu0 %v5948
      %6221 = vmatpush1.bf16.msra.mxu0 %v5947
      %6222 = vmatprep.mubr.bf16.mxu0 %v5118
      %6223 = vmatmul.mubr.bf16.gmra.mrb[0].mxu0 %v5117
      %v6224 = vpop.f32.mrb[0].mxu0
      %v6225 = vadd.f32 %v5410, %v6224
      %v6226 = vpop.f32.mrb[0].mxu0
      %v6227 = vadd.f32 %v5414, %v6226
      %v6228 = vpop.f32.mrb[0].mxu0
      %v6229 = vadd.f32 %v5410, %v6228
      %v6230 = vpop.f32.mrb[0].mxu0
      %v6231 = vadd.f32 %v5414, %v6230
      %6232 = vmatprep.mubr.bf16.mxu0 %v5124
      %6233 = vmatmul.mubr.bf16.gmra.mrb[0].mxu0 %v5123
      %v6234 = vpop.f32.mrb[0].mxu0
      %v6235 = vadd.f32 %v5410, %v6234
      %v6236 = vpop.f32.mrb[0].mxu0
      %v6237 = vadd.f32 %v5414, %v6236
      %v6238 = vpop.f32.mrb[0].mxu0
      %v6239 = vadd.f32 %v5410, %v6238
      %v6240 = vpop.f32.mrb[0].mxu0
      %v6241 = vadd.f32 %v5414, %v6240
      %6242 = vmatprep.mubr.bf16.mxu0 %v5130
      %6243 = vmatmul.mubr.bf16.gmra.mrb[0].mxu0 %v5129
      %v6244 = vpop.f32.mrb[0].mxu0
      %v6245 = vadd.f32 %v5410, %v6244
      %v6246 = vpop.f32.mrb[0].mxu0
      %v6247 = vadd.f32 %v5414, %v6246
      %v6248 = vpop.f32.mrb[0].mxu0
      %v6249 = vadd.f32 %v5410, %v6248
      %v6250 = vpop.f32.mrb[0].mxu0
      %v6251 = vadd.f32 %v5414, %v6250
      %6252 = vmatprep.mubr.bf16.mxu0 %v5136
      %6253 = vmatmul.mubr.bf16.gmra.mrb[0].mxu0 %v5135
      %v6254 = vpop.f32.mrb[0].mxu0
      %v6255 = vadd.f32 %v5410, %v6254
      %v6256 = vpop.f32.mrb[0].mxu0
      %v6257 = vadd.f32 %v5414, %v6256
      %v6258 = vpop.f32.mrb[0].mxu0
      %v6259 = vadd.f32 %v5410, %v6258
      %v6260 = vpop.f32.mrb[0].mxu0
      %v6261 = vadd.f32 %v5414, %v6260
      %6262 = vmatprep.mubr.bf16.mxu0 %v5142
      %6263 = vmatmul.mubr.bf16.gmra.mrb[0].mxu0 %v5141
      %v6264 = vpop.f32.mrb[0].mxu0
      %v6265 = vadd.f32 %v5410, %v6264
      %v6266 = vpop.f32.mrb[0].mxu0
      %v6267 = vadd.f32 %v5414, %v6266
      %v6268 = vpop.f32.mrb[0].mxu0
      %v6269 = vadd.f32 %v5410, %v6268
      %v6270 = vpop.f32.mrb[0].mxu0
      %v6271 = vadd.f32 %v5414, %v6270
      %6272 = vmatprep.mubr.bf16.mxu0 %v5148
      %6273 = vmatmul.mubr.bf16.gmra.mrb[0].mxu0 %v5147
      %v6274 = vpop.f32.mrb[0].mxu0
      %v6275 = vadd.f32 %v5410, %v6274
      %v6276 = vpop.f32.mrb[0].mxu0
      %v6277 = vadd.f32 %v5414, %v6276
      %v6278 = vpop.f32.mrb[0].mxu0
      %v6279 = vadd.f32 %v5410, %v6278
      %v6280 = vpop.f32.mrb[0].mxu0
      %v6281 = vadd.f32 %v5414, %v6280
      %6282 = vmatprep.mubr.bf16.mxu0 %v5154
      %6283 = vmatmul.mubr.bf16.gmra.mrb[0].mxu0 %v5153
      %v6284 = vpop.f32.mrb[0].mxu0
      %v6285 = vadd.f32 %v5410, %v6284
      %v6286 = vpop.f32.mrb[0].mxu0
      %v6287 = vadd.f32 %v5414, %v6286
      %v6288 = vpop.f32.mrb[0].mxu0
      %v6289 = vadd.f32 %v5410, %v6288
      %v6290 = vpop.f32.mrb[0].mxu0
      %v6291 = vadd.f32 %v5414, %v6290
      %6292 = vmatprep.mubr.bf16.mxu0 %v5160
      %6293 = vmatmul.mubr.bf16.gmra.mrb[0].mxu0 %v5159
      %v6294 = vpop.f32.mrb[0].mxu0
      %v6295 = vadd.f32 %v5410, %v6294
      %v6296 = vpop.f32.mrb[0].mxu0
      %v6297 = vadd.f32 %v5414, %v6296
      %v6298 = vpop.f32.mrb[0].mxu0
      %v6299 = vadd.f32 %v5410, %v6298
      %v6300 = vpop.f32.mrb[0].mxu0
      %v6301 = vadd.f32 %v5414, %v6300
      %6302 = vmatprep.mubr.bf16.mxu0 %v5166
      %6303 = vmatmul.mubr.bf16.gmra.mrb[0].mxu0 %v5165
      %v6304 = vpop.f32.mrb[0].mxu0
      %v6305 = vadd.f32 %v5410, %v6304
      %v6306 = vpop.f32.mrb[0].mxu0
      %v6307 = vadd.f32 %v5414, %v6306
      %v6308 = vpop.f32.mrb[0].mxu0
      %v6309 = vadd.f32 %v5410, %v6308
      %v6310 = vpop.f32.mrb[0].mxu0
      %v6311 = vadd.f32 %v5414, %v6310
      %6312 = vmatprep.mubr.bf16.mxu0 %v5172
      %6313 = vmatmul.mubr.bf16.gmra.mrb[0].mxu0 %v5171
      %v6314 = vpop.f32.mrb[0].mxu0
      %v6315 = vadd.f32 %v5410, %v6314
      %v6316 = vpop.f32.mrb[0].mxu0
      %v6317 = vadd.f32 %v5414, %v6316
      %v6318 = vpop.f32.mrb[0].mxu0
      %v6319 = vadd.f32 %v5410, %v6318
      %v6320 = vpop.f32.mrb[0].mxu0
      %v6321 = vadd.f32 %v5414, %v6320
      %6322 = vmatprep.mubr.bf16.mxu0 %v5178
      %6323 = vmatmul.mubr.bf16.gmra.mrb[0].mxu0 %v5177
      %v6324 = vpop.f32.mrb[0].mxu0
      %v6325 = vadd.f32 %v5410, %v6324
      %v6326 = vpop.f32.mrb[0].mxu0
      %v6327 = vadd.f32 %v5414, %v6326
      %v6328 = vpop.f32.mrb[0].mxu0
      %v6329 = vadd.f32 %v5410, %v6328
      %v6330 = vpop.f32.mrb[0].mxu0
      %v6331 = vadd.f32 %v5414, %v6330
      %6332 = vmatprep.mubr.bf16.mxu0 %v5184
      %6333 = vmatmul.mubr.bf16.gmra.mrb[0].mxu0 %v5183
      %v6334 = vpop.f32.mrb[0].mxu0
      %v6335 = vadd.f32 %v5410, %v6334
      %v6336 = vpop.f32.mrb[0].mxu0
      %v6337 = vadd.f32 %v5414, %v6336
      %v6338 = vpop.f32.mrb[0].mxu0
      %v6339 = vadd.f32 %v5410, %v6338
      %v6340 = vpop.f32.mrb[0].mxu0
      %v6341 = vadd.f32 %v5414, %v6340
      %6342 = vmatprep.mubr.bf16.mxu0 %v5190
      %6343 = vmatmul.mubr.bf16.gmra.mrb[0].mxu0 %v5189
      %v6344 = vpop.f32.mrb[0].mxu0
      %v6345 = vadd.f32 %v5410, %v6344
      %v6346 = vpop.f32.mrb[0].mxu0
      %v6347 = vadd.f32 %v5414, %v6346
      %v6348 = vpop.f32.mrb[0].mxu0
      %v6349 = vadd.f32 %v5410, %v6348
      %v6350 = vpop.f32.mrb[0].mxu0
      %v6351 = vadd.f32 %v5414, %v6350
      %6352 = vmatprep.mubr.bf16.mxu0 %v5196
      %6353 = vmatmul.mubr.bf16.gmra.mrb[0].mxu0 %v5195
      %v6354 = vpop.f32.mrb[0].mxu0
      %v6355 = vadd.f32 %v5410, %v6354
      %v6356 = vpop.f32.mrb[0].mxu0
      %v6357 = vadd.f32 %v5414, %v6356
      %v6358 = vpop.f32.mrb[0].mxu0
      %v6359 = vadd.f32 %v5410, %v6358
      %v6360 = vpop.f32.mrb[0].mxu0
      %v6361 = vadd.f32 %v5414, %v6360
      %6362 = vmatprep.mubr.bf16.mxu0 %v5202
      %6363 = vmatmul.mubr.bf16.gmra.mrb[0].mxu0 %v5201
      %v6364 = vpop.f32.mrb[0].mxu0
      %v6365 = vadd.f32 %v5410, %v6364
      %v6366 = vpop.f32.mrb[0].mxu0
      %v6367 = vadd.f32 %v5414, %v6366
      %v6368 = vpop.f32.mrb[0].mxu0
      %v6369 = vadd.f32 %v5410, %v6368
      %v6370 = vpop.f32.mrb[0].mxu0
      %v6371 = vadd.f32 %v5414, %v6370
      %6372 = vmatprep.mubr.bf16.mxu0 %v5208
      %6373 = vmatmul.mubr.bf16.gmra.mrb[0].mxu0 %v5207
      %v6374 = vpop.f32.mrb[0].mxu0
      %v6375 = vadd.f32 %v5410, %v6374
      %v6376 = vpop.f32.mrb[0].mxu0
      %v6377 = vadd.f32 %v5414, %v6376
      %v6378 = vpop.f32.mrb[0].mxu0
      %v6379 = vadd.f32 %v5410, %v6378
      %v6380 = vpop.f32.mrb[0].mxu0
      %v6381 = vadd.f32 %v5414, %v6380
      %6382 = vdwg.mxu0
      %6383 = vmatprep.subr.bf16.mxu0 %v5951
      %6384 = vmatpush1.bf16.msra.mxu0 %v5950
      %6385 = vmatprep.subr.bf16.mxu0 %v5954
      %6386 = vmatpush1.bf16.msra.mxu0 %v5953
      %6387 = vmatprep.subr.bf16.mxu0 %v5957
      %6388 = vmatpush1.bf16.msra.mxu0 %v5956
      %6389 = vmatprep.subr.bf16.mxu0 %v5960
      %6390 = vmatpush1.bf16.msra.mxu0 %v5959
      %6391 = vmatprep.subr.bf16.mxu0 %v5963
      %6392 = vmatpush1.bf16.msra.mxu0 %v5962
      %6393 = vmatprep.subr.bf16.mxu0 %v5966
      %6394 = vmatpush1.bf16.msra.mxu0 %v5965
      %6395 = vmatprep.subr.bf16.mxu0 %v5969
      %6396 = vmatpush1.bf16.msra.mxu0 %v5968
      %6397 = vmatprep.subr.bf16.mxu0 %v5972
      %6398 = vmatpush1.bf16.msra.mxu0 %v5971
      %6399 = vmatprep.subr.bf16.mxu0 %v5975
      %6400 = vmatpush1.bf16.msra.mxu0 %v5974
      %6401 = vmatprep.subr.bf16.mxu0 %v5978
      %6402 = vmatpush1.bf16.msra.mxu0 %v5977
      %6403 = vmatprep.subr.bf16.mxu0 %v5981
      %6404 = vmatpush1.bf16.msra.mxu0 %v5980
      %6405 = vmatprep.subr.bf16.mxu0 %v5984
      %6406 = vmatpush1.bf16.msra.mxu0 %v5983
      %6407 = vmatprep.subr.bf16.mxu0 %v5987
      %6408 = vmatpush1.bf16.msra.mxu0 %v5986
      %6409 = vmatprep.subr.bf16.mxu0 %v5990
      %6410 = vmatpush1.bf16.msra.mxu0 %v5989
      %6411 = vmatprep.subr.bf16.mxu0 %v5993
      %6412 = vmatpush1.bf16.msra.mxu0 %v5992
      %6413 = vmatprep.subr.bf16.mxu0 %v5996
      %6414 = vmatpush1.bf16.msra.mxu0 %v5995
      %6415 = vmatprep.mubr.bf16.mxu0 %v5120
      %6416 = vmatmul.mubr.bf16.gmra.mrb[0].mxu0 %v5119
      %v6417 = vpop.f32.mrb[0].mxu0
      %v6418 = vadd.f32 %v6225, %v6417
      %v6419 = vpop.f32.mrb[0].mxu0
      %v6420 = vadd.f32 %v6227, %v6419
      %v6421 = vpop.f32.mrb[0].mxu0
      %v6422 = vadd.f32 %v6229, %v6421
      %v6423 = vpop.f32.mrb[0].mxu0
      %v6424 = vadd.f32 %v6231, %v6423
      %6425 = vmatprep.mubr.bf16.mxu0 %v5126
      %6426 = vmatmul.mubr.bf16.gmra.mrb[0].mxu0 %v5125
      %v6427 = vpop.f32.mrb[0].mxu0
      %v6428 = vadd.f32 %v6235, %v6427
      %v6429 = vpop.f32.mrb[0].mxu0
      %v6430 = vadd.f32 %v6237, %v6429
      %v6431 = vpop.f32.mrb[0].mxu0
      %v6432 = vadd.f32 %v6239, %v6431
      %v6433 = vpop.f32.mrb[0].mxu0
      %v6434 = vadd.f32 %v6241, %v6433
      %6435 = vmatprep.mubr.bf16.mxu0 %v5132
      %6436 = vmatmul.mubr.bf16.gmra.mrb[0].mxu0 %v5131
      %v6437 = vpop.f32.mrb[0].mxu0
      %v6438 = vadd.f32 %v6245, %v6437
      %v6439 = vpop.f32.mrb[0].mxu0
      %v6440 = vadd.f32 %v6247, %v6439
      %v6441 = vpop.f32.mrb[0].mxu0
      %v6442 = vadd.f32 %v6249, %v6441
      %v6443 = vpop.f32.mrb[0].mxu0
      %v6444 = vadd.f32 %v6251, %v6443
      %6445 = vmatprep.mubr.bf16.mxu0 %v5138
      %6446 = vmatmul.mubr.bf16.gmra.mrb[0].mxu0 %v5137
      %v6447 = vpop.f32.mrb[0].mxu0
      %v6448 = vadd.f32 %v6255, %v6447
      %v6449 = vpop.f32.mrb[0].mxu0
      %v6450 = vadd.f32 %v6257, %v6449
      %v6451 = vpop.f32.mrb[0].mxu0
      %v6452 = vadd.f32 %v6259, %v6451
      %v6453 = vpop.f32.mrb[0].mxu0
      %v6454 = vadd.f32 %v6261, %v6453
      %6455 = vmatprep.mubr.bf16.mxu0 %v5144
      %6456 = vmatmul.mubr.bf16.gmra.mrb[0].mxu0 %v5143
      %v6457 = vpop.f32.mrb[0].mxu0
      %v6458 = vadd.f32 %v6265, %v6457
      %v6459 = vpop.f32.mrb[0].mxu0
      %v6460 = vadd.f32 %v6267, %v6459
      %v6461 = vpop.f32.mrb[0].mxu0
      %v6462 = vadd.f32 %v6269, %v6461
      %v6463 = vpop.f32.mrb[0].mxu0
      %v6464 = vadd.f32 %v6271, %v6463
      %6465 = vmatprep.mubr.bf16.mxu0 %v5150
      %6466 = vmatmul.mubr.bf16.gmra.mrb[0].mxu0 %v5149
      %v6467 = vpop.f32.mrb[0].mxu0
      %v6468 = vadd.f32 %v6275, %v6467
      %v6469 = vpop.f32.mrb[0].mxu0
      %v6470 = vadd.f32 %v6277, %v6469
      %v6471 = vpop.f32.mrb[0].mxu0
      %v6472 = vadd.f32 %v6279, %v6471
      %v6473 = vpop.f32.mrb[0].mxu0
      %v6474 = vadd.f32 %v6281, %v6473
      %6475 = vmatprep.mubr.bf16.mxu0 %v5156
      %6476 = vmatmul.mubr.bf16.gmra.mrb[0].mxu0 %v5155
      %v6477 = vpop.f32.mrb[0].mxu0
      %v6478 = vadd.f32 %v6285, %v6477
      %v6479 = vpop.f32.mrb[0].mxu0
      %v6480 = vadd.f32 %v6287, %v6479
      %v6481 = vpop.f32.mrb[0].mxu0
      %v6482 = vadd.f32 %v6289, %v6481
      %v6483 = vpop.f32.mrb[0].mxu0
      %v6484 = vadd.f32 %v6291, %v6483
      %6485 = vmatprep.mubr.bf16.mxu0 %v5162
      %6486 = vmatmul.mubr.bf16.gmra.mrb[0].mxu0 %v5161
      %v6487 = vpop.f32.mrb[0].mxu0
      %v6488 = vadd.f32 %v6295, %v6487
      %v6489 = vpop.f32.mrb[0].mxu0
      %v6490 = vadd.f32 %v6297, %v6489
      %v6491 = vpop.f32.mrb[0].mxu0
      %v6492 = vadd.f32 %v6299, %v6491
      %v6493 = vpop.f32.mrb[0].mxu0
      %v6494 = vadd.f32 %v6301, %v6493
      %6495 = vmatprep.mubr.bf16.mxu0 %v5168
      %6496 = vmatmul.mubr.bf16.gmra.mrb[0].mxu0 %v5167
      %v6497 = vpop.f32.mrb[0].mxu0
      %v6498 = vadd.f32 %v6305, %v6497
      %v6499 = vpop.f32.mrb[0].mxu0
      %v6500 = vadd.f32 %v6307, %v6499
      %v6501 = vpop.f32.mrb[0].mxu0
      %v6502 = vadd.f32 %v6309, %v6501
      %v6503 = vpop.f32.mrb[0].mxu0
      %v6504 = vadd.f32 %v6311, %v6503
      %6505 = vmatprep.mubr.bf16.mxu0 %v5174
      %6506 = vmatmul.mubr.bf16.gmra.mrb[0].mxu0 %v5173
      %v6507 = vpop.f32.mrb[0].mxu0
      %v6508 = vadd.f32 %v6315, %v6507
      %v6509 = vpop.f32.mrb[0].mxu0
      %v6510 = vadd.f32 %v6317, %v6509
      %v6511 = vpop.f32.mrb[0].mxu0
      %v6512 = vadd.f32 %v6319, %v6511
      %v6513 = vpop.f32.mrb[0].mxu0
      %v6514 = vadd.f32 %v6321, %v6513
      %6515 = vmatprep.mubr.bf16.mxu0 %v5180
      %6516 = vmatmul.mubr.bf16.gmra.mrb[0].mxu0 %v5179
      %v6517 = vpop.f32.mrb[0].mxu0
      %v6518 = vadd.f32 %v6325, %v6517
      %v6519 = vpop.f32.mrb[0].mxu0
      %v6520 = vadd.f32 %v6327, %v6519
      %v6521 = vpop.f32.mrb[0].mxu0
      %v6522 = vadd.f32 %v6329, %v6521
      %v6523 = vpop.f32.mrb[0].mxu0
      %v6524 = vadd.f32 %v6331, %v6523
      %6525 = vmatprep.mubr.bf16.mxu0 %v5186
      %6526 = vmatmul.mubr.bf16.gmra.mrb[0].mxu0 %v5185
      %v6527 = vpop.f32.mrb[0].mxu0
      %v6528 = vadd.f32 %v6335, %v6527
      %v6529 = vpop.f32.mrb[0].mxu0
      %v6530 = vadd.f32 %v6337, %v6529
      %v6531 = vpop.f32.mrb[0].mxu0
      %v6532 = vadd.f32 %v6339, %v6531
      %v6533 = vpop.f32.mrb[0].mxu0
      %v6534 = vadd.f32 %v6341, %v6533
      %6535 = vmatprep.mubr.bf16.mxu0 %v5192
      %6536 = vmatmul.mubr.bf16.gmra.mrb[0].mxu0 %v5191
      %v6537 = vpop.f32.mrb[0].mxu0
      %v6538 = vadd.f32 %v6345, %v6537
      %v6539 = vpop.f32.mrb[0].mxu0
      %v6540 = vadd.f32 %v6347, %v6539
      %v6541 = vpop.f32.mrb[0].mxu0
      %v6542 = vadd.f32 %v6349, %v6541
      %v6543 = vpop.f32.mrb[0].mxu0
      %v6544 = vadd.f32 %v6351, %v6543
      %6545 = vmatprep.mubr.bf16.mxu0 %v5198
      %6546 = vmatmul.mubr.bf16.gmra.mrb[0].mxu0 %v5197
      %v6547 = vpop.f32.mrb[0].mxu0
      %v6548 = vadd.f32 %v6355, %v6547
      %v6549 = vpop.f32.mrb[0].mxu0
      %v6550 = vadd.f32 %v6357, %v6549
      %v6551 = vpop.f32.mrb[0].mxu0
      %v6552 = vadd.f32 %v6359, %v6551
      %v6553 = vpop.f32.mrb[0].mxu0
      %v6554 = vadd.f32 %v6361, %v6553
      %6555 = vmatprep.mubr.bf16.mxu0 %v5204
      %6556 = vmatmul.mubr.bf16.gmra.mrb[0].mxu0 %v5203
      %v6557 = vpop.f32.mrb[0].mxu0
      %v6558 = vadd.f32 %v6365, %v6557
      %v6559 = vpop.f32.mrb[0].mxu0
      %v6560 = vadd.f32 %v6367, %v6559
      %v6561 = vpop.f32.mrb[0].mxu0
      %v6562 = vadd.f32 %v6369, %v6561
      %v6563 = vpop.f32.mrb[0].mxu0
      %v6564 = vadd.f32 %v6371, %v6563
      %6565 = vmatprep.mubr.bf16.mxu0 %v5210
      %6566 = vmatmul.mubr.bf16.gmra.mrb[0].mxu0 %v5209
      %v6567 = vpop.f32.mrb[0].mxu0
      %v6568 = vadd.f32 %v6375, %v6567
      %v6569 = vpop.f32.mrb[0].mxu0
      %v6570 = vadd.f32 %v6377, %v6569
      %v6571 = vpop.f32.mrb[0].mxu0
      %v6572 = vadd.f32 %v6379, %v6571
      %v6573 = vpop.f32.mrb[0].mxu0
      %v6574 = vadd.f32 %v6381, %v6573
      %6575 = vdwg.mxu0
      %6576 = vmatprep.subr.bf16.mxu0 %v5999
      %6577 = vmatpush1.bf16.msra.mxu0 %v5998
      %6578 = vmatprep.subr.bf16.mxu0 %v6002
      %6579 = vmatpush1.bf16.msra.mxu0 %v6001
      %6580 = vmatprep.subr.bf16.mxu0 %v6005
      %6581 = vmatpush1.bf16.msra.mxu0 %v6004
      %6582 = vmatprep.subr.bf16.mxu0 %v6008
      %6583 = vmatpush1.bf16.msra.mxu0 %v6007
      %6584 = vmatprep.subr.bf16.mxu0 %v6011
      %6585 = vmatpush1.bf16.msra.mxu0 %v6010
      %6586 = vmatprep.subr.bf16.mxu0 %v6014
      %6587 = vmatpush1.bf16.msra.mxu0 %v6013
      %6588 = vmatprep.subr.bf16.mxu0 %v6017
      %6589 = vmatpush1.bf16.msra.mxu0 %v6016
      %6590 = vmatprep.subr.bf16.mxu0 %v6020
      %6591 = vmatpush1.bf16.msra.mxu0 %v6019
      %6592 = vmatprep.subr.bf16.mxu0 %v6023
      %6593 = vmatpush1.bf16.msra.mxu0 %v6022
      %6594 = vmatprep.subr.bf16.mxu0 %v6026
      %6595 = vmatpush1.bf16.msra.mxu0 %v6025
      %6596 = vmatprep.subr.bf16.mxu0 %v6029
      %6597 = vmatpush1.bf16.msra.mxu0 %v6028
      %6598 = vmatprep.subr.bf16.mxu0 %v6032
      %6599 = vmatpush1.bf16.msra.mxu0 %v6031
      %6600 = vmatprep.subr.bf16.mxu0 %v6035
      %6601 = vmatpush1.bf16.msra.mxu0 %v6034
      %6602 = vmatprep.subr.bf16.mxu0 %v6038
      %6603 = vmatpush1.bf16.msra.mxu0 %v6037
      %6604 = vmatprep.subr.bf16.mxu0 %v6041
      %6605 = vmatpush1.bf16.msra.mxu0 %v6040
      %6606 = vmatprep.subr.bf16.mxu0 %v6044
      %6607 = vmatpush1.bf16.msra.mxu0 %v6043
      %6608 = vmatprep.mubr.bf16.mxu0 %v5122
      %6609 = vmatmul.mubr.bf16.gmra.mrb[0].mxu0 %v5121
      %v6610 = vpop.f32.mrb[0].mxu0
      %v6611 = vadd.f32 %v6418, %v6610
      %v6612 = vpop.f32.mrb[0].mxu0
      %v6613 = vadd.f32 %v6420, %v6612
      %v6614 = vpop.f32.mrb[0].mxu0
      %v6615 = vadd.f32 %v6422, %v6614
      %v6616 = vpop.f32.mrb[0].mxu0
      %v6617 = vadd.f32 %v6424, %v6616
      %6618 = vmatprep.mubr.bf16.mxu0 %v5128
      %6619 = vmatmul.mubr.bf16.gmra.mrb[0].mxu0 %v5127
      %v6620 = vpop.f32.mrb[0].mxu0
      %v6621 = vadd.f32 %v6428, %v6620
      %v6622 = vpop.f32.mrb[0].mxu0
      %v6623 = vadd.f32 %v6430, %v6622
      %v6624 = vpop.f32.mrb[0].mxu0
      %v6625 = vadd.f32 %v6432, %v6624
      %v6626 = vpop.f32.mrb[0].mxu0
      %v6627 = vadd.f32 %v6434, %v6626
      %6628 = vmatprep.mubr.bf16.mxu0 %v5134
      %6629 = vmatmul.mubr.bf16.gmra.mrb[0].mxu0 %v5133
      %v6630 = vpop.f32.mrb[0].mxu0
      %v6631 = vadd.f32 %v6438, %v6630
      %v6632 = vpop.f32.mrb[0].mxu0
      %v6633 = vadd.f32 %v6440, %v6632
      %v6634 = vpop.f32.mrb[0].mxu0
      %v6635 = vadd.f32 %v6442, %v6634
      %v6636 = vpop.f32.mrb[0].mxu0
      %v6637 = vadd.f32 %v6444, %v6636
      %6638 = vmatprep.mubr.bf16.mxu0 %v5140
      %6639 = vmatmul.mubr.bf16.gmra.mrb[0].mxu0 %v5139
      %v6640 = vpop.f32.mrb[0].mxu0
      %v6641 = vadd.f32 %v6448, %v6640
      %v6642 = vpop.f32.mrb[0].mxu0
      %v6643 = vadd.f32 %v6450, %v6642
      %v6644 = vpop.f32.mrb[0].mxu0
      %v6645 = vadd.f32 %v6452, %v6644
      %v6646 = vpop.f32.mrb[0].mxu0
      %v6647 = vadd.f32 %v6454, %v6646
      %6648 = vmatprep.mubr.bf16.mxu0 %v5146
      %6649 = vmatmul.mubr.bf16.gmra.mrb[0].mxu0 %v5145
      %v6650 = vpop.f32.mrb[0].mxu0
      %v6651 = vadd.f32 %v6458, %v6650
      %v6652 = vpop.f32.mrb[0].mxu0
      %v6653 = vadd.f32 %v6460, %v6652
      %v6654 = vpop.f32.mrb[0].mxu0
      %v6655 = vadd.f32 %v6462, %v6654
      %v6656 = vpop.f32.mrb[0].mxu0
      %v6657 = vadd.f32 %v6464, %v6656
      %6658 = vmatprep.mubr.bf16.mxu0 %v5152
      %6659 = vmatmul.mubr.bf16.gmra.mrb[0].mxu0 %v5151
      %v6660 = vpop.f32.mrb[0].mxu0
      %v6661 = vadd.f32 %v6468, %v6660
      %v6662 = vpop.f32.mrb[0].mxu0
      %v6663 = vadd.f32 %v6470, %v6662
      %v6664 = vpop.f32.mrb[0].mxu0
      %v6665 = vadd.f32 %v6472, %v6664
      %v6666 = vpop.f32.mrb[0].mxu0
      %v6667 = vadd.f32 %v6474, %v6666
      %6668 = vmatprep.mubr.bf16.mxu0 %v5158
      %6669 = vmatmul.mubr.bf16.gmra.mrb[0].mxu0 %v5157
      %v6670 = vpop.f32.mrb[0].mxu0
      %v6671 = vadd.f32 %v6478, %v6670
      %v6672 = vpop.f32.mrb[0].mxu0
      %v6673 = vadd.f32 %v6480, %v6672
      %v6674 = vpop.f32.mrb[0].mxu0
      %v6675 = vadd.f32 %v6482, %v6674
      %v6676 = vpop.f32.mrb[0].mxu0
      %v6677 = vadd.f32 %v6484, %v6676
      %6678 = vmatprep.mubr.bf16.mxu0 %v5164
      %6679 = vmatmul.mubr.bf16.gmra.mrb[0].mxu0 %v5163
      %v6680 = vpop.f32.mrb[0].mxu0
      %v6681 = vadd.f32 %v6488, %v6680
      %v6682 = vpop.f32.mrb[0].mxu0
      %v6683 = vadd.f32 %v6490, %v6682
      %v6684 = vpop.f32.mrb[0].mxu0
      %v6685 = vadd.f32 %v6492, %v6684
      %v6686 = vpop.f32.mrb[0].mxu0
      %v6687 = vadd.f32 %v6494, %v6686
      %6688 = vmatprep.mubr.bf16.mxu0 %v5170
      %6689 = vmatmul.mubr.bf16.gmra.mrb[0].mxu0 %v5169
      %v6690 = vpop.f32.mrb[0].mxu0
      %v6691 = vadd.f32 %v6498, %v6690
      %v6692 = vpop.f32.mrb[0].mxu0
      %v6693 = vadd.f32 %v6500, %v6692
      %v6694 = vpop.f32.mrb[0].mxu0
      %v6695 = vadd.f32 %v6502, %v6694
      %v6696 = vpop.f32.mrb[0].mxu0
      %v6697 = vadd.f32 %v6504, %v6696
      %6698 = vmatprep.mubr.bf16.mxu0 %v5176
      %6699 = vmatmul.mubr.bf16.gmra.mrb[0].mxu0 %v5175
      %v6700 = vpop.f32.mrb[0].mxu0
      %v6701 = vadd.f32 %v6508, %v6700
      %v6702 = vpop.f32.mrb[0].mxu0
      %v6703 = vadd.f32 %v6510, %v6702
      %v6704 = vpop.f32.mrb[0].mxu0
      %v6705 = vadd.f32 %v6512, %v6704
      %v6706 = vpop.f32.mrb[0].mxu0
      %v6707 = vadd.f32 %v6514, %v6706
      %6708 = vmatprep.mubr.bf16.mxu0 %v5182
      %6709 = vmatmul.mubr.bf16.gmra.mrb[0].mxu0 %v5181
      %v6710 = vpop.f32.mrb[0].mxu0
      %v6711 = vadd.f32 %v6518, %v6710
      %v6712 = vpop.f32.mrb[0].mxu0
      %v6713 = vadd.f32 %v6520, %v6712
      %v6714 = vpop.f32.mrb[0].mxu0
      %v6715 = vadd.f32 %v6522, %v6714
      %v6716 = vpop.f32.mrb[0].mxu0
      %v6717 = vadd.f32 %v6524, %v6716
      %6718 = vmatprep.mubr.bf16.mxu0 %v5188
      %6719 = vmatmul.mubr.bf16.gmra.mrb[0].mxu0 %v5187
      %v6720 = vpop.f32.mrb[0].mxu0
      %v6721 = vadd.f32 %v6528, %v6720
      %v6722 = vpop.f32.mrb[0].mxu0
      %v6723 = vadd.f32 %v6530, %v6722
      %v6724 = vpop.f32.mrb[0].mxu0
      %v6725 = vadd.f32 %v6532, %v6724
      %v6726 = vpop.f32.mrb[0].mxu0
      %v6727 = vadd.f32 %v6534, %v6726
      %6728 = vmatprep.mubr.bf16.mxu0 %v5194
      %6729 = vmatmul.mubr.bf16.gmra.mrb[0].mxu0 %v5193
      %v6730 = vpop.f32.mrb[0].mxu0
      %v6731 = vadd.f32 %v6538, %v6730
      %v6732 = vpop.f32.mrb[0].mxu0
      %v6733 = vadd.f32 %v6540, %v6732
      %v6734 = vpop.f32.mrb[0].mxu0
      %v6735 = vadd.f32 %v6542, %v6734
      %v6736 = vpop.f32.mrb[0].mxu0
      %v6737 = vadd.f32 %v6544, %v6736
      %6738 = vmatprep.mubr.bf16.mxu0 %v5200
      %6739 = vmatmul.mubr.bf16.gmra.mrb[0].mxu0 %v5199
      %v6740 = vpop.f32.mrb[0].mxu0
      %v6741 = vadd.f32 %v6548, %v6740
      %v6742 = vpop.f32.mrb[0].mxu0
      %v6743 = vadd.f32 %v6550, %v6742
      %v6744 = vpop.f32.mrb[0].mxu0
      %v6745 = vadd.f32 %v6552, %v6744
      %v6746 = vpop.f32.mrb[0].mxu0
      %v6747 = vadd.f32 %v6554, %v6746
      %6748 = vmatprep.mubr.bf16.mxu0 %v5206
      %6749 = vmatmul.mubr.bf16.gmra.mrb[0].mxu0 %v5205
      %v6750 = vpop.f32.mrb[0].mxu0
      %v6751 = vadd.f32 %v6558, %v6750
      %v6752 = vpop.f32.mrb[0].mxu0
      %v6753 = vadd.f32 %v6560, %v6752
      %v6754 = vpop.f32.mrb[0].mxu0
      %v6755 = vadd.f32 %v6562, %v6754
      %v6756 = vpop.f32.mrb[0].mxu0
      %v6757 = vadd.f32 %v6564, %v6756
      %6758 = vmatprep.mubr.bf16.mxu0 %v5212
      %6759 = vmatmul.mubr.bf16.gmra.mrb[0].mxu0 %v5211
      %v6760 = vpop.f32.mrb[0].mxu0
      %v6761 = vadd.f32 %v6568, %v6760
      %v6762 = vpop.f32.mrb[0].mxu0
      %v6763 = vadd.f32 %v6570, %v6762
      %v6764 = vpop.f32.mrb[0].mxu0
      %v6765 = vadd.f32 %v6572, %v6764
      %v6766 = vpop.f32.mrb[0].mxu0
      %v6767 = vadd.f32 %v6574, %v6766
      %6768 = vdwg.mxu0
      %6769 = vmatprep.subr.bf16.mxu0 0
      %6770 = vmatpush1.bf16.msra.mxu0 %v5904
      %6771 = vmatprep.subr.bf16.mxu0 0
      %6772 = vmatpush1.bf16.msra.mxu0 %v5907
      %6773 = vmatprep.subr.bf16.mxu0 0
      %6774 = vmatpush1.bf16.msra.mxu0 %v5910
      %6775 = vmatprep.subr.bf16.mxu0 0
      %6776 = vmatpush1.bf16.msra.mxu0 %v5913
      %6777 = vmatprep.subr.bf16.mxu0 0
      %6778 = vmatpush1.bf16.msra.mxu0 %v5916
      %6779 = vmatprep.subr.bf16.mxu0 0
      %6780 = vmatpush1.bf16.msra.mxu0 %v5919
      %6781 = vmatprep.subr.bf16.mxu0 0
      %6782 = vmatpush1.bf16.msra.mxu0 %v5922
      %6783 = vmatprep.subr.bf16.mxu0 0
      %6784 = vmatpush1.bf16.msra.mxu0 %v5925
      %6785 = vmatprep.subr.bf16.mxu0 0
      %6786 = vmatpush1.bf16.msra.mxu0 %v5928
      %6787 = vmatprep.subr.bf16.mxu0 0
      %6788 = vmatpush1.bf16.msra.mxu0 %v5931
      %6789 = vmatprep.subr.bf16.mxu0 0
      %6790 = vmatpush1.bf16.msra.mxu0 %v5934
      %6791 = vmatprep.subr.bf16.mxu0 0
      %6792 = vmatpush1.bf16.msra.mxu0 %v5937
      %6793 = vmatprep.subr.bf16.mxu0 0
      %6794 = vmatpush1.bf16.msra.mxu0 %v5940
      %6795 = vmatprep.subr.bf16.mxu0 0
      %6796 = vmatpush1.bf16.msra.mxu0 %v5943
      %6797 = vmatprep.subr.bf16.mxu0 0
      %6798 = vmatpush1.bf16.msra.mxu0 %v5946
      %6799 = vmatprep.subr.bf16.mxu0 0
      %6800 = vmatpush1.bf16.msra.mxu0 %v5949
      %6801 = vmatprep.mubr.bf16.mxu0 %v5118
      %6802 = vmatmul.mubr.bf16.gmra.mrb[0].mxu0 %v5117
      %v6803 = vpop.f32.mrb[0].mxu0
      %v6804 = vadd.f32 %v5418, %v6803
      %v6805 = vpop.f32.mrb[0].mxu0
      %v6806 = vpop.f32.mrb[0].mxu0
      %v6807 = vadd.f32 %v5418, %v6806
      %v6808 = vpop.f32.mrb[0].mxu0
      %6809 = vmatprep.mubr.bf16.mxu0 %v5124
      %6810 = vmatmul.mubr.bf16.gmra.mrb[0].mxu0 %v5123
      %v6811 = vpop.f32.mrb[0].mxu0
      %v6812 = vadd.f32 %v5418, %v6811
      %v6813 = vpop.f32.mrb[0].mxu0
      %v6814 = vpop.f32.mrb[0].mxu0
      %v6815 = vadd.f32 %v5418, %v6814
      %v6816 = vpop.f32.mrb[0].mxu0
      %6817 = vmatprep.mubr.bf16.mxu0 %v5130
      %6818 = vmatmul.mubr.bf16.gmra.mrb[0].mxu0 %v5129
      %v6819 = vpop.f32.mrb[0].mxu0
      %v6820 = vadd.f32 %v5418, %v6819
      %v6821 = vpop.f32.mrb[0].mxu0
      %v6822 = vpop.f32.mrb[0].mxu0
      %v6823 = vadd.f32 %v5418, %v6822
      %v6824 = vpop.f32.mrb[0].mxu0
      %6825 = vmatprep.mubr.bf16.mxu0 %v5136
      %6826 = vmatmul.mubr.bf16.gmra.mrb[0].mxu0 %v5135
      %v6827 = vpop.f32.mrb[0].mxu0
      %v6828 = vadd.f32 %v5418, %v6827
      %v6829 = vpop.f32.mrb[0].mxu0
      %v6830 = vpop.f32.mrb[0].mxu0
      %v6831 = vadd.f32 %v5418, %v6830
      %v6832 = vpop.f32.mrb[0].mxu0
      %6833 = vmatprep.mubr.bf16.mxu0 %v5142
      %6834 = vmatmul.mubr.bf16.gmra.mrb[0].mxu0 %v5141
      %v6835 = vpop.f32.mrb[0].mxu0
      %v6836 = vadd.f32 %v5418, %v6835
      %v6837 = vpop.f32.mrb[0].mxu0
      %v6838 = vpop.f32.mrb[0].mxu0
      %v6839 = vadd.f32 %v5418, %v6838
      %v6840 = vpop.f32.mrb[0].mxu0
      %6841 = vmatprep.mubr.bf16.mxu0 %v5148
      %6842 = vmatmul.mubr.bf16.gmra.mrb[0].mxu0 %v5147
      %v6843 = vpop.f32.mrb[0].mxu0
      %v6844 = vadd.f32 %v5418, %v6843
      %v6845 = vpop.f32.mrb[0].mxu0
      %v6846 = vpop.f32.mrb[0].mxu0
      %v6847 = vadd.f32 %v5418, %v6846
      %v6848 = vpop.f32.mrb[0].mxu0
      %6849 = vmatprep.mubr.bf16.mxu0 %v5154
      %6850 = vmatmul.mubr.bf16.gmra.mrb[0].mxu0 %v5153
      %v6851 = vpop.f32.mrb[0].mxu0
      %v6852 = vadd.f32 %v5418, %v6851
      %v6853 = vpop.f32.mrb[0].mxu0
      %v6854 = vpop.f32.mrb[0].mxu0
      %v6855 = vadd.f32 %v5418, %v6854
      %v6856 = vpop.f32.mrb[0].mxu0
      %6857 = vmatprep.mubr.bf16.mxu0 %v5160
      %6858 = vmatmul.mubr.bf16.gmra.mrb[0].mxu0 %v5159
      %v6859 = vpop.f32.mrb[0].mxu0
      %v6860 = vadd.f32 %v5418, %v6859
      %v6861 = vpop.f32.mrb[0].mxu0
      %v6862 = vpop.f32.mrb[0].mxu0
      %v6863 = vadd.f32 %v5418, %v6862
      %v6864 = vpop.f32.mrb[0].mxu0
      %6865 = vmatprep.mubr.bf16.mxu0 %v5166
      %6866 = vmatmul.mubr.bf16.gmra.mrb[0].mxu0 %v5165
      %v6867 = vpop.f32.mrb[0].mxu0
      %v6868 = vadd.f32 %v5418, %v6867
      %v6869 = vpop.f32.mrb[0].mxu0
      %v6870 = vpop.f32.mrb[0].mxu0
      %v6871 = vadd.f32 %v5418, %v6870
      %v6872 = vpop.f32.mrb[0].mxu0
      %6873 = vmatprep.mubr.bf16.mxu0 %v5172
      %6874 = vmatmul.mubr.bf16.gmra.mrb[0].mxu0 %v5171
      %v6875 = vpop.f32.mrb[0].mxu0
      %v6876 = vadd.f32 %v5418, %v6875
      %v6877 = vpop.f32.mrb[0].mxu0
      %v6878 = vpop.f32.mrb[0].mxu0
      %v6879 = vadd.f32 %v5418, %v6878
      %v6880 = vpop.f32.mrb[0].mxu0
      %6881 = vmatprep.mubr.bf16.mxu0 %v5178
      %6882 = vmatmul.mubr.bf16.gmra.mrb[0].mxu0 %v5177
      %v6883 = vpop.f32.mrb[0].mxu0
      %v6884 = vadd.f32 %v5418, %v6883
      %v6885 = vpop.f32.mrb[0].mxu0
      %v6886 = vpop.f32.mrb[0].mxu0
      %v6887 = vadd.f32 %v5418, %v6886
      %v6888 = vpop.f32.mrb[0].mxu0
      %6889 = vmatprep.mubr.bf16.mxu0 %v5184
      %6890 = vmatmul.mubr.bf16.gmra.mrb[0].mxu0 %v5183
      %v6891 = vpop.f32.mrb[0].mxu0
      %v6892 = vadd.f32 %v5418, %v6891
      %v6893 = vpop.f32.mrb[0].mxu0
      %v6894 = vpop.f32.mrb[0].mxu0
      %v6895 = vadd.f32 %v5418, %v6894
      %v6896 = vpop.f32.mrb[0].mxu0
      %6897 = vmatprep.mubr.bf16.mxu0 %v5190
      %6898 = vmatmul.mubr.bf16.gmra.mrb[0].mxu0 %v5189
      %v6899 = vpop.f32.mrb[0].mxu0
      %v6900 = vadd.f32 %v5418, %v6899
      %v6901 = vpop.f32.mrb[0].mxu0
      %v6902 = vpop.f32.mrb[0].mxu0
      %v6903 = vadd.f32 %v5418, %v6902
      %v6904 = vpop.f32.mrb[0].mxu0
      %6905 = vmatprep.mubr.bf16.mxu0 %v5196
      %6906 = vmatmul.mubr.bf16.gmra.mrb[0].mxu0 %v5195
      %v6907 = vpop.f32.mrb[0].mxu0
      %v6908 = vadd.f32 %v5418, %v6907
      %v6909 = vpop.f32.mrb[0].mxu0
      %v6910 = vpop.f32.mrb[0].mxu0
      %v6911 = vadd.f32 %v5418, %v6910
      %v6912 = vpop.f32.mrb[0].mxu0
      %6913 = vmatprep.mubr.bf16.mxu0 %v5202
      %6914 = vmatmul.mubr.bf16.gmra.mrb[0].mxu0 %v5201
      %v6915 = vpop.f32.mrb[0].mxu0
      %v6916 = vadd.f32 %v5418, %v6915
      %v6917 = vpop.f32.mrb[0].mxu0
      %v6918 = vpop.f32.mrb[0].mxu0
      %v6919 = vadd.f32 %v5418, %v6918
      %v6920 = vpop.f32.mrb[0].mxu0
      %6921 = vmatprep.mubr.bf16.mxu0 %v5208
      %6922 = vmatmul.mubr.bf16.gmra.mrb[0].mxu0 %v5207
      %v6923 = vpop.f32.mrb[0].mxu0
      %v6924 = vadd.f32 %v5418, %v6923
      %v6925 = vpop.f32.mrb[0].mxu0
      %v6926 = vpop.f32.mrb[0].mxu0
      %v6927 = vadd.f32 %v5418, %v6926
      %v6928 = vpop.f32.mrb[0].mxu0
      %6929 = vdwg.mxu0
      %6930 = vmatprep.subr.bf16.mxu0 0
      %6931 = vmatpush1.bf16.msra.mxu0 %v5952
      %6932 = vmatprep.subr.bf16.mxu0 0
      %6933 = vmatpush1.bf16.msra.mxu0 %v5955
      %6934 = vmatprep.subr.bf16.mxu0 0
      %6935 = vmatpush1.bf16.msra.mxu0 %v5958
      %6936 = vmatprep.subr.bf16.mxu0 0
      %6937 = vmatpush1.bf16.msra.mxu0 %v5961
      %6938 = vmatprep.subr.bf16.mxu0 0
      %6939 = vmatpush1.bf16.msra.mxu0 %v5964
      %6940 = vmatprep.subr.bf16.mxu0 0
      %6941 = vmatpush1.bf16.msra.mxu0 %v5967
      %6942 = vmatprep.subr.bf16.mxu0 0
      %6943 = vmatpush1.bf16.msra.mxu0 %v5970
      %6944 = vmatprep.subr.bf16.mxu0 0
      %6945 = vmatpush1.bf16.msra.mxu0 %v5973
      %6946 = vmatprep.subr.bf16.mxu0 0
      %6947 = vmatpush1.bf16.msra.mxu0 %v5976
      %6948 = vmatprep.subr.bf16.mxu0 0
      %6949 = vmatpush1.bf16.msra.mxu0 %v5979
      %6950 = vmatprep.subr.bf16.mxu0 0
      %6951 = vmatpush1.bf16.msra.mxu0 %v5982
      %6952 = vmatprep.subr.bf16.mxu0 0
      %6953 = vmatpush1.bf16.msra.mxu0 %v5985
      %6954 = vmatprep.subr.bf16.mxu0 0
      %6955 = vmatpush1.bf16.msra.mxu0 %v5988
      %6956 = vmatprep.subr.bf16.mxu0 0
      %6957 = vmatpush1.bf16.msra.mxu0 %v5991
      %6958 = vmatprep.subr.bf16.mxu0 0
      %6959 = vmatpush1.bf16.msra.mxu0 %v5994
      %6960 = vmatprep.subr.bf16.mxu0 0
      %6961 = vmatpush1.bf16.msra.mxu0 %v5997
      %6962 = vmatprep.mubr.bf16.mxu0 %v5120
      %6963 = vmatmul.mubr.bf16.gmra.mrb[0].mxu0 %v5119
      %v6964 = vpop.f32.mrb[0].mxu0
      %v6965 = vadd.f32 %v6804, %v6964
      %v6966 = vpop.f32.mrb[0].mxu0
      %v6967 = vpop.f32.mrb[0].mxu0
      %v6968 = vadd.f32 %v6807, %v6967
      %v6969 = vpop.f32.mrb[0].mxu0
      %6970 = vmatprep.mubr.bf16.mxu0 %v5126
      %6971 = vmatmul.mubr.bf16.gmra.mrb[0].mxu0 %v5125
      %v6972 = vpop.f32.mrb[0].mxu0
      %v6973 = vadd.f32 %v6812, %v6972
      %v6974 = vpop.f32.mrb[0].mxu0
      %v6975 = vpop.f32.mrb[0].mxu0
      %v6976 = vadd.f32 %v6815, %v6975
      %v6977 = vpop.f32.mrb[0].mxu0
      %6978 = vmatprep.mubr.bf16.mxu0 %v5132
      %6979 = vmatmul.mubr.bf16.gmra.mrb[0].mxu0 %v5131
      %v6980 = vpop.f32.mrb[0].mxu0
      %v6981 = vadd.f32 %v6820, %v6980
      %v6982 = vpop.f32.mrb[0].mxu0
      %v6983 = vpop.f32.mrb[0].mxu0
      %v6984 = vadd.f32 %v6823, %v6983
      %v6985 = vpop.f32.mrb[0].mxu0
      %6986 = vmatprep.mubr.bf16.mxu0 %v5138
      %6987 = vmatmul.mubr.bf16.gmra.mrb[0].mxu0 %v5137
      %v6988 = vpop.f32.mrb[0].mxu0
      %v6989 = vadd.f32 %v6828, %v6988
      %v6990 = vpop.f32.mrb[0].mxu0
      %v6991 = vpop.f32.mrb[0].mxu0
      %v6992 = vadd.f32 %v6831, %v6991
      %v6993 = vpop.f32.mrb[0].mxu0
      %6994 = vmatprep.mubr.bf16.mxu0 %v5144
      %6995 = vmatmul.mubr.bf16.gmra.mrb[0].mxu0 %v5143
      %v6996 = vpop.f32.mrb[0].mxu0
      %v6997 = vadd.f32 %v6836, %v6996
      %v6998 = vpop.f32.mrb[0].mxu0
      %v6999 = vpop.f32.mrb[0].mxu0
      %v7000 = vadd.f32 %v6839, %v6999
      %v7001 = vpop.f32.mrb[0].mxu0
      %7002 = vmatprep.mubr.bf16.mxu0 %v5150
      %7003 = vmatmul.mubr.bf16.gmra.mrb[0].mxu0 %v5149
      %v7004 = vpop.f32.mrb[0].mxu0
      %v7005 = vadd.f32 %v6844, %v7004
      %v7006 = vpop.f32.mrb[0].mxu0
      %v7007 = vpop.f32.mrb[0].mxu0
      %v7008 = vadd.f32 %v6847, %v7007
      %v7009 = vpop.f32.mrb[0].mxu0
      %7010 = vmatprep.mubr.bf16.mxu0 %v5156
      %7011 = vmatmul.mubr.bf16.gmra.mrb[0].mxu0 %v5155
      %v7012 = vpop.f32.mrb[0].mxu0
      %v7013 = vadd.f32 %v6852, %v7012
      %v7014 = vpop.f32.mrb[0].mxu0
      %v7015 = vpop.f32.mrb[0].mxu0
      %v7016 = vadd.f32 %v6855, %v7015
      %v7017 = vpop.f32.mrb[0].mxu0
      %7018 = vmatprep.mubr.bf16.mxu0 %v5162
      %7019 = vmatmul.mubr.bf16.gmra.mrb[0].mxu0 %v5161
      %v7020 = vpop.f32.mrb[0].mxu0
      %v7021 = vadd.f32 %v6860, %v7020
      %v7022 = vpop.f32.mrb[0].mxu0
      %v7023 = vpop.f32.mrb[0].mxu0
      %v7024 = vadd.f32 %v6863, %v7023
      %v7025 = vpop.f32.mrb[0].mxu0
      %7026 = vmatprep.mubr.bf16.mxu0 %v5168
      %7027 = vmatmul.mubr.bf16.gmra.mrb[0].mxu0 %v5167
      %v7028 = vpop.f32.mrb[0].mxu0
      %v7029 = vadd.f32 %v6868, %v7028
      %v7030 = vpop.f32.mrb[0].mxu0
      %v7031 = vpop.f32.mrb[0].mxu0
      %v7032 = vadd.f32 %v6871, %v7031
      %v7033 = vpop.f32.mrb[0].mxu0
      %7034 = vmatprep.mubr.bf16.mxu0 %v5174
      %7035 = vmatmul.mubr.bf16.gmra.mrb[0].mxu0 %v5173
      %v7036 = vpop.f32.mrb[0].mxu0
      %v7037 = vadd.f32 %v6876, %v7036
      %v7038 = vpop.f32.mrb[0].mxu0
      %v7039 = vpop.f32.mrb[0].mxu0
      %v7040 = vadd.f32 %v6879, %v7039
      %v7041 = vpop.f32.mrb[0].mxu0
      %7042 = vmatprep.mubr.bf16.mxu0 %v5180
      %7043 = vmatmul.mubr.bf16.gmra.mrb[0].mxu0 %v5179
      %v7044 = vpop.f32.mrb[0].mxu0
      %v7045 = vadd.f32 %v6884, %v7044
      %v7046 = vpop.f32.mrb[0].mxu0
      %v7047 = vpop.f32.mrb[0].mxu0
      %v7048 = vadd.f32 %v6887, %v7047
      %v7049 = vpop.f32.mrb[0].mxu0
      %7050 = vmatprep.mubr.bf16.mxu0 %v5186
      %7051 = vmatmul.mubr.bf16.gmra.mrb[0].mxu0 %v5185
      %v7052 = vpop.f32.mrb[0].mxu0
      %v7053 = vadd.f32 %v6892, %v7052
      %v7054 = vpop.f32.mrb[0].mxu0
      %v7055 = vpop.f32.mrb[0].mxu0
      %v7056 = vadd.f32 %v6895, %v7055
      %v7057 = vpop.f32.mrb[0].mxu0
      %7058 = vmatprep.mubr.bf16.mxu0 %v5192
      %7059 = vmatmul.mubr.bf16.gmra.mrb[0].mxu0 %v5191
      %v7060 = vpop.f32.mrb[0].mxu0
      %v7061 = vadd.f32 %v6900, %v7060
      %v7062 = vpop.f32.mrb[0].mxu0
      %v7063 = vpop.f32.mrb[0].mxu0
      %v7064 = vadd.f32 %v6903, %v7063
      %v7065 = vpop.f32.mrb[0].mxu0
      %7066 = vmatprep.mubr.bf16.mxu0 %v5198
      %7067 = vmatmul.mubr.bf16.gmra.mrb[0].mxu0 %v5197
      %v7068 = vpop.f32.mrb[0].mxu0
      %v7069 = vadd.f32 %v6908, %v7068
      %v7070 = vpop.f32.mrb[0].mxu0
      %v7071 = vpop.f32.mrb[0].mxu0
      %v7072 = vadd.f32 %v6911, %v7071
      %v7073 = vpop.f32.mrb[0].mxu0
      %7074 = vmatprep.mubr.bf16.mxu0 %v5204
      %7075 = vmatmul.mubr.bf16.gmra.mrb[0].mxu0 %v5203
      %v7076 = vpop.f32.mrb[0].mxu0
      %v7077 = vadd.f32 %v6916, %v7076
      %v7078 = vpop.f32.mrb[0].mxu0
      %v7079 = vpop.f32.mrb[0].mxu0
      %v7080 = vadd.f32 %v6919, %v7079
      %v7081 = vpop.f32.mrb[0].mxu0
      %7082 = vmatprep.mubr.bf16.mxu0 %v5210
      %7083 = vmatmul.mubr.bf16.gmra.mrb[0].mxu0 %v5209
      %v7084 = vpop.f32.mrb[0].mxu0
      %v7085 = vadd.f32 %v6924, %v7084
      %v7086 = vpop.f32.mrb[0].mxu0
      %v7087 = vpop.f32.mrb[0].mxu0
      %v7088 = vadd.f32 %v6927, %v7087
      %v7089 = vpop.f32.mrb[0].mxu0
      %7090 = vdwg.mxu0
      %7091 = vmatprep.subr.bf16.mxu0 0
      %7092 = vmatpush1.bf16.msra.mxu0 %v6000
      %7093 = vmatprep.subr.bf16.mxu0 0
      %7094 = vmatpush1.bf16.msra.mxu0 %v6003
      %7095 = vmatprep.subr.bf16.mxu0 0
      %7096 = vmatpush1.bf16.msra.mxu0 %v6006
      %7097 = vmatprep.subr.bf16.mxu0 0
      %7098 = vmatpush1.bf16.msra.mxu0 %v6009
      %7099 = vmatprep.subr.bf16.mxu0 0
      %7100 = vmatpush1.bf16.msra.mxu0 %v6012
      %7101 = vmatprep.subr.bf16.mxu0 0
      %7102 = vmatpush1.bf16.msra.mxu0 %v6015
      %7103 = vmatprep.subr.bf16.mxu0 0
      %7104 = vmatpush1.bf16.msra.mxu0 %v6018
      %7105 = vmatprep.subr.bf16.mxu0 0
      %7106 = vmatpush1.bf16.msra.mxu0 %v6021
      %7107 = vmatprep.subr.bf16.mxu0 0
      %7108 = vmatpush1.bf16.msra.mxu0 %v6024
      %7109 = vmatprep.subr.bf16.mxu0 0
      %7110 = vmatpush1.bf16.msra.mxu0 %v6027
      %7111 = vmatprep.subr.bf16.mxu0 0
      %7112 = vmatpush1.bf16.msra.mxu0 %v6030
      %7113 = vmatprep.subr.bf16.mxu0 0
      %7114 = vmatpush1.bf16.msra.mxu0 %v6033
      %7115 = vmatprep.subr.bf16.mxu0 0
      %7116 = vmatpush1.bf16.msra.mxu0 %v6036
      %7117 = vmatprep.subr.bf16.mxu0 0
      %7118 = vmatpush1.bf16.msra.mxu0 %v6039
      %7119 = vmatprep.subr.bf16.mxu0 0
      %7120 = vmatpush1.bf16.msra.mxu0 %v6042
      %7121 = vmatprep.subr.bf16.mxu0 0
      %7122 = vmatpush1.bf16.msra.mxu0 %v6045
      %7123 = vmatprep.mubr.bf16.mxu0 %v5122
      %7124 = vmatmul.mubr.bf16.gmra.mrb[0].mxu0 %v5121
      %v7125 = vpop.f32.mrb[0].mxu0
      %v7126 = vadd.f32 %v6965, %v7125
      %v7127 = vpop.f32.mrb[0].mxu0
      %v7128 = vpop.f32.mrb[0].mxu0
      %v7129 = vadd.f32 %v6968, %v7128
      %v7130 = vpop.f32.mrb[0].mxu0
      %7131 = vmatprep.mubr.bf16.mxu0 %v5128
      %7132 = vmatmul.mubr.bf16.gmra.mrb[0].mxu0 %v5127
      %v7133 = vpop.f32.mrb[0].mxu0
      %v7134 = vadd.f32 %v6973, %v7133
      %v7135 = vpop.f32.mrb[0].mxu0
      %v7136 = vpop.f32.mrb[0].mxu0
      %v7137 = vadd.f32 %v6976, %v7136
      %v7138 = vpop.f32.mrb[0].mxu0
      %7139 = vmatprep.mubr.bf16.mxu0 %v5134
      %7140 = vmatmul.mubr.bf16.gmra.mrb[0].mxu0 %v5133
      %v7141 = vpop.f32.mrb[0].mxu0
      %v7142 = vadd.f32 %v6981, %v7141
      %v7143 = vpop.f32.mrb[0].mxu0
      %v7144 = vpop.f32.mrb[0].mxu0
      %v7145 = vadd.f32 %v6984, %v7144
      %v7146 = vpop.f32.mrb[0].mxu0
      %7147 = vmatprep.mubr.bf16.mxu0 %v5140
      %7148 = vmatmul.mubr.bf16.gmra.mrb[0].mxu0 %v5139
      %v7149 = vpop.f32.mrb[0].mxu0
      %v7150 = vadd.f32 %v6989, %v7149
      %v7151 = vpop.f32.mrb[0].mxu0
      %v7152 = vpop.f32.mrb[0].mxu0
      %v7153 = vadd.f32 %v6992, %v7152
      %v7154 = vpop.f32.mrb[0].mxu0
      %7155 = vmatprep.mubr.bf16.mxu0 %v5146
      %7156 = vmatmul.mubr.bf16.gmra.mrb[0].mxu0 %v5145
      %v7157 = vpop.f32.mrb[0].mxu0
      %v7158 = vadd.f32 %v6997, %v7157
      %v7159 = vpop.f32.mrb[0].mxu0
      %v7160 = vpop.f32.mrb[0].mxu0
      %v7161 = vadd.f32 %v7000, %v7160
      %v7162 = vpop.f32.mrb[0].mxu0
      %7163 = vmatprep.mubr.bf16.mxu0 %v5152
      %7164 = vmatmul.mubr.bf16.gmra.mrb[0].mxu0 %v5151
      %v7165 = vpop.f32.mrb[0].mxu0
      %v7166 = vadd.f32 %v7005, %v7165
      %v7167 = vpop.f32.mrb[0].mxu0
      %v7168 = vpop.f32.mrb[0].mxu0
      %v7169 = vadd.f32 %v7008, %v7168
      %v7170 = vpop.f32.mrb[0].mxu0
      %7171 = vmatprep.mubr.bf16.mxu0 %v5158
      %7172 = vmatmul.mubr.bf16.gmra.mrb[0].mxu0 %v5157
      %v7173 = vpop.f32.mrb[0].mxu0
      %v7174 = vadd.f32 %v7013, %v7173
      %v7175 = vpop.f32.mrb[0].mxu0
      %v7176 = vpop.f32.mrb[0].mxu0
      %v7177 = vadd.f32 %v7016, %v7176
      %v7178 = vpop.f32.mrb[0].mxu0
      %7179 = vmatprep.mubr.bf16.mxu0 %v5164
      %7180 = vmatmul.mubr.bf16.gmra.mrb[0].mxu0 %v5163
      %v7181 = vpop.f32.mrb[0].mxu0
      %v7182 = vadd.f32 %v7021, %v7181
      %v7183 = vpop.f32.mrb[0].mxu0
      %v7184 = vpop.f32.mrb[0].mxu0
      %v7185 = vadd.f32 %v7024, %v7184
      %v7186 = vpop.f32.mrb[0].mxu0
      %7187 = vmatprep.mubr.bf16.mxu0 %v5170
      %7188 = vmatmul.mubr.bf16.gmra.mrb[0].mxu0 %v5169
      %v7189 = vpop.f32.mrb[0].mxu0
      %v7190 = vadd.f32 %v7029, %v7189
      %v7191 = vpop.f32.mrb[0].mxu0
      %v7192 = vpop.f32.mrb[0].mxu0
      %v7193 = vadd.f32 %v7032, %v7192
      %v7194 = vpop.f32.mrb[0].mxu0
      %7195 = vmatprep.mubr.bf16.mxu0 %v5176
      %7196 = vmatmul.mubr.bf16.gmra.mrb[0].mxu0 %v5175
      %v7197 = vpop.f32.mrb[0].mxu0
      %v7198 = vadd.f32 %v7037, %v7197
      %v7199 = vpop.f32.mrb[0].mxu0
      %v7200 = vpop.f32.mrb[0].mxu0
      %v7201 = vadd.f32 %v7040, %v7200
      %v7202 = vpop.f32.mrb[0].mxu0
      %7203 = vmatprep.mubr.bf16.mxu0 %v5182
      %7204 = vmatmul.mubr.bf16.gmra.mrb[0].mxu0 %v5181
      %v7205 = vpop.f32.mrb[0].mxu0
      %v7206 = vadd.f32 %v7045, %v7205
      %v7207 = vpop.f32.mrb[0].mxu0
      %v7208 = vpop.f32.mrb[0].mxu0
      %v7209 = vadd.f32 %v7048, %v7208
      %v7210 = vpop.f32.mrb[0].mxu0
      %7211 = vmatprep.mubr.bf16.mxu0 %v5188
      %7212 = vmatmul.mubr.bf16.gmra.mrb[0].mxu0 %v5187
      %v7213 = vpop.f32.mrb[0].mxu0
      %v7214 = vadd.f32 %v7053, %v7213
      %v7215 = vpop.f32.mrb[0].mxu0
      %v7216 = vpop.f32.mrb[0].mxu0
      %v7217 = vadd.f32 %v7056, %v7216
      %v7218 = vpop.f32.mrb[0].mxu0
      %7219 = vmatprep.mubr.bf16.mxu0 %v5194
      %7220 = vmatmul.mubr.bf16.gmra.mrb[0].mxu0 %v5193
      %v7221 = vpop.f32.mrb[0].mxu0
      %v7222 = vadd.f32 %v7061, %v7221
      %v7223 = vpop.f32.mrb[0].mxu0
      %v7224 = vpop.f32.mrb[0].mxu0
      %v7225 = vadd.f32 %v7064, %v7224
      %v7226 = vpop.f32.mrb[0].mxu0
      %7227 = vmatprep.mubr.bf16.mxu0 %v5200
      %7228 = vmatmul.mubr.bf16.gmra.mrb[0].mxu0 %v5199
      %v7229 = vpop.f32.mrb[0].mxu0
      %v7230 = vadd.f32 %v7069, %v7229
      %v7231 = vpop.f32.mrb[0].mxu0
      %v7232 = vpop.f32.mrb[0].mxu0
      %v7233 = vadd.f32 %v7072, %v7232
      %v7234 = vpop.f32.mrb[0].mxu0
      %7235 = vmatprep.mubr.bf16.mxu0 %v5206
      %7236 = vmatmul.mubr.bf16.gmra.mrb[0].mxu0 %v5205
      %v7237 = vpop.f32.mrb[0].mxu0
      %v7238 = vadd.f32 %v7077, %v7237
      %v7239 = vpop.f32.mrb[0].mxu0
      %v7240 = vpop.f32.mrb[0].mxu0
      %v7241 = vadd.f32 %v7080, %v7240
      %v7242 = vpop.f32.mrb[0].mxu0
      %7243 = vmatprep.mubr.bf16.mxu0 %v5212
      %7244 = vmatmul.mubr.bf16.gmra.mrb[0].mxu0 %v5211
      %v7245 = vpop.f32.mrb[0].mxu0
      %v7246 = vadd.f32 %v7085, %v7245
      %v7247 = vpop.f32.mrb[0].mxu0
      %v7248 = vpop.f32.mrb[0].mxu0
      %v7249 = vadd.f32 %v7088, %v7248
      %v7250 = vpop.f32.mrb[0].mxu0
      %7251 = vdwg.mxu0
      %vm7252 = vcmp.ge.f32.partialorder %v6611, 0.0
      %vm7253 = vcmp.ge.f32.partialorder %v6613, 0.0
      %vm7254 = vcmp.ge.f32.partialorder %v7126, 0.0
      %vm7255 = vcmp.ge.f32.partialorder %v6615, 0.0
      %vm7256 = vcmp.ge.f32.partialorder %v6617, 0.0
      %vm7257 = vcmp.ge.f32.partialorder %v7129, 0.0
      %vm7258 = vcmp.ge.f32.partialorder %v6621, 0.0
      %vm7259 = vcmp.ge.f32.partialorder %v6623, 0.0
      %vm7260 = vcmp.ge.f32.partialorder %v7134, 0.0
      %vm7261 = vcmp.ge.f32.partialorder %v6625, 0.0
      %vm7262 = vcmp.ge.f32.partialorder %v6627, 0.0
      %vm7263 = vcmp.ge.f32.partialorder %v7137, 0.0
      %vm7264 = vcmp.ge.f32.partialorder %v6631, 0.0
      %vm7265 = vcmp.ge.f32.partialorder %v6633, 0.0
      %vm7266 = vcmp.ge.f32.partialorder %v7142, 0.0
      %vm7267 = vcmp.ge.f32.partialorder %v6635, 0.0
      %vm7268 = vcmp.ge.f32.partialorder %v6637, 0.0
      %vm7269 = vcmp.ge.f32.partialorder %v7145, 0.0
      %vm7270 = vcmp.ge.f32.partialorder %v6641, 0.0
      %vm7271 = vcmp.ge.f32.partialorder %v6643, 0.0
      %vm7272 = vcmp.ge.f32.partialorder %v7150, 0.0
      %vm7273 = vcmp.ge.f32.partialorder %v6645, 0.0
      %vm7274 = vcmp.ge.f32.partialorder %v6647, 0.0
      %vm7275 = vcmp.ge.f32.partialorder %v7153, 0.0
      %vm7276 = vcmp.ge.f32.partialorder %v6651, 0.0
      %vm7277 = vcmp.ge.f32.partialorder %v6653, 0.0
      %vm7278 = vcmp.ge.f32.partialorder %v7158, 0.0
      %vm7279 = vcmp.ge.f32.partialorder %v6655, 0.0
      %vm7280 = vcmp.ge.f32.partialorder %v6657, 0.0
      %vm7281 = vcmp.ge.f32.partialorder %v7161, 0.0
      %vm7282 = vcmp.ge.f32.partialorder %v6661, 0.0
      %vm7283 = vcmp.ge.f32.partialorder %v6663, 0.0
      %vm7284 = vcmp.ge.f32.partialorder %v7166, 0.0
      %vm7285 = vcmp.ge.f32.partialorder %v6665, 0.0
      %vm7286 = vcmp.ge.f32.partialorder %v6667, 0.0
      %vm7287 = vcmp.ge.f32.partialorder %v7169, 0.0
      %vm7288 = vcmp.ge.f32.partialorder %v6671, 0.0
      %vm7289 = vcmp.ge.f32.partialorder %v6673, 0.0
      %vm7290 = vcmp.ge.f32.partialorder %v7174, 0.0
      %vm7291 = vcmp.ge.f32.partialorder %v6675, 0.0
      %vm7292 = vcmp.ge.f32.partialorder %v6677, 0.0
      %vm7293 = vcmp.ge.f32.partialorder %v7177, 0.0
      %vm7294 = vcmp.ge.f32.partialorder %v6681, 0.0
      %vm7295 = vcmp.ge.f32.partialorder %v6683, 0.0
      %vm7296 = vcmp.ge.f32.partialorder %v7182, 0.0
      %vm7297 = vcmp.ge.f32.partialorder %v6685, 0.0
      %vm7298 = vcmp.ge.f32.partialorder %v6687, 0.0
      %vm7299 = vcmp.ge.f32.partialorder %v7185, 0.0
      %vm7300 = vcmp.ge.f32.partialorder %v6691, 0.0
      %vm7301 = vcmp.ge.f32.partialorder %v6693, 0.0
      %vm7302 = vcmp.ge.f32.partialorder %v7190, 0.0
      %vm7303 = vcmp.ge.f32.partialorder %v6695, 0.0
      %vm7304 = vcmp.ge.f32.partialorder %v6697, 0.0
      %vm7305 = vcmp.ge.f32.partialorder %v7193, 0.0
      %vm7306 = vcmp.ge.f32.partialorder %v6701, 0.0
      %vm7307 = vcmp.ge.f32.partialorder %v6703, 0.0
      %vm7308 = vcmp.ge.f32.partialorder %v7198, 0.0
      %vm7309 = vcmp.ge.f32.partialorder %v6705, 0.0
      %vm7310 = vcmp.ge.f32.partialorder %v6707, 0.0
      %vm7311 = vcmp.ge.f32.partialorder %v7201, 0.0
      %vm7312 = vcmp.ge.f32.partialorder %v6711, 0.0
      %vm7313 = vcmp.ge.f32.partialorder %v6713, 0.0
      %vm7314 = vcmp.ge.f32.partialorder %v7206, 0.0
      %vm7315 = vcmp.ge.f32.partialorder %v6715, 0.0
      %vm7316 = vcmp.ge.f32.partialorder %v6717, 0.0
      %vm7317 = vcmp.ge.f32.partialorder %v7209, 0.0
      %vm7318 = vcmp.ge.f32.partialorder %v6721, 0.0
      %vm7319 = vcmp.ge.f32.partialorder %v6723, 0.0
      %vm7320 = vcmp.ge.f32.partialorder %v7214, 0.0
      %vm7321 = vcmp.ge.f32.partialorder %v6725, 0.0
      %vm7322 = vcmp.ge.f32.partialorder %v6727, 0.0
      %vm7323 = vcmp.ge.f32.partialorder %v7217, 0.0
      %vm7324 = vcmp.ge.f32.partialorder %v6731, 0.0
      %vm7325 = vcmp.ge.f32.partialorder %v6733, 0.0
      %vm7326 = vcmp.ge.f32.partialorder %v7222, 0.0
      %vm7327 = vcmp.ge.f32.partialorder %v6735, 0.0
      %vm7328 = vcmp.ge.f32.partialorder %v6737, 0.0
      %vm7329 = vcmp.ge.f32.partialorder %v7225, 0.0
      %vm7330 = vcmp.ge.f32.partialorder %v6741, 0.0
      %vm7331 = vcmp.ge.f32.partialorder %v6743, 0.0
      %vm7332 = vcmp.ge.f32.partialorder %v7230, 0.0
      %vm7333 = vcmp.ge.f32.partialorder %v6745, 0.0
      %vm7334 = vcmp.ge.f32.partialorder %v6747, 0.0
      %vm7335 = vcmp.ge.f32.partialorder %v7233, 0.0
      %vm7336 = vcmp.ge.f32.partialorder %v6751, 0.0
      %vm7337 = vcmp.ge.f32.partialorder %v6753, 0.0
      %vm7338 = vcmp.ge.f32.partialorder %v7238, 0.0
      %vm7339 = vcmp.ge.f32.partialorder %v6755, 0.0
      %vm7340 = vcmp.ge.f32.partialorder %v6757, 0.0
      %vm7341 = vcmp.ge.f32.partialorder %v7241, 0.0
      %vm7342 = vcmp.ge.f32.partialorder %v6761, 0.0
      %vm7343 = vcmp.ge.f32.partialorder %v6763, 0.0
      %vm7344 = vcmp.ge.f32.partialorder %v7246, 0.0
      %vm7345 = vcmp.ge.f32.partialorder %v6765, 0.0
      %vm7346 = vcmp.ge.f32.partialorder %v6767, 0.0
      %vm7347 = vcmp.ge.f32.partialorder %v7249, 0.0
      %v7348 = vmul.f32 %v6611, 0.01
      %v7349 = vmul.f32 %v6613, 0.01
      %v7350 = vmul.f32 %v7126, 0.01
      %v7351 = vmul.f32 %v6615, 0.01
      %v7352 = vmul.f32 %v6617, 0.01
      %v7353 = vmul.f32 %v7129, 0.01
      %v7354 = vmul.f32 %v6621, 0.01
      %v7355 = vmul.f32 %v6623, 0.01
      %v7356 = vmul.f32 %v7134, 0.01
      %v7357 = vmul.f32 %v6625, 0.01
      %v7358 = vmul.f32 %v6627, 0.01
      %v7359 = vmul.f32 %v7137, 0.01
      %v7360 = vmul.f32 %v6631, 0.01
      %v7361 = vmul.f32 %v6633, 0.01
      %v7362 = vmul.f32 %v7142, 0.01
      %v7363 = vmul.f32 %v6635, 0.01
      %v7364 = vmul.f32 %v6637, 0.01
      %v7365 = vmul.f32 %v7145, 0.01
      %v7366 = vmul.f32 %v6641, 0.01
      %v7367 = vmul.f32 %v6643, 0.01
      %v7368 = vmul.f32 %v7150, 0.01
      %v7369 = vmul.f32 %v6645, 0.01
      %v7370 = vmul.f32 %v6647, 0.01
      %v7371 = vmul.f32 %v7153, 0.01
      %v7372 = vmul.f32 %v6651, 0.01
      %v7373 = vmul.f32 %v6653, 0.01
      %v7374 = vmul.f32 %v7158, 0.01
      %v7375 = vmul.f32 %v6655, 0.01
      %v7376 = vmul.f32 %v6657, 0.01
      %v7377 = vmul.f32 %v7161, 0.01
      %v7378 = vmul.f32 %v6661, 0.01
      %v7379 = vmul.f32 %v6663, 0.01
      %v7380 = vmul.f32 %v7166, 0.01
      %v7381 = vmul.f32 %v6665, 0.01
      %v7382 = vmul.f32 %v6667, 0.01
      %v7383 = vmul.f32 %v7169, 0.01
      %v7384 = vmul.f32 %v6671, 0.01
      %v7385 = vmul.f32 %v6673, 0.01
      %v7386 = vmul.f32 %v7174, 0.01
      %v7387 = vmul.f32 %v6675, 0.01
      %v7388 = vmul.f32 %v6677, 0.01
      %v7389 = vmul.f32 %v7177, 0.01
      %v7390 = vmul.f32 %v6681, 0.01
      %v7391 = vmul.f32 %v6683, 0.01
      %v7392 = vmul.f32 %v7182, 0.01
      %v7393 = vmul.f32 %v6685, 0.01
      %v7394 = vmul.f32 %v6687, 0.01
      %v7395 = vmul.f32 %v7185, 0.01
      %v7396 = vmul.f32 %v6691, 0.01
      %v7397 = vmul.f32 %v6693, 0.01
      %v7398 = vmul.f32 %v7190, 0.01
      %v7399 = vmul.f32 %v6695, 0.01
      %v7400 = vmul.f32 %v6697, 0.01
      %v7401 = vmul.f32 %v7193, 0.01
      %v7402 = vmul.f32 %v6701, 0.01
      %v7403 = vmul.f32 %v6703, 0.01
      %v7404 = vmul.f32 %v7198, 0.01
      %v7405 = vmul.f32 %v6705, 0.01
      %v7406 = vmul.f32 %v6707, 0.01
      %v7407 = vmul.f32 %v7201, 0.01
      %v7408 = vmul.f32 %v6711, 0.01
      %v7409 = vmul.f32 %v6713, 0.01
      %v7410 = vmul.f32 %v7206, 0.01
      %v7411 = vmul.f32 %v6715, 0.01
      %v7412 = vmul.f32 %v6717, 0.01
      %v7413 = vmul.f32 %v7209, 0.01
      %v7414 = vmul.f32 %v6721, 0.01
      %v7415 = vmul.f32 %v6723, 0.01
      %v7416 = vmul.f32 %v7214, 0.01
      %v7417 = vmul.f32 %v6725, 0.01
      %v7418 = vmul.f32 %v6727, 0.01
      %v7419 = vmul.f32 %v7217, 0.01
      %v7420 = vmul.f32 %v6731, 0.01
      %v7421 = vmul.f32 %v6733, 0.01
      %v7422 = vmul.f32 %v7222, 0.01
      %v7423 = vmul.f32 %v6735, 0.01
      %v7424 = vmul.f32 %v6737, 0.01
      %v7425 = vmul.f32 %v7225, 0.01
      %v7426 = vmul.f32 %v6741, 0.01
      %v7427 = vmul.f32 %v6743, 0.01
      %v7428 = vmul.f32 %v7230, 0.01
      %v7429 = vmul.f32 %v6745, 0.01
      %v7430 = vmul.f32 %v6747, 0.01
      %v7431 = vmul.f32 %v7233, 0.01
      %v7432 = vmul.f32 %v6751, 0.01
      %v7433 = vmul.f32 %v6753, 0.01
      %v7434 = vmul.f32 %v7238, 0.01
      %v7435 = vmul.f32 %v6755, 0.01
      %v7436 = vmul.f32 %v6757, 0.01
      %v7437 = vmul.f32 %v7241, 0.01
      %v7438 = vmul.f32 %v6761, 0.01
      %v7439 = vmul.f32 %v6763, 0.01
      %v7440 = vmul.f32 %v7246, 0.01
      %v7441 = vmul.f32 %v6765, 0.01
      %v7442 = vmul.f32 %v6767, 0.01
      %v7443 = vmul.f32 %v7249, 0.01
      %v7444 = vsel %vm7252, %v6611, %v7348
      %v7445 = vsel %vm7253, %v6613, %v7349
      %v7446 = vsel %vm7254, %v7126, %v7350
      %v7447 = vsel %vm7255, %v6615, %v7351
      %v7448 = vsel %vm7256, %v6617, %v7352
      %v7449 = vsel %vm7257, %v7129, %v7353
      %v7450 = vsel %vm7258, %v6621, %v7354
      %v7451 = vsel %vm7259, %v6623, %v7355
      %v7452 = vsel %vm7260, %v7134, %v7356
      %v7453 = vsel %vm7261, %v6625, %v7357
      %v7454 = vsel %vm7262, %v6627, %v7358
      %v7455 = vsel %vm7263, %v7137, %v7359
      %v7456 = vsel %vm7264, %v6631, %v7360
      %v7457 = vsel %vm7265, %v6633, %v7361
      %v7458 = vsel %vm7266, %v7142, %v7362
      %v7459 = vsel %vm7267, %v6635, %v7363
      %v7460 = vsel %vm7268, %v6637, %v7364
      %v7461 = vsel %vm7269, %v7145, %v7365
      %v7462 = vsel %vm7270, %v6641, %v7366
      %v7463 = vsel %vm7271, %v6643, %v7367
      %v7464 = vsel %vm7272, %v7150, %v7368
      %v7465 = vsel %vm7273, %v6645, %v7369
      %v7466 = vsel %vm7274, %v6647, %v7370
      %v7467 = vsel %vm7275, %v7153, %v7371
      %v7468 = vsel %vm7276, %v6651, %v7372
      %v7469 = vsel %vm7277, %v6653, %v7373
      %v7470 = vsel %vm7278, %v7158, %v7374
      %v7471 = vsel %vm7279, %v6655, %v7375
      %v7472 = vsel %vm7280, %v6657, %v7376
      %v7473 = vsel %vm7281, %v7161, %v7377
      %v7474 = vsel %vm7282, %v6661, %v7378
      %v7475 = vsel %vm7283, %v6663, %v7379
      %v7476 = vsel %vm7284, %v7166, %v7380
      %v7477 = vsel %vm7285, %v6665, %v7381
      %v7478 = vsel %vm7286, %v6667, %v7382
      %v7479 = vsel %vm7287, %v7169, %v7383
      %v7480 = vsel %vm7288, %v6671, %v7384
      %v7481 = vsel %vm7289, %v6673, %v7385
      %v7482 = vsel %vm7290, %v7174, %v7386
      %v7483 = vsel %vm7291, %v6675, %v7387
      %v7484 = vsel %vm7292, %v6677, %v7388
      %v7485 = vsel %vm7293, %v7177, %v7389
      %v7486 = vsel %vm7294, %v6681, %v7390
      %v7487 = vsel %vm7295, %v6683, %v7391
      %v7488 = vsel %vm7296, %v7182, %v7392
      %v7489 = vsel %vm7297, %v6685, %v7393
      %v7490 = vsel %vm7298, %v6687, %v7394
      %v7491 = vsel %vm7299, %v7185, %v7395
      %v7492 = vsel %vm7300, %v6691, %v7396
      %v7493 = vsel %vm7301, %v6693, %v7397
      %v7494 = vsel %vm7302, %v7190, %v7398
      %v7495 = vsel %vm7303, %v6695, %v7399
      %v7496 = vsel %vm7304, %v6697, %v7400
      %v7497 = vsel %vm7305, %v7193, %v7401
      %v7498 = vsel %vm7306, %v6701, %v7402
      %v7499 = vsel %vm7307, %v6703, %v7403
      %v7500 = vsel %vm7308, %v7198, %v7404
      %v7501 = vsel %vm7309, %v6705, %v7405
      %v7502 = vsel %vm7310, %v6707, %v7406
      %v7503 = vsel %vm7311, %v7201, %v7407
      %v7504 = vsel %vm7312, %v6711, %v7408
      %v7505 = vsel %vm7313, %v6713, %v7409
      %v7506 = vsel %vm7314, %v7206, %v7410
      %v7507 = vsel %vm7315, %v6715, %v7411
      %v7508 = vsel %vm7316, %v6717, %v7412
      %v7509 = vsel %vm7317, %v7209, %v7413
      %v7510 = vsel %vm7318, %v6721, %v7414
      %v7511 = vsel %vm7319, %v6723, %v7415
      %v7512 = vsel %vm7320, %v7214, %v7416
      %v7513 = vsel %vm7321, %v6725, %v7417
      %v7514 = vsel %vm7322, %v6727, %v7418
      %v7515 = vsel %vm7323, %v7217, %v7419
      %v7516 = vsel %vm7324, %v6731, %v7420
      %v7517 = vsel %vm7325, %v6733, %v7421
      %v7518 = vsel %vm7326, %v7222, %v7422
      %v7519 = vsel %vm7327, %v6735, %v7423
      %v7520 = vsel %vm7328, %v6737, %v7424
      %v7521 = vsel %vm7329, %v7225, %v7425
      %v7522 = vsel %vm7330, %v6741, %v7426
      %v7523 = vsel %vm7331, %v6743, %v7427
      %v7524 = vsel %vm7332, %v7230, %v7428
      %v7525 = vsel %vm7333, %v6745, %v7429
      %v7526 = vsel %vm7334, %v6747, %v7430
      %v7527 = vsel %vm7335, %v7233, %v7431
      %v7528 = vsel %vm7336, %v6751, %v7432
      %v7529 = vsel %vm7337, %v6753, %v7433
      %v7530 = vsel %vm7338, %v7238, %v7434
      %v7531 = vsel %vm7339, %v6755, %v7435
      %v7532 = vsel %vm7340, %v6757, %v7436
      %v7533 = vsel %vm7341, %v7241, %v7437
      %v7534 = vsel %vm7342, %v6761, %v7438
      %v7535 = vsel %vm7343, %v6763, %v7439
      %v7536 = vsel %vm7344, %v7246, %v7440
      %v7537 = vsel %vm7345, %v6765, %v7441
      %v7538 = vsel %vm7346, %v6767, %v7442
      %v7539 = vsel %vm7347, %v7249, %v7443
      %v7540 = vpack.c.bf16 %v7447, %v7444
      %v7541 = vpack.c.bf16 %v7448, %v7445
      %v7542 = vpack.c.bf16 %v7449, %v7446
      %v7543 = vpack.c.bf16 %v7453, %v7450
      %v7544 = vpack.c.bf16 %v7454, %v7451
      %v7545 = vpack.c.bf16 %v7455, %v7452
      %v7546 = vpack.c.bf16 %v7459, %v7456
      %v7547 = vpack.c.bf16 %v7460, %v7457
      %v7548 = vpack.c.bf16 %v7461, %v7458
      %v7549 = vpack.c.bf16 %v7465, %v7462
      %v7550 = vpack.c.bf16 %v7466, %v7463
      %v7551 = vpack.c.bf16 %v7467, %v7464
      %v7552 = vpack.c.bf16 %v7471, %v7468
      %v7553 = vpack.c.bf16 %v7472, %v7469
      %v7554 = vpack.c.bf16 %v7473, %v7470
      %v7555 = vpack.c.bf16 %v7477, %v7474
      %v7556 = vpack.c.bf16 %v7478, %v7475
      %v7557 = vpack.c.bf16 %v7479, %v7476
      %v7558 = vpack.c.bf16 %v7483, %v7480
      %v7559 = vpack.c.bf16 %v7484, %v7481
      %v7560 = vpack.c.bf16 %v7485, %v7482
      %v7561 = vpack.c.bf16 %v7489, %v7486
      %v7562 = vpack.c.bf16 %v7490, %v7487
      %v7563 = vpack.c.bf16 %v7491, %v7488
      %v7564 = vpack.c.bf16 %v7495, %v7492
      %v7565 = vpack.c.bf16 %v7496, %v7493
      %v7566 = vpack.c.bf16 %v7497, %v7494
      %v7567 = vpack.c.bf16 %v7501, %v7498
      %v7568 = vpack.c.bf16 %v7502, %v7499
      %v7569 = vpack.c.bf16 %v7503, %v7500
      %v7570 = vpack.c.bf16 %v7507, %v7504
      %v7571 = vpack.c.bf16 %v7508, %v7505
      %v7572 = vpack.c.bf16 %v7509, %v7506
      %v7573 = vpack.c.bf16 %v7513, %v7510
      %v7574 = vpack.c.bf16 %v7514, %v7511
      %v7575 = vpack.c.bf16 %v7515, %v7512
      %v7576 = vpack.c.bf16 %v7519, %v7516
      %v7577 = vpack.c.bf16 %v7520, %v7517
      %v7578 = vpack.c.bf16 %v7521, %v7518
      %v7579 = vpack.c.bf16 %v7525, %v7522
      %v7580 = vpack.c.bf16 %v7526, %v7523
      %v7581 = vpack.c.bf16 %v7527, %v7524
      %v7582 = vpack.c.bf16 %v7531, %v7528
      %v7583 = vpack.c.bf16 %v7532, %v7529
      %v7584 = vpack.c.bf16 %v7533, %v7530
      %v7585 = vpack.c.bf16 %v7537, %v7534
      %v7586 = vpack.c.bf16 %v7538, %v7535
      %v7587 = vpack.c.bf16 %v7539, %v7536
      %v7588 = vld [vmem:[%s11] sm:$0xff]
      %v7589 = vld [vmem:[%s11 + $0x8] sm:$0xff]
      %v7590 = vld [vmem:[%s11 + $0x10] sm:$0xff]
      %v7591 = vld [vmem:[%s11 + $0x18] sm:$0xff]
      %v7592 = vld [vmem:[%s11 + $0x20] sm:$0xff]
      %v7593 = vld [vmem:[%s11 + $0x28] sm:$0xff]
      %v7594 = vld [vmem:[%s11 + $0x30] sm:$0xff]
      %v7595 = vld [vmem:[%s11 + $0x38] sm:$0xff]
      %v7596 = vld [vmem:[%s11 + $0x40] sm:$0xff]
      %v7597 = vld [vmem:[%s11 + $0x48] sm:$0xff]
      %v7598 = vld [vmem:[%s11 + $0x50] sm:$0xff]
      %v7599 = vld [vmem:[%s11 + $0x58] sm:$0xff]
      %v7600 = vld [vmem:[%s11 + $0x60] sm:$0xff]
      %v7601 = vld [vmem:[%s11 + $0x68] sm:$0xff]
      %v7602 = vld [vmem:[%s11 + $0x70] sm:$0xff]
      %v7603 = vld [vmem:[%s11 + $0x78] sm:$0xff]
      %v7604 = vld [vmem:[%s11 + $0x80] sm:$0xff]
      %v7605 = vld [vmem:[%s11 + $0x88] sm:$0xff]
      %v7606 = vld [vmem:[%s11 + $0x90] sm:$0xff]
      %v7607 = vld [vmem:[%s11 + $0x98] sm:$0xff]
      %v7608 = vld [vmem:[%s11 + $0xa0] sm:$0xff]
      %v7609 = vld [vmem:[%s11 + $0xa8] sm:$0xff]
      %v7610 = vld [vmem:[%s11 + $0xb0] sm:$0xff]
      %v7611 = vld [vmem:[%s11 + $0xb8] sm:$0xff]
      %v7612 = vld [vmem:[%s11 + $0xc0] sm:$0xff]
      %v7613 = vld [vmem:[%s11 + $0xc8] sm:$0xff]
      %v7614 = vld [vmem:[%s11 + $0xd0] sm:$0xff]
      %v7615 = vld [vmem:[%s11 + $0xd8] sm:$0xff]
      %v7616 = vld [vmem:[%s11 + $0xe0] sm:$0xff]
      %v7617 = vld [vmem:[%s11 + $0xe8] sm:$0xff]
      %v7618 = vld [vmem:[%s11 + $0xf0] sm:$0xff]
      %v7619 = vld [vmem:[%s11 + $0xf8] sm:$0xff]
      %v7620 = vld [vmem:[%s11 + $0x100] sm:$0xff]
      %v7621 = vld [vmem:[%s11 + $0x108] sm:$0xff]
      %v7622 = vld [vmem:[%s11 + $0x110] sm:$0xff]
      %v7623 = vld [vmem:[%s11 + $0x118] sm:$0xff]
      %v7624 = vld [vmem:[%s11 + $0x120] sm:$0xff]
      %v7625 = vld [vmem:[%s11 + $0x128] sm:$0xff]
      %v7626 = vld [vmem:[%s11 + $0x130] sm:$0xff]
      %v7627 = vld [vmem:[%s11 + $0x138] sm:$0xff]
      %v7628 = vld [vmem:[%s11 + $0x140] sm:$0xff]
      %v7629 = vld [vmem:[%s11 + $0x148] sm:$0xff]
      %v7630 = vld [vmem:[%s11 + $0x150] sm:$0xff]
      %v7631 = vld [vmem:[%s11 + $0x158] sm:$0xff]
      %v7632 = vld [vmem:[%s11 + $0x160] sm:$0xff]
      %v7633 = vld [vmem:[%s11 + $0x168] sm:$0xff]
      %v7634 = vld [vmem:[%s11 + $0x170] sm:$0xff]
      %v7635 = vld [vmem:[%s11 + $0x178] sm:$0xff]
      %v7636 = vld [vmem:[%s12] sm:$0x3]
      %v7638 = vlaneseq
      %v7639 = vshrl.u32 %v7638, 7
      %v7640 = vsub.s32 0, %v7639
      %v7641 = vrot.slane %v7636, %v7640
      %v7642 = vlaneseq
      %v7643 = vshrl.u32 %v7642, 7
      %v7644 = vsub.s32 1, %v7643
      %v7645 = vrot.slane %v7636, %v7644
      %v7696 = vunpack.c.l.b16 %v7588
      %v7697 = vunpack.c.h.b16 %v7588
      %v7698 = vunpack.c.l.b16 %v7589
      %v7699 = vunpack.c.h.b16 %v7589
      %v7700 = vunpack.c.l.b16 %v7590
      %v7701 = vunpack.c.h.b16 %v7590
      %v7702 = vunpack.c.l.b16 %v7591
      %v7703 = vunpack.c.h.b16 %v7591
      %v7704 = vunpack.c.l.b16 %v7592
      %v7705 = vunpack.c.h.b16 %v7592
      %v7706 = vunpack.c.l.b16 %v7593
      %v7707 = vunpack.c.h.b16 %v7593
      %v7708 = vunpack.c.l.b16 %v7594
      %v7709 = vunpack.c.h.b16 %v7594
      %v7710 = vunpack.c.l.b16 %v7595
      %v7711 = vunpack.c.h.b16 %v7595
      %v7712 = vunpack.c.l.b16 %v7596
      %v7713 = vunpack.c.h.b16 %v7596
      %v7714 = vunpack.c.l.b16 %v7597
      %v7715 = vunpack.c.h.b16 %v7597
      %v7716 = vunpack.c.l.b16 %v7598
      %v7717 = vunpack.c.h.b16 %v7598
      %v7718 = vunpack.c.l.b16 %v7599
      %v7719 = vunpack.c.h.b16 %v7599
      %v7720 = vunpack.c.l.b16 %v7600
      %v7721 = vunpack.c.h.b16 %v7600
      %v7722 = vunpack.c.l.b16 %v7601
      %v7723 = vunpack.c.h.b16 %v7601
      %v7724 = vunpack.c.l.b16 %v7602
      %v7725 = vunpack.c.h.b16 %v7602
      %v7726 = vunpack.c.l.b16 %v7603
      %v7727 = vunpack.c.h.b16 %v7603
      %v7728 = vunpack.c.l.b16 %v7604
      %v7729 = vunpack.c.h.b16 %v7604
      %v7730 = vunpack.c.l.b16 %v7605
      %v7731 = vunpack.c.h.b16 %v7605
      %v7732 = vunpack.c.l.b16 %v7606
      %v7733 = vunpack.c.h.b16 %v7606
      %v7734 = vunpack.c.l.b16 %v7607
      %v7735 = vunpack.c.h.b16 %v7607
      %v7736 = vunpack.c.l.b16 %v7608
      %v7737 = vunpack.c.h.b16 %v7608
      %v7738 = vunpack.c.l.b16 %v7609
      %v7739 = vunpack.c.h.b16 %v7609
      %v7740 = vunpack.c.l.b16 %v7610
      %v7741 = vunpack.c.h.b16 %v7610
      %v7742 = vunpack.c.l.b16 %v7611
      %v7743 = vunpack.c.h.b16 %v7611
      %v7744 = vunpack.c.l.b16 %v7612
      %v7745 = vunpack.c.h.b16 %v7612
      %v7746 = vunpack.c.l.b16 %v7613
      %v7747 = vunpack.c.h.b16 %v7613
      %v7748 = vunpack.c.l.b16 %v7614
      %v7749 = vunpack.c.h.b16 %v7614
      %v7750 = vunpack.c.l.b16 %v7615
      %v7751 = vunpack.c.h.b16 %v7615
      %v7752 = vunpack.c.l.b16 %v7616
      %v7753 = vunpack.c.h.b16 %v7616
      %v7754 = vunpack.c.l.b16 %v7617
      %v7755 = vunpack.c.h.b16 %v7617
      %v7756 = vunpack.c.l.b16 %v7618
      %v7757 = vunpack.c.h.b16 %v7618
      %v7758 = vunpack.c.l.b16 %v7619
      %v7759 = vunpack.c.h.b16 %v7619
      %v7760 = vunpack.c.l.b16 %v7620
      %v7761 = vunpack.c.h.b16 %v7620
      %v7762 = vunpack.c.l.b16 %v7621
      %v7763 = vunpack.c.h.b16 %v7621
      %v7764 = vunpack.c.l.b16 %v7622
      %v7765 = vunpack.c.h.b16 %v7622
      %v7766 = vunpack.c.l.b16 %v7623
      %v7767 = vunpack.c.h.b16 %v7623
      %v7768 = vunpack.c.l.b16 %v7624
      %v7769 = vunpack.c.h.b16 %v7624
      %v7770 = vunpack.c.l.b16 %v7625
      %v7771 = vunpack.c.h.b16 %v7625
      %v7772 = vunpack.c.l.b16 %v7626
      %v7773 = vunpack.c.h.b16 %v7626
      %v7774 = vunpack.c.l.b16 %v7627
      %v7775 = vunpack.c.h.b16 %v7627
      %v7776 = vunpack.c.l.b16 %v7628
      %v7777 = vunpack.c.h.b16 %v7628
      %v7778 = vunpack.c.l.b16 %v7629
      %v7779 = vunpack.c.h.b16 %v7629
      %v7780 = vunpack.c.l.b16 %v7630
      %v7781 = vunpack.c.h.b16 %v7630
      %v7782 = vunpack.c.l.b16 %v7631
      %v7783 = vunpack.c.h.b16 %v7631
      %v7784 = vunpack.c.l.b16 %v7632
      %v7785 = vunpack.c.h.b16 %v7632
      %v7786 = vunpack.c.l.b16 %v7633
      %v7787 = vunpack.c.h.b16 %v7633
      %v7788 = vunpack.c.l.b16 %v7634
      %v7789 = vunpack.c.h.b16 %v7634
      %v7790 = vunpack.c.l.b16 %v7635
      %v7791 = vunpack.c.h.b16 %v7635
      %v7792 = vpack.c.b16 %v7698, %v7696
      %v7793 = vpack.c.b16 %v7699, %v7697
      %v7794 = vpack.c.b16 %v7702, %v7700
      %v7795 = vpack.c.b16 %v7703, %v7701
      %v7796 = vpack.c.b16 %v7706, %v7704
      %v7797 = vpack.c.b16 %v7707, %v7705
      %v7798 = vpack.c.b16 %v7710, %v7708
      %v7799 = vpack.c.b16 %v7711, %v7709
      %v7800 = vpack.c.b16 %v7714, %v7712
      %v7801 = vpack.c.b16 %v7715, %v7713
      %v7802 = vpack.c.b16 %v7718, %v7716
      %v7803 = vpack.c.b16 %v7719, %v7717
      %v7804 = vpack.c.b16 %v7722, %v7720
      %v7805 = vpack.c.b16 %v7723, %v7721
      %v7806 = vpack.c.b16 %v7726, %v7724
      %v7807 = vpack.c.b16 %v7727, %v7725
      %v7808 = vpack.c.b16 %v7730, %v7728
      %v7809 = vpack.c.b16 %v7731, %v7729
      %v7810 = vpack.c.b16 %v7734, %v7732
      %v7811 = vpack.c.b16 %v7735, %v7733
      %v7812 = vpack.c.b16 %v7738, %v7736
      %v7813 = vpack.c.b16 %v7739, %v7737
      %v7814 = vpack.c.b16 %v7742, %v7740
      %v7815 = vpack.c.b16 %v7743, %v7741
      %v7816 = vpack.c.b16 %v7746, %v7744
      %v7817 = vpack.c.b16 %v7747, %v7745
      %v7818 = vpack.c.b16 %v7750, %v7748
      %v7819 = vpack.c.b16 %v7751, %v7749
      %v7820 = vpack.c.b16 %v7754, %v7752
      %v7821 = vpack.c.b16 %v7755, %v7753
      %v7822 = vpack.c.b16 %v7758, %v7756
      %v7823 = vpack.c.b16 %v7759, %v7757
      %v7824 = vpack.c.b16 %v7762, %v7760
      %v7825 = vpack.c.b16 %v7763, %v7761
      %v7826 = vpack.c.b16 %v7766, %v7764
      %v7827 = vpack.c.b16 %v7767, %v7765
      %v7828 = vpack.c.b16 %v7770, %v7768
      %v7829 = vpack.c.b16 %v7771, %v7769
      %v7830 = vpack.c.b16 %v7774, %v7772
      %v7831 = vpack.c.b16 %v7775, %v7773
      %v7832 = vpack.c.b16 %v7778, %v7776
      %v7833 = vpack.c.b16 %v7779, %v7777
      %v7834 = vpack.c.b16 %v7782, %v7780
      %v7835 = vpack.c.b16 %v7783, %v7781
      %v7836 = vpack.c.b16 %v7786, %v7784
      %v7837 = vpack.c.b16 %v7787, %v7785
      %v7838 = vpack.c.b16 %v7790, %v7788
      %v7839 = vpack.c.b16 %v7791, %v7789
      %7888 = vmatprep.subr.bf16.mxu0 %v7793
      %7889 = vmatpush1.bf16.msra.mxu0 %v7792
      %7890 = vmatprep.subr.bf16.mxu0 %v7795
      %7891 = vmatpush1.bf16.msra.mxu0 %v7794
      %7892 = vmatprep.subr.bf16.mxu0 %v7797
      %7893 = vmatpush1.bf16.msra.mxu0 %v7796
      %7894 = vmatprep.subr.bf16.mxu0 %v7799
      %7895 = vmatpush1.bf16.msra.mxu0 %v7798
      %7896 = vmatprep.subr.bf16.mxu0 %v7801
      %7897 = vmatpush1.bf16.msra.mxu0 %v7800
      %7898 = vmatprep.subr.bf16.mxu0 %v7803
      %7899 = vmatpush1.bf16.msra.mxu0 %v7802
      %7900 = vmatprep.subr.bf16.mxu0 %v7805
      %7901 = vmatpush1.bf16.msra.mxu0 %v7804
      %7902 = vmatprep.subr.bf16.mxu0 %v7807
      %7903 = vmatpush1.bf16.msra.mxu0 %v7806
      %7904 = vmatprep.subr.bf16.mxu0 %v7809
      %7905 = vmatpush1.bf16.msra.mxu0 %v7808
      %7906 = vmatprep.subr.bf16.mxu0 %v7811
      %7907 = vmatpush1.bf16.msra.mxu0 %v7810
      %7908 = vmatprep.subr.bf16.mxu0 %v7813
      %7909 = vmatpush1.bf16.msra.mxu0 %v7812
      %7910 = vmatprep.subr.bf16.mxu0 %v7815
      %7911 = vmatpush1.bf16.msra.mxu0 %v7814
      %7912 = vmatprep.subr.bf16.mxu0 %v7817
      %7913 = vmatpush1.bf16.msra.mxu0 %v7816
      %7914 = vmatprep.subr.bf16.mxu0 %v7819
      %7915 = vmatpush1.bf16.msra.mxu0 %v7818
      %7916 = vmatprep.subr.bf16.mxu0 %v7821
      %7917 = vmatpush1.bf16.msra.mxu0 %v7820
      %7918 = vmatprep.subr.bf16.mxu0 %v7823
      %7919 = vmatpush1.bf16.msra.mxu0 %v7822
      %7920 = vmatprep.mubr.bf16.mxu0 %v7541
      %7921 = vmatmul.mubr.bf16.gmra.mrb[0].mxu0 %v7540
      %v7922 = vpop.f32.mrb[0].mxu0
      %v7923 = vadd.f32 %v7641, %v7922
      %v7924 = vpop.f32.mrb[0].mxu0
      %v7925 = vadd.f32 %v7645, %v7924
      %v7926 = vpop.f32.mrb[0].mxu0
      %v7927 = vadd.f32 %v7641, %v7926
      %v7928 = vpop.f32.mrb[0].mxu0
      %v7929 = vadd.f32 %v7645, %v7928
      %7930 = vmatprep.mubr.bf16.mxu0 %v7544
      %7931 = vmatmul.mubr.bf16.gmra.mrb[0].mxu0 %v7543
      %v7932 = vpop.f32.mrb[0].mxu0
      %v7933 = vadd.f32 %v7641, %v7932
      %v7934 = vpop.f32.mrb[0].mxu0
      %v7935 = vadd.f32 %v7645, %v7934
      %v7936 = vpop.f32.mrb[0].mxu0
      %v7937 = vadd.f32 %v7641, %v7936
      %v7938 = vpop.f32.mrb[0].mxu0
      %v7939 = vadd.f32 %v7645, %v7938
      %7940 = vmatprep.mubr.bf16.mxu0 %v7547
      %7941 = vmatmul.mubr.bf16.gmra.mrb[0].mxu0 %v7546
      %v7942 = vpop.f32.mrb[0].mxu0
      %v7943 = vadd.f32 %v7641, %v7942
      %v7944 = vpop.f32.mrb[0].mxu0
      %v7945 = vadd.f32 %v7645, %v7944
      %v7946 = vpop.f32.mrb[0].mxu0
      %v7947 = vadd.f32 %v7641, %v7946
      %v7948 = vpop.f32.mrb[0].mxu0
      %v7949 = vadd.f32 %v7645, %v7948
      %7950 = vmatprep.mubr.bf16.mxu0 %v7550
      %7951 = vmatmul.mubr.bf16.gmra.mrb[0].mxu0 %v7549
      %v7952 = vpop.f32.mrb[0].mxu0
      %v7953 = vadd.f32 %v7641, %v7952
      %v7954 = vpop.f32.mrb[0].mxu0
      %v7955 = vadd.f32 %v7645, %v7954
      %v7956 = vpop.f32.mrb[0].mxu0
      %v7957 = vadd.f32 %v7641, %v7956
      %v7958 = vpop.f32.mrb[0].mxu0
      %v7959 = vadd.f32 %v7645, %v7958
      %7960 = vmatprep.mubr.bf16.mxu0 %v7553
      %7961 = vmatmul.mubr.bf16.gmra.mrb[0].mxu0 %v7552
      %v7962 = vpop.f32.mrb[0].mxu0
      %v7963 = vadd.f32 %v7641, %v7962
      %v7964 = vpop.f32.mrb[0].mxu0
      %v7965 = vadd.f32 %v7645, %v7964
      %v7966 = vpop.f32.mrb[0].mxu0
      %v7967 = vadd.f32 %v7641, %v7966
      %v7968 = vpop.f32.mrb[0].mxu0
      %v7969 = vadd.f32 %v7645, %v7968
      %7970 = vmatprep.mubr.bf16.mxu0 %v7556
      %7971 = vmatmul.mubr.bf16.gmra.mrb[0].mxu0 %v7555
      %v7972 = vpop.f32.mrb[0].mxu0
      %v7973 = vadd.f32 %v7641, %v7972
      %v7974 = vpop.f32.mrb[0].mxu0
      %v7975 = vadd.f32 %v7645, %v7974
      %v7976 = vpop.f32.mrb[0].mxu0
      %v7977 = vadd.f32 %v7641, %v7976
      %v7978 = vpop.f32.mrb[0].mxu0
      %v7979 = vadd.f32 %v7645, %v7978
      %7980 = vmatprep.mubr.bf16.mxu0 %v7559
      %7981 = vmatmul.mubr.bf16.gmra.mrb[0].mxu0 %v7558
      %v7982 = vpop.f32.mrb[0].mxu0
      %v7983 = vadd.f32 %v7641, %v7982
      %v7984 = vpop.f32.mrb[0].mxu0
      %v7985 = vadd.f32 %v7645, %v7984
      %v7986 = vpop.f32.mrb[0].mxu0
      %v7987 = vadd.f32 %v7641, %v7986
      %v7988 = vpop.f32.mrb[0].mxu0
      %v7989 = vadd.f32 %v7645, %v7988
      %7990 = vmatprep.mubr.bf16.mxu0 %v7562
      %7991 = vmatmul.mubr.bf16.gmra.mrb[0].mxu0 %v7561
      %v7992 = vpop.f32.mrb[0].mxu0
      %v7993 = vadd.f32 %v7641, %v7992
      %v7994 = vpop.f32.mrb[0].mxu0
      %v7995 = vadd.f32 %v7645, %v7994
      %v7996 = vpop.f32.mrb[0].mxu0
      %v7997 = vadd.f32 %v7641, %v7996
      %v7998 = vpop.f32.mrb[0].mxu0
      %v7999 = vadd.f32 %v7645, %v7998
      %8000 = vmatprep.mubr.bf16.mxu0 %v7565
      %8001 = vmatmul.mubr.bf16.gmra.mrb[0].mxu0 %v7564
      %v8002 = vpop.f32.mrb[0].mxu0
      %v8003 = vadd.f32 %v7641, %v8002
      %v8004 = vpop.f32.mrb[0].mxu0
      %v8005 = vadd.f32 %v7645, %v8004
      %v8006 = vpop.f32.mrb[0].mxu0
      %v8007 = vadd.f32 %v7641, %v8006
      %v8008 = vpop.f32.mrb[0].mxu0
      %v8009 = vadd.f32 %v7645, %v8008
      %8010 = vmatprep.mubr.bf16.mxu0 %v7568
      %8011 = vmatmul.mubr.bf16.gmra.mrb[0].mxu0 %v7567
      %v8012 = vpop.f32.mrb[0].mxu0
      %v8013 = vadd.f32 %v7641, %v8012
      %v8014 = vpop.f32.mrb[0].mxu0
      %v8015 = vadd.f32 %v7645, %v8014
      %v8016 = vpop.f32.mrb[0].mxu0
      %v8017 = vadd.f32 %v7641, %v8016
      %v8018 = vpop.f32.mrb[0].mxu0
      %v8019 = vadd.f32 %v7645, %v8018
      %8020 = vmatprep.mubr.bf16.mxu0 %v7571
      %8021 = vmatmul.mubr.bf16.gmra.mrb[0].mxu0 %v7570
      %v8022 = vpop.f32.mrb[0].mxu0
      %v8023 = vadd.f32 %v7641, %v8022
      %v8024 = vpop.f32.mrb[0].mxu0
      %v8025 = vadd.f32 %v7645, %v8024
      %v8026 = vpop.f32.mrb[0].mxu0
      %v8027 = vadd.f32 %v7641, %v8026
      %v8028 = vpop.f32.mrb[0].mxu0
      %v8029 = vadd.f32 %v7645, %v8028
      %8030 = vmatprep.mubr.bf16.mxu0 %v7574
      %8031 = vmatmul.mubr.bf16.gmra.mrb[0].mxu0 %v7573
      %v8032 = vpop.f32.mrb[0].mxu0
      %v8033 = vadd.f32 %v7641, %v8032
      %v8034 = vpop.f32.mrb[0].mxu0
      %v8035 = vadd.f32 %v7645, %v8034
      %v8036 = vpop.f32.mrb[0].mxu0
      %v8037 = vadd.f32 %v7641, %v8036
      %v8038 = vpop.f32.mrb[0].mxu0
      %v8039 = vadd.f32 %v7645, %v8038
      %8040 = vmatprep.mubr.bf16.mxu0 %v7577
      %8041 = vmatmul.mubr.bf16.gmra.mrb[0].mxu0 %v7576
      %v8042 = vpop.f32.mrb[0].mxu0
      %v8043 = vadd.f32 %v7641, %v8042
      %v8044 = vpop.f32.mrb[0].mxu0
      %v8045 = vadd.f32 %v7645, %v8044
      %v8046 = vpop.f32.mrb[0].mxu0
      %v8047 = vadd.f32 %v7641, %v8046
      %v8048 = vpop.f32.mrb[0].mxu0
      %v8049 = vadd.f32 %v7645, %v8048
      %8050 = vmatprep.mubr.bf16.mxu0 %v7580
      %8051 = vmatmul.mubr.bf16.gmra.mrb[0].mxu0 %v7579
      %v8052 = vpop.f32.mrb[0].mxu0
      %v8053 = vadd.f32 %v7641, %v8052
      %v8054 = vpop.f32.mrb[0].mxu0
      %v8055 = vadd.f32 %v7645, %v8054
      %v8056 = vpop.f32.mrb[0].mxu0
      %v8057 = vadd.f32 %v7641, %v8056
      %v8058 = vpop.f32.mrb[0].mxu0
      %v8059 = vadd.f32 %v7645, %v8058
      %8060 = vmatprep.mubr.bf16.mxu0 %v7583
      %8061 = vmatmul.mubr.bf16.gmra.mrb[0].mxu0 %v7582
      %v8062 = vpop.f32.mrb[0].mxu0
      %v8063 = vadd.f32 %v7641, %v8062
      %v8064 = vpop.f32.mrb[0].mxu0
      %v8065 = vadd.f32 %v7645, %v8064
      %v8066 = vpop.f32.mrb[0].mxu0
      %v8067 = vadd.f32 %v7641, %v8066
      %v8068 = vpop.f32.mrb[0].mxu0
      %v8069 = vadd.f32 %v7645, %v8068
      %8070 = vmatprep.mubr.bf16.mxu0 %v7586
      %8071 = vmatmul.mubr.bf16.gmra.mrb[0].mxu0 %v7585
      %v8072 = vpop.f32.mrb[0].mxu0
      %v8073 = vadd.f32 %v7641, %v8072
      %v8074 = vpop.f32.mrb[0].mxu0
      %v8075 = vadd.f32 %v7645, %v8074
      %v8076 = vpop.f32.mrb[0].mxu0
      %v8077 = vadd.f32 %v7641, %v8076
      %v8078 = vpop.f32.mrb[0].mxu0
      %v8079 = vadd.f32 %v7645, %v8078
      %8080 = vdwg.mxu0
      %8081 = vmatprep.subr.bf16.mxu0 %v7825
      %8082 = vmatpush1.bf16.msra.mxu0 %v7824
      %8083 = vmatprep.subr.bf16.mxu0 %v7827
      %8084 = vmatpush1.bf16.msra.mxu0 %v7826
      %8085 = vmatprep.subr.bf16.mxu0 %v7829
      %8086 = vmatpush1.bf16.msra.mxu0 %v7828
      %8087 = vmatprep.subr.bf16.mxu0 %v7831
      %8088 = vmatpush1.bf16.msra.mxu0 %v7830
      %8089 = vmatprep.subr.bf16.mxu0 %v7833
      %8090 = vmatpush1.bf16.msra.mxu0 %v7832
      %8091 = vmatprep.subr.bf16.mxu0 %v7835
      %8092 = vmatpush1.bf16.msra.mxu0 %v7834
      %8093 = vmatprep.subr.bf16.mxu0 %v7837
      %8094 = vmatpush1.bf16.msra.mxu0 %v7836
      %8095 = vmatprep.subr.bf16.mxu0 %v7839
      %8096 = vmatpush1.bf16.msra.mxu0 %v7838
      %8097 = vmatprep.subr.bf16.mxu0 0
      %8098 = vmatpush1.bf16.msra.mxu0 0
      %8099 = vmatprep.subr.bf16.mxu0 0
      %8100 = vmatpush1.bf16.msra.mxu0 0
      %8101 = vmatprep.subr.bf16.mxu0 0
      %8102 = vmatpush1.bf16.msra.mxu0 0
      %8103 = vmatprep.subr.bf16.mxu0 0
      %8104 = vmatpush1.bf16.msra.mxu0 0
      %8105 = vmatprep.subr.bf16.mxu0 0
      %8106 = vmatpush1.bf16.msra.mxu0 0
      %8107 = vmatprep.subr.bf16.mxu0 0
      %8108 = vmatpush1.bf16.msra.mxu0 0
      %8109 = vmatprep.subr.bf16.mxu0 0
      %8110 = vmatpush1.bf16.msra.mxu0 0
      %8111 = vmatprep.subr.bf16.mxu0 0
      %8112 = vmatpush1.bf16.msra.mxu0 0
      %8113 = vmatprep.mubr.bf16.mxu0 0
      %8114 = vmatmul.mubr.bf16.gmra.mrb[0].mxu0 %v7542
      %v8115 = vpop.f32.mrb[0].mxu0
      %v8116 = vadd.f32 %v7923, %v8115
      %v8117 = vpop.f32.mrb[0].mxu0
      %v8118 = vadd.f32 %v7925, %v8117
      %v8119 = vpop.f32.mrb[0].mxu0
      %v8120 = vadd.f32 %v7927, %v8119
      %v8121 = vpop.f32.mrb[0].mxu0
      %v8122 = vadd.f32 %v7929, %v8121
      %8123 = vmatprep.mubr.bf16.mxu0 0
      %8124 = vmatmul.mubr.bf16.gmra.mrb[0].mxu0 %v7545
      %v8125 = vpop.f32.mrb[0].mxu0
      %v8126 = vadd.f32 %v7933, %v8125
      %v8127 = vpop.f32.mrb[0].mxu0
      %v8128 = vadd.f32 %v7935, %v8127
      %v8129 = vpop.f32.mrb[0].mxu0
      %v8130 = vadd.f32 %v7937, %v8129
      %v8131 = vpop.f32.mrb[0].mxu0
      %v8132 = vadd.f32 %v7939, %v8131
      %8133 = vmatprep.mubr.bf16.mxu0 0
      %8134 = vmatmul.mubr.bf16.gmra.mrb[0].mxu0 %v7548
      %v8135 = vpop.f32.mrb[0].mxu0
      %v8136 = vadd.f32 %v7943, %v8135
      %v8137 = vpop.f32.mrb[0].mxu0
      %v8138 = vadd.f32 %v7945, %v8137
      %v8139 = vpop.f32.mrb[0].mxu0
      %v8140 = vadd.f32 %v7947, %v8139
      %v8141 = vpop.f32.mrb[0].mxu0
      %v8142 = vadd.f32 %v7949, %v8141
      %8143 = vmatprep.mubr.bf16.mxu0 0
      %8144 = vmatmul.mubr.bf16.gmra.mrb[0].mxu0 %v7551
      %v8145 = vpop.f32.mrb[0].mxu0
      %v8146 = vadd.f32 %v7953, %v8145
      %v8147 = vpop.f32.mrb[0].mxu0
      %v8148 = vadd.f32 %v7955, %v8147
      %v8149 = vpop.f32.mrb[0].mxu0
      %v8150 = vadd.f32 %v7957, %v8149
      %v8151 = vpop.f32.mrb[0].mxu0
      %v8152 = vadd.f32 %v7959, %v8151
      %8153 = vmatprep.mubr.bf16.mxu0 0
      %8154 = vmatmul.mubr.bf16.gmra.mrb[0].mxu0 %v7554
      %v8155 = vpop.f32.mrb[0].mxu0
      %v8156 = vadd.f32 %v7963, %v8155
      %v8157 = vpop.f32.mrb[0].mxu0
      %v8158 = vadd.f32 %v7965, %v8157
      %v8159 = vpop.f32.mrb[0].mxu0
      %v8160 = vadd.f32 %v7967, %v8159
      %v8161 = vpop.f32.mrb[0].mxu0
      %v8162 = vadd.f32 %v7969, %v8161
      %8163 = vmatprep.mubr.bf16.mxu0 0
      %8164 = vmatmul.mubr.bf16.gmra.mrb[0].mxu0 %v7557
      %v8165 = vpop.f32.mrb[0].mxu0
      %v8166 = vadd.f32 %v7973, %v8165
      %v8167 = vpop.f32.mrb[0].mxu0
      %v8168 = vadd.f32 %v7975, %v8167
      %v8169 = vpop.f32.mrb[0].mxu0
      %v8170 = vadd.f32 %v7977, %v8169
      %v8171 = vpop.f32.mrb[0].mxu0
      %v8172 = vadd.f32 %v7979, %v8171
      %8173 = vmatprep.mubr.bf16.mxu0 0
      %8174 = vmatmul.mubr.bf16.gmra.mrb[0].mxu0 %v7560
      %v8175 = vpop.f32.mrb[0].mxu0
      %v8176 = vadd.f32 %v7983, %v8175
      %v8177 = vpop.f32.mrb[0].mxu0
      %v8178 = vadd.f32 %v7985, %v8177
      %v8179 = vpop.f32.mrb[0].mxu0
      %v8180 = vadd.f32 %v7987, %v8179
      %v8181 = vpop.f32.mrb[0].mxu0
      %v8182 = vadd.f32 %v7989, %v8181
      %8183 = vmatprep.mubr.bf16.mxu0 0
      %8184 = vmatmul.mubr.bf16.gmra.mrb[0].mxu0 %v7563
      %v8185 = vpop.f32.mrb[0].mxu0
      %v8186 = vadd.f32 %v7993, %v8185
      %v8187 = vpop.f32.mrb[0].mxu0
      %v8188 = vadd.f32 %v7995, %v8187
      %v8189 = vpop.f32.mrb[0].mxu0
      %v8190 = vadd.f32 %v7997, %v8189
      %v8191 = vpop.f32.mrb[0].mxu0
      %v8192 = vadd.f32 %v7999, %v8191
      %8193 = vmatprep.mubr.bf16.mxu0 0
      %8194 = vmatmul.mubr.bf16.gmra.mrb[0].mxu0 %v7566
      %v8195 = vpop.f32.mrb[0].mxu0
      %v8196 = vadd.f32 %v8003, %v8195
      %v8197 = vpop.f32.mrb[0].mxu0
      %v8198 = vadd.f32 %v8005, %v8197
      %v8199 = vpop.f32.mrb[0].mxu0
      %v8200 = vadd.f32 %v8007, %v8199
      %v8201 = vpop.f32.mrb[0].mxu0
      %v8202 = vadd.f32 %v8009, %v8201
      %8203 = vmatprep.mubr.bf16.mxu0 0
      %8204 = vmatmul.mubr.bf16.gmra.mrb[0].mxu0 %v7569
      %v8205 = vpop.f32.mrb[0].mxu0
      %v8206 = vadd.f32 %v8013, %v8205
      %v8207 = vpop.f32.mrb[0].mxu0
      %v8208 = vadd.f32 %v8015, %v8207
      %v8209 = vpop.f32.mrb[0].mxu0
      %v8210 = vadd.f32 %v8017, %v8209
      %v8211 = vpop.f32.mrb[0].mxu0
      %v8212 = vadd.f32 %v8019, %v8211
      %8213 = vmatprep.mubr.bf16.mxu0 0
      %8214 = vmatmul.mubr.bf16.gmra.mrb[0].mxu0 %v7572
      %v8215 = vpop.f32.mrb[0].mxu0
      %v8216 = vadd.f32 %v8023, %v8215
      %v8217 = vpop.f32.mrb[0].mxu0
      %v8218 = vadd.f32 %v8025, %v8217
      %v8219 = vpop.f32.mrb[0].mxu0
      %v8220 = vadd.f32 %v8027, %v8219
      %v8221 = vpop.f32.mrb[0].mxu0
      %v8222 = vadd.f32 %v8029, %v8221
      %8223 = vmatprep.mubr.bf16.mxu0 0
      %8224 = vmatmul.mubr.bf16.gmra.mrb[0].mxu0 %v7575
      %v8225 = vpop.f32.mrb[0].mxu0
      %v8226 = vadd.f32 %v8033, %v8225
      %v8227 = vpop.f32.mrb[0].mxu0
      %v8228 = vadd.f32 %v8035, %v8227
      %v8229 = vpop.f32.mrb[0].mxu0
      %v8230 = vadd.f32 %v8037, %v8229
      %v8231 = vpop.f32.mrb[0].mxu0
      %v8232 = vadd.f32 %v8039, %v8231
      %8233 = vmatprep.mubr.bf16.mxu0 0
      %8234 = vmatmul.mubr.bf16.gmra.mrb[0].mxu0 %v7578
      %v8235 = vpop.f32.mrb[0].mxu0
      %v8236 = vadd.f32 %v8043, %v8235
      %v8237 = vpop.f32.mrb[0].mxu0
      %v8238 = vadd.f32 %v8045, %v8237
      %v8239 = vpop.f32.mrb[0].mxu0
      %v8240 = vadd.f32 %v8047, %v8239
      %v8241 = vpop.f32.mrb[0].mxu0
      %v8242 = vadd.f32 %v8049, %v8241
      %8243 = vmatprep.mubr.bf16.mxu0 0
      %8244 = vmatmul.mubr.bf16.gmra.mrb[0].mxu0 %v7581
      %v8245 = vpop.f32.mrb[0].mxu0
      %v8246 = vadd.f32 %v8053, %v8245
      %v8247 = vpop.f32.mrb[0].mxu0
      %v8248 = vadd.f32 %v8055, %v8247
      %v8249 = vpop.f32.mrb[0].mxu0
      %v8250 = vadd.f32 %v8057, %v8249
      %v8251 = vpop.f32.mrb[0].mxu0
      %v8252 = vadd.f32 %v8059, %v8251
      %8253 = vmatprep.mubr.bf16.mxu0 0
      %8254 = vmatmul.mubr.bf16.gmra.mrb[0].mxu0 %v7584
      %v8255 = vpop.f32.mrb[0].mxu0
      %v8256 = vadd.f32 %v8063, %v8255
      %v8257 = vpop.f32.mrb[0].mxu0
      %v8258 = vadd.f32 %v8065, %v8257
      %v8259 = vpop.f32.mrb[0].mxu0
      %v8260 = vadd.f32 %v8067, %v8259
      %v8261 = vpop.f32.mrb[0].mxu0
      %v8262 = vadd.f32 %v8069, %v8261
      %8263 = vmatprep.mubr.bf16.mxu0 0
      %8264 = vmatmul.mubr.bf16.gmra.mrb[0].mxu0 %v7587
      %v8265 = vpop.f32.mrb[0].mxu0
      %v8266 = vadd.f32 %v8073, %v8265
      %v8267 = vpop.f32.mrb[0].mxu0
      %v8268 = vadd.f32 %v8075, %v8267
      %v8269 = vpop.f32.mrb[0].mxu0
      %v8270 = vadd.f32 %v8077, %v8269
      %v8271 = vpop.f32.mrb[0].mxu0
      %v8272 = vadd.f32 %v8079, %v8271
      %8273 = vdwg.mxu0
      %vm8274 = vcmp.ge.f32.partialorder %v8116, 0.0
      %vm8275 = vcmp.ge.f32.partialorder %v8118, 0.0
      %vm8276 = vcmp.ge.f32.partialorder %v8120, 0.0
      %vm8277 = vcmp.ge.f32.partialorder %v8122, 0.0
      %vm8278 = vcmp.ge.f32.partialorder %v8126, 0.0
      %vm8279 = vcmp.ge.f32.partialorder %v8128, 0.0
      %vm8280 = vcmp.ge.f32.partialorder %v8130, 0.0
      %vm8281 = vcmp.ge.f32.partialorder %v8132, 0.0
      %vm8282 = vcmp.ge.f32.partialorder %v8136, 0.0
      %vm8283 = vcmp.ge.f32.partialorder %v8138, 0.0
      %vm8284 = vcmp.ge.f32.partialorder %v8140, 0.0
      %vm8285 = vcmp.ge.f32.partialorder %v8142, 0.0
      %vm8286 = vcmp.ge.f32.partialorder %v8146, 0.0
      %vm8287 = vcmp.ge.f32.partialorder %v8148, 0.0
      %vm8288 = vcmp.ge.f32.partialorder %v8150, 0.0
      %vm8289 = vcmp.ge.f32.partialorder %v8152, 0.0
      %vm8290 = vcmp.ge.f32.partialorder %v8156, 0.0
      %vm8291 = vcmp.ge.f32.partialorder %v8158, 0.0
      %vm8292 = vcmp.ge.f32.partialorder %v8160, 0.0
      %vm8293 = vcmp.ge.f32.partialorder %v8162, 0.0
      %vm8294 = vcmp.ge.f32.partialorder %v8166, 0.0
      %vm8295 = vcmp.ge.f32.partialorder %v8168, 0.0
      %vm8296 = vcmp.ge.f32.partialorder %v8170, 0.0
      %vm8297 = vcmp.ge.f32.partialorder %v8172, 0.0
      %vm8298 = vcmp.ge.f32.partialorder %v8176, 0.0
      %vm8299 = vcmp.ge.f32.partialorder %v8178, 0.0
      %vm8300 = vcmp.ge.f32.partialorder %v8180, 0.0
      %vm8301 = vcmp.ge.f32.partialorder %v8182, 0.0
      %vm8302 = vcmp.ge.f32.partialorder %v8186, 0.0
      %vm8303 = vcmp.ge.f32.partialorder %v8188, 0.0
      %vm8304 = vcmp.ge.f32.partialorder %v8190, 0.0
      %vm8305 = vcmp.ge.f32.partialorder %v8192, 0.0
      %vm8306 = vcmp.ge.f32.partialorder %v8196, 0.0
      %vm8307 = vcmp.ge.f32.partialorder %v8198, 0.0
      %vm8308 = vcmp.ge.f32.partialorder %v8200, 0.0
      %vm8309 = vcmp.ge.f32.partialorder %v8202, 0.0
      %vm8310 = vcmp.ge.f32.partialorder %v8206, 0.0
      %vm8311 = vcmp.ge.f32.partialorder %v8208, 0.0
      %vm8312 = vcmp.ge.f32.partialorder %v8210, 0.0
      %vm8313 = vcmp.ge.f32.partialorder %v8212, 0.0
      %vm8314 = vcmp.ge.f32.partialorder %v8216, 0.0
      %vm8315 = vcmp.ge.f32.partialorder %v8218, 0.0
      %vm8316 = vcmp.ge.f32.partialorder %v8220, 0.0
      %vm8317 = vcmp.ge.f32.partialorder %v8222, 0.0
      %vm8318 = vcmp.ge.f32.partialorder %v8226, 0.0
      %vm8319 = vcmp.ge.f32.partialorder %v8228, 0.0
      %vm8320 = vcmp.ge.f32.partialorder %v8230, 0.0
      %vm8321 = vcmp.ge.f32.partialorder %v8232, 0.0
      %vm8322 = vcmp.ge.f32.partialorder %v8236, 0.0
      %vm8323 = vcmp.ge.f32.partialorder %v8238, 0.0
      %vm8324 = vcmp.ge.f32.partialorder %v8240, 0.0
      %vm8325 = vcmp.ge.f32.partialorder %v8242, 0.0
      %vm8326 = vcmp.ge.f32.partialorder %v8246, 0.0
      %vm8327 = vcmp.ge.f32.partialorder %v8248, 0.0
      %vm8328 = vcmp.ge.f32.partialorder %v8250, 0.0
      %vm8329 = vcmp.ge.f32.partialorder %v8252, 0.0
      %vm8330 = vcmp.ge.f32.partialorder %v8256, 0.0
      %vm8331 = vcmp.ge.f32.partialorder %v8258, 0.0
      %vm8332 = vcmp.ge.f32.partialorder %v8260, 0.0
      %vm8333 = vcmp.ge.f32.partialorder %v8262, 0.0
      %vm8334 = vcmp.ge.f32.partialorder %v8266, 0.0
      %vm8335 = vcmp.ge.f32.partialorder %v8268, 0.0
      %vm8336 = vcmp.ge.f32.partialorder %v8270, 0.0
      %vm8337 = vcmp.ge.f32.partialorder %v8272, 0.0
      %v8338 = vmul.f32 %v8116, 0.01
      %v8339 = vmul.f32 %v8118, 0.01
      %v8340 = vmul.f32 %v8120, 0.01
      %v8341 = vmul.f32 %v8122, 0.01
      %v8342 = vmul.f32 %v8126, 0.01
      %v8343 = vmul.f32 %v8128, 0.01
      %v8344 = vmul.f32 %v8130, 0.01
      %v8345 = vmul.f32 %v8132, 0.01
      %v8346 = vmul.f32 %v8136, 0.01
      %v8347 = vmul.f32 %v8138, 0.01
      %v8348 = vmul.f32 %v8140, 0.01
      %v8349 = vmul.f32 %v8142, 0.01
      %v8350 = vmul.f32 %v8146, 0.01
      %v8351 = vmul.f32 %v8148, 0.01
      %v8352 = vmul.f32 %v8150, 0.01
      %v8353 = vmul.f32 %v8152, 0.01
      %v8354 = vmul.f32 %v8156, 0.01
      %v8355 = vmul.f32 %v8158, 0.01
      %v8356 = vmul.f32 %v8160, 0.01
      %v8357 = vmul.f32 %v8162, 0.01
      %v8358 = vmul.f32 %v8166, 0.01
      %v8359 = vmul.f32 %v8168, 0.01
      %v8360 = vmul.f32 %v8170, 0.01
      %v8361 = vmul.f32 %v8172, 0.01
      %v8362 = vmul.f32 %v8176, 0.01
      %v8363 = vmul.f32 %v8178, 0.01
      %v8364 = vmul.f32 %v8180, 0.01
      %v8365 = vmul.f32 %v8182, 0.01
      %v8366 = vmul.f32 %v8186, 0.01
      %v8367 = vmul.f32 %v8188, 0.01
      %v8368 = vmul.f32 %v8190, 0.01
      %v8369 = vmul.f32 %v8192, 0.01
      %v8370 = vmul.f32 %v8196, 0.01
      %v8371 = vmul.f32 %v8198, 0.01
      %v8372 = vmul.f32 %v8200, 0.01
      %v8373 = vmul.f32 %v8202, 0.01
      %v8374 = vmul.f32 %v8206, 0.01
      %v8375 = vmul.f32 %v8208, 0.01
      %v8376 = vmul.f32 %v8210, 0.01
      %v8377 = vmul.f32 %v8212, 0.01
      %v8378 = vmul.f32 %v8216, 0.01
      %v8379 = vmul.f32 %v8218, 0.01
      %v8380 = vmul.f32 %v8220, 0.01
      %v8381 = vmul.f32 %v8222, 0.01
      %v8382 = vmul.f32 %v8226, 0.01
      %v8383 = vmul.f32 %v8228, 0.01
      %v8384 = vmul.f32 %v8230, 0.01
      %v8385 = vmul.f32 %v8232, 0.01
      %v8386 = vmul.f32 %v8236, 0.01
      %v8387 = vmul.f32 %v8238, 0.01
      %v8388 = vmul.f32 %v8240, 0.01
      %v8389 = vmul.f32 %v8242, 0.01
      %v8390 = vmul.f32 %v8246, 0.01
      %v8391 = vmul.f32 %v8248, 0.01
      %v8392 = vmul.f32 %v8250, 0.01
      %v8393 = vmul.f32 %v8252, 0.01
      %v8394 = vmul.f32 %v8256, 0.01
      %v8395 = vmul.f32 %v8258, 0.01
      %v8396 = vmul.f32 %v8260, 0.01
      %v8397 = vmul.f32 %v8262, 0.01
      %v8398 = vmul.f32 %v8266, 0.01
      %v8399 = vmul.f32 %v8268, 0.01
      %v8400 = vmul.f32 %v8270, 0.01
      %v8401 = vmul.f32 %v8272, 0.01
      %v8402 = vsel %vm8274, %v8116, %v8338
      %v8403 = vsel %vm8275, %v8118, %v8339
      %v8404 = vsel %vm8276, %v8120, %v8340
      %v8405 = vsel %vm8277, %v8122, %v8341
      %v8406 = vsel %vm8278, %v8126, %v8342
      %v8407 = vsel %vm8279, %v8128, %v8343
      %v8408 = vsel %vm8280, %v8130, %v8344
      %v8409 = vsel %vm8281, %v8132, %v8345
      %v8410 = vsel %vm8282, %v8136, %v8346
      %v8411 = vsel %vm8283, %v8138, %v8347
      %v8412 = vsel %vm8284, %v8140, %v8348
      %v8413 = vsel %vm8285, %v8142, %v8349
      %v8414 = vsel %vm8286, %v8146, %v8350
      %v8415 = vsel %vm8287, %v8148, %v8351
      %v8416 = vsel %vm8288, %v8150, %v8352
      %v8417 = vsel %vm8289, %v8152, %v8353
      %v8418 = vsel %vm8290, %v8156, %v8354
      %v8419 = vsel %vm8291, %v8158, %v8355
      %v8420 = vsel %vm8292, %v8160, %v8356
      %v8421 = vsel %vm8293, %v8162, %v8357
      %v8422 = vsel %vm8294, %v8166, %v8358
      %v8423 = vsel %vm8295, %v8168, %v8359
      %v8424 = vsel %vm8296, %v8170, %v8360
      %v8425 = vsel %vm8297, %v8172, %v8361
      %v8426 = vsel %vm8298, %v8176, %v8362
      %v8427 = vsel %vm8299, %v8178, %v8363
      %v8428 = vsel %vm8300, %v8180, %v8364
      %v8429 = vsel %vm8301, %v8182, %v8365
      %v8430 = vsel %vm8302, %v8186, %v8366
      %v8431 = vsel %vm8303, %v8188, %v8367
      %v8432 = vsel %vm8304, %v8190, %v8368
      %v8433 = vsel %vm8305, %v8192, %v8369
      %v8434 = vsel %vm8306, %v8196, %v8370
      %v8435 = vsel %vm8307, %v8198, %v8371
      %v8436 = vsel %vm8308, %v8200, %v8372
      %v8437 = vsel %vm8309, %v8202, %v8373
      %v8438 = vsel %vm8310, %v8206, %v8374
      %v8439 = vsel %vm8311, %v8208, %v8375
      %v8440 = vsel %vm8312, %v8210, %v8376
      %v8441 = vsel %vm8313, %v8212, %v8377
      %v8442 = vsel %vm8314, %v8216, %v8378
      %v8443 = vsel %vm8315, %v8218, %v8379
      %v8444 = vsel %vm8316, %v8220, %v8380
      %v8445 = vsel %vm8317, %v8222, %v8381
      %v8446 = vsel %vm8318, %v8226, %v8382
      %v8447 = vsel %vm8319, %v8228, %v8383
      %v8448 = vsel %vm8320, %v8230, %v8384
      %v8449 = vsel %vm8321, %v8232, %v8385
      %v8450 = vsel %vm8322, %v8236, %v8386
      %v8451 = vsel %vm8323, %v8238, %v8387
      %v8452 = vsel %vm8324, %v8240, %v8388
      %v8453 = vsel %vm8325, %v8242, %v8389
      %v8454 = vsel %vm8326, %v8246, %v8390
      %v8455 = vsel %vm8327, %v8248, %v8391
      %v8456 = vsel %vm8328, %v8250, %v8392
      %v8457 = vsel %vm8329, %v8252, %v8393
      %v8458 = vsel %vm8330, %v8256, %v8394
      %v8459 = vsel %vm8331, %v8258, %v8395
      %v8460 = vsel %vm8332, %v8260, %v8396
      %v8461 = vsel %vm8333, %v8262, %v8397
      %v8462 = vsel %vm8334, %v8266, %v8398
      %v8463 = vsel %vm8335, %v8268, %v8399
      %v8464 = vsel %vm8336, %v8270, %v8400
      %v8465 = vsel %vm8337, %v8272, %v8401
      %v8466 = vpack.c.bf16 %v8404, %v8402
      %v8467 = vpack.c.bf16 %v8405, %v8403
      %v8468 = vpack.c.bf16 %v8408, %v8406
      %v8469 = vpack.c.bf16 %v8409, %v8407
      %v8470 = vpack.c.bf16 %v8412, %v8410
      %v8471 = vpack.c.bf16 %v8413, %v8411
      %v8472 = vpack.c.bf16 %v8416, %v8414
      %v8473 = vpack.c.bf16 %v8417, %v8415
      %v8474 = vpack.c.bf16 %v8420, %v8418
      %v8475 = vpack.c.bf16 %v8421, %v8419
      %v8476 = vpack.c.bf16 %v8424, %v8422
      %v8477 = vpack.c.bf16 %v8425, %v8423
      %v8478 = vpack.c.bf16 %v8428, %v8426
      %v8479 = vpack.c.bf16 %v8429, %v8427
      %v8480 = vpack.c.bf16 %v8432, %v8430
      %v8481 = vpack.c.bf16 %v8433, %v8431
      %v8482 = vpack.c.bf16 %v8436, %v8434
      %v8483 = vpack.c.bf16 %v8437, %v8435
      %v8484 = vpack.c.bf16 %v8440, %v8438
      %v8485 = vpack.c.bf16 %v8441, %v8439
      %v8486 = vpack.c.bf16 %v8444, %v8442
      %v8487 = vpack.c.bf16 %v8445, %v8443
      %v8488 = vpack.c.bf16 %v8448, %v8446
      %v8489 = vpack.c.bf16 %v8449, %v8447
      %v8490 = vpack.c.bf16 %v8452, %v8450
      %v8491 = vpack.c.bf16 %v8453, %v8451
      %v8492 = vpack.c.bf16 %v8456, %v8454
      %v8493 = vpack.c.bf16 %v8457, %v8455
      %v8494 = vpack.c.bf16 %v8460, %v8458
      %v8495 = vpack.c.bf16 %v8461, %v8459
      %v8496 = vpack.c.bf16 %v8464, %v8462
      %v8497 = vpack.c.bf16 %v8465, %v8463
      %v8498 = vld [vmem:[%s13] sm:$0xf]
      %v8499 = vld [vmem:[%s13 + $0x4] sm:$0xf]
      %v8500 = vld [vmem:[%s13 + $0x8] sm:$0xf]
      %v8501 = vld [vmem:[%s13 + $0xc] sm:$0xf]
      %v8502 = vld [vmem:[%s13 + $0x10] sm:$0xf]
      %v8503 = vld [vmem:[%s13 + $0x14] sm:$0xf]
      %v8504 = vld [vmem:[%s13 + $0x18] sm:$0xf]
      %v8505 = vld [vmem:[%s13 + $0x1c] sm:$0xf]
      %v8506 = vld [vmem:[%s13 + $0x20] sm:$0xf]
      %v8507 = vld [vmem:[%s13 + $0x24] sm:$0xf]
      %v8508 = vld [vmem:[%s13 + $0x28] sm:$0xf]
      %v8509 = vld [vmem:[%s13 + $0x2c] sm:$0xf]
      %v8510 = vld [vmem:[%s13 + $0x30] sm:$0xf]
      %v8511 = vld [vmem:[%s13 + $0x34] sm:$0xf]
      %v8512 = vld [vmem:[%s13 + $0x38] sm:$0xf]
      %v8513 = vld [vmem:[%s13 + $0x3c] sm:$0xf]
      %v8514 = vld [vmem:[%s13 + $0x40] sm:$0xf]
      %v8515 = vld [vmem:[%s13 + $0x44] sm:$0xf]
      %v8516 = vld [vmem:[%s13 + $0x48] sm:$0xf]
      %v8517 = vld [vmem:[%s13 + $0x4c] sm:$0xf]
      %v8518 = vld [vmem:[%s13 + $0x50] sm:$0xf]
      %v8519 = vld [vmem:[%s13 + $0x54] sm:$0xf]
      %v8520 = vld [vmem:[%s13 + $0x58] sm:$0xf]
      %v8521 = vld [vmem:[%s13 + $0x5c] sm:$0xf]
      %v8522 = vld [vmem:[%s13 + $0x60] sm:$0xf]
      %v8523 = vld [vmem:[%s13 + $0x64] sm:$0xf]
      %v8524 = vld [vmem:[%s13 + $0x68] sm:$0xf]
      %v8525 = vld [vmem:[%s13 + $0x6c] sm:$0xf]
      %v8526 = vld [vmem:[%s13 + $0x70] sm:$0xf]
      %v8527 = vld [vmem:[%s13 + $0x74] sm:$0xf]
      %v8528 = vld [vmem:[%s13 + $0x78] sm:$0xf]
      %v8529 = vld [vmem:[%s13 + $0x7c] sm:$0xf]
      %v8530 = vld [vmem:[%s14] sm:$0x1]
      %v8532 = vlaneseq
      %v8533 = vshrl.u32 %v8532, 7
      %v8534 = vsub.s32 0, %v8533
      %v8535 = vrot.slane %v8530, %v8534
      %v8569 = vunpack.c.l.b16 %v8498
      %v8570 = vunpack.c.l.b16 %v8499
      %v8571 = vunpack.c.l.b16 %v8500
      %v8572 = vunpack.c.l.b16 %v8501
      %v8573 = vunpack.c.l.b16 %v8502
      %v8574 = vunpack.c.l.b16 %v8503
      %v8575 = vunpack.c.l.b16 %v8504
      %v8576 = vunpack.c.l.b16 %v8505
      %v8577 = vunpack.c.l.b16 %v8506
      %v8578 = vunpack.c.l.b16 %v8507
      %v8579 = vunpack.c.l.b16 %v8508
      %v8580 = vunpack.c.l.b16 %v8509
      %v8581 = vunpack.c.l.b16 %v8510
      %v8582 = vunpack.c.l.b16 %v8511
      %v8583 = vunpack.c.l.b16 %v8512
      %v8584 = vunpack.c.l.b16 %v8513
      %v8585 = vunpack.c.l.b16 %v8514
      %v8586 = vunpack.c.l.b16 %v8515
      %v8587 = vunpack.c.l.b16 %v8516
      %v8588 = vunpack.c.l.b16 %v8517
      %v8589 = vunpack.c.l.b16 %v8518
      %v8590 = vunpack.c.l.b16 %v8519
      %v8591 = vunpack.c.l.b16 %v8520
      %v8592 = vunpack.c.l.b16 %v8521
      %v8593 = vunpack.c.l.b16 %v8522
      %v8594 = vunpack.c.l.b16 %v8523
      %v8595 = vunpack.c.l.b16 %v8524
      %v8596 = vunpack.c.l.b16 %v8525
      %v8597 = vunpack.c.l.b16 %v8526
      %v8598 = vunpack.c.l.b16 %v8527
      %v8599 = vunpack.c.l.b16 %v8528
      %v8600 = vunpack.c.l.b16 %v8529
      %v8601 = vpack.c.b16 %v8570, %v8569
      %v8602 = vpack.c.b16 %v8572, %v8571
      %v8603 = vpack.c.b16 %v8574, %v8573
      %v8604 = vpack.c.b16 %v8576, %v8575
      %v8605 = vpack.c.b16 %v8578, %v8577
      %v8606 = vpack.c.b16 %v8580, %v8579
      %v8607 = vpack.c.b16 %v8582, %v8581
      %v8608 = vpack.c.b16 %v8584, %v8583
      %v8609 = vpack.c.b16 %v8586, %v8585
      %v8610 = vpack.c.b16 %v8588, %v8587
      %v8611 = vpack.c.b16 %v8590, %v8589
      %v8612 = vpack.c.b16 %v8592, %v8591
      %v8613 = vpack.c.b16 %v8594, %v8593
      %v8614 = vpack.c.b16 %v8596, %v8595
      %v8615 = vpack.c.b16 %v8598, %v8597
      %v8616 = vpack.c.b16 %v8600, %v8599
      %8633 = vmatprep.subr.bf16.mxu0 0
      %8634 = vmatpush1.bf16.msra.mxu0 %v8601
      %8635 = vmatprep.subr.bf16.mxu0 0
      %8636 = vmatpush1.bf16.msra.mxu0 %v8602
      %8637 = vmatprep.subr.bf16.mxu0 0
      %8638 = vmatpush1.bf16.msra.mxu0 %v8603
      %8639 = vmatprep.subr.bf16.mxu0 0
      %8640 = vmatpush1.bf16.msra.mxu0 %v8604
      %8641 = vmatprep.subr.bf16.mxu0 0
      %8642 = vmatpush1.bf16.msra.mxu0 %v8605
      %8643 = vmatprep.subr.bf16.mxu0 0
      %8644 = vmatpush1.bf16.msra.mxu0 %v8606
      %8645 = vmatprep.subr.bf16.mxu0 0
      %8646 = vmatpush1.bf16.msra.mxu0 %v8607
      %8647 = vmatprep.subr.bf16.mxu0 0
      %8648 = vmatpush1.bf16.msra.mxu0 %v8608
      %8649 = vmatprep.subr.bf16.mxu0 0
      %8650 = vmatpush1.bf16.msra.mxu0 %v8609
      %8651 = vmatprep.subr.bf16.mxu0 0
      %8652 = vmatpush1.bf16.msra.mxu0 %v8610
      %8653 = vmatprep.subr.bf16.mxu0 0
      %8654 = vmatpush1.bf16.msra.mxu0 %v8611
      %8655 = vmatprep.subr.bf16.mxu0 0
      %8656 = vmatpush1.bf16.msra.mxu0 %v8612
      %8657 = vmatprep.subr.bf16.mxu0 0
      %8658 = vmatpush1.bf16.msra.mxu0 %v8613
      %8659 = vmatprep.subr.bf16.mxu0 0
      %8660 = vmatpush1.bf16.msra.mxu0 %v8614
      %8661 = vmatprep.subr.bf16.mxu0 0
      %8662 = vmatpush1.bf16.msra.mxu0 %v8615
      %8663 = vmatprep.subr.bf16.mxu0 0
      %8664 = vmatpush1.bf16.msra.mxu0 %v8616
      %8665 = vmatprep.mubr.bf16.mxu0 %v8467
      %8666 = vmatmul.mubr.bf16.gmra.mrb[0].mxu0 %v8466
      %v8667 = vpop.f32.mrb[0].mxu0
      %v8668 = vadd.f32 %v8535, %v8667
      %v8669 = vpop.f32.mrb[0].mxu0
      %v8670 = vpop.f32.mrb[0].mxu0
      %v8671 = vadd.f32 %v8535, %v8670
      %v8672 = vpop.f32.mrb[0].mxu0
      %8673 = vmatprep.mubr.bf16.mxu0 %v8469
      %8674 = vmatmul.mubr.bf16.gmra.mrb[0].mxu0 %v8468
      %v8675 = vpop.f32.mrb[0].mxu0
      %v8676 = vadd.f32 %v8535, %v8675
      %v8677 = vpop.f32.mrb[0].mxu0
      %v8678 = vpop.f32.mrb[0].mxu0
      %v8679 = vadd.f32 %v8535, %v8678
      %v8680 = vpop.f32.mrb[0].mxu0
      %8681 = vmatprep.mubr.bf16.mxu0 %v8471
      %8682 = vmatmul.mubr.bf16.gmra.mrb[0].mxu0 %v8470
      %v8683 = vpop.f32.mrb[0].mxu0
      %v8684 = vadd.f32 %v8535, %v8683
      %v8685 = vpop.f32.mrb[0].mxu0
      %v8686 = vpop.f32.mrb[0].mxu0
      %v8687 = vadd.f32 %v8535, %v8686
      %v8688 = vpop.f32.mrb[0].mxu0
      %8689 = vmatprep.mubr.bf16.mxu0 %v8473
      %8690 = vmatmul.mubr.bf16.gmra.mrb[0].mxu0 %v8472
      %v8691 = vpop.f32.mrb[0].mxu0
      %v8692 = vadd.f32 %v8535, %v8691
      %v8693 = vpop.f32.mrb[0].mxu0
      %v8694 = vpop.f32.mrb[0].mxu0
      %v8695 = vadd.f32 %v8535, %v8694
      %v8696 = vpop.f32.mrb[0].mxu0
      %8697 = vmatprep.mubr.bf16.mxu0 %v8475
      %8698 = vmatmul.mubr.bf16.gmra.mrb[0].mxu0 %v8474
      %v8699 = vpop.f32.mrb[0].mxu0
      %v8700 = vadd.f32 %v8535, %v8699
      %v8701 = vpop.f32.mrb[0].mxu0
      %v8702 = vpop.f32.mrb[0].mxu0
      %v8703 = vadd.f32 %v8535, %v8702
      %v8704 = vpop.f32.mrb[0].mxu0
      %8705 = vmatprep.mubr.bf16.mxu0 %v8477
      %8706 = vmatmul.mubr.bf16.gmra.mrb[0].mxu0 %v8476
      %v8707 = vpop.f32.mrb[0].mxu0
      %v8708 = vadd.f32 %v8535, %v8707
      %v8709 = vpop.f32.mrb[0].mxu0
      %v8710 = vpop.f32.mrb[0].mxu0
      %v8711 = vadd.f32 %v8535, %v8710
      %v8712 = vpop.f32.mrb[0].mxu0
      %8713 = vmatprep.mubr.bf16.mxu0 %v8479
      %8714 = vmatmul.mubr.bf16.gmra.mrb[0].mxu0 %v8478
      %v8715 = vpop.f32.mrb[0].mxu0
      %v8716 = vadd.f32 %v8535, %v8715
      %v8717 = vpop.f32.mrb[0].mxu0
      %v8718 = vpop.f32.mrb[0].mxu0
      %v8719 = vadd.f32 %v8535, %v8718
      %v8720 = vpop.f32.mrb[0].mxu0
      %8721 = vmatprep.mubr.bf16.mxu0 %v8481
      %8722 = vmatmul.mubr.bf16.gmra.mrb[0].mxu0 %v8480
      %v8723 = vpop.f32.mrb[0].mxu0
      %v8724 = vadd.f32 %v8535, %v8723
      %v8725 = vpop.f32.mrb[0].mxu0
      %v8726 = vpop.f32.mrb[0].mxu0
      %v8727 = vadd.f32 %v8535, %v8726
      %v8728 = vpop.f32.mrb[0].mxu0
      %8729 = vmatprep.mubr.bf16.mxu0 %v8483
      %8730 = vmatmul.mubr.bf16.gmra.mrb[0].mxu0 %v8482
      %v8731 = vpop.f32.mrb[0].mxu0
      %v8732 = vadd.f32 %v8535, %v8731
      %v8733 = vpop.f32.mrb[0].mxu0
      %v8734 = vpop.f32.mrb[0].mxu0
      %v8735 = vadd.f32 %v8535, %v8734
      %v8736 = vpop.f32.mrb[0].mxu0
      %8737 = vmatprep.mubr.bf16.mxu0 %v8485
      %8738 = vmatmul.mubr.bf16.gmra.mrb[0].mxu0 %v8484
      %v8739 = vpop.f32.mrb[0].mxu0
      %v8740 = vadd.f32 %v8535, %v8739
      %v8741 = vpop.f32.mrb[0].mxu0
      %v8742 = vpop.f32.mrb[0].mxu0
      %v8743 = vadd.f32 %v8535, %v8742
      %v8744 = vpop.f32.mrb[0].mxu0
      %8745 = vmatprep.mubr.bf16.mxu0 %v8487
      %8746 = vmatmul.mubr.bf16.gmra.mrb[0].mxu0 %v8486
      %v8747 = vpop.f32.mrb[0].mxu0
      %v8748 = vadd.f32 %v8535, %v8747
      %v8749 = vpop.f32.mrb[0].mxu0
      %v8750 = vpop.f32.mrb[0].mxu0
      %v8751 = vadd.f32 %v8535, %v8750
      %v8752 = vpop.f32.mrb[0].mxu0
      %8753 = vmatprep.mubr.bf16.mxu0 %v8489
      %8754 = vmatmul.mubr.bf16.gmra.mrb[0].mxu0 %v8488
      %v8755 = vpop.f32.mrb[0].mxu0
      %v8756 = vadd.f32 %v8535, %v8755
      %v8757 = vpop.f32.mrb[0].mxu0
      %v8758 = vpop.f32.mrb[0].mxu0
      %v8759 = vadd.f32 %v8535, %v8758
      %v8760 = vpop.f32.mrb[0].mxu0
      %8761 = vmatprep.mubr.bf16.mxu0 %v8491
      %8762 = vmatmul.mubr.bf16.gmra.mrb[0].mxu0 %v8490
      %v8763 = vpop.f32.mrb[0].mxu0
      %v8764 = vadd.f32 %v8535, %v8763
      %v8765 = vpop.f32.mrb[0].mxu0
      %v8766 = vpop.f32.mrb[0].mxu0
      %v8767 = vadd.f32 %v8535, %v8766
      %v8768 = vpop.f32.mrb[0].mxu0
      %8769 = vmatprep.mubr.bf16.mxu0 %v8493
      %8770 = vmatmul.mubr.bf16.gmra.mrb[0].mxu0 %v8492
      %v8771 = vpop.f32.mrb[0].mxu0
      %v8772 = vadd.f32 %v8535, %v8771
      %v8773 = vpop.f32.mrb[0].mxu0
      %v8774 = vpop.f32.mrb[0].mxu0
      %v8775 = vadd.f32 %v8535, %v8774
      %v8776 = vpop.f32.mrb[0].mxu0
      %8777 = vmatprep.mubr.bf16.mxu0 %v8495
      %8778 = vmatmul.mubr.bf16.gmra.mrb[0].mxu0 %v8494
      %v8779 = vpop.f32.mrb[0].mxu0
      %v8780 = vadd.f32 %v8535, %v8779
      %v8781 = vpop.f32.mrb[0].mxu0
      %v8782 = vpop.f32.mrb[0].mxu0
      %v8783 = vadd.f32 %v8535, %v8782
      %v8784 = vpop.f32.mrb[0].mxu0
      %8785 = vmatprep.mubr.bf16.mxu0 %v8497
      %8786 = vmatmul.mubr.bf16.gmra.mrb[0].mxu0 %v8496
      %v8787 = vpop.f32.mrb[0].mxu0
      %v8788 = vadd.f32 %v8535, %v8787
      %v8789 = vpop.f32.mrb[0].mxu0
      %v8790 = vpop.f32.mrb[0].mxu0
      %v8791 = vadd.f32 %v8535, %v8790
      %v8792 = vpop.f32.mrb[0].mxu0
      %8793 = vdwg.mxu0
      %vm8794 = vcmp.ge.f32.partialorder %v8668, 0.0
      %vm8795 = vcmp.ge.f32.partialorder %v8671, 0.0
      %vm8796 = vcmp.ge.f32.partialorder %v8676, 0.0
      %vm8797 = vcmp.ge.f32.partialorder %v8679, 0.0
      %vm8798 = vcmp.ge.f32.partialorder %v8684, 0.0
      %vm8799 = vcmp.ge.f32.partialorder %v8687, 0.0
      %vm8800 = vcmp.ge.f32.partialorder %v8692, 0.0
      %vm8801 = vcmp.ge.f32.partialorder %v8695, 0.0
      %vm8802 = vcmp.ge.f32.partialorder %v8700, 0.0
      %vm8803 = vcmp.ge.f32.partialorder %v8703, 0.0
      %vm8804 = vcmp.ge.f32.partialorder %v8708, 0.0
      %vm8805 = vcmp.ge.f32.partialorder %v8711, 0.0
      %vm8806 = vcmp.ge.f32.partialorder %v8716, 0.0
      %vm8807 = vcmp.ge.f32.partialorder %v8719, 0.0
      %vm8808 = vcmp.ge.f32.partialorder %v8724, 0.0
      %vm8809 = vcmp.ge.f32.partialorder %v8727, 0.0
      %vm8810 = vcmp.ge.f32.partialorder %v8732, 0.0
      %vm8811 = vcmp.ge.f32.partialorder %v8735, 0.0
      %vm8812 = vcmp.ge.f32.partialorder %v8740, 0.0
      %vm8813 = vcmp.ge.f32.partialorder %v8743, 0.0
      %vm8814 = vcmp.ge.f32.partialorder %v8748, 0.0
      %vm8815 = vcmp.ge.f32.partialorder %v8751, 0.0
      %vm8816 = vcmp.ge.f32.partialorder %v8756, 0.0
      %vm8817 = vcmp.ge.f32.partialorder %v8759, 0.0
      %vm8818 = vcmp.ge.f32.partialorder %v8764, 0.0
      %vm8819 = vcmp.ge.f32.partialorder %v8767, 0.0
      %vm8820 = vcmp.ge.f32.partialorder %v8772, 0.0
      %vm8821 = vcmp.ge.f32.partialorder %v8775, 0.0
      %vm8822 = vcmp.ge.f32.partialorder %v8780, 0.0
      %vm8823 = vcmp.ge.f32.partialorder %v8783, 0.0
      %vm8824 = vcmp.ge.f32.partialorder %v8788, 0.0
      %vm8825 = vcmp.ge.f32.partialorder %v8791, 0.0
      %v8826 = vmul.f32 %v8668, 0.01
      %v8827 = vmul.f32 %v8671, 0.01
      %v8828 = vmul.f32 %v8676, 0.01
      %v8829 = vmul.f32 %v8679, 0.01
      %v8830 = vmul.f32 %v8684, 0.01
      %v8831 = vmul.f32 %v8687, 0.01
      %v8832 = vmul.f32 %v8692, 0.01
      %v8833 = vmul.f32 %v8695, 0.01
      %v8834 = vmul.f32 %v8700, 0.01
      %v8835 = vmul.f32 %v8703, 0.01
      %v8836 = vmul.f32 %v8708, 0.01
      %v8837 = vmul.f32 %v8711, 0.01
      %v8838 = vmul.f32 %v8716, 0.01
      %v8839 = vmul.f32 %v8719, 0.01
      %v8840 = vmul.f32 %v8724, 0.01
      %v8841 = vmul.f32 %v8727, 0.01
      %v8842 = vmul.f32 %v8732, 0.01
      %v8843 = vmul.f32 %v8735, 0.01
      %v8844 = vmul.f32 %v8740, 0.01
      %v8845 = vmul.f32 %v8743, 0.01
      %v8846 = vmul.f32 %v8748, 0.01
      %v8847 = vmul.f32 %v8751, 0.01
      %v8848 = vmul.f32 %v8756, 0.01
      %v8849 = vmul.f32 %v8759, 0.01
      %v8850 = vmul.f32 %v8764, 0.01
      %v8851 = vmul.f32 %v8767, 0.01
      %v8852 = vmul.f32 %v8772, 0.01
      %v8853 = vmul.f32 %v8775, 0.01
      %v8854 = vmul.f32 %v8780, 0.01
      %v8855 = vmul.f32 %v8783, 0.01
      %v8856 = vmul.f32 %v8788, 0.01
      %v8857 = vmul.f32 %v8791, 0.01
      %v8858 = vsel %vm8794, %v8668, %v8826
      %v8859 = vsel %vm8795, %v8671, %v8827
      %v8860 = vsel %vm8796, %v8676, %v8828
      %v8861 = vsel %vm8797, %v8679, %v8829
      %v8862 = vsel %vm8798, %v8684, %v8830
      %v8863 = vsel %vm8799, %v8687, %v8831
      %v8864 = vsel %vm8800, %v8692, %v8832
      %v8865 = vsel %vm8801, %v8695, %v8833
      %v8866 = vsel %vm8802, %v8700, %v8834
      %v8867 = vsel %vm8803, %v8703, %v8835
      %v8868 = vsel %vm8804, %v8708, %v8836
      %v8869 = vsel %vm8805, %v8711, %v8837
      %v8870 = vsel %vm8806, %v8716, %v8838
      %v8871 = vsel %vm8807, %v8719, %v8839
      %v8872 = vsel %vm8808, %v8724, %v8840
      %v8873 = vsel %vm8809, %v8727, %v8841
      %v8874 = vsel %vm8810, %v8732, %v8842
      %v8875 = vsel %vm8811, %v8735, %v8843
      %v8876 = vsel %vm8812, %v8740, %v8844
      %v8877 = vsel %vm8813, %v8743, %v8845
      %v8878 = vsel %vm8814, %v8748, %v8846
      %v8879 = vsel %vm8815, %v8751, %v8847
      %v8880 = vsel %vm8816, %v8756, %v8848
      %v8881 = vsel %vm8817, %v8759, %v8849
      %v8882 = vsel %vm8818, %v8764, %v8850
      %v8883 = vsel %vm8819, %v8767, %v8851
      %v8884 = vsel %vm8820, %v8772, %v8852
      %v8885 = vsel %vm8821, %v8775, %v8853
      %v8886 = vsel %vm8822, %v8780, %v8854
      %v8887 = vsel %vm8823, %v8783, %v8855
      %v8888 = vsel %vm8824, %v8788, %v8856
      %v8889 = vsel %vm8825, %v8791, %v8857
      %v8890 = vpack.c.bf16 %v8859, %v8858
      %v8891 = vpack.c.bf16 %v8861, %v8860
      %v8892 = vpack.c.bf16 %v8863, %v8862
      %v8893 = vpack.c.bf16 %v8865, %v8864
      %v8894 = vpack.c.bf16 %v8867, %v8866
      %v8895 = vpack.c.bf16 %v8869, %v8868
      %v8896 = vpack.c.bf16 %v8871, %v8870
      %v8897 = vpack.c.bf16 %v8873, %v8872
      %v8898 = vpack.c.bf16 %v8875, %v8874
      %v8899 = vpack.c.bf16 %v8877, %v8876
      %v8900 = vpack.c.bf16 %v8879, %v8878
      %v8901 = vpack.c.bf16 %v8881, %v8880
      %v8902 = vpack.c.bf16 %v8883, %v8882
      %v8903 = vpack.c.bf16 %v8885, %v8884
      %v8904 = vpack.c.bf16 %v8887, %v8886
      %v8905 = vpack.c.bf16 %v8889, %v8888
      %v8906 = vld [vmem:[%s15] sm:$0xf]
      %v8907 = vld [vmem:[%s15 + $0x4] sm:$0xf]
      %v8908 = vld [vmem:[%s15 + $0x8] sm:$0xf]
      %v8909 = vld [vmem:[%s15 + $0xc] sm:$0xf]
      %v8910 = vld [vmem:[%s15 + $0x10] sm:$0xf]
      %v8911 = vld [vmem:[%s15 + $0x14] sm:$0xf]
      %v8912 = vld [vmem:[%s15 + $0x18] sm:$0xf]
      %v8913 = vld [vmem:[%s15 + $0x1c] sm:$0xf]
      %v8914 = vld [vmem:[%s15 + $0x20] sm:$0xf]
      %v8915 = vld [vmem:[%s15 + $0x24] sm:$0xf]
      %v8916 = vld [vmem:[%s15 + $0x28] sm:$0xf]
      %v8917 = vld [vmem:[%s15 + $0x2c] sm:$0xf]
      %v8918 = vld [vmem:[%s15 + $0x30] sm:$0xf]
      %v8919 = vld [vmem:[%s15 + $0x34] sm:$0xf]
      %v8920 = vld [vmem:[%s15 + $0x38] sm:$0xf]
      %v8921 = vld [vmem:[%s15 + $0x3c] sm:$0xf]
      %v8922 = vld [vmem:[%s16] sm:$0x1]
      %v8924 = vlaneseq
      %v8925 = vshrl.u32 %v8924, 7
      %v8926 = vsub.s32 0, %v8925
      %v8927 = vrot.slane %v8922, %v8926
      %v8945 = vunpack.c.l.b16 %v8906
      %v8946 = vunpack.c.l.b16 %v8907
      %v8947 = vunpack.c.l.b16 %v8908
      %v8948 = vunpack.c.l.b16 %v8909
      %v8949 = vunpack.c.l.b16 %v8910
      %v8950 = vunpack.c.l.b16 %v8911
      %v8951 = vunpack.c.l.b16 %v8912
      %v8952 = vunpack.c.l.b16 %v8913
      %v8953 = vunpack.c.l.b16 %v8914
      %v8954 = vunpack.c.l.b16 %v8915
      %v8955 = vunpack.c.l.b16 %v8916
      %v8956 = vunpack.c.l.b16 %v8917
      %v8957 = vunpack.c.l.b16 %v8918
      %v8958 = vunpack.c.l.b16 %v8919
      %v8959 = vunpack.c.l.b16 %v8920
      %v8960 = vunpack.c.l.b16 %v8921
      %v8961 = vpack.c.b16 %v8946, %v8945
      %v8962 = vpack.c.b16 %v8948, %v8947
      %v8963 = vpack.c.b16 %v8950, %v8949
      %v8964 = vpack.c.b16 %v8952, %v8951
      %v8965 = vpack.c.b16 %v8954, %v8953
      %v8966 = vpack.c.b16 %v8956, %v8955
      %v8967 = vpack.c.b16 %v8958, %v8957
      %v8968 = vpack.c.b16 %v8960, %v8959
      %8977 = vmatprep.subr.bf16.mxu0 0
      %8978 = vmatpush1.bf16.msra.mxu0 %v8961
      %8979 = vmatprep.subr.bf16.mxu0 0
      %8980 = vmatpush1.bf16.msra.mxu0 %v8962
      %8981 = vmatprep.subr.bf16.mxu0 0
      %8982 = vmatpush1.bf16.msra.mxu0 %v8963
      %8983 = vmatprep.subr.bf16.mxu0 0
      %8984 = vmatpush1.bf16.msra.mxu0 %v8964
      %8985 = vmatprep.subr.bf16.mxu0 0
      %8986 = vmatpush1.bf16.msra.mxu0 %v8965
      %8987 = vmatprep.subr.bf16.mxu0 0
      %8988 = vmatpush1.bf16.msra.mxu0 %v8966
      %8989 = vmatprep.subr.bf16.mxu0 0
      %8990 = vmatpush1.bf16.msra.mxu0 %v8967
      %8991 = vmatprep.subr.bf16.mxu0 0
      %8992 = vmatpush1.bf16.msra.mxu0 %v8968
      %8993 = vmatprep.subr.bf16.mxu0 0
      %8994 = vmatpush1.bf16.msra.mxu0 0
      %8995 = vmatprep.subr.bf16.mxu0 0
      %8996 = vmatpush1.bf16.msra.mxu0 0
      %8997 = vmatprep.subr.bf16.mxu0 0
      %8998 = vmatpush1.bf16.msra.mxu0 0
      %8999 = vmatprep.subr.bf16.mxu0 0
      %9000 = vmatpush1.bf16.msra.mxu0 0
      %9001 = vmatprep.subr.bf16.mxu0 0
      %9002 = vmatpush1.bf16.msra.mxu0 0
      %9003 = vmatprep.subr.bf16.mxu0 0
      %9004 = vmatpush1.bf16.msra.mxu0 0
      %9005 = vmatprep.subr.bf16.mxu0 0
      %9006 = vmatpush1.bf16.msra.mxu0 0
      %9007 = vmatprep.subr.bf16.mxu0 0
      %9008 = vmatpush1.bf16.msra.mxu0 0
      %9009 = vmatprep.mubr.bf16.mxu0 0
      %9010 = vmatmul.mubr.bf16.gmra.mrb[0].mxu0 %v8890
      %v9011 = vpop.f32.mrb[0].mxu0
      %v9012 = vadd.f32 %v8927, %v9011
      %v9013 = vpop.f32.mrb[0].mxu0
      %v9014 = vpop.f32.mrb[0].mxu0
      %v9015 = vadd.f32 %v8927, %v9014
      %v9016 = vpop.f32.mrb[0].mxu0
      %9017 = vmatprep.mubr.bf16.mxu0 0
      %9018 = vmatmul.mubr.bf16.gmra.mrb[0].mxu0 %v8891
      %v9019 = vpop.f32.mrb[0].mxu0
      %v9020 = vadd.f32 %v8927, %v9019
      %v9021 = vpop.f32.mrb[0].mxu0
      %v9022 = vpop.f32.mrb[0].mxu0
      %v9023 = vadd.f32 %v8927, %v9022
      %v9024 = vpop.f32.mrb[0].mxu0
      %9025 = vmatprep.mubr.bf16.mxu0 0
      %9026 = vmatmul.mubr.bf16.gmra.mrb[0].mxu0 %v8892
      %v9027 = vpop.f32.mrb[0].mxu0
      %v9028 = vadd.f32 %v8927, %v9027
      %v9029 = vpop.f32.mrb[0].mxu0
      %v9030 = vpop.f32.mrb[0].mxu0
      %v9031 = vadd.f32 %v8927, %v9030
      %v9032 = vpop.f32.mrb[0].mxu0
      %9033 = vmatprep.mubr.bf16.mxu0 0
      %9034 = vmatmul.mubr.bf16.gmra.mrb[0].mxu0 %v8893
      %v9035 = vpop.f32.mrb[0].mxu0
      %v9036 = vadd.f32 %v8927, %v9035
      %v9037 = vpop.f32.mrb[0].mxu0
      %v9038 = vpop.f32.mrb[0].mxu0
      %v9039 = vadd.f32 %v8927, %v9038
      %v9040 = vpop.f32.mrb[0].mxu0
      %9041 = vmatprep.mubr.bf16.mxu0 0
      %9042 = vmatmul.mubr.bf16.gmra.mrb[0].mxu0 %v8894
      %v9043 = vpop.f32.mrb[0].mxu0
      %v9044 = vadd.f32 %v8927, %v9043
      %v9045 = vpop.f32.mrb[0].mxu0
      %v9046 = vpop.f32.mrb[0].mxu0
      %v9047 = vadd.f32 %v8927, %v9046
      %v9048 = vpop.f32.mrb[0].mxu0
      %9049 = vmatprep.mubr.bf16.mxu0 0
      %9050 = vmatmul.mubr.bf16.gmra.mrb[0].mxu0 %v8895
      %v9051 = vpop.f32.mrb[0].mxu0
      %v9052 = vadd.f32 %v8927, %v9051
      %v9053 = vpop.f32.mrb[0].mxu0
      %v9054 = vpop.f32.mrb[0].mxu0
      %v9055 = vadd.f32 %v8927, %v9054
      %v9056 = vpop.f32.mrb[0].mxu0
      %9057 = vmatprep.mubr.bf16.mxu0 0
      %9058 = vmatmul.mubr.bf16.gmra.mrb[0].mxu0 %v8896
      %v9059 = vpop.f32.mrb[0].mxu0
      %v9060 = vadd.f32 %v8927, %v9059
      %v9061 = vpop.f32.mrb[0].mxu0
      %v9062 = vpop.f32.mrb[0].mxu0
      %v9063 = vadd.f32 %v8927, %v9062
      %v9064 = vpop.f32.mrb[0].mxu0
      %9065 = vmatprep.mubr.bf16.mxu0 0
      %9066 = vmatmul.mubr.bf16.gmra.mrb[0].mxu0 %v8897
      %v9067 = vpop.f32.mrb[0].mxu0
      %v9068 = vadd.f32 %v8927, %v9067
      %v9069 = vpop.f32.mrb[0].mxu0
      %v9070 = vpop.f32.mrb[0].mxu0
      %v9071 = vadd.f32 %v8927, %v9070
      %v9072 = vpop.f32.mrb[0].mxu0
      %9073 = vmatprep.mubr.bf16.mxu0 0
      %9074 = vmatmul.mubr.bf16.gmra.mrb[0].mxu0 %v8898
      %v9075 = vpop.f32.mrb[0].mxu0
      %v9076 = vadd.f32 %v8927, %v9075
      %v9077 = vpop.f32.mrb[0].mxu0
      %v9078 = vpop.f32.mrb[0].mxu0
      %v9079 = vadd.f32 %v8927, %v9078
      %v9080 = vpop.f32.mrb[0].mxu0
      %9081 = vmatprep.mubr.bf16.mxu0 0
      %9082 = vmatmul.mubr.bf16.gmra.mrb[0].mxu0 %v8899
      %v9083 = vpop.f32.mrb[0].mxu0
      %v9084 = vadd.f32 %v8927, %v9083
      %v9085 = vpop.f32.mrb[0].mxu0
      %v9086 = vpop.f32.mrb[0].mxu0
      %v9087 = vadd.f32 %v8927, %v9086
      %v9088 = vpop.f32.mrb[0].mxu0
      %9089 = vmatprep.mubr.bf16.mxu0 0
      %9090 = vmatmul.mubr.bf16.gmra.mrb[0].mxu0 %v8900
      %v9091 = vpop.f32.mrb[0].mxu0
      %v9092 = vadd.f32 %v8927, %v9091
      %v9093 = vpop.f32.mrb[0].mxu0
      %v9094 = vpop.f32.mrb[0].mxu0
      %v9095 = vadd.f32 %v8927, %v9094
      %v9096 = vpop.f32.mrb[0].mxu0
      %9097 = vmatprep.mubr.bf16.mxu0 0
      %9098 = vmatmul.mubr.bf16.gmra.mrb[0].mxu0 %v8901
      %v9099 = vpop.f32.mrb[0].mxu0
      %v9100 = vadd.f32 %v8927, %v9099
      %v9101 = vpop.f32.mrb[0].mxu0
      %v9102 = vpop.f32.mrb[0].mxu0
      %v9103 = vadd.f32 %v8927, %v9102
      %v9104 = vpop.f32.mrb[0].mxu0
      %9105 = vmatprep.mubr.bf16.mxu0 0
      %9106 = vmatmul.mubr.bf16.gmra.mrb[0].mxu0 %v8902
      %v9107 = vpop.f32.mrb[0].mxu0
      %v9108 = vadd.f32 %v8927, %v9107
      %v9109 = vpop.f32.mrb[0].mxu0
      %v9110 = vpop.f32.mrb[0].mxu0
      %v9111 = vadd.f32 %v8927, %v9110
      %v9112 = vpop.f32.mrb[0].mxu0
      %9113 = vmatprep.mubr.bf16.mxu0 0
      %9114 = vmatmul.mubr.bf16.gmra.mrb[0].mxu0 %v8903
      %v9115 = vpop.f32.mrb[0].mxu0
      %v9116 = vadd.f32 %v8927, %v9115
      %v9117 = vpop.f32.mrb[0].mxu0
      %v9118 = vpop.f32.mrb[0].mxu0
      %v9119 = vadd.f32 %v8927, %v9118
      %v9120 = vpop.f32.mrb[0].mxu0
      %9121 = vmatprep.mubr.bf16.mxu0 0
      %9122 = vmatmul.mubr.bf16.gmra.mrb[0].mxu0 %v8904
      %v9123 = vpop.f32.mrb[0].mxu0
      %v9124 = vadd.f32 %v8927, %v9123
      %v9125 = vpop.f32.mrb[0].mxu0
      %v9126 = vpop.f32.mrb[0].mxu0
      %v9127 = vadd.f32 %v8927, %v9126
      %v9128 = vpop.f32.mrb[0].mxu0
      %9129 = vmatprep.mubr.bf16.mxu0 0
      %9130 = vmatmul.mubr.bf16.gmra.mrb[0].mxu0 %v8905
      %v9131 = vpop.f32.mrb[0].mxu0
      %v9132 = vadd.f32 %v8927, %v9131
      %v9133 = vpop.f32.mrb[0].mxu0
      %v9134 = vpop.f32.mrb[0].mxu0
      %v9135 = vadd.f32 %v8927, %v9134
      %v9136 = vpop.f32.mrb[0].mxu0
      %9137 = vdwg.mxu0
      %9138 = vst [vmem:[%s550] sm:$0xff] %v9012
      %9139 = vst [vmem:[%s550 + $0x8] sm:$0xff] %v9015
      %9140 = vst [vmem:[%s550 + $0x10] sm:$0xff] %v9020
      %9141 = vst [vmem:[%s550 + $0x18] sm:$0xff] %v9023
      %9142 = vst [vmem:[%s550 + $0x20] sm:$0xff] %v9028
      %9143 = vst [vmem:[%s550 + $0x28] sm:$0xff] %v9031
      %9144 = vst [vmem:[%s550 + $0x30] sm:$0xff] %v9036
      %9145 = vst [vmem:[%s550 + $0x38] sm:$0xff] %v9039
      %9146 = vst [vmem:[%s550 + $0x40] sm:$0xff] %v9044
      %9147 = vst [vmem:[%s550 + $0x48] sm:$0xff] %v9047
      %9148 = vst [vmem:[%s550 + $0x50] sm:$0xff] %v9052
      %9149 = vst [vmem:[%s550 + $0x58] sm:$0xff] %v9055
      %9150 = vst [vmem:[%s550 + $0x60] sm:$0xff] %v9060
      %9151 = vst [vmem:[%s550 + $0x68] sm:$0xff] %v9063
      %9152 = vst [vmem:[%s550 + $0x70] sm:$0xff] %v9068
      %9153 = vst [vmem:[%s550 + $0x78] sm:$0xff] %v9071
      %9154 = vst [vmem:[%s550 + $0x80] sm:$0xff] %v9076
      %9155 = vst [vmem:[%s550 + $0x88] sm:$0xff] %v9079
      %9156 = vst [vmem:[%s550 + $0x90] sm:$0xff] %v9084
      %9157 = vst [vmem:[%s550 + $0x98] sm:$0xff] %v9087
      %9158 = vst [vmem:[%s550 + $0xa0] sm:$0xff] %v9092
      %9159 = vst [vmem:[%s550 + $0xa8] sm:$0xff] %v9095
      %9160 = vst [vmem:[%s550 + $0xb0] sm:$0xff] %v9100
      %9161 = vst [vmem:[%s550 + $0xb8] sm:$0xff] %v9103
      %9162 = vst [vmem:[%s550 + $0xc0] sm:$0xff] %v9108
      %9163 = vst [vmem:[%s550 + $0xc8] sm:$0xff] %v9111
      %9164 = vst [vmem:[%s550 + $0xd0] sm:$0xff] %v9116
      %9165 = vst [vmem:[%s550 + $0xd8] sm:$0xff] %v9119
      %9166 = vst [vmem:[%s550 + $0xe0] sm:$0xff] %v9124
      %9167 = vst [vmem:[%s550 + $0xe8] sm:$0xff] %v9127
      %9168 = vst [vmem:[%s550 + $0xf0] sm:$0xff] %v9132
      %9169 = vst [vmem:[%s550 + $0xf8] sm:$0xff] %v9135
      %s9170 = smul.u32 32, %s28
      %p9171 = scmp.lt.s32.totalorder %s9170, 63
      %s9172 = scalar_select %p9171, %s9170, 63
      %s9173 = smul.addr %s9172, 8
      %s9174 = scalar_lea.vmem %s17, %s9173
      // Predicated region
      $region89: #{net_forward.1} parent=87 // pred_check
        %p9175 = pneg %p408
      $region90: #{net_forward.1} parent=87 // pred_check_branch
        %9177 = sbr.rel (%p9175) target = $region92
      $region91: #{net_forward.1} parent=87 // pred_region
        %s9178 = smul.u32 32, %s28
      $region92: #{net_forward.1} parent=87 // pred_fallthru
        _
    $region88: #{net_forward.1} parent=5 // pred_fallthru
      _
    %p9179 = scmp.le.s32.totalorder 2, %s23
    // Predicated region
    $region93: #{net_forward.1} parent=5 // pred_check
      %p9180 = pneg %p9179
    $region94: #{net_forward.1} parent=5 // pred_check_branch
      %9182 = sbr.rel (%p9180) target = $region96
    $region95: #{net_forward.1} parent=5 // pred_region
      %s9183 = ssub.s32 %s23, 2
      // Predicated region
      $region97: #{net_forward.1} parent=95 // pred_check
        %p9184 = pneg %p414
      $region98: #{net_forward.1} parent=95 // pred_check_branch
        %9186 = sbr.rel (%p9184) target = $region100
      $region99: #{net_forward.1} parent=95 // pred_region
        %s9187 = smul.u32 32, %s29
        %p9188 = scmp.lt.s32.totalorder %s9187, 63
        %s9189 = scalar_select %p9188, %s9187, 63
        %s9190 = smul.addr %s9189, 8
        %s9191 = scalar_lea.vmem %s17, %s9190
      $region100: #{net_forward.1} parent=95 // pred_fallthru
        _
    $region96: #{net_forward.1} parent=5 // pred_fallthru
      _
  $region6: #{net_forward.1} parent=0 // loop_footer
    %s27 = sadd.s32 1, %s23
  $region7: #{net_forward.1} parent=0 // loop_footer_branch
    %22 = sbr.rel target = $region3
  $region8: #{net_forward.1} parent=0 // loop_exit
    _

</llo_original>
